<compile_context>
chip_gen: v7x
topology: tpu7x:2x2x1
jax: 0.10.0
libtpu: 0.0.40
codegen_flags: <defaults>
</compile_context>

<pallas_src>
import functools

import jax
import jax.numpy as jnp
import numpy as np
from jax.experimental import pallas as pl
from jax.experimental.pallas import tpu as pltpu


# ----------------------------------------------------------------------------
# Fused MSCGroup kernel
# ----------------------------------------------------------------------------
def _msc_group_kernel(x_ref, w1_ref, b1_ref, ws_ref, bs_ref, w2_ref, b2_ref,
                      wsa_ref, cw1_ref, cb1_ref, cw2_ref, cb2_ref, mask_ref,
                      o_ref, pad_ref, col_ref,
                      *, H, W, C, Cm, scales, dils, block_num, res):
    blk = pl.program_id(1)
    HW = H * W
    S = len(scales)
    dmax = max(scales)
    base = dmax * (W + 1)          # fixed interior offset in the flat halo buffer

    # One-time (per image) zeroing of the halo buffer: the interior is fully
    # overwritten before every read and the halo is never written afterwards,
    # so a single zero at the first block suffices (scratch persists across the
    # sequential block axis).  Also initializes the block-loop carry.
    @pl.when(blk == 0)
    def _():
        pad_ref[...] = jnp.zeros_like(pad_ref)
        o_ref[...] = x_ref[...]

    def conv3x3(inp, w, b, dil, cin):
        """Dilated 3x3 conv of a (cin, H*W) image as one lane-dense MXU matmul.

        9 taps = contiguous lane-shifted slices of the flat halo buffer
        (vertical out-of-range lands in the zero halo; horizontal wraparound
        lanes are zeroed by the 0/1 edge masks), stored as full-lane-width rows
        of the (9*cin, HW) im2col scratch.  `inp is None` => interior of
        pad_ref is already filled by the caller.
        """
        di = dils.index(dil)
        lm = mask_ref[2 * di:2 * di + 1, :]        # keep-mask, left edge
        rm = mask_ref[2 * di + 1:2 * di + 2, :]    # keep-mask, right edge
        if inp is not None:
            pad_ref[0:cin, base:base + HW] = inp
        for i in range(3):
            for j in range(3):
                k = i * 3 + j
                off = base + (i - 1) * dil * W + (j - 1) * dil
                patch = pad_ref[0:cin, off:off + HW]
                if j == 0:
                    patch = patch * lm
                elif j == 2:
                    patch = patch * rm
                col_ref[k * cin:(k + 1) * cin, :] = patch
        y = jnp.dot(w, col_ref[0:9 * cin, :],
                    preferred_element_type=jnp.float32)
        return y if b is None else y + b

    x = o_ref[0]                                           # (C, HW) carry

    # conv1 of all scales fused: one im2col + one (S*Cm, 9C) @ (9C, HW) matmul.
    h1 = jnp.maximum(conv3x3(x, w1_ref[blk], b1_ref[blk], 1, C), 0.0)

    acc = jnp.zeros((C, HW), jnp.float32)
    for si, scale in enumerate(scales):
        g = blk * S + si
        h = h1[si * Cm:(si + 1) * Cm, :]                              # (Cm, HW)
        h = conv3x3(h, ws_ref[g], bs_ref[g], scale, Cm)               # sconv
        h = jnp.maximum(h + x, 0.0)                                   # +res, act
        h = conv3x3(h, w2_ref[g], b2_ref[g], 1, C)                    # conv2
        # SpatialAttention(kernel=3): [avg;max] over channels -> 3x3 -> sigmoid
        pad_ref[0:1, base:base + HW] = jnp.mean(h, axis=0, keepdims=True)
        pad_ref[1:2, base:base + HW] = jnp.max(h, axis=0, keepdims=True)
        s = conv3x3(None, wsa_ref[g], None, 1, 2)                     # (1, HW)
        h = h * jax.nn.sigmoid(s)
        # CALayer: global avg pool -> 1x1 -> ReLU -> 1x1 -> sigmoid gate
        y = jnp.mean(h, axis=1, keepdims=True)                        # (C, 1)
        t = jnp.maximum(
            jnp.dot(cw1_ref[g], y, preferred_element_type=jnp.float32)
            + cb1_ref[g], 0.0)                                        # (Cr, 1)
        z = jax.nn.sigmoid(
            jnp.dot(cw2_ref[g], t, preferred_element_type=jnp.float32)
            + cb2_ref[g])                                             # (C, 1)
        acc = acc + h * z

    new_x = acc + x                                        # MSCBlock residual
    o_ref[0] = new_x
    if res:
        @pl.when(blk == block_num - 1)
        def _():
            o_ref[0] = new_x + x_ref[0]                    # group residual


# ----------------------------------------------------------------------------
# Parameter packing (per-block / per-scale dicts -> stacked, matmul-ready)
# ----------------------------------------------------------------------------
def _pack_params(params, scales):
    blocks = params["blocks"]

    def conv_rows(w):   # (3,3,Cin,Cout) -> (Cout, 9*Cin); column = (i*3+j)*Cin + c
        return jnp.transpose(w, (3, 0, 1, 2)).reshape(w.shape[3], -1)

    def stack_bs(get):  # per-(block, scale) -> leading axis index block*S + scale
        return jnp.concatenate(
            [jnp.stack([get(bp[str(s)]) for s in scales], 0) for bp in blocks], 0)

    w1 = jnp.stack(
        [jnp.concatenate([conv_rows(bp[str(s)]["w1"]) for s in scales], 0)
         for bp in blocks], 0)                               # (B, S*Cm, 9C)
    b1 = jnp.stack(
        [jnp.concatenate([bp[str(s)]["b1"].reshape(-1, 1) for s in scales], 0)
         for bp in blocks], 0)                               # (B, S*Cm, 1)

    return {
        "w1": w1, "b1": b1,
        "ws": stack_bs(lambda p: conv_rows(p["ws"])),        # (B*S, C, 9*Cm)
        "bs": stack_bs(lambda p: p["bs"].reshape(-1, 1)),    # (B*S, C, 1)
        "w2": stack_bs(lambda p: conv_rows(p["w2"])),        # (B*S, C, 9*C)
        "b2": stack_bs(lambda p: p["b2"].reshape(-1, 1)),
        "wsa": stack_bs(lambda p: conv_rows(p["wsa"][..., None])),  # (B*S, 1, 18)
        "cw1": stack_bs(lambda p: p["cw1"].T),               # (B*S, Cr, C)
        "cb1": stack_bs(lambda p: p["cb1"].reshape(-1, 1)),  # (B*S, Cr, 1)
        "cw2": stack_bs(lambda p: p["cw2"].T),               # (B*S, C, Cr)
        "cb2": stack_bs(lambda p: p["cb2"].reshape(-1, 1)),  # (B*S, C, 1)
    }


# ----------------------------------------------------------------------------
# Public forward (NCHW in / NCHW out)
# ----------------------------------------------------------------------------
def msc_group_forward(x_nchw, params, scales=(1, 2, 3), res=False):
    N, C, H, W = x_nchw.shape
    HW = H * W
    x = x_nchw.reshape(N, C, HW)        # spatial flattened onto the lane axis

    pk = _pack_params(params, scales)
    S = len(scales)
    block_num = len(params["blocks"])
    Cm = pk["w1"].shape[1] // S
    dmax = max(scales)
    dils = tuple(sorted(set(scales) | {1}))

    # 0/1 horizontal edge masks per dilation (row 2*d: left edge valid,
    # row 2*d+1: right edge valid) for the lane-shifted im2col taps.
    wcol = np.arange(HW) % W
    edge = np.stack(
        sum([[(wcol >= d).astype(np.float32),
              (wcol < W - d).astype(np.float32)] for d in dils], []), 0)
    edge_mask = jnp.asarray(edge)                           # (2*len(dils), HW)

    def full_spec(arr):
        nd = arr.ndim
        return pl.BlockSpec(arr.shape, lambda n, b, _nd=nd: (0,) * _nd)

    kernel = functools.partial(
        _msc_group_kernel, H=H, W=W, C=C, Cm=Cm, scales=tuple(scales),
        dils=dils, block_num=block_num, res=res)

    L = HW + 2 * dmax * (W + 1)          # flat halo buffer length

    out = pl.pallas_call(
        kernel,
        out_shape=jax.ShapeDtypeStruct((N, C, HW), jnp.float32),
        grid=(N, block_num),
        in_specs=[
            pl.BlockSpec((1, C, HW), lambda n, b: (n, 0, 0)),
            full_spec(pk["w1"]), full_spec(pk["b1"]),
            full_spec(pk["ws"]), full_spec(pk["bs"]),
            full_spec(pk["w2"]), full_spec(pk["b2"]),
            full_spec(pk["wsa"]),
            full_spec(pk["cw1"]), full_spec(pk["cb1"]),
            full_spec(pk["cw2"]), full_spec(pk["cb2"]),
            full_spec(edge_mask),
        ],
        out_specs=pl.BlockSpec((1, C, HW), lambda n, b: (n, 0, 0)),
        scratch_shapes=[
            pltpu.VMEM((C, L), jnp.float32),        # flat halo-padded image
            pltpu.VMEM((9 * C, HW), jnp.float32),   # im2col patch matrix
        ],
        compiler_params=pltpu.CompilerParams(
            dimension_semantics=("parallel", "arbitrary"),
            vmem_limit_bytes=32 * 1024 * 1024),
    )(x, pk["w1"], pk["b1"], pk["ws"], pk["bs"], pk["w2"], pk["b2"],
      pk["wsa"], pk["cw1"], pk["cb1"], pk["cw2"], pk["cb2"], edge_mask)

    return out.reshape(N, C, H, W)


# ----------------------------------------------------------------------------
# Deterministic parameter init (shapes follow the PyTorch __init__)
# ----------------------------------------------------------------------------
def init_msc_group_params(key, C, block_num, scales, reduction=2):
    Cm = C // 2            # midplanes = inplanes // 2
    Cr = C // reduction    # CALayer bottleneck
    blocks = []
    for _ in range(block_num):
        block = {}
        for s in scales:
            key, *ks = jax.random.split(key, 12)

            def nrm(k, shape, fan):
                return (jax.random.normal(k, shape, jnp.float32)
                        / jnp.sqrt(jnp.float32(fan)))

            block[str(s)] = {
                "w1": nrm(ks[0], (3, 3, C, Cm), 9 * C),
                "b1": nrm(ks[1], (1, Cm), C),
                "ws": nrm(ks[2], (3, 3, Cm, C), 9 * Cm),
                "bs": nrm(ks[3], (1, C), Cm),
                "w2": nrm(ks[4], (3, 3, C, C), 9 * C),
                "b2": nrm(ks[5], (1, C), C),
                "wsa": nrm(ks[6], (3, 3, 2), 18),          # SpatialAttention, no bias
                "cw1": nrm(ks[7], (C, Cr), C),
                "cb1": nrm(ks[8], (1, Cr), C),
                "cw2": nrm(ks[9], (Cr, C), Cr),
                "cb2": nrm(ks[10], (1, C), Cr),
            }
        blocks.append(block)
    return {"blocks": blocks}


# ----------------------------------------------------------------------------
# Pure-JAX reference (for the numerical check of the Pallas path)
# ----------------------------------------------------------------------------
def _conv_ref(x, w, b, dil):
    y = jax.lax.conv_general_dilated(
        x, w, window_strides=(1, 1), padding=((dil, dil), (dil, dil)),
        rhs_dilation=(dil, dil), dimension_numbers=("NHWC", "HWIO", "NHWC"),
        precision=jax.lax.Precision.HIGHEST)
    return y + b.reshape(1, 1, 1, -1)


def _attn_ref(x, wsa, w1, b1, w2, b2):
    avg = jnp.mean(x, axis=-1, keepdims=True)
    mx = jnp.max(x, axis=-1, keepdims=True)
    s = jnp.concatenate([avg, mx], axis=-1)
    sa = jax.lax.conv_general_dilated(
        s, wsa[..., None], (1, 1), ((1, 1), (1, 1)),
        dimension_numbers=("NHWC", "HWIO", "NHWC"),
        precision=jax.lax.Precision.HIGHEST)
    xw = x * jax.nn.sigmoid(sa)
    y = jnp.mean(xw, axis=(1, 2), keepdims=True)
    h = jax.nn.relu(jnp.einsum("nijc,cd->nijd", y, w1) + b1.reshape(1, 1, 1, -1))
    z = jnp.einsum("nijd,dc->nijc", h, w2) + b2.reshape(1, 1, 1, -1)
    return xw * jax.nn.sigmoid(z)


def msc_group_ref(x_nchw, params, scales, res=False):
    x = jnp.transpose(x_nchw, (0, 2, 3, 1))
    r = x
    for bp in params["blocks"]:
        acc = None
        for s in scales:
            p = bp[str(s)]
            h = jax.nn.relu(_conv_ref(x, p["w1"], p["b1"], 1))
            h = jax.nn.relu(_conv_ref(h, p["ws"], p["bs"], s) + x)
            h = _conv_ref(h, p["w2"], p["b2"], 1)
            o = _attn_ref(h, p["wsa"], p["cw1"], p["cb1"], p["cw2"], p["cb2"])
            acc = o if acc is None else acc + o
        x = acc + x
    if res:
        x = x + r
    return jnp.transpose(x, (0, 3, 1, 2))


# ----------------------------------------------------------------------------
if __name__ == "__main__":
    key = jax.random.PRNGKey(0)
    N, C, H, W = 2, 16, 16, 16            # batch, inplanes, spatial
    block_num = 2
    scales = (1, 2, 3)

    kx, kp = jax.random.split(key)
    x = jax.random.normal(kx, (N, C, H, W), jnp.float32)   # NCHW, like PyTorch
    params = init_msc_group_params(kp, C, block_num, scales, reduction=2)

    fwd = jax.jit(functools.partial(msc_group_forward, scales=scales, res=False))
    out = jax.block_until_ready(fwd(x, params))

    # numerical check vs pure-JAX reference (f32 vs f32: tight tolerance; an
    # indexing / weight-layout bug would produce O(1) error, so 2e-4 still
    # catches everything while leaving margin for summation-order differences).
    ref = jax.block_until_ready(msc_group_ref(x, params, scales, res=False))
    rel_err = float(jnp.max(jnp.abs(out - ref)) / (jnp.max(jnp.abs(ref)) + 1e-6))

    assert out.shape == (N, C, H, W)
    assert bool(jnp.isfinite(out).all())
    assert rel_err < 2e-4, f"Pallas vs reference mismatch: rel_err={rel_err}"

    print("KERNEL_OK")
</pallas_src>

<mosaic_0001>
module attributes {stable_mosaic.version = 11 : i64} {
  func.func @_msc_group_kernel(%arg0: i32, %arg1: i32, %arg2: memref<1x16x256xf32, #tpu.memory_space<vmem>>, %arg3: memref<2x24x144xf32, #tpu.memory_space<vmem>>, %arg4: memref<2x24x1xf32, #tpu.memory_space<vmem>>, %arg5: memref<6x16x72xf32, #tpu.memory_space<vmem>>, %arg6: memref<6x16x1xf32, #tpu.memory_space<vmem>>, %arg7: memref<6x16x144xf32, #tpu.memory_space<vmem>>, %arg8: memref<6x16x1xf32, #tpu.memory_space<vmem>>, %arg9: memref<6x1x18xf32, #tpu.memory_space<vmem>>, %arg10: memref<6x8x16xf32, #tpu.memory_space<vmem>>, %arg11: memref<6x8x1xf32, #tpu.memory_space<vmem>>, %arg12: memref<6x16x8xf32, #tpu.memory_space<vmem>>, %arg13: memref<6x16x1xf32, #tpu.memory_space<vmem>>, %arg14: memref<6x256xf32, #tpu.memory_space<vmem>>, %arg15: memref<1x16x256xf32, #tpu.memory_space<vmem>>, %arg16: memref<16x358xf32, #tpu.memory_space<vmem>>, %arg17: memref<144x256xf32, #tpu.memory_space<vmem>>) attributes {dimension_semantics = [#tpu.dimension_semantics<parallel>, #tpu.dimension_semantics<arbitrary>], iteration_bounds = array<i64: 2, 2>, scalar_prefetch = 0 : i64, scratch_operands = 2 : i64, tpu.core_type = #tpu.core_type<tc>, window_params = [{transform_indices = @transform_0, window_bounds = array<i64: 1, 16, 256>}, {pipeline_mode = #tpu.pipeline_mode<synchronous>, transform_indices = @transform_1, window_bounds = array<i64: 2, 24, 144>}, {pipeline_mode = #tpu.pipeline_mode<synchronous>, transform_indices = @transform_2, window_bounds = array<i64: 2, 24, 1>}, {pipeline_mode = #tpu.pipeline_mode<synchronous>, transform_indices = @transform_3, window_bounds = array<i64: 6, 16, 72>}, {pipeline_mode = #tpu.pipeline_mode<synchronous>, transform_indices = @transform_4, window_bounds = array<i64: 6, 16, 1>}, {pipeline_mode = #tpu.pipeline_mode<synchronous>, transform_indices = @transform_5, window_bounds = array<i64: 6, 16, 144>}, {pipeline_mode = #tpu.pipeline_mode<synchronous>, transform_indices = @transform_6, window_bounds = array<i64: 6, 16, 1>}, {pipeline_mode = #tpu.pipeline_mode<synchronous>, transform_indices = @transform_7, window_bounds = array<i64: 6, 1, 18>}, {pipeline_mode = #tpu.pipeline_mode<synchronous>, transform_indices = @transform_8, window_bounds = array<i64: 6, 8, 16>}, {pipeline_mode = #tpu.pipeline_mode<synchronous>, transform_indices = @transform_9, window_bounds = array<i64: 6, 8, 1>}, {pipeline_mode = #tpu.pipeline_mode<synchronous>, transform_indices = @transform_10, window_bounds = array<i64: 6, 16, 8>}, {pipeline_mode = #tpu.pipeline_mode<synchronous>, transform_indices = @transform_11, window_bounds = array<i64: 6, 16, 1>}, {pipeline_mode = #tpu.pipeline_mode<synchronous>, transform_indices = @transform_12, window_bounds = array<i64: 6, 256>}, {transform_indices = @transform_13, window_bounds = array<i64: 1, 16, 256>}]} {
    %c0_i32 = arith.constant 0 : i32
    %0 = arith.cmpi eq, %arg1, %c0_i32 : i32
    %1 = arith.extui %0 : i1 to i32
    %c0_i32_0 = arith.constant 0 : i32
    %2 = arith.cmpi ne, %1, %c0_i32_0 : i32
    scf.if %2 {
      %cst_516 = arith.constant 0.000000e+00 : f32
      %577 = vector.broadcast %cst_516 : f32 to vector<16x358xf32>
      %c0_517 = arith.constant 0 : index
      %c0_518 = arith.constant 0 : index
      %578 = vector.load %arg16[%c0_517, %c0_518] : memref<16x358xf32, #tpu.memory_space<vmem>>, vector<16x358xf32>
      tpu.vector_store %arg16[%c0_517, %c0_518], %577 {strides = array<i32>} : memref<16x358xf32, #tpu.memory_space<vmem>>, vector<16x358xf32>,
      %c0_519 = arith.constant 0 : index
      %c0_520 = arith.constant 0 : index
      %c0_521 = arith.constant 0 : index
      %579 = vector.load %arg2[%c0_519, %c0_520, %c0_521] : memref<1x16x256xf32, #tpu.memory_space<vmem>>, vector<1x16x256xf32>
      %c0_522 = arith.constant 0 : index
      %c0_523 = arith.constant 0 : index
      %c0_524 = arith.constant 0 : index
      %580 = vector.load %arg15[%c0_522, %c0_523, %c0_524] : memref<1x16x256xf32, #tpu.memory_space<vmem>>, vector<1x16x256xf32>
      tpu.vector_store %arg15[%c0_522, %c0_523, %c0_524], %579 {strides = array<i32>} : memref<1x16x256xf32, #tpu.memory_space<vmem>>, vector<1x16x256xf32>,
    } else {
    }
    %c0 = arith.constant 0 : index
    %c0_1 = arith.constant 0 : index
    %c0_2 = arith.constant 0 : index
    %3 = vector.load %arg15[%c0, %c0_1, %c0_2] : memref<1x16x256xf32, #tpu.memory_space<vmem>>, vector<1x16x256xf32>
    %4 = vector.shape_cast %3 : vector<1x16x256xf32> to vector<16x256xf32>
    %5 = arith.index_cast %arg1 : i32 to index
    %c0_3 = arith.constant 0 : index
    %c0_4 = arith.constant 0 : index
    %6 = vector.load %arg3[%5, %c0_3, %c0_4] : memref<2x24x144xf32, #tpu.memory_space<vmem>>, vector<1x24x144xf32>
    %7 = vector.shape_cast %6 : vector<1x24x144xf32> to vector<24x144xf32>
    %8 = arith.index_cast %arg1 : i32 to index
    %c0_5 = arith.constant 0 : index
    %c0_6 = arith.constant 0 : index
    %9 = vector.load %arg4[%8, %c0_5, %c0_6] : memref<2x24x1xf32, #tpu.memory_space<vmem>>, vector<1x24x1xf32>
    %10 = vector.shape_cast %9 : vector<1x24x1xf32> to vector<24x1xf32>
    %c0_7 = arith.constant 0 : index
    %c0_8 = arith.constant 0 : index
    %11 = vector.load %arg14[%c0_7, %c0_8] : memref<6x256xf32, #tpu.memory_space<vmem>>, vector<1x256xf32>
    %c1 = arith.constant 1 : index
    %c0_9 = arith.constant 0 : index
    %12 = vector.load %arg14[%c1, %c0_9] : memref<6x256xf32, #tpu.memory_space<vmem>>, vector<1x256xf32>
    %c0_10 = arith.constant 0 : index
    %c51 = arith.constant 51 : index
    %13 = vector.load %arg16[%c0_10, %c51] : memref<16x358xf32, #tpu.memory_space<vmem>>, vector<16x256xf32>
    tpu.vector_store %arg16[%c0_10, %c51], %4 {strides = array<i32>} : memref<16x358xf32, #tpu.memory_space<vmem>>, vector<16x256xf32>,
    %c0_11 = arith.constant 0 : index
    %c34 = arith.constant 34 : index
    %14 = vector.load %arg16[%c0_11, %c34] : memref<16x358xf32, #tpu.memory_space<vmem>>, vector<16x256xf32>
    %15 = vector.broadcast %11 : vector<1x256xf32> to vector<16x256xf32>
    %16 = arith.mulf %14, %15 : vector<16x256xf32>
    %c0_12 = arith.constant 0 : index
    %c0_13 = arith.constant 0 : index
    %17 = vector.load %arg17[%c0_12, %c0_13] : memref<144x256xf32, #tpu.memory_space<vmem>>, vector<16x256xf32>
    tpu.vector_store %arg17[%c0_12, %c0_13], %16 {strides = array<i32>} : memref<144x256xf32, #tpu.memory_space<vmem>>, vector<16x256xf32>,
    %c0_14 = arith.constant 0 : index
    %c35 = arith.constant 35 : index
    %18 = vector.load %arg16[%c0_14, %c35] : memref<16x358xf32, #tpu.memory_space<vmem>>, vector<16x256xf32>
    %c16 = arith.constant 16 : index
    %c0_15 = arith.constant 0 : index
    %19 = vector.load %arg17[%c16, %c0_15] : memref<144x256xf32, #tpu.memory_space<vmem>>, vector<16x256xf32>
    tpu.vector_store %arg17[%c16, %c0_15], %18 {strides = array<i32>} : memref<144x256xf32, #tpu.memory_space<vmem>>, vector<16x256xf32>,
    %c0_16 = arith.constant 0 : index
    %c36 = arith.constant 36 : index
    %20 = vector.load %arg16[%c0_16, %c36] : memref<16x358xf32, #tpu.memory_space<vmem>>, vector<16x256xf32>
    %21 = vector.broadcast %12 : vector<1x256xf32> to vector<16x256xf32>
    %22 = arith.mulf %20, %21 : vector<16x256xf32>
    %c32 = arith.constant 32 : index
    %c0_17 = arith.constant 0 : index
    %23 = vector.load %arg17[%c32, %c0_17] : memref<144x256xf32, #tpu.memory_space<vmem>>, vector<16x256xf32>
    tpu.vector_store %arg17[%c32, %c0_17], %22 {strides = array<i32>} : memref<144x256xf32, #tpu.memory_space<vmem>>, vector<16x256xf32>,
    %c0_18 = arith.constant 0 : index
    %c50 = arith.constant 50 : index
    %24 = vector.load %arg16[%c0_18, %c50] : memref<16x358xf32, #tpu.memory_space<vmem>>, vector<16x256xf32>
    %25 = vector.broadcast %11 : vector<1x256xf32> to vector<16x256xf32>
    %26 = arith.mulf %24, %25 : vector<16x256xf32>
    %c48 = arith.constant 48 : index
    %c0_19 = arith.constant 0 : index
    %27 = vector.load %arg17[%c48, %c0_19] : memref<144x256xf32, #tpu.memory_space<vmem>>, vector<16x256xf32>
    tpu.vector_store %arg17[%c48, %c0_19], %26 {strides = array<i32>} : memref<144x256xf32, #tpu.memory_space<vmem>>, vector<16x256xf32>,
    %c0_20 = arith.constant 0 : index
    %c51_21 = arith.constant 51 : index
    %28 = vector.load %arg16[%c0_20, %c51_21] : memref<16x358xf32, #tpu.memory_space<vmem>>, vector<16x256xf32>
    %c64 = arith.constant 64 : index
    %c0_22 = arith.constant 0 : index
    %29 = vector.load %arg17[%c64, %c0_22] : memref<144x256xf32, #tpu.memory_space<vmem>>, vector<16x256xf32>
    tpu.vector_store %arg17[%c64, %c0_22], %28 {strides = array<i32>} : memref<144x256xf32, #tpu.memory_space<vmem>>, vector<16x256xf32>,
    %c0_23 = arith.constant 0 : index
    %c52 = arith.constant 52 : index
    %30 = vector.load %arg16[%c0_23, %c52] : memref<16x358xf32, #tpu.memory_space<vmem>>, vector<16x256xf32>
    %31 = vector.broadcast %12 : vector<1x256xf32> to vector<16x256xf32>
    %32 = arith.mulf %30, %31 : vector<16x256xf32>
    %c80 = arith.constant 80 : index
    %c0_24 = arith.constant 0 : index
    %33 = vector.load %arg17[%c80, %c0_24] : memref<144x256xf32, #tpu.memory_space<vmem>>, vector<16x256xf32>
    tpu.vector_store %arg17[%c80, %c0_24], %32 {strides = array<i32>} : memref<144x256xf32, #tpu.memory_space<vmem>>, vector<16x256xf32>,
    %c0_25 = arith.constant 0 : index
    %c66 = arith.constant 66 : index
    %34 = vector.load %arg16[%c0_25, %c66] : memref<16x358xf32, #tpu.memory_space<vmem>>, vector<16x256xf32>
    %35 = vector.broadcast %11 : vector<1x256xf32> to vector<16x256xf32>
    %36 = arith.mulf %34, %35 : vector<16x256xf32>
    %c96 = arith.constant 96 : index
    %c0_26 = arith.constant 0 : index
    %37 = vector.load %arg17[%c96, %c0_26] : memref<144x256xf32, #tpu.memory_space<vmem>>, vector<16x256xf32>
    tpu.vector_store %arg17[%c96, %c0_26], %36 {strides = array<i32>} : memref<144x256xf32, #tpu.memory_space<vmem>>, vector<16x256xf32>,
    %c0_27 = arith.constant 0 : index
    %c67 = arith.constant 67 : index
    %38 = vector.load %arg16[%c0_27, %c67] : memref<16x358xf32, #tpu.memory_space<vmem>>, vector<16x256xf32>
    %c112 = arith.constant 112 : index
    %c0_28 = arith.constant 0 : index
    %39 = vector.load %arg17[%c112, %c0_28] : memref<144x256xf32, #tpu.memory_space<vmem>>, vector<16x256xf32>
    tpu.vector_store %arg17[%c112, %c0_28], %38 {strides = array<i32>} : memref<144x256xf32, #tpu.memory_space<vmem>>, vector<16x256xf32>,
    %c0_29 = arith.constant 0 : index
    %c68 = arith.constant 68 : index
    %40 = vector.load %arg16[%c0_29, %c68] : memref<16x358xf32, #tpu.memory_space<vmem>>, vector<16x256xf32>
    %41 = vector.broadcast %12 : vector<1x256xf32> to vector<16x256xf32>
    %42 = arith.mulf %40, %41 : vector<16x256xf32>
    %c128 = arith.constant 128 : index
    %c0_30 = arith.constant 0 : index
    %43 = vector.load %arg17[%c128, %c0_30] : memref<144x256xf32, #tpu.memory_space<vmem>>, vector<16x256xf32>
    tpu.vector_store %arg17[%c128, %c0_30], %42 {strides = array<i32>} : memref<144x256xf32, #tpu.memory_space<vmem>>, vector<16x256xf32>,
    %c0_31 = arith.constant 0 : index
    %c0_32 = arith.constant 0 : index
    %44 = vector.load %arg17[%c0_31, %c0_32] : memref<144x256xf32, #tpu.memory_space<vmem>>, vector<144x256xf32>
    %cst = arith.constant dense<0.000000e+00> : vector<24x256xf32>
    %45 = tpu.matmul %7, %44, %cst {dimension_numbers = #tpu.dot_dimension_numbers<[1], [0], [0], [1], [0, 0, 1, 1], [], []>} : vector<24x144xf32>, vector<144x256xf32>, vector<24x256xf32> -> vector<24x256xf32>
    %46 = vector.broadcast %10 : vector<24x1xf32> to vector<24x256xf32>
    %47 = arith.addf %45, %46 : vector<24x256xf32>
    %cst_33 = arith.constant 0.000000e+00 : f32
    %48 = vector.broadcast %cst_33 : f32 to vector<24x256xf32>
    %49 = arith.maximumf %47, %48 : vector<24x256xf32>
    %cst_34 = arith.constant 0.000000e+00 : f32
    %50 = vector.broadcast %cst_34 : f32 to vector<16x256xf32>
    %c3_i32 = arith.constant 3 : i32
    %51 = arith.muli %arg1, %c3_i32 : i32
    %c0_i32_35 = arith.constant 0 : i32
    %52 = arith.addi %51, %c0_i32_35 : i32
    %53 = vector.extract_strided_slice %49 {offsets = [0, 0], sizes = [8, 256], strides = [1, 1]} : vector<24x256xf32> to vector<8x256xf32>
    %54 = arith.index_cast %52 : i32 to index
    %c0_36 = arith.constant 0 : index
    %c0_37 = arith.constant 0 : index
    %55 = vector.load %arg5[%54, %c0_36, %c0_37] : memref<6x16x72xf32, #tpu.memory_space<vmem>>, vector<1x16x72xf32>
    %56 = vector.shape_cast %55 : vector<1x16x72xf32> to vector<16x72xf32>
    %57 = arith.index_cast %52 : i32 to index
    %c0_38 = arith.constant 0 : index
    %c0_39 = arith.constant 0 : index
    %58 = vector.load %arg6[%57, %c0_38, %c0_39] : memref<6x16x1xf32, #tpu.memory_space<vmem>>, vector<1x16x1xf32>
    %59 = vector.shape_cast %58 : vector<1x16x1xf32> to vector<16x1xf32>
    %c0_40 = arith.constant 0 : index
    %c0_41 = arith.constant 0 : index
    %60 = vector.load %arg14[%c0_40, %c0_41] : memref<6x256xf32, #tpu.memory_space<vmem>>, vector<1x256xf32>
    %c1_42 = arith.constant 1 : index
    %c0_43 = arith.constant 0 : index
    %61 = vector.load %arg14[%c1_42, %c0_43] : memref<6x256xf32, #tpu.memory_space<vmem>>, vector<1x256xf32>
    %c0_44 = arith.constant 0 : index
    %c51_45 = arith.constant 51 : index
    %62 = vector.load %arg16[%c0_44, %c51_45] : memref<16x358xf32, #tpu.memory_space<vmem>>, vector<8x256xf32>
    tpu.vector_store %arg16[%c0_44, %c51_45], %53 {strides = array<i32>} : memref<16x358xf32, #tpu.memory_space<vmem>>, vector<8x256xf32>,
    %c0_46 = arith.constant 0 : index
    %c34_47 = arith.constant 34 : index
    %63 = vector.load %arg16[%c0_46, %c34_47] : memref<16x358xf32, #tpu.memory_space<vmem>>, vector<8x256xf32>
    %64 = vector.broadcast %60 : vector<1x256xf32> to vector<8x256xf32>
    %65 = arith.mulf %63, %64 : vector<8x256xf32>
    %c0_48 = arith.constant 0 : index
    %c0_49 = arith.constant 0 : index
    %66 = vector.load %arg17[%c0_48, %c0_49] : memref<144x256xf32, #tpu.memory_space<vmem>>, vector<8x256xf32>
    tpu.vector_store %arg17[%c0_48, %c0_49], %65 {strides = array<i32>} : memref<144x256xf32, #tpu.memory_space<vmem>>, vector<8x256xf32>,
    %c0_50 = arith.constant 0 : index
    %c35_51 = arith.constant 35 : index
    %67 = vector.load %arg16[%c0_50, %c35_51] : memref<16x358xf32, #tpu.memory_space<vmem>>, vector<8x256xf32>
    %c8 = arith.constant 8 : index
    %c0_52 = arith.constant 0 : index
    %68 = vector.load %arg17[%c8, %c0_52] : memref<144x256xf32, #tpu.memory_space<vmem>>, vector<8x256xf32>
    tpu.vector_store %arg17[%c8, %c0_52], %67 {strides = array<i32>} : memref<144x256xf32, #tpu.memory_space<vmem>>, vector<8x256xf32>,
    %c0_53 = arith.constant 0 : index
    %c36_54 = arith.constant 36 : index
    %69 = vector.load %arg16[%c0_53, %c36_54] : memref<16x358xf32, #tpu.memory_space<vmem>>, vector<8x256xf32>
    %70 = vector.broadcast %61 : vector<1x256xf32> to vector<8x256xf32>
    %71 = arith.mulf %69, %70 : vector<8x256xf32>
    %c16_55 = arith.constant 16 : index
    %c0_56 = arith.constant 0 : index
    %72 = vector.load %arg17[%c16_55, %c0_56] : memref<144x256xf32, #tpu.memory_space<vmem>>, vector<8x256xf32>
    tpu.vector_store %arg17[%c16_55, %c0_56], %71 {strides = array<i32>} : memref<144x256xf32, #tpu.memory_space<vmem>>, vector<8x256xf32>,
    %c0_57 = arith.constant 0 : index
    %c50_58 = arith.constant 50 : index
    %73 = vector.load %arg16[%c0_57, %c50_58] : memref<16x358xf32, #tpu.memory_space<vmem>>, vector<8x256xf32>
    %74 = vector.broadcast %60 : vector<1x256xf32> to vector<8x256xf32>
    %75 = arith.mulf %73, %74 : vector<8x256xf32>
    %c24 = arith.constant 24 : index
    %c0_59 = arith.constant 0 : index
    %76 = vector.load %arg17[%c24, %c0_59] : memref<144x256xf32, #tpu.memory_space<vmem>>, vector<8x256xf32>
    tpu.vector_store %arg17[%c24, %c0_59], %75 {strides = array<i32>} : memref<144x256xf32, #tpu.memory_space<vmem>>, vector<8x256xf32>,
    %c0_60 = arith.constant 0 : index
    %c51_61 = arith.constant 51 : index
    %77 = vector.load %arg16[%c0_60, %c51_61] : memref<16x358xf32, #tpu.memory_space<vmem>>, vector<8x256xf32>
    %c32_62 = arith.constant 32 : index
    %c0_63 = arith.constant 0 : index
    %78 = vector.load %arg17[%c32_62, %c0_63] : memref<144x256xf32, #tpu.memory_space<vmem>>, vector<8x256xf32>
    tpu.vector_store %arg17[%c32_62, %c0_63], %77 {strides = array<i32>} : memref<144x256xf32, #tpu.memory_space<vmem>>, vector<8x256xf32>,
    %c0_64 = arith.constant 0 : index
    %c52_65 = arith.constant 52 : index
    %79 = vector.load %arg16[%c0_64, %c52_65] : memref<16x358xf32, #tpu.memory_space<vmem>>, vector<8x256xf32>
    %80 = vector.broadcast %61 : vector<1x256xf32> to vector<8x256xf32>
    %81 = arith.mulf %79, %80 : vector<8x256xf32>
    %c40 = arith.constant 40 : index
    %c0_66 = arith.constant 0 : index
    %82 = vector.load %arg17[%c40, %c0_66] : memref<144x256xf32, #tpu.memory_space<vmem>>, vector<8x256xf32>
    tpu.vector_store %arg17[%c40, %c0_66], %81 {strides = array<i32>} : memref<144x256xf32, #tpu.memory_space<vmem>>, vector<8x256xf32>,
    %c0_67 = arith.constant 0 : index
    %c66_68 = arith.constant 66 : index
    %83 = vector.load %arg16[%c0_67, %c66_68] : memref<16x358xf32, #tpu.memory_space<vmem>>, vector<8x256xf32>
    %84 = vector.broadcast %60 : vector<1x256xf32> to vector<8x256xf32>
    %85 = arith.mulf %83, %84 : vector<8x256xf32>
    %c48_69 = arith.constant 48 : index
    %c0_70 = arith.constant 0 : index
    %86 = vector.load %arg17[%c48_69, %c0_70] : memref<144x256xf32, #tpu.memory_space<vmem>>, vector<8x256xf32>
    tpu.vector_store %arg17[%c48_69, %c0_70], %85 {strides = array<i32>} : memref<144x256xf32, #tpu.memory_space<vmem>>, vector<8x256xf32>,
    %c0_71 = arith.constant 0 : index
    %c67_72 = arith.constant 67 : index
    %87 = vector.load %arg16[%c0_71, %c67_72] : memref<16x358xf32, #tpu.memory_space<vmem>>, vector<8x256xf32>
    %c56 = arith.constant 56 : index
    %c0_73 = arith.constant 0 : index
    %88 = vector.load %arg17[%c56, %c0_73] : memref<144x256xf32, #tpu.memory_space<vmem>>, vector<8x256xf32>
    tpu.vector_store %arg17[%c56, %c0_73], %87 {strides = array<i32>} : memref<144x256xf32, #tpu.memory_space<vmem>>, vector<8x256xf32>,
    %c0_74 = arith.constant 0 : index
    %c68_75 = arith.constant 68 : index
    %89 = vector.load %arg16[%c0_74, %c68_75] : memref<16x358xf32, #tpu.memory_space<vmem>>, vector<8x256xf32>
    %90 = vector.broadcast %61 : vector<1x256xf32> to vector<8x256xf32>
    %91 = arith.mulf %89, %90 : vector<8x256xf32>
    %c64_76 = arith.constant 64 : index
    %c0_77 = arith.constant 0 : index
    %92 = vector.load %arg17[%c64_76, %c0_77] : memref<144x256xf32, #tpu.memory_space<vmem>>, vector<8x256xf32>
    tpu.vector_store %arg17[%c64_76, %c0_77], %91 {strides = array<i32>} : memref<144x256xf32, #tpu.memory_space<vmem>>, vector<8x256xf32>,
    %c0_78 = arith.constant 0 : index
    %c0_79 = arith.constant 0 : index
    %93 = vector.load %arg17[%c0_78, %c0_79] : memref<144x256xf32, #tpu.memory_space<vmem>>, vector<72x256xf32>
    %cst_80 = arith.constant dense<0.000000e+00> : vector<16x256xf32>
    %94 = tpu.matmul %56, %93, %cst_80 {dimension_numbers = #tpu.dot_dimension_numbers<[1], [0], [0], [1], [0, 0, 1, 1], [], []>} : vector<16x72xf32>, vector<72x256xf32>, vector<16x256xf32> -> vector<16x256xf32>
    %95 = vector.broadcast %59 : vector<16x1xf32> to vector<16x256xf32>
    %96 = arith.addf %94, %95 : vector<16x256xf32>
    %97 = arith.addf %96, %4 : vector<16x256xf32>
    %cst_81 = arith.constant 0.000000e+00 : f32
    %98 = vector.broadcast %cst_81 : f32 to vector<16x256xf32>
    %99 = arith.maximumf %97, %98 : vector<16x256xf32>
    %100 = arith.index_cast %52 : i32 to index
    %c0_82 = arith.constant 0 : index
    %c0_83 = arith.constant 0 : index
    %101 = vector.load %arg7[%100, %c0_82, %c0_83] : memref<6x16x144xf32, #tpu.memory_space<vmem>>, vector<1x16x144xf32>
    %102 = vector.shape_cast %101 : vector<1x16x144xf32> to vector<16x144xf32>
    %103 = arith.index_cast %52 : i32 to index
    %c0_84 = arith.constant 0 : index
    %c0_85 = arith.constant 0 : index
    %104 = vector.load %arg8[%103, %c0_84, %c0_85] : memref<6x16x1xf32, #tpu.memory_space<vmem>>, vector<1x16x1xf32>
    %105 = vector.shape_cast %104 : vector<1x16x1xf32> to vector<16x1xf32>
    %c0_86 = arith.constant 0 : index
    %c0_87 = arith.constant 0 : index
    %106 = vector.load %arg14[%c0_86, %c0_87] : memref<6x256xf32, #tpu.memory_space<vmem>>, vector<1x256xf32>
    %c1_88 = arith.constant 1 : index
    %c0_89 = arith.constant 0 : index
    %107 = vector.load %arg14[%c1_88, %c0_89] : memref<6x256xf32, #tpu.memory_space<vmem>>, vector<1x256xf32>
    %c0_90 = arith.constant 0 : index
    %c51_91 = arith.constant 51 : index
    %108 = vector.load %arg16[%c0_90, %c51_91] : memref<16x358xf32, #tpu.memory_space<vmem>>, vector<16x256xf32>
    tpu.vector_store %arg16[%c0_90, %c51_91], %99 {strides = array<i32>} : memref<16x358xf32, #tpu.memory_space<vmem>>, vector<16x256xf32>,
    %c0_92 = arith.constant 0 : index
    %c34_93 = arith.constant 34 : index
    %109 = vector.load %arg16[%c0_92, %c34_93] : memref<16x358xf32, #tpu.memory_space<vmem>>, vector<16x256xf32>
    %110 = vector.broadcast %106 : vector<1x256xf32> to vector<16x256xf32>
    %111 = arith.mulf %109, %110 : vector<16x256xf32>
    %c0_94 = arith.constant 0 : index
    %c0_95 = arith.constant 0 : index
    %112 = vector.load %arg17[%c0_94, %c0_95] : memref<144x256xf32, #tpu.memory_space<vmem>>, vector<16x256xf32>
    tpu.vector_store %arg17[%c0_94, %c0_95], %111 {strides = array<i32>} : memref<144x256xf32, #tpu.memory_space<vmem>>, vector<16x256xf32>,
    %c0_96 = arith.constant 0 : index
    %c35_97 = arith.constant 35 : index
    %113 = vector.load %arg16[%c0_96, %c35_97] : memref<16x358xf32, #tpu.memory_space<vmem>>, vector<16x256xf32>
    %c16_98 = arith.constant 16 : index
    %c0_99 = arith.constant 0 : index
    %114 = vector.load %arg17[%c16_98, %c0_99] : memref<144x256xf32, #tpu.memory_space<vmem>>, vector<16x256xf32>
    tpu.vector_store %arg17[%c16_98, %c0_99], %113 {strides = array<i32>} : memref<144x256xf32, #tpu.memory_space<vmem>>, vector<16x256xf32>,
    %c0_100 = arith.constant 0 : index
    %c36_101 = arith.constant 36 : index
    %115 = vector.load %arg16[%c0_100, %c36_101] : memref<16x358xf32, #tpu.memory_space<vmem>>, vector<16x256xf32>
    %116 = vector.broadcast %107 : vector<1x256xf32> to vector<16x256xf32>
    %117 = arith.mulf %115, %116 : vector<16x256xf32>
    %c32_102 = arith.constant 32 : index
    %c0_103 = arith.constant 0 : index
    %118 = vector.load %arg17[%c32_102, %c0_103] : memref<144x256xf32, #tpu.memory_space<vmem>>, vector<16x256xf32>
    tpu.vector_store %arg17[%c32_102, %c0_103], %117 {strides = array<i32>} : memref<144x256xf32, #tpu.memory_space<vmem>>, vector<16x256xf32>,
    %c0_104 = arith.constant 0 : index
    %c50_105 = arith.constant 50 : index
    %119 = vector.load %arg16[%c0_104, %c50_105] : memref<16x358xf32, #tpu.memory_space<vmem>>, vector<16x256xf32>
    %120 = vector.broadcast %106 : vector<1x256xf32> to vector<16x256xf32>
    %121 = arith.mulf %119, %120 : vector<16x256xf32>
    %c48_106 = arith.constant 48 : index
    %c0_107 = arith.constant 0 : index
    %122 = vector.load %arg17[%c48_106, %c0_107] : memref<144x256xf32, #tpu.memory_space<vmem>>, vector<16x256xf32>
    tpu.vector_store %arg17[%c48_106, %c0_107], %121 {strides = array<i32>} : memref<144x256xf32, #tpu.memory_space<vmem>>, vector<16x256xf32>,
    %c0_108 = arith.constant 0 : index
    %c51_109 = arith.constant 51 : index
    %123 = vector.load %arg16[%c0_108, %c51_109] : memref<16x358xf32, #tpu.memory_space<vmem>>, vector<16x256xf32>
    %c64_110 = arith.constant 64 : index
    %c0_111 = arith.constant 0 : index
    %124 = vector.load %arg17[%c64_110, %c0_111] : memref<144x256xf32, #tpu.memory_space<vmem>>, vector<16x256xf32>
    tpu.vector_store %arg17[%c64_110, %c0_111], %123 {strides = array<i32>} : memref<144x256xf32, #tpu.memory_space<vmem>>, vector<16x256xf32>,
    %c0_112 = arith.constant 0 : index
    %c52_113 = arith.constant 52 : index
    %125 = vector.load %arg16[%c0_112, %c52_113] : memref<16x358xf32, #tpu.memory_space<vmem>>, vector<16x256xf32>
    %126 = vector.broadcast %107 : vector<1x256xf32> to vector<16x256xf32>
    %127 = arith.mulf %125, %126 : vector<16x256xf32>
    %c80_114 = arith.constant 80 : index
    %c0_115 = arith.constant 0 : index
    %128 = vector.load %arg17[%c80_114, %c0_115] : memref<144x256xf32, #tpu.memory_space<vmem>>, vector<16x256xf32>
    tpu.vector_store %arg17[%c80_114, %c0_115], %127 {strides = array<i32>} : memref<144x256xf32, #tpu.memory_space<vmem>>, vector<16x256xf32>,
    %c0_116 = arith.constant 0 : index
    %c66_117 = arith.constant 66 : index
    %129 = vector.load %arg16[%c0_116, %c66_117] : memref<16x358xf32, #tpu.memory_space<vmem>>, vector<16x256xf32>
    %130 = vector.broadcast %106 : vector<1x256xf32> to vector<16x256xf32>
    %131 = arith.mulf %129, %130 : vector<16x256xf32>
    %c96_118 = arith.constant 96 : index
    %c0_119 = arith.constant 0 : index
    %132 = vector.load %arg17[%c96_118, %c0_119] : memref<144x256xf32, #tpu.memory_space<vmem>>, vector<16x256xf32>
    tpu.vector_store %arg17[%c96_118, %c0_119], %131 {strides = array<i32>} : memref<144x256xf32, #tpu.memory_space<vmem>>, vector<16x256xf32>,
    %c0_120 = arith.constant 0 : index
    %c67_121 = arith.constant 67 : index
    %133 = vector.load %arg16[%c0_120, %c67_121] : memref<16x358xf32, #tpu.memory_space<vmem>>, vector<16x256xf32>
    %c112_122 = arith.constant 112 : index
    %c0_123 = arith.constant 0 : index
    %134 = vector.load %arg17[%c112_122, %c0_123] : memref<144x256xf32, #tpu.memory_space<vmem>>, vector<16x256xf32>
    tpu.vector_store %arg17[%c112_122, %c0_123], %133 {strides = array<i32>} : memref<144x256xf32, #tpu.memory_space<vmem>>, vector<16x256xf32>,
    %c0_124 = arith.constant 0 : index
    %c68_125 = arith.constant 68 : index
    %135 = vector.load %arg16[%c0_124, %c68_125] : memref<16x358xf32, #tpu.memory_space<vmem>>, vector<16x256xf32>
    %136 = vector.broadcast %107 : vector<1x256xf32> to vector<16x256xf32>
    %137 = arith.mulf %135, %136 : vector<16x256xf32>
    %c128_126 = arith.constant 128 : index
    %c0_127 = arith.constant 0 : index
    %138 = vector.load %arg17[%c128_126, %c0_127] : memref<144x256xf32, #tpu.memory_space<vmem>>, vector<16x256xf32>
    tpu.vector_store %arg17[%c128_126, %c0_127], %137 {strides = array<i32>} : memref<144x256xf32, #tpu.memory_space<vmem>>, vector<16x256xf32>,
    %c0_128 = arith.constant 0 : index
    %c0_129 = arith.constant 0 : index
    %139 = vector.load %arg17[%c0_128, %c0_129] : memref<144x256xf32, #tpu.memory_space<vmem>>, vector<144x256xf32>
    %cst_130 = arith.constant dense<0.000000e+00> : vector<16x256xf32>
    %140 = tpu.matmul %102, %139, %cst_130 {dimension_numbers = #tpu.dot_dimension_numbers<[1], [0], [0], [1], [0, 0, 1, 1], [], []>} : vector<16x144xf32>, vector<144x256xf32>, vector<16x256xf32> -> vector<16x256xf32>
    %141 = vector.broadcast %105 : vector<16x1xf32> to vector<16x256xf32>
    %142 = arith.addf %140, %141 : vector<16x256xf32>
    %cst_131 = arith.constant dense<0.000000e+00> : vector<256xf32>
    %143 = vector.multi_reduction <add>, %142, %cst_131 [0] : vector<16x256xf32> to vector<256xf32>
    %144 = vector.shape_cast %143 : vector<256xf32> to vector<1x256xf32>
    %cst_132 = arith.constant 1.600000e+01 : f32
    %145 = vector.broadcast %cst_132 : f32 to vector<1x256xf32>
    %146 = arith.divf %144, %145 : vector<1x256xf32>
    %c0_133 = arith.constant 0 : index
    %c51_134 = arith.constant 51 : index
    %147 = vector.load %arg16[%c0_133, %c51_134] : memref<16x358xf32, #tpu.memory_space<vmem>>, vector<1x256xf32>
    tpu.vector_store %arg16[%c0_133, %c51_134], %146 {strides = array<i32>} : memref<16x358xf32, #tpu.memory_space<vmem>>, vector<1x256xf32>,
    %cst_135 = arith.constant dense<0xFF800000> : vector<256xf32>
    %148 = vector.multi_reduction <maximumf>, %142, %cst_135 [0] : vector<16x256xf32> to vector<256xf32>
    %149 = vector.shape_cast %148 : vector<256xf32> to vector<1x256xf32>
    %c1_136 = arith.constant 1 : index
    %c51_137 = arith.constant 51 : index
    %150 = vector.load %arg16[%c1_136, %c51_137] : memref<16x358xf32, #tpu.memory_space<vmem>>, vector<1x256xf32>
    tpu.vector_store %arg16[%c1_136, %c51_137], %149 {strides = array<i32>} : memref<16x358xf32, #tpu.memory_space<vmem>>, vector<1x256xf32>,
    %151 = arith.index_cast %52 : i32 to index
    %c0_138 = arith.constant 0 : index
    %c0_139 = arith.constant 0 : index
    %152 = vector.load %arg9[%151, %c0_138, %c0_139] : memref<6x1x18xf32, #tpu.memory_space<vmem>>, vector<1x1x18xf32>
    %153 = vector.shape_cast %152 : vector<1x1x18xf32> to vector<1x18xf32>
    %c0_140 = arith.constant 0 : index
    %c0_141 = arith.constant 0 : index
    %154 = vector.load %arg14[%c0_140, %c0_141] : memref<6x256xf32, #tpu.memory_space<vmem>>, vector<1x256xf32>
    %c1_142 = arith.constant 1 : index
    %c0_143 = arith.constant 0 : index
    %155 = vector.load %arg14[%c1_142, %c0_143] : memref<6x256xf32, #tpu.memory_space<vmem>>, vector<1x256xf32>
    %c0_144 = arith.constant 0 : index
    %c34_145 = arith.constant 34 : index
    %156 = vector.load %arg16[%c0_144, %c34_145] : memref<16x358xf32, #tpu.memory_space<vmem>>, vector<2x256xf32>
    %157 = vector.broadcast %154 : vector<1x256xf32> to vector<2x256xf32>
    %158 = arith.mulf %156, %157 : vector<2x256xf32>
    %c0_146 = arith.constant 0 : index
    %c0_147 = arith.constant 0 : index
    %159 = vector.load %arg17[%c0_146, %c0_147] : memref<144x256xf32, #tpu.memory_space<vmem>>, vector<2x256xf32>
    tpu.vector_store %arg17[%c0_146, %c0_147], %158 {strides = array<i32>} : memref<144x256xf32, #tpu.memory_space<vmem>>, vector<2x256xf32>,
    %c0_148 = arith.constant 0 : index
    %c35_149 = arith.constant 35 : index
    %160 = vector.load %arg16[%c0_148, %c35_149] : memref<16x358xf32, #tpu.memory_space<vmem>>, vector<2x256xf32>
    %c2 = arith.constant 2 : index
    %c0_150 = arith.constant 0 : index
    %161 = vector.load %arg17[%c2, %c0_150] : memref<144x256xf32, #tpu.memory_space<vmem>>, vector<2x256xf32>
    tpu.vector_store %arg17[%c2, %c0_150], %160 {strides = array<i32>} : memref<144x256xf32, #tpu.memory_space<vmem>>, vector<2x256xf32>,
    %c0_151 = arith.constant 0 : index
    %c36_152 = arith.constant 36 : index
    %162 = vector.load %arg16[%c0_151, %c36_152] : memref<16x358xf32, #tpu.memory_space<vmem>>, vector<2x256xf32>
    %163 = vector.broadcast %155 : vector<1x256xf32> to vector<2x256xf32>
    %164 = arith.mulf %162, %163 : vector<2x256xf32>
    %c4 = arith.constant 4 : index
    %c0_153 = arith.constant 0 : index
    %165 = vector.load %arg17[%c4, %c0_153] : memref<144x256xf32, #tpu.memory_space<vmem>>, vector<2x256xf32>
    tpu.vector_store %arg17[%c4, %c0_153], %164 {strides = array<i32>} : memref<144x256xf32, #tpu.memory_space<vmem>>, vector<2x256xf32>,
    %c0_154 = arith.constant 0 : index
    %c50_155 = arith.constant 50 : index
    %166 = vector.load %arg16[%c0_154, %c50_155] : memref<16x358xf32, #tpu.memory_space<vmem>>, vector<2x256xf32>
    %167 = vector.broadcast %154 : vector<1x256xf32> to vector<2x256xf32>
    %168 = arith.mulf %166, %167 : vector<2x256xf32>
    %c6 = arith.constant 6 : index
    %c0_156 = arith.constant 0 : index
    %169 = vector.load %arg17[%c6, %c0_156] : memref<144x256xf32, #tpu.memory_space<vmem>>, vector<2x256xf32>
    tpu.vector_store %arg17[%c6, %c0_156], %168 {strides = array<i32>} : memref<144x256xf32, #tpu.memory_space<vmem>>, vector<2x256xf32>,
    %c0_157 = arith.constant 0 : index
    %c51_158 = arith.constant 51 : index
    %170 = vector.load %arg16[%c0_157, %c51_158] : memref<16x358xf32, #tpu.memory_space<vmem>>, vector<2x256xf32>
    %c8_159 = arith.constant 8 : index
    %c0_160 = arith.constant 0 : index
    %171 = vector.load %arg17[%c8_159, %c0_160] : memref<144x256xf32, #tpu.memory_space<vmem>>, vector<2x256xf32>
    tpu.vector_store %arg17[%c8_159, %c0_160], %170 {strides = array<i32>} : memref<144x256xf32, #tpu.memory_space<vmem>>, vector<2x256xf32>,
    %c0_161 = arith.constant 0 : index
    %c52_162 = arith.constant 52 : index
    %172 = vector.load %arg16[%c0_161, %c52_162] : memref<16x358xf32, #tpu.memory_space<vmem>>, vector<2x256xf32>
    %173 = vector.broadcast %155 : vector<1x256xf32> to vector<2x256xf32>
    %174 = arith.mulf %172, %173 : vector<2x256xf32>
    %c10 = arith.constant 10 : index
    %c0_163 = arith.constant 0 : index
    %175 = vector.load %arg17[%c10, %c0_163] : memref<144x256xf32, #tpu.memory_space<vmem>>, vector<2x256xf32>
    tpu.vector_store %arg17[%c10, %c0_163], %174 {strides = array<i32>} : memref<144x256xf32, #tpu.memory_space<vmem>>, vector<2x256xf32>,
    %c0_164 = arith.constant 0 : index
    %c66_165 = arith.constant 66 : index
    %176 = vector.load %arg16[%c0_164, %c66_165] : memref<16x358xf32, #tpu.memory_space<vmem>>, vector<2x256xf32>
    %177 = vector.broadcast %154 : vector<1x256xf32> to vector<2x256xf32>
    %178 = arith.mulf %176, %177 : vector<2x256xf32>
    %c12 = arith.constant 12 : index
    %c0_166 = arith.constant 0 : index
    %179 = vector.load %arg17[%c12, %c0_166] : memref<144x256xf32, #tpu.memory_space<vmem>>, vector<2x256xf32>
    tpu.vector_store %arg17[%c12, %c0_166], %178 {strides = array<i32>} : memref<144x256xf32, #tpu.memory_space<vmem>>, vector<2x256xf32>,
    %c0_167 = arith.constant 0 : index
    %c67_168 = arith.constant 67 : index
    %180 = vector.load %arg16[%c0_167, %c67_168] : memref<16x358xf32, #tpu.memory_space<vmem>>, vector<2x256xf32>
    %c14 = arith.constant 14 : index
    %c0_169 = arith.constant 0 : index
    %181 = vector.load %arg17[%c14, %c0_169] : memref<144x256xf32, #tpu.memory_space<vmem>>, vector<2x256xf32>
    tpu.vector_store %arg17[%c14, %c0_169], %180 {strides = array<i32>} : memref<144x256xf32, #tpu.memory_space<vmem>>, vector<2x256xf32>,
    %c0_170 = arith.constant 0 : index
    %c68_171 = arith.constant 68 : index
    %182 = vector.load %arg16[%c0_170, %c68_171] : memref<16x358xf32, #tpu.memory_space<vmem>>, vector<2x256xf32>
    %183 = vector.broadcast %155 : vector<1x256xf32> to vector<2x256xf32>
    %184 = arith.mulf %182, %183 : vector<2x256xf32>
    %c16_172 = arith.constant 16 : index
    %c0_173 = arith.constant 0 : index
    %185 = vector.load %arg17[%c16_172, %c0_173] : memref<144x256xf32, #tpu.memory_space<vmem>>, vector<2x256xf32>
    tpu.vector_store %arg17[%c16_172, %c0_173], %184 {strides = array<i32>} : memref<144x256xf32, #tpu.memory_space<vmem>>, vector<2x256xf32>,
    %c0_174 = arith.constant 0 : index
    %c0_175 = arith.constant 0 : index
    %186 = vector.load %arg17[%c0_174, %c0_175] : memref<144x256xf32, #tpu.memory_space<vmem>>, vector<18x256xf32>
    %cst_176 = arith.constant dense<0.000000e+00> : vector<1x256xf32>
    %187 = tpu.matmul %153, %186, %cst_176 {dimension_numbers = #tpu.dot_dimension_numbers<[1], [0], [0], [1], [0, 0, 1, 1], [], []>} : vector<1x18xf32>, vector<18x256xf32>, vector<1x256xf32> -> vector<1x256xf32>
    %188 = arith.negf %187 : vector<1x256xf32>
    %189 = math.exp %188 : vector<1x256xf32>
    %cst_177 = arith.constant 1.000000e+00 : f32
    %190 = vector.broadcast %cst_177 : f32 to vector<1x256xf32>
    %191 = arith.addf %190, %189 : vector<1x256xf32>
    %192 = arith.divf %190, %191 : vector<1x256xf32>
    %193 = vector.broadcast %192 : vector<1x256xf32> to vector<16x256xf32>
    %194 = arith.mulf %142, %193 : vector<16x256xf32>
    %cst_178 = arith.constant dense<0.000000e+00> : vector<16xf32>
    %195 = vector.multi_reduction <add>, %194, %cst_178 [1] : vector<16x256xf32> to vector<16xf32>
    %196 = vector.shape_cast %195 : vector<16xf32> to vector<16x1xf32>
    %cst_179 = arith.constant 2.560000e+02 : f32
    %197 = vector.broadcast %cst_179 : f32 to vector<16x1xf32>
    %198 = arith.divf %196, %197 : vector<16x1xf32>
    %199 = arith.index_cast %52 : i32 to index
    %c0_180 = arith.constant 0 : index
    %c0_181 = arith.constant 0 : index
    %200 = vector.load %arg10[%199, %c0_180, %c0_181] : memref<6x8x16xf32, #tpu.memory_space<vmem>>, vector<1x8x16xf32>
    %201 = vector.shape_cast %200 : vector<1x8x16xf32> to vector<8x16xf32>
    %cst_182 = arith.constant dense<0.000000e+00> : vector<8x1xf32>
    %202 = tpu.matmul %201, %198, %cst_182 {dimension_numbers = #tpu.dot_dimension_numbers<[1], [0], [0], [1], [0, 0, 1, 1], [], []>} : vector<8x16xf32>, vector<16x1xf32>, vector<8x1xf32> -> vector<8x1xf32>
    %203 = arith.index_cast %52 : i32 to index
    %c0_183 = arith.constant 0 : index
    %c0_184 = arith.constant 0 : index
    %204 = vector.load %arg11[%203, %c0_183, %c0_184] : memref<6x8x1xf32, #tpu.memory_space<vmem>>, vector<1x8x1xf32>
    %205 = vector.shape_cast %204 : vector<1x8x1xf32> to vector<8x1xf32>
    %206 = arith.addf %202, %205 : vector<8x1xf32>
    %cst_185 = arith.constant 0.000000e+00 : f32
    %207 = vector.broadcast %cst_185 : f32 to vector<8x1xf32>
    %208 = arith.maximumf %206, %207 : vector<8x1xf32>
    %209 = arith.index_cast %52 : i32 to index
    %c0_186 = arith.constant 0 : index
    %c0_187 = arith.constant 0 : index
    %210 = vector.load %arg12[%209, %c0_186, %c0_187] : memref<6x16x8xf32, #tpu.memory_space<vmem>>, vector<1x16x8xf32>
    %211 = vector.shape_cast %210 : vector<1x16x8xf32> to vector<16x8xf32>
    %cst_188 = arith.constant dense<0.000000e+00> : vector<16x1xf32>
    %212 = tpu.matmul %211, %208, %cst_188 {dimension_numbers = #tpu.dot_dimension_numbers<[1], [0], [0], [1], [0, 0, 1, 1], [], []>} : vector<16x8xf32>, vector<8x1xf32>, vector<16x1xf32> -> vector<16x1xf32>
    %213 = arith.index_cast %52 : i32 to index
    %c0_189 = arith.constant 0 : index
    %c0_190 = arith.constant 0 : index
    %214 = vector.load %arg13[%213, %c0_189, %c0_190] : memref<6x16x1xf32, #tpu.memory_space<vmem>>, vector<1x16x1xf32>
    %215 = vector.shape_cast %214 : vector<1x16x1xf32> to vector<16x1xf32>
    %216 = arith.addf %212, %215 : vector<16x1xf32>
    %217 = arith.negf %216 : vector<16x1xf32>
    %218 = math.exp %217 : vector<16x1xf32>
    %cst_191 = arith.constant 1.000000e+00 : f32
    %219 = vector.broadcast %cst_191 : f32 to vector<16x1xf32>
    %220 = arith.addf %219, %218 : vector<16x1xf32>
    %221 = arith.divf %219, %220 : vector<16x1xf32>
    %222 = vector.broadcast %221 : vector<16x1xf32> to vector<16x256xf32>
    %223 = arith.mulf %194, %222 : vector<16x256xf32>
    %224 = arith.addf %50, %223 : vector<16x256xf32>
    %c3_i32_192 = arith.constant 3 : i32
    %225 = arith.muli %arg1, %c3_i32_192 : i32
    %c1_i32 = arith.constant 1 : i32
    %226 = arith.addi %225, %c1_i32 : i32
    %227 = vector.extract_strided_slice %49 {offsets = [8, 0], sizes = [8, 256], strides = [1, 1]} : vector<24x256xf32> to vector<8x256xf32>
    %228 = arith.index_cast %226 : i32 to index
    %c0_193 = arith.constant 0 : index
    %c0_194 = arith.constant 0 : index
    %229 = vector.load %arg5[%228, %c0_193, %c0_194] : memref<6x16x72xf32, #tpu.memory_space<vmem>>, vector<1x16x72xf32>
    %230 = vector.shape_cast %229 : vector<1x16x72xf32> to vector<16x72xf32>
    %231 = arith.index_cast %226 : i32 to index
    %c0_195 = arith.constant 0 : index
    %c0_196 = arith.constant 0 : index
    %232 = vector.load %arg6[%231, %c0_195, %c0_196] : memref<6x16x1xf32, #tpu.memory_space<vmem>>, vector<1x16x1xf32>
    %233 = vector.shape_cast %232 : vector<1x16x1xf32> to vector<16x1xf32>
    %c2_197 = arith.constant 2 : index
    %c0_198 = arith.constant 0 : index
    %234 = vector.load %arg14[%c2_197, %c0_198] : memref<6x256xf32, #tpu.memory_space<vmem>>, vector<1x256xf32>
    %c3 = arith.constant 3 : index
    %c0_199 = arith.constant 0 : index
    %235 = vector.load %arg14[%c3, %c0_199] : memref<6x256xf32, #tpu.memory_space<vmem>>, vector<1x256xf32>
    %c0_200 = arith.constant 0 : index
    %c51_201 = arith.constant 51 : index
    %236 = vector.load %arg16[%c0_200, %c51_201] : memref<16x358xf32, #tpu.memory_space<vmem>>, vector<8x256xf32>
    tpu.vector_store %arg16[%c0_200, %c51_201], %227 {strides = array<i32>} : memref<16x358xf32, #tpu.memory_space<vmem>>, vector<8x256xf32>,
    %c0_202 = arith.constant 0 : index
    %c17 = arith.constant 17 : index
    %237 = vector.load %arg16[%c0_202, %c17] : memref<16x358xf32, #tpu.memory_space<vmem>>, vector<8x256xf32>
    %238 = vector.broadcast %234 : vector<1x256xf32> to vector<8x256xf32>
    %239 = arith.mulf %237, %238 : vector<8x256xf32>
    %c0_203 = arith.constant 0 : index
    %c0_204 = arith.constant 0 : index
    %240 = vector.load %arg17[%c0_203, %c0_204] : memref<144x256xf32, #tpu.memory_space<vmem>>, vector<8x256xf32>
    tpu.vector_store %arg17[%c0_203, %c0_204], %239 {strides = array<i32>} : memref<144x256xf32, #tpu.memory_space<vmem>>, vector<8x256xf32>,
    %c0_205 = arith.constant 0 : index
    %c19 = arith.constant 19 : index
    %241 = vector.load %arg16[%c0_205, %c19] : memref<16x358xf32, #tpu.memory_space<vmem>>, vector<8x256xf32>
    %c8_206 = arith.constant 8 : index
    %c0_207 = arith.constant 0 : index
    %242 = vector.load %arg17[%c8_206, %c0_207] : memref<144x256xf32, #tpu.memory_space<vmem>>, vector<8x256xf32>
    tpu.vector_store %arg17[%c8_206, %c0_207], %241 {strides = array<i32>} : memref<144x256xf32, #tpu.memory_space<vmem>>, vector<8x256xf32>,
    %c0_208 = arith.constant 0 : index
    %c21 = arith.constant 21 : index
    %243 = vector.load %arg16[%c0_208, %c21] : memref<16x358xf32, #tpu.memory_space<vmem>>, vector<8x256xf32>
    %244 = vector.broadcast %235 : vector<1x256xf32> to vector<8x256xf32>
    %245 = arith.mulf %243, %244 : vector<8x256xf32>
    %c16_209 = arith.constant 16 : index
    %c0_210 = arith.constant 0 : index
    %246 = vector.load %arg17[%c16_209, %c0_210] : memref<144x256xf32, #tpu.memory_space<vmem>>, vector<8x256xf32>
    tpu.vector_store %arg17[%c16_209, %c0_210], %245 {strides = array<i32>} : memref<144x256xf32, #tpu.memory_space<vmem>>, vector<8x256xf32>,
    %c0_211 = arith.constant 0 : index
    %c49 = arith.constant 49 : index
    %247 = vector.load %arg16[%c0_211, %c49] : memref<16x358xf32, #tpu.memory_space<vmem>>, vector<8x256xf32>
    %248 = vector.broadcast %234 : vector<1x256xf32> to vector<8x256xf32>
    %249 = arith.mulf %247, %248 : vector<8x256xf32>
    %c24_212 = arith.constant 24 : index
    %c0_213 = arith.constant 0 : index
    %250 = vector.load %arg17[%c24_212, %c0_213] : memref<144x256xf32, #tpu.memory_space<vmem>>, vector<8x256xf32>
    tpu.vector_store %arg17[%c24_212, %c0_213], %249 {strides = array<i32>} : memref<144x256xf32, #tpu.memory_space<vmem>>, vector<8x256xf32>,
    %c0_214 = arith.constant 0 : index
    %c51_215 = arith.constant 51 : index
    %251 = vector.load %arg16[%c0_214, %c51_215] : memref<16x358xf32, #tpu.memory_space<vmem>>, vector<8x256xf32>
    %c32_216 = arith.constant 32 : index
    %c0_217 = arith.constant 0 : index
    %252 = vector.load %arg17[%c32_216, %c0_217] : memref<144x256xf32, #tpu.memory_space<vmem>>, vector<8x256xf32>
    tpu.vector_store %arg17[%c32_216, %c0_217], %251 {strides = array<i32>} : memref<144x256xf32, #tpu.memory_space<vmem>>, vector<8x256xf32>,
    %c0_218 = arith.constant 0 : index
    %c53 = arith.constant 53 : index
    %253 = vector.load %arg16[%c0_218, %c53] : memref<16x358xf32, #tpu.memory_space<vmem>>, vector<8x256xf32>
    %254 = vector.broadcast %235 : vector<1x256xf32> to vector<8x256xf32>
    %255 = arith.mulf %253, %254 : vector<8x256xf32>
    %c40_219 = arith.constant 40 : index
    %c0_220 = arith.constant 0 : index
    %256 = vector.load %arg17[%c40_219, %c0_220] : memref<144x256xf32, #tpu.memory_space<vmem>>, vector<8x256xf32>
    tpu.vector_store %arg17[%c40_219, %c0_220], %255 {strides = array<i32>} : memref<144x256xf32, #tpu.memory_space<vmem>>, vector<8x256xf32>,
    %c0_221 = arith.constant 0 : index
    %c81 = arith.constant 81 : index
    %257 = vector.load %arg16[%c0_221, %c81] : memref<16x358xf32, #tpu.memory_space<vmem>>, vector<8x256xf32>
    %258 = vector.broadcast %234 : vector<1x256xf32> to vector<8x256xf32>
    %259 = arith.mulf %257, %258 : vector<8x256xf32>
    %c48_222 = arith.constant 48 : index
    %c0_223 = arith.constant 0 : index
    %260 = vector.load %arg17[%c48_222, %c0_223] : memref<144x256xf32, #tpu.memory_space<vmem>>, vector<8x256xf32>
    tpu.vector_store %arg17[%c48_222, %c0_223], %259 {strides = array<i32>} : memref<144x256xf32, #tpu.memory_space<vmem>>, vector<8x256xf32>,
    %c0_224 = arith.constant 0 : index
    %c83 = arith.constant 83 : index
    %261 = vector.load %arg16[%c0_224, %c83] : memref<16x358xf32, #tpu.memory_space<vmem>>, vector<8x256xf32>
    %c56_225 = arith.constant 56 : index
    %c0_226 = arith.constant 0 : index
    %262 = vector.load %arg17[%c56_225, %c0_226] : memref<144x256xf32, #tpu.memory_space<vmem>>, vector<8x256xf32>
    tpu.vector_store %arg17[%c56_225, %c0_226], %261 {strides = array<i32>} : memref<144x256xf32, #tpu.memory_space<vmem>>, vector<8x256xf32>,
    %c0_227 = arith.constant 0 : index
    %c85 = arith.constant 85 : index
    %263 = vector.load %arg16[%c0_227, %c85] : memref<16x358xf32, #tpu.memory_space<vmem>>, vector<8x256xf32>
    %264 = vector.broadcast %235 : vector<1x256xf32> to vector<8x256xf32>
    %265 = arith.mulf %263, %264 : vector<8x256xf32>
    %c64_228 = arith.constant 64 : index
    %c0_229 = arith.constant 0 : index
    %266 = vector.load %arg17[%c64_228, %c0_229] : memref<144x256xf32, #tpu.memory_space<vmem>>, vector<8x256xf32>
    tpu.vector_store %arg17[%c64_228, %c0_229], %265 {strides = array<i32>} : memref<144x256xf32, #tpu.memory_space<vmem>>, vector<8x256xf32>,
    %c0_230 = arith.constant 0 : index
    %c0_231 = arith.constant 0 : index
    %267 = vector.load %arg17[%c0_230, %c0_231] : memref<144x256xf32, #tpu.memory_space<vmem>>, vector<72x256xf32>
    %cst_232 = arith.constant dense<0.000000e+00> : vector<16x256xf32>
    %268 = tpu.matmul %230, %267, %cst_232 {dimension_numbers = #tpu.dot_dimension_numbers<[1], [0], [0], [1], [0, 0, 1, 1], [], []>} : vector<16x72xf32>, vector<72x256xf32>, vector<16x256xf32> -> vector<16x256xf32>
    %269 = vector.broadcast %233 : vector<16x1xf32> to vector<16x256xf32>
    %270 = arith.addf %268, %269 : vector<16x256xf32>
    %271 = arith.addf %270, %4 : vector<16x256xf32>
    %cst_233 = arith.constant 0.000000e+00 : f32
    %272 = vector.broadcast %cst_233 : f32 to vector<16x256xf32>
    %273 = arith.maximumf %271, %272 : vector<16x256xf32>
    %274 = arith.index_cast %226 : i32 to index
    %c0_234 = arith.constant 0 : index
    %c0_235 = arith.constant 0 : index
    %275 = vector.load %arg7[%274, %c0_234, %c0_235] : memref<6x16x144xf32, #tpu.memory_space<vmem>>, vector<1x16x144xf32>
    %276 = vector.shape_cast %275 : vector<1x16x144xf32> to vector<16x144xf32>
    %277 = arith.index_cast %226 : i32 to index
    %c0_236 = arith.constant 0 : index
    %c0_237 = arith.constant 0 : index
    %278 = vector.load %arg8[%277, %c0_236, %c0_237] : memref<6x16x1xf32, #tpu.memory_space<vmem>>, vector<1x16x1xf32>
    %279 = vector.shape_cast %278 : vector<1x16x1xf32> to vector<16x1xf32>
    %c0_238 = arith.constant 0 : index
    %c0_239 = arith.constant 0 : index
    %280 = vector.load %arg14[%c0_238, %c0_239] : memref<6x256xf32, #tpu.memory_space<vmem>>, vector<1x256xf32>
    %c1_240 = arith.constant 1 : index
    %c0_241 = arith.constant 0 : index
    %281 = vector.load %arg14[%c1_240, %c0_241] : memref<6x256xf32, #tpu.memory_space<vmem>>, vector<1x256xf32>
    %c0_242 = arith.constant 0 : index
    %c51_243 = arith.constant 51 : index
    %282 = vector.load %arg16[%c0_242, %c51_243] : memref<16x358xf32, #tpu.memory_space<vmem>>, vector<16x256xf32>
    tpu.vector_store %arg16[%c0_242, %c51_243], %273 {strides = array<i32>} : memref<16x358xf32, #tpu.memory_space<vmem>>, vector<16x256xf32>,
    %c0_244 = arith.constant 0 : index
    %c34_245 = arith.constant 34 : index
    %283 = vector.load %arg16[%c0_244, %c34_245] : memref<16x358xf32, #tpu.memory_space<vmem>>, vector<16x256xf32>
    %284 = vector.broadcast %280 : vector<1x256xf32> to vector<16x256xf32>
    %285 = arith.mulf %283, %284 : vector<16x256xf32>
    %c0_246 = arith.constant 0 : index
    %c0_247 = arith.constant 0 : index
    %286 = vector.load %arg17[%c0_246, %c0_247] : memref<144x256xf32, #tpu.memory_space<vmem>>, vector<16x256xf32>
    tpu.vector_store %arg17[%c0_246, %c0_247], %285 {strides = array<i32>} : memref<144x256xf32, #tpu.memory_space<vmem>>, vector<16x256xf32>,
    %c0_248 = arith.constant 0 : index
    %c35_249 = arith.constant 35 : index
    %287 = vector.load %arg16[%c0_248, %c35_249] : memref<16x358xf32, #tpu.memory_space<vmem>>, vector<16x256xf32>
    %c16_250 = arith.constant 16 : index
    %c0_251 = arith.constant 0 : index
    %288 = vector.load %arg17[%c16_250, %c0_251] : memref<144x256xf32, #tpu.memory_space<vmem>>, vector<16x256xf32>
    tpu.vector_store %arg17[%c16_250, %c0_251], %287 {strides = array<i32>} : memref<144x256xf32, #tpu.memory_space<vmem>>, vector<16x256xf32>,
    %c0_252 = arith.constant 0 : index
    %c36_253 = arith.constant 36 : index
    %289 = vector.load %arg16[%c0_252, %c36_253] : memref<16x358xf32, #tpu.memory_space<vmem>>, vector<16x256xf32>
    %290 = vector.broadcast %281 : vector<1x256xf32> to vector<16x256xf32>
    %291 = arith.mulf %289, %290 : vector<16x256xf32>
    %c32_254 = arith.constant 32 : index
    %c0_255 = arith.constant 0 : index
    %292 = vector.load %arg17[%c32_254, %c0_255] : memref<144x256xf32, #tpu.memory_space<vmem>>, vector<16x256xf32>
    tpu.vector_store %arg17[%c32_254, %c0_255], %291 {strides = array<i32>} : memref<144x256xf32, #tpu.memory_space<vmem>>, vector<16x256xf32>,
    %c0_256 = arith.constant 0 : index
    %c50_257 = arith.constant 50 : index
    %293 = vector.load %arg16[%c0_256, %c50_257] : memref<16x358xf32, #tpu.memory_space<vmem>>, vector<16x256xf32>
    %294 = vector.broadcast %280 : vector<1x256xf32> to vector<16x256xf32>
    %295 = arith.mulf %293, %294 : vector<16x256xf32>
    %c48_258 = arith.constant 48 : index
    %c0_259 = arith.constant 0 : index
    %296 = vector.load %arg17[%c48_258, %c0_259] : memref<144x256xf32, #tpu.memory_space<vmem>>, vector<16x256xf32>
    tpu.vector_store %arg17[%c48_258, %c0_259], %295 {strides = array<i32>} : memref<144x256xf32, #tpu.memory_space<vmem>>, vector<16x256xf32>,
    %c0_260 = arith.constant 0 : index
    %c51_261 = arith.constant 51 : index
    %297 = vector.load %arg16[%c0_260, %c51_261] : memref<16x358xf32, #tpu.memory_space<vmem>>, vector<16x256xf32>
    %c64_262 = arith.constant 64 : index
    %c0_263 = arith.constant 0 : index
    %298 = vector.load %arg17[%c64_262, %c0_263] : memref<144x256xf32, #tpu.memory_space<vmem>>, vector<16x256xf32>
    tpu.vector_store %arg17[%c64_262, %c0_263], %297 {strides = array<i32>} : memref<144x256xf32, #tpu.memory_space<vmem>>, vector<16x256xf32>,
    %c0_264 = arith.constant 0 : index
    %c52_265 = arith.constant 52 : index
    %299 = vector.load %arg16[%c0_264, %c52_265] : memref<16x358xf32, #tpu.memory_space<vmem>>, vector<16x256xf32>
    %300 = vector.broadcast %281 : vector<1x256xf32> to vector<16x256xf32>
    %301 = arith.mulf %299, %300 : vector<16x256xf32>
    %c80_266 = arith.constant 80 : index
    %c0_267 = arith.constant 0 : index
    %302 = vector.load %arg17[%c80_266, %c0_267] : memref<144x256xf32, #tpu.memory_space<vmem>>, vector<16x256xf32>
    tpu.vector_store %arg17[%c80_266, %c0_267], %301 {strides = array<i32>} : memref<144x256xf32, #tpu.memory_space<vmem>>, vector<16x256xf32>,
    %c0_268 = arith.constant 0 : index
    %c66_269 = arith.constant 66 : index
    %303 = vector.load %arg16[%c0_268, %c66_269] : memref<16x358xf32, #tpu.memory_space<vmem>>, vector<16x256xf32>
    %304 = vector.broadcast %280 : vector<1x256xf32> to vector<16x256xf32>
    %305 = arith.mulf %303, %304 : vector<16x256xf32>
    %c96_270 = arith.constant 96 : index
    %c0_271 = arith.constant 0 : index
    %306 = vector.load %arg17[%c96_270, %c0_271] : memref<144x256xf32, #tpu.memory_space<vmem>>, vector<16x256xf32>
    tpu.vector_store %arg17[%c96_270, %c0_271], %305 {strides = array<i32>} : memref<144x256xf32, #tpu.memory_space<vmem>>, vector<16x256xf32>,
    %c0_272 = arith.constant 0 : index
    %c67_273 = arith.constant 67 : index
    %307 = vector.load %arg16[%c0_272, %c67_273] : memref<16x358xf32, #tpu.memory_space<vmem>>, vector<16x256xf32>
    %c112_274 = arith.constant 112 : index
    %c0_275 = arith.constant 0 : index
    %308 = vector.load %arg17[%c112_274, %c0_275] : memref<144x256xf32, #tpu.memory_space<vmem>>, vector<16x256xf32>
    tpu.vector_store %arg17[%c112_274, %c0_275], %307 {strides = array<i32>} : memref<144x256xf32, #tpu.memory_space<vmem>>, vector<16x256xf32>,
    %c0_276 = arith.constant 0 : index
    %c68_277 = arith.constant 68 : index
    %309 = vector.load %arg16[%c0_276, %c68_277] : memref<16x358xf32, #tpu.memory_space<vmem>>, vector<16x256xf32>
    %310 = vector.broadcast %281 : vector<1x256xf32> to vector<16x256xf32>
    %311 = arith.mulf %309, %310 : vector<16x256xf32>
    %c128_278 = arith.constant 128 : index
    %c0_279 = arith.constant 0 : index
    %312 = vector.load %arg17[%c128_278, %c0_279] : memref<144x256xf32, #tpu.memory_space<vmem>>, vector<16x256xf32>
    tpu.vector_store %arg17[%c128_278, %c0_279], %311 {strides = array<i32>} : memref<144x256xf32, #tpu.memory_space<vmem>>, vector<16x256xf32>,
    %c0_280 = arith.constant 0 : index
    %c0_281 = arith.constant 0 : index
    %313 = vector.load %arg17[%c0_280, %c0_281] : memref<144x256xf32, #tpu.memory_space<vmem>>, vector<144x256xf32>
    %cst_282 = arith.constant dense<0.000000e+00> : vector<16x256xf32>
    %314 = tpu.matmul %276, %313, %cst_282 {dimension_numbers = #tpu.dot_dimension_numbers<[1], [0], [0], [1], [0, 0, 1, 1], [], []>} : vector<16x144xf32>, vector<144x256xf32>, vector<16x256xf32> -> vector<16x256xf32>
    %315 = vector.broadcast %279 : vector<16x1xf32> to vector<16x256xf32>
    %316 = arith.addf %314, %315 : vector<16x256xf32>
    %cst_283 = arith.constant dense<0.000000e+00> : vector<256xf32>
    %317 = vector.multi_reduction <add>, %316, %cst_283 [0] : vector<16x256xf32> to vector<256xf32>
    %318 = vector.shape_cast %317 : vector<256xf32> to vector<1x256xf32>
    %cst_284 = arith.constant 1.600000e+01 : f32
    %319 = vector.broadcast %cst_284 : f32 to vector<1x256xf32>
    %320 = arith.divf %318, %319 : vector<1x256xf32>
    %c0_285 = arith.constant 0 : index
    %c51_286 = arith.constant 51 : index
    %321 = vector.load %arg16[%c0_285, %c51_286] : memref<16x358xf32, #tpu.memory_space<vmem>>, vector<1x256xf32>
    tpu.vector_store %arg16[%c0_285, %c51_286], %320 {strides = array<i32>} : memref<16x358xf32, #tpu.memory_space<vmem>>, vector<1x256xf32>,
    %cst_287 = arith.constant dense<0xFF800000> : vector<256xf32>
    %322 = vector.multi_reduction <maximumf>, %316, %cst_287 [0] : vector<16x256xf32> to vector<256xf32>
    %323 = vector.shape_cast %322 : vector<256xf32> to vector<1x256xf32>
    %c1_288 = arith.constant 1 : index
    %c51_289 = arith.constant 51 : index
    %324 = vector.load %arg16[%c1_288, %c51_289] : memref<16x358xf32, #tpu.memory_space<vmem>>, vector<1x256xf32>
    tpu.vector_store %arg16[%c1_288, %c51_289], %323 {strides = array<i32>} : memref<16x358xf32, #tpu.memory_space<vmem>>, vector<1x256xf32>,
    %325 = arith.index_cast %226 : i32 to index
    %c0_290 = arith.constant 0 : index
    %c0_291 = arith.constant 0 : index
    %326 = vector.load %arg9[%325, %c0_290, %c0_291] : memref<6x1x18xf32, #tpu.memory_space<vmem>>, vector<1x1x18xf32>
    %327 = vector.shape_cast %326 : vector<1x1x18xf32> to vector<1x18xf32>
    %c0_292 = arith.constant 0 : index
    %c0_293 = arith.constant 0 : index
    %328 = vector.load %arg14[%c0_292, %c0_293] : memref<6x256xf32, #tpu.memory_space<vmem>>, vector<1x256xf32>
    %c1_294 = arith.constant 1 : index
    %c0_295 = arith.constant 0 : index
    %329 = vector.load %arg14[%c1_294, %c0_295] : memref<6x256xf32, #tpu.memory_space<vmem>>, vector<1x256xf32>
    %c0_296 = arith.constant 0 : index
    %c34_297 = arith.constant 34 : index
    %330 = vector.load %arg16[%c0_296, %c34_297] : memref<16x358xf32, #tpu.memory_space<vmem>>, vector<2x256xf32>
    %331 = vector.broadcast %328 : vector<1x256xf32> to vector<2x256xf32>
    %332 = arith.mulf %330, %331 : vector<2x256xf32>
    %c0_298 = arith.constant 0 : index
    %c0_299 = arith.constant 0 : index
    %333 = vector.load %arg17[%c0_298, %c0_299] : memref<144x256xf32, #tpu.memory_space<vmem>>, vector<2x256xf32>
    tpu.vector_store %arg17[%c0_298, %c0_299], %332 {strides = array<i32>} : memref<144x256xf32, #tpu.memory_space<vmem>>, vector<2x256xf32>,
    %c0_300 = arith.constant 0 : index
    %c35_301 = arith.constant 35 : index
    %334 = vector.load %arg16[%c0_300, %c35_301] : memref<16x358xf32, #tpu.memory_space<vmem>>, vector<2x256xf32>
    %c2_302 = arith.constant 2 : index
    %c0_303 = arith.constant 0 : index
    %335 = vector.load %arg17[%c2_302, %c0_303] : memref<144x256xf32, #tpu.memory_space<vmem>>, vector<2x256xf32>
    tpu.vector_store %arg17[%c2_302, %c0_303], %334 {strides = array<i32>} : memref<144x256xf32, #tpu.memory_space<vmem>>, vector<2x256xf32>,
    %c0_304 = arith.constant 0 : index
    %c36_305 = arith.constant 36 : index
    %336 = vector.load %arg16[%c0_304, %c36_305] : memref<16x358xf32, #tpu.memory_space<vmem>>, vector<2x256xf32>
    %337 = vector.broadcast %329 : vector<1x256xf32> to vector<2x256xf32>
    %338 = arith.mulf %336, %337 : vector<2x256xf32>
    %c4_306 = arith.constant 4 : index
    %c0_307 = arith.constant 0 : index
    %339 = vector.load %arg17[%c4_306, %c0_307] : memref<144x256xf32, #tpu.memory_space<vmem>>, vector<2x256xf32>
    tpu.vector_store %arg17[%c4_306, %c0_307], %338 {strides = array<i32>} : memref<144x256xf32, #tpu.memory_space<vmem>>, vector<2x256xf32>,
    %c0_308 = arith.constant 0 : index
    %c50_309 = arith.constant 50 : index
    %340 = vector.load %arg16[%c0_308, %c50_309] : memref<16x358xf32, #tpu.memory_space<vmem>>, vector<2x256xf32>
    %341 = vector.broadcast %328 : vector<1x256xf32> to vector<2x256xf32>
    %342 = arith.mulf %340, %341 : vector<2x256xf32>
    %c6_310 = arith.constant 6 : index
    %c0_311 = arith.constant 0 : index
    %343 = vector.load %arg17[%c6_310, %c0_311] : memref<144x256xf32, #tpu.memory_space<vmem>>, vector<2x256xf32>
    tpu.vector_store %arg17[%c6_310, %c0_311], %342 {strides = array<i32>} : memref<144x256xf32, #tpu.memory_space<vmem>>, vector<2x256xf32>,
    %c0_312 = arith.constant 0 : index
    %c51_313 = arith.constant 51 : index
    %344 = vector.load %arg16[%c0_312, %c51_313] : memref<16x358xf32, #tpu.memory_space<vmem>>, vector<2x256xf32>
    %c8_314 = arith.constant 8 : index
    %c0_315 = arith.constant 0 : index
    %345 = vector.load %arg17[%c8_314, %c0_315] : memref<144x256xf32, #tpu.memory_space<vmem>>, vector<2x256xf32>
    tpu.vector_store %arg17[%c8_314, %c0_315], %344 {strides = array<i32>} : memref<144x256xf32, #tpu.memory_space<vmem>>, vector<2x256xf32>,
    %c0_316 = arith.constant 0 : index
    %c52_317 = arith.constant 52 : index
    %346 = vector.load %arg16[%c0_316, %c52_317] : memref<16x358xf32, #tpu.memory_space<vmem>>, vector<2x256xf32>
    %347 = vector.broadcast %329 : vector<1x256xf32> to vector<2x256xf32>
    %348 = arith.mulf %346, %347 : vector<2x256xf32>
    %c10_318 = arith.constant 10 : index
    %c0_319 = arith.constant 0 : index
    %349 = vector.load %arg17[%c10_318, %c0_319] : memref<144x256xf32, #tpu.memory_space<vmem>>, vector<2x256xf32>
    tpu.vector_store %arg17[%c10_318, %c0_319], %348 {strides = array<i32>} : memref<144x256xf32, #tpu.memory_space<vmem>>, vector<2x256xf32>,
    %c0_320 = arith.constant 0 : index
    %c66_321 = arith.constant 66 : index
    %350 = vector.load %arg16[%c0_320, %c66_321] : memref<16x358xf32, #tpu.memory_space<vmem>>, vector<2x256xf32>
    %351 = vector.broadcast %328 : vector<1x256xf32> to vector<2x256xf32>
    %352 = arith.mulf %350, %351 : vector<2x256xf32>
    %c12_322 = arith.constant 12 : index
    %c0_323 = arith.constant 0 : index
    %353 = vector.load %arg17[%c12_322, %c0_323] : memref<144x256xf32, #tpu.memory_space<vmem>>, vector<2x256xf32>
    tpu.vector_store %arg17[%c12_322, %c0_323], %352 {strides = array<i32>} : memref<144x256xf32, #tpu.memory_space<vmem>>, vector<2x256xf32>,
    %c0_324 = arith.constant 0 : index
    %c67_325 = arith.constant 67 : index
    %354 = vector.load %arg16[%c0_324, %c67_325] : memref<16x358xf32, #tpu.memory_space<vmem>>, vector<2x256xf32>
    %c14_326 = arith.constant 14 : index
    %c0_327 = arith.constant 0 : index
    %355 = vector.load %arg17[%c14_326, %c0_327] : memref<144x256xf32, #tpu.memory_space<vmem>>, vector<2x256xf32>
    tpu.vector_store %arg17[%c14_326, %c0_327], %354 {strides = array<i32>} : memref<144x256xf32, #tpu.memory_space<vmem>>, vector<2x256xf32>,
    %c0_328 = arith.constant 0 : index
    %c68_329 = arith.constant 68 : index
    %356 = vector.load %arg16[%c0_328, %c68_329] : memref<16x358xf32, #tpu.memory_space<vmem>>, vector<2x256xf32>
    %357 = vector.broadcast %329 : vector<1x256xf32> to vector<2x256xf32>
    %358 = arith.mulf %356, %357 : vector<2x256xf32>
    %c16_330 = arith.constant 16 : index
    %c0_331 = arith.constant 0 : index
    %359 = vector.load %arg17[%c16_330, %c0_331] : memref<144x256xf32, #tpu.memory_space<vmem>>, vector<2x256xf32>
    tpu.vector_store %arg17[%c16_330, %c0_331], %358 {strides = array<i32>} : memref<144x256xf32, #tpu.memory_space<vmem>>, vector<2x256xf32>,
    %c0_332 = arith.constant 0 : index
    %c0_333 = arith.constant 0 : index
    %360 = vector.load %arg17[%c0_332, %c0_333] : memref<144x256xf32, #tpu.memory_space<vmem>>, vector<18x256xf32>
    %cst_334 = arith.constant dense<0.000000e+00> : vector<1x256xf32>
    %361 = tpu.matmul %327, %360, %cst_334 {dimension_numbers = #tpu.dot_dimension_numbers<[1], [0], [0], [1], [0, 0, 1, 1], [], []>} : vector<1x18xf32>, vector<18x256xf32>, vector<1x256xf32> -> vector<1x256xf32>
    %362 = arith.negf %361 : vector<1x256xf32>
    %363 = math.exp %362 : vector<1x256xf32>
    %cst_335 = arith.constant 1.000000e+00 : f32
    %364 = vector.broadcast %cst_335 : f32 to vector<1x256xf32>
    %365 = arith.addf %364, %363 : vector<1x256xf32>
    %366 = arith.divf %364, %365 : vector<1x256xf32>
    %367 = vector.broadcast %366 : vector<1x256xf32> to vector<16x256xf32>
    %368 = arith.mulf %316, %367 : vector<16x256xf32>
    %cst_336 = arith.constant dense<0.000000e+00> : vector<16xf32>
    %369 = vector.multi_reduction <add>, %368, %cst_336 [1] : vector<16x256xf32> to vector<16xf32>
    %370 = vector.shape_cast %369 : vector<16xf32> to vector<16x1xf32>
    %cst_337 = arith.constant 2.560000e+02 : f32
    %371 = vector.broadcast %cst_337 : f32 to vector<16x1xf32>
    %372 = arith.divf %370, %371 : vector<16x1xf32>
    %373 = arith.index_cast %226 : i32 to index
    %c0_338 = arith.constant 0 : index
    %c0_339 = arith.constant 0 : index
    %374 = vector.load %arg10[%373, %c0_338, %c0_339] : memref<6x8x16xf32, #tpu.memory_space<vmem>>, vector<1x8x16xf32>
    %375 = vector.shape_cast %374 : vector<1x8x16xf32> to vector<8x16xf32>
    %cst_340 = arith.constant dense<0.000000e+00> : vector<8x1xf32>
    %376 = tpu.matmul %375, %372, %cst_340 {dimension_numbers = #tpu.dot_dimension_numbers<[1], [0], [0], [1], [0, 0, 1, 1], [], []>} : vector<8x16xf32>, vector<16x1xf32>, vector<8x1xf32> -> vector<8x1xf32>
    %377 = arith.index_cast %226 : i32 to index
    %c0_341 = arith.constant 0 : index
    %c0_342 = arith.constant 0 : index
    %378 = vector.load %arg11[%377, %c0_341, %c0_342] : memref<6x8x1xf32, #tpu.memory_space<vmem>>, vector<1x8x1xf32>
    %379 = vector.shape_cast %378 : vector<1x8x1xf32> to vector<8x1xf32>
    %380 = arith.addf %376, %379 : vector<8x1xf32>
    %cst_343 = arith.constant 0.000000e+00 : f32
    %381 = vector.broadcast %cst_343 : f32 to vector<8x1xf32>
    %382 = arith.maximumf %380, %381 : vector<8x1xf32>
    %383 = arith.index_cast %226 : i32 to index
    %c0_344 = arith.constant 0 : index
    %c0_345 = arith.constant 0 : index
    %384 = vector.load %arg12[%383, %c0_344, %c0_345] : memref<6x16x8xf32, #tpu.memory_space<vmem>>, vector<1x16x8xf32>
    %385 = vector.shape_cast %384 : vector<1x16x8xf32> to vector<16x8xf32>
    %cst_346 = arith.constant dense<0.000000e+00> : vector<16x1xf32>
    %386 = tpu.matmul %385, %382, %cst_346 {dimension_numbers = #tpu.dot_dimension_numbers<[1], [0], [0], [1], [0, 0, 1, 1], [], []>} : vector<16x8xf32>, vector<8x1xf32>, vector<16x1xf32> -> vector<16x1xf32>
    %387 = arith.index_cast %226 : i32 to index
    %c0_347 = arith.constant 0 : index
    %c0_348 = arith.constant 0 : index
    %388 = vector.load %arg13[%387, %c0_347, %c0_348] : memref<6x16x1xf32, #tpu.memory_space<vmem>>, vector<1x16x1xf32>
    %389 = vector.shape_cast %388 : vector<1x16x1xf32> to vector<16x1xf32>
    %390 = arith.addf %386, %389 : vector<16x1xf32>
    %391 = arith.negf %390 : vector<16x1xf32>
    %392 = math.exp %391 : vector<16x1xf32>
    %cst_349 = arith.constant 1.000000e+00 : f32
    %393 = vector.broadcast %cst_349 : f32 to vector<16x1xf32>
    %394 = arith.addf %393, %392 : vector<16x1xf32>
    %395 = arith.divf %393, %394 : vector<16x1xf32>
    %396 = vector.broadcast %395 : vector<16x1xf32> to vector<16x256xf32>
    %397 = arith.mulf %368, %396 : vector<16x256xf32>
    %398 = arith.addf %224, %397 : vector<16x256xf32>
    %c3_i32_350 = arith.constant 3 : i32
    %399 = arith.muli %arg1, %c3_i32_350 : i32
    %c2_i32 = arith.constant 2 : i32
    %400 = arith.addi %399, %c2_i32 : i32
    %401 = vector.extract_strided_slice %49 {offsets = [16, 0], sizes = [8, 256], strides = [1, 1]} : vector<24x256xf32> to vector<8x256xf32>
    %402 = arith.index_cast %400 : i32 to index
    %c0_351 = arith.constant 0 : index
    %c0_352 = arith.constant 0 : index
    %403 = vector.load %arg5[%402, %c0_351, %c0_352] : memref<6x16x72xf32, #tpu.memory_space<vmem>>, vector<1x16x72xf32>
    %404 = vector.shape_cast %403 : vector<1x16x72xf32> to vector<16x72xf32>
    %405 = arith.index_cast %400 : i32 to index
    %c0_353 = arith.constant 0 : index
    %c0_354 = arith.constant 0 : index
    %406 = vector.load %arg6[%405, %c0_353, %c0_354] : memref<6x16x1xf32, #tpu.memory_space<vmem>>, vector<1x16x1xf32>
    %407 = vector.shape_cast %406 : vector<1x16x1xf32> to vector<16x1xf32>
    %c4_355 = arith.constant 4 : index
    %c0_356 = arith.constant 0 : index
    %408 = vector.load %arg14[%c4_355, %c0_356] : memref<6x256xf32, #tpu.memory_space<vmem>>, vector<1x256xf32>
    %c5 = arith.constant 5 : index
    %c0_357 = arith.constant 0 : index
    %409 = vector.load %arg14[%c5, %c0_357] : memref<6x256xf32, #tpu.memory_space<vmem>>, vector<1x256xf32>
    %c0_358 = arith.constant 0 : index
    %c51_359 = arith.constant 51 : index
    %410 = vector.load %arg16[%c0_358, %c51_359] : memref<16x358xf32, #tpu.memory_space<vmem>>, vector<8x256xf32>
    tpu.vector_store %arg16[%c0_358, %c51_359], %401 {strides = array<i32>} : memref<16x358xf32, #tpu.memory_space<vmem>>, vector<8x256xf32>,
    %c0_360 = arith.constant 0 : index
    %c0_361 = arith.constant 0 : index
    %411 = vector.load %arg16[%c0_360, %c0_361] : memref<16x358xf32, #tpu.memory_space<vmem>>, vector<8x256xf32>
    %412 = vector.broadcast %408 : vector<1x256xf32> to vector<8x256xf32>
    %413 = arith.mulf %411, %412 : vector<8x256xf32>
    %c0_362 = arith.constant 0 : index
    %c0_363 = arith.constant 0 : index
    %414 = vector.load %arg17[%c0_362, %c0_363] : memref<144x256xf32, #tpu.memory_space<vmem>>, vector<8x256xf32>
    tpu.vector_store %arg17[%c0_362, %c0_363], %413 {strides = array<i32>} : memref<144x256xf32, #tpu.memory_space<vmem>>, vector<8x256xf32>,
    %c0_364 = arith.constant 0 : index
    %c3_365 = arith.constant 3 : index
    %415 = vector.load %arg16[%c0_364, %c3_365] : memref<16x358xf32, #tpu.memory_space<vmem>>, vector<8x256xf32>
    %c8_366 = arith.constant 8 : index
    %c0_367 = arith.constant 0 : index
    %416 = vector.load %arg17[%c8_366, %c0_367] : memref<144x256xf32, #tpu.memory_space<vmem>>, vector<8x256xf32>
    tpu.vector_store %arg17[%c8_366, %c0_367], %415 {strides = array<i32>} : memref<144x256xf32, #tpu.memory_space<vmem>>, vector<8x256xf32>,
    %c0_368 = arith.constant 0 : index
    %c6_369 = arith.constant 6 : index
    %417 = vector.load %arg16[%c0_368, %c6_369] : memref<16x358xf32, #tpu.memory_space<vmem>>, vector<8x256xf32>
    %418 = vector.broadcast %409 : vector<1x256xf32> to vector<8x256xf32>
    %419 = arith.mulf %417, %418 : vector<8x256xf32>
    %c16_370 = arith.constant 16 : index
    %c0_371 = arith.constant 0 : index
    %420 = vector.load %arg17[%c16_370, %c0_371] : memref<144x256xf32, #tpu.memory_space<vmem>>, vector<8x256xf32>
    tpu.vector_store %arg17[%c16_370, %c0_371], %419 {strides = array<i32>} : memref<144x256xf32, #tpu.memory_space<vmem>>, vector<8x256xf32>,
    %c0_372 = arith.constant 0 : index
    %c48_373 = arith.constant 48 : index
    %421 = vector.load %arg16[%c0_372, %c48_373] : memref<16x358xf32, #tpu.memory_space<vmem>>, vector<8x256xf32>
    %422 = vector.broadcast %408 : vector<1x256xf32> to vector<8x256xf32>
    %423 = arith.mulf %421, %422 : vector<8x256xf32>
    %c24_374 = arith.constant 24 : index
    %c0_375 = arith.constant 0 : index
    %424 = vector.load %arg17[%c24_374, %c0_375] : memref<144x256xf32, #tpu.memory_space<vmem>>, vector<8x256xf32>
    tpu.vector_store %arg17[%c24_374, %c0_375], %423 {strides = array<i32>} : memref<144x256xf32, #tpu.memory_space<vmem>>, vector<8x256xf32>,
    %c0_376 = arith.constant 0 : index
    %c51_377 = arith.constant 51 : index
    %425 = vector.load %arg16[%c0_376, %c51_377] : memref<16x358xf32, #tpu.memory_space<vmem>>, vector<8x256xf32>
    %c32_378 = arith.constant 32 : index
    %c0_379 = arith.constant 0 : index
    %426 = vector.load %arg17[%c32_378, %c0_379] : memref<144x256xf32, #tpu.memory_space<vmem>>, vector<8x256xf32>
    tpu.vector_store %arg17[%c32_378, %c0_379], %425 {strides = array<i32>} : memref<144x256xf32, #tpu.memory_space<vmem>>, vector<8x256xf32>,
    %c0_380 = arith.constant 0 : index
    %c54 = arith.constant 54 : index
    %427 = vector.load %arg16[%c0_380, %c54] : memref<16x358xf32, #tpu.memory_space<vmem>>, vector<8x256xf32>
    %428 = vector.broadcast %409 : vector<1x256xf32> to vector<8x256xf32>
    %429 = arith.mulf %427, %428 : vector<8x256xf32>
    %c40_381 = arith.constant 40 : index
    %c0_382 = arith.constant 0 : index
    %430 = vector.load %arg17[%c40_381, %c0_382] : memref<144x256xf32, #tpu.memory_space<vmem>>, vector<8x256xf32>
    tpu.vector_store %arg17[%c40_381, %c0_382], %429 {strides = array<i32>} : memref<144x256xf32, #tpu.memory_space<vmem>>, vector<8x256xf32>,
    %c0_383 = arith.constant 0 : index
    %c96_384 = arith.constant 96 : index
    %431 = vector.load %arg16[%c0_383, %c96_384] : memref<16x358xf32, #tpu.memory_space<vmem>>, vector<8x256xf32>
    %432 = vector.broadcast %408 : vector<1x256xf32> to vector<8x256xf32>
    %433 = arith.mulf %431, %432 : vector<8x256xf32>
    %c48_385 = arith.constant 48 : index
    %c0_386 = arith.constant 0 : index
    %434 = vector.load %arg17[%c48_385, %c0_386] : memref<144x256xf32, #tpu.memory_space<vmem>>, vector<8x256xf32>
    tpu.vector_store %arg17[%c48_385, %c0_386], %433 {strides = array<i32>} : memref<144x256xf32, #tpu.memory_space<vmem>>, vector<8x256xf32>,
    %c0_387 = arith.constant 0 : index
    %c99 = arith.constant 99 : index
    %435 = vector.load %arg16[%c0_387, %c99] : memref<16x358xf32, #tpu.memory_space<vmem>>, vector<8x256xf32>
    %c56_388 = arith.constant 56 : index
    %c0_389 = arith.constant 0 : index
    %436 = vector.load %arg17[%c56_388, %c0_389] : memref<144x256xf32, #tpu.memory_space<vmem>>, vector<8x256xf32>
    tpu.vector_store %arg17[%c56_388, %c0_389], %435 {strides = array<i32>} : memref<144x256xf32, #tpu.memory_space<vmem>>, vector<8x256xf32>,
    %c0_390 = arith.constant 0 : index
    %c102 = arith.constant 102 : index
    %437 = vector.load %arg16[%c0_390, %c102] : memref<16x358xf32, #tpu.memory_space<vmem>>, vector<8x256xf32>
    %438 = vector.broadcast %409 : vector<1x256xf32> to vector<8x256xf32>
    %439 = arith.mulf %437, %438 : vector<8x256xf32>
    %c64_391 = arith.constant 64 : index
    %c0_392 = arith.constant 0 : index
    %440 = vector.load %arg17[%c64_391, %c0_392] : memref<144x256xf32, #tpu.memory_space<vmem>>, vector<8x256xf32>
    tpu.vector_store %arg17[%c64_391, %c0_392], %439 {strides = array<i32>} : memref<144x256xf32, #tpu.memory_space<vmem>>, vector<8x256xf32>,
    %c0_393 = arith.constant 0 : index
    %c0_394 = arith.constant 0 : index
    %441 = vector.load %arg17[%c0_393, %c0_394] : memref<144x256xf32, #tpu.memory_space<vmem>>, vector<72x256xf32>
    %cst_395 = arith.constant dense<0.000000e+00> : vector<16x256xf32>
    %442 = tpu.matmul %404, %441, %cst_395 {dimension_numbers = #tpu.dot_dimension_numbers<[1], [0], [0], [1], [0, 0, 1, 1], [], []>} : vector<16x72xf32>, vector<72x256xf32>, vector<16x256xf32> -> vector<16x256xf32>
    %443 = vector.broadcast %407 : vector<16x1xf32> to vector<16x256xf32>
    %444 = arith.addf %442, %443 : vector<16x256xf32>
    %445 = arith.addf %444, %4 : vector<16x256xf32>
    %cst_396 = arith.constant 0.000000e+00 : f32
    %446 = vector.broadcast %cst_396 : f32 to vector<16x256xf32>
    %447 = arith.maximumf %445, %446 : vector<16x256xf32>
    %448 = arith.index_cast %400 : i32 to index
    %c0_397 = arith.constant 0 : index
    %c0_398 = arith.constant 0 : index
    %449 = vector.load %arg7[%448, %c0_397, %c0_398] : memref<6x16x144xf32, #tpu.memory_space<vmem>>, vector<1x16x144xf32>
    %450 = vector.shape_cast %449 : vector<1x16x144xf32> to vector<16x144xf32>
    %451 = arith.index_cast %400 : i32 to index
    %c0_399 = arith.constant 0 : index
    %c0_400 = arith.constant 0 : index
    %452 = vector.load %arg8[%451, %c0_399, %c0_400] : memref<6x16x1xf32, #tpu.memory_space<vmem>>, vector<1x16x1xf32>
    %453 = vector.shape_cast %452 : vector<1x16x1xf32> to vector<16x1xf32>
    %c0_401 = arith.constant 0 : index
    %c0_402 = arith.constant 0 : index
    %454 = vector.load %arg14[%c0_401, %c0_402] : memref<6x256xf32, #tpu.memory_space<vmem>>, vector<1x256xf32>
    %c1_403 = arith.constant 1 : index
    %c0_404 = arith.constant 0 : index
    %455 = vector.load %arg14[%c1_403, %c0_404] : memref<6x256xf32, #tpu.memory_space<vmem>>, vector<1x256xf32>
    %c0_405 = arith.constant 0 : index
    %c51_406 = arith.constant 51 : index
    %456 = vector.load %arg16[%c0_405, %c51_406] : memref<16x358xf32, #tpu.memory_space<vmem>>, vector<16x256xf32>
    tpu.vector_store %arg16[%c0_405, %c51_406], %447 {strides = array<i32>} : memref<16x358xf32, #tpu.memory_space<vmem>>, vector<16x256xf32>,
    %c0_407 = arith.constant 0 : index
    %c34_408 = arith.constant 34 : index
    %457 = vector.load %arg16[%c0_407, %c34_408] : memref<16x358xf32, #tpu.memory_space<vmem>>, vector<16x256xf32>
    %458 = vector.broadcast %454 : vector<1x256xf32> to vector<16x256xf32>
    %459 = arith.mulf %457, %458 : vector<16x256xf32>
    %c0_409 = arith.constant 0 : index
    %c0_410 = arith.constant 0 : index
    %460 = vector.load %arg17[%c0_409, %c0_410] : memref<144x256xf32, #tpu.memory_space<vmem>>, vector<16x256xf32>
    tpu.vector_store %arg17[%c0_409, %c0_410], %459 {strides = array<i32>} : memref<144x256xf32, #tpu.memory_space<vmem>>, vector<16x256xf32>,
    %c0_411 = arith.constant 0 : index
    %c35_412 = arith.constant 35 : index
    %461 = vector.load %arg16[%c0_411, %c35_412] : memref<16x358xf32, #tpu.memory_space<vmem>>, vector<16x256xf32>
    %c16_413 = arith.constant 16 : index
    %c0_414 = arith.constant 0 : index
    %462 = vector.load %arg17[%c16_413, %c0_414] : memref<144x256xf32, #tpu.memory_space<vmem>>, vector<16x256xf32>
    tpu.vector_store %arg17[%c16_413, %c0_414], %461 {strides = array<i32>} : memref<144x256xf32, #tpu.memory_space<vmem>>, vector<16x256xf32>,
    %c0_415 = arith.constant 0 : index
    %c36_416 = arith.constant 36 : index
    %463 = vector.load %arg16[%c0_415, %c36_416] : memref<16x358xf32, #tpu.memory_space<vmem>>, vector<16x256xf32>
    %464 = vector.broadcast %455 : vector<1x256xf32> to vector<16x256xf32>
    %465 = arith.mulf %463, %464 : vector<16x256xf32>
    %c32_417 = arith.constant 32 : index
    %c0_418 = arith.constant 0 : index
    %466 = vector.load %arg17[%c32_417, %c0_418] : memref<144x256xf32, #tpu.memory_space<vmem>>, vector<16x256xf32>
    tpu.vector_store %arg17[%c32_417, %c0_418], %465 {strides = array<i32>} : memref<144x256xf32, #tpu.memory_space<vmem>>, vector<16x256xf32>,
    %c0_419 = arith.constant 0 : index
    %c50_420 = arith.constant 50 : index
    %467 = vector.load %arg16[%c0_419, %c50_420] : memref<16x358xf32, #tpu.memory_space<vmem>>, vector<16x256xf32>
    %468 = vector.broadcast %454 : vector<1x256xf32> to vector<16x256xf32>
    %469 = arith.mulf %467, %468 : vector<16x256xf32>
    %c48_421 = arith.constant 48 : index
    %c0_422 = arith.constant 0 : index
    %470 = vector.load %arg17[%c48_421, %c0_422] : memref<144x256xf32, #tpu.memory_space<vmem>>, vector<16x256xf32>
    tpu.vector_store %arg17[%c48_421, %c0_422], %469 {strides = array<i32>} : memref<144x256xf32, #tpu.memory_space<vmem>>, vector<16x256xf32>,
    %c0_423 = arith.constant 0 : index
    %c51_424 = arith.constant 51 : index
    %471 = vector.load %arg16[%c0_423, %c51_424] : memref<16x358xf32, #tpu.memory_space<vmem>>, vector<16x256xf32>
    %c64_425 = arith.constant 64 : index
    %c0_426 = arith.constant 0 : index
    %472 = vector.load %arg17[%c64_425, %c0_426] : memref<144x256xf32, #tpu.memory_space<vmem>>, vector<16x256xf32>
    tpu.vector_store %arg17[%c64_425, %c0_426], %471 {strides = array<i32>} : memref<144x256xf32, #tpu.memory_space<vmem>>, vector<16x256xf32>,
    %c0_427 = arith.constant 0 : index
    %c52_428 = arith.constant 52 : index
    %473 = vector.load %arg16[%c0_427, %c52_428] : memref<16x358xf32, #tpu.memory_space<vmem>>, vector<16x256xf32>
    %474 = vector.broadcast %455 : vector<1x256xf32> to vector<16x256xf32>
    %475 = arith.mulf %473, %474 : vector<16x256xf32>
    %c80_429 = arith.constant 80 : index
    %c0_430 = arith.constant 0 : index
    %476 = vector.load %arg17[%c80_429, %c0_430] : memref<144x256xf32, #tpu.memory_space<vmem>>, vector<16x256xf32>
    tpu.vector_store %arg17[%c80_429, %c0_430], %475 {strides = array<i32>} : memref<144x256xf32, #tpu.memory_space<vmem>>, vector<16x256xf32>,
    %c0_431 = arith.constant 0 : index
    %c66_432 = arith.constant 66 : index
    %477 = vector.load %arg16[%c0_431, %c66_432] : memref<16x358xf32, #tpu.memory_space<vmem>>, vector<16x256xf32>
    %478 = vector.broadcast %454 : vector<1x256xf32> to vector<16x256xf32>
    %479 = arith.mulf %477, %478 : vector<16x256xf32>
    %c96_433 = arith.constant 96 : index
    %c0_434 = arith.constant 0 : index
    %480 = vector.load %arg17[%c96_433, %c0_434] : memref<144x256xf32, #tpu.memory_space<vmem>>, vector<16x256xf32>
    tpu.vector_store %arg17[%c96_433, %c0_434], %479 {strides = array<i32>} : memref<144x256xf32, #tpu.memory_space<vmem>>, vector<16x256xf32>,
    %c0_435 = arith.constant 0 : index
    %c67_436 = arith.constant 67 : index
    %481 = vector.load %arg16[%c0_435, %c67_436] : memref<16x358xf32, #tpu.memory_space<vmem>>, vector<16x256xf32>
    %c112_437 = arith.constant 112 : index
    %c0_438 = arith.constant 0 : index
    %482 = vector.load %arg17[%c112_437, %c0_438] : memref<144x256xf32, #tpu.memory_space<vmem>>, vector<16x256xf32>
    tpu.vector_store %arg17[%c112_437, %c0_438], %481 {strides = array<i32>} : memref<144x256xf32, #tpu.memory_space<vmem>>, vector<16x256xf32>,
    %c0_439 = arith.constant 0 : index
    %c68_440 = arith.constant 68 : index
    %483 = vector.load %arg16[%c0_439, %c68_440] : memref<16x358xf32, #tpu.memory_space<vmem>>, vector<16x256xf32>
    %484 = vector.broadcast %455 : vector<1x256xf32> to vector<16x256xf32>
    %485 = arith.mulf %483, %484 : vector<16x256xf32>
    %c128_441 = arith.constant 128 : index
    %c0_442 = arith.constant 0 : index
    %486 = vector.load %arg17[%c128_441, %c0_442] : memref<144x256xf32, #tpu.memory_space<vmem>>, vector<16x256xf32>
    tpu.vector_store %arg17[%c128_441, %c0_442], %485 {strides = array<i32>} : memref<144x256xf32, #tpu.memory_space<vmem>>, vector<16x256xf32>,
    %c0_443 = arith.constant 0 : index
    %c0_444 = arith.constant 0 : index
    %487 = vector.load %arg17[%c0_443, %c0_444] : memref<144x256xf32, #tpu.memory_space<vmem>>, vector<144x256xf32>
    %cst_445 = arith.constant dense<0.000000e+00> : vector<16x256xf32>
    %488 = tpu.matmul %450, %487, %cst_445 {dimension_numbers = #tpu.dot_dimension_numbers<[1], [0], [0], [1], [0, 0, 1, 1], [], []>} : vector<16x144xf32>, vector<144x256xf32>, vector<16x256xf32> -> vector<16x256xf32>
    %489 = vector.broadcast %453 : vector<16x1xf32> to vector<16x256xf32>
    %490 = arith.addf %488, %489 : vector<16x256xf32>
    %cst_446 = arith.constant dense<0.000000e+00> : vector<256xf32>
    %491 = vector.multi_reduction <add>, %490, %cst_446 [0] : vector<16x256xf32> to vector<256xf32>
    %492 = vector.shape_cast %491 : vector<256xf32> to vector<1x256xf32>
    %cst_447 = arith.constant 1.600000e+01 : f32
    %493 = vector.broadcast %cst_447 : f32 to vector<1x256xf32>
    %494 = arith.divf %492, %493 : vector<1x256xf32>
    %c0_448 = arith.constant 0 : index
    %c51_449 = arith.constant 51 : index
    %495 = vector.load %arg16[%c0_448, %c51_449] : memref<16x358xf32, #tpu.memory_space<vmem>>, vector<1x256xf32>
    tpu.vector_store %arg16[%c0_448, %c51_449], %494 {strides = array<i32>} : memref<16x358xf32, #tpu.memory_space<vmem>>, vector<1x256xf32>,
    %cst_450 = arith.constant dense<0xFF800000> : vector<256xf32>
    %496 = vector.multi_reduction <maximumf>, %490, %cst_450 [0] : vector<16x256xf32> to vector<256xf32>
    %497 = vector.shape_cast %496 : vector<256xf32> to vector<1x256xf32>
    %c1_451 = arith.constant 1 : index
    %c51_452 = arith.constant 51 : index
    %498 = vector.load %arg16[%c1_451, %c51_452] : memref<16x358xf32, #tpu.memory_space<vmem>>, vector<1x256xf32>
    tpu.vector_store %arg16[%c1_451, %c51_452], %497 {strides = array<i32>} : memref<16x358xf32, #tpu.memory_space<vmem>>, vector<1x256xf32>,
    %499 = arith.index_cast %400 : i32 to index
    %c0_453 = arith.constant 0 : index
    %c0_454 = arith.constant 0 : index
    %500 = vector.load %arg9[%499, %c0_453, %c0_454] : memref<6x1x18xf32, #tpu.memory_space<vmem>>, vector<1x1x18xf32>
    %501 = vector.shape_cast %500 : vector<1x1x18xf32> to vector<1x18xf32>
    %c0_455 = arith.constant 0 : index
    %c0_456 = arith.constant 0 : index
    %502 = vector.load %arg14[%c0_455, %c0_456] : memref<6x256xf32, #tpu.memory_space<vmem>>, vector<1x256xf32>
    %c1_457 = arith.constant 1 : index
    %c0_458 = arith.constant 0 : index
    %503 = vector.load %arg14[%c1_457, %c0_458] : memref<6x256xf32, #tpu.memory_space<vmem>>, vector<1x256xf32>
    %c0_459 = arith.constant 0 : index
    %c34_460 = arith.constant 34 : index
    %504 = vector.load %arg16[%c0_459, %c34_460] : memref<16x358xf32, #tpu.memory_space<vmem>>, vector<2x256xf32>
    %505 = vector.broadcast %502 : vector<1x256xf32> to vector<2x256xf32>
    %506 = arith.mulf %504, %505 : vector<2x256xf32>
    %c0_461 = arith.constant 0 : index
    %c0_462 = arith.constant 0 : index
    %507 = vector.load %arg17[%c0_461, %c0_462] : memref<144x256xf32, #tpu.memory_space<vmem>>, vector<2x256xf32>
    tpu.vector_store %arg17[%c0_461, %c0_462], %506 {strides = array<i32>} : memref<144x256xf32, #tpu.memory_space<vmem>>, vector<2x256xf32>,
    %c0_463 = arith.constant 0 : index
    %c35_464 = arith.constant 35 : index
    %508 = vector.load %arg16[%c0_463, %c35_464] : memref<16x358xf32, #tpu.memory_space<vmem>>, vector<2x256xf32>
    %c2_465 = arith.constant 2 : index
    %c0_466 = arith.constant 0 : index
    %509 = vector.load %arg17[%c2_465, %c0_466] : memref<144x256xf32, #tpu.memory_space<vmem>>, vector<2x256xf32>
    tpu.vector_store %arg17[%c2_465, %c0_466], %508 {strides = array<i32>} : memref<144x256xf32, #tpu.memory_space<vmem>>, vector<2x256xf32>,
    %c0_467 = arith.constant 0 : index
    %c36_468 = arith.constant 36 : index
    %510 = vector.load %arg16[%c0_467, %c36_468] : memref<16x358xf32, #tpu.memory_space<vmem>>, vector<2x256xf32>
    %511 = vector.broadcast %503 : vector<1x256xf32> to vector<2x256xf32>
    %512 = arith.mulf %510, %511 : vector<2x256xf32>
    %c4_469 = arith.constant 4 : index
    %c0_470 = arith.constant 0 : index
    %513 = vector.load %arg17[%c4_469, %c0_470] : memref<144x256xf32, #tpu.memory_space<vmem>>, vector<2x256xf32>
    tpu.vector_store %arg17[%c4_469, %c0_470], %512 {strides = array<i32>} : memref<144x256xf32, #tpu.memory_space<vmem>>, vector<2x256xf32>,
    %c0_471 = arith.constant 0 : index
    %c50_472 = arith.constant 50 : index
    %514 = vector.load %arg16[%c0_471, %c50_472] : memref<16x358xf32, #tpu.memory_space<vmem>>, vector<2x256xf32>
    %515 = vector.broadcast %502 : vector<1x256xf32> to vector<2x256xf32>
    %516 = arith.mulf %514, %515 : vector<2x256xf32>
    %c6_473 = arith.constant 6 : index
    %c0_474 = arith.constant 0 : index
    %517 = vector.load %arg17[%c6_473, %c0_474] : memref<144x256xf32, #tpu.memory_space<vmem>>, vector<2x256xf32>
    tpu.vector_store %arg17[%c6_473, %c0_474], %516 {strides = array<i32>} : memref<144x256xf32, #tpu.memory_space<vmem>>, vector<2x256xf32>,
    %c0_475 = arith.constant 0 : index
    %c51_476 = arith.constant 51 : index
    %518 = vector.load %arg16[%c0_475, %c51_476] : memref<16x358xf32, #tpu.memory_space<vmem>>, vector<2x256xf32>
    %c8_477 = arith.constant 8 : index
    %c0_478 = arith.constant 0 : index
    %519 = vector.load %arg17[%c8_477, %c0_478] : memref<144x256xf32, #tpu.memory_space<vmem>>, vector<2x256xf32>
    tpu.vector_store %arg17[%c8_477, %c0_478], %518 {strides = array<i32>} : memref<144x256xf32, #tpu.memory_space<vmem>>, vector<2x256xf32>,
    %c0_479 = arith.constant 0 : index
    %c52_480 = arith.constant 52 : index
    %520 = vector.load %arg16[%c0_479, %c52_480] : memref<16x358xf32, #tpu.memory_space<vmem>>, vector<2x256xf32>
    %521 = vector.broadcast %503 : vector<1x256xf32> to vector<2x256xf32>
    %522 = arith.mulf %520, %521 : vector<2x256xf32>
    %c10_481 = arith.constant 10 : index
    %c0_482 = arith.constant 0 : index
    %523 = vector.load %arg17[%c10_481, %c0_482] : memref<144x256xf32, #tpu.memory_space<vmem>>, vector<2x256xf32>
    tpu.vector_store %arg17[%c10_481, %c0_482], %522 {strides = array<i32>} : memref<144x256xf32, #tpu.memory_space<vmem>>, vector<2x256xf32>,
    %c0_483 = arith.constant 0 : index
    %c66_484 = arith.constant 66 : index
    %524 = vector.load %arg16[%c0_483, %c66_484] : memref<16x358xf32, #tpu.memory_space<vmem>>, vector<2x256xf32>
    %525 = vector.broadcast %502 : vector<1x256xf32> to vector<2x256xf32>
    %526 = arith.mulf %524, %525 : vector<2x256xf32>
    %c12_485 = arith.constant 12 : index
    %c0_486 = arith.constant 0 : index
    %527 = vector.load %arg17[%c12_485, %c0_486] : memref<144x256xf32, #tpu.memory_space<vmem>>, vector<2x256xf32>
    tpu.vector_store %arg17[%c12_485, %c0_486], %526 {strides = array<i32>} : memref<144x256xf32, #tpu.memory_space<vmem>>, vector<2x256xf32>,
    %c0_487 = arith.constant 0 : index
    %c67_488 = arith.constant 67 : index
    %528 = vector.load %arg16[%c0_487, %c67_488] : memref<16x358xf32, #tpu.memory_space<vmem>>, vector<2x256xf32>
    %c14_489 = arith.constant 14 : index
    %c0_490 = arith.constant 0 : index
    %529 = vector.load %arg17[%c14_489, %c0_490] : memref<144x256xf32, #tpu.memory_space<vmem>>, vector<2x256xf32>
    tpu.vector_store %arg17[%c14_489, %c0_490], %528 {strides = array<i32>} : memref<144x256xf32, #tpu.memory_space<vmem>>, vector<2x256xf32>,
    %c0_491 = arith.constant 0 : index
    %c68_492 = arith.constant 68 : index
    %530 = vector.load %arg16[%c0_491, %c68_492] : memref<16x358xf32, #tpu.memory_space<vmem>>, vector<2x256xf32>
    %531 = vector.broadcast %503 : vector<1x256xf32> to vector<2x256xf32>
    %532 = arith.mulf %530, %531 : vector<2x256xf32>
    %c16_493 = arith.constant 16 : index
    %c0_494 = arith.constant 0 : index
    %533 = vector.load %arg17[%c16_493, %c0_494] : memref<144x256xf32, #tpu.memory_space<vmem>>, vector<2x256xf32>
    tpu.vector_store %arg17[%c16_493, %c0_494], %532 {strides = array<i32>} : memref<144x256xf32, #tpu.memory_space<vmem>>, vector<2x256xf32>,
    %c0_495 = arith.constant 0 : index
    %c0_496 = arith.constant 0 : index
    %534 = vector.load %arg17[%c0_495, %c0_496] : memref<144x256xf32, #tpu.memory_space<vmem>>, vector<18x256xf32>
    %cst_497 = arith.constant dense<0.000000e+00> : vector<1x256xf32>
    %535 = tpu.matmul %501, %534, %cst_497 {dimension_numbers = #tpu.dot_dimension_numbers<[1], [0], [0], [1], [0, 0, 1, 1], [], []>} : vector<1x18xf32>, vector<18x256xf32>, vector<1x256xf32> -> vector<1x256xf32>
    %536 = arith.negf %535 : vector<1x256xf32>
    %537 = math.exp %536 : vector<1x256xf32>
    %cst_498 = arith.constant 1.000000e+00 : f32
    %538 = vector.broadcast %cst_498 : f32 to vector<1x256xf32>
    %539 = arith.addf %538, %537 : vector<1x256xf32>
    %540 = arith.divf %538, %539 : vector<1x256xf32>
    %541 = vector.broadcast %540 : vector<1x256xf32> to vector<16x256xf32>
    %542 = arith.mulf %490, %541 : vector<16x256xf32>
    %cst_499 = arith.constant dense<0.000000e+00> : vector<16xf32>
    %543 = vector.multi_reduction <add>, %542, %cst_499 [1] : vector<16x256xf32> to vector<16xf32>
    %544 = vector.shape_cast %543 : vector<16xf32> to vector<16x1xf32>
    %cst_500 = arith.constant 2.560000e+02 : f32
    %545 = vector.broadcast %cst_500 : f32 to vector<16x1xf32>
    %546 = arith.divf %544, %545 : vector<16x1xf32>
    %547 = arith.index_cast %400 : i32 to index
    %c0_501 = arith.constant 0 : index
    %c0_502 = arith.constant 0 : index
    %548 = vector.load %arg10[%547, %c0_501, %c0_502] : memref<6x8x16xf32, #tpu.memory_space<vmem>>, vector<1x8x16xf32>
    %549 = vector.shape_cast %548 : vector<1x8x16xf32> to vector<8x16xf32>
    %cst_503 = arith.constant dense<0.000000e+00> : vector<8x1xf32>
    %550 = tpu.matmul %549, %546, %cst_503 {dimension_numbers = #tpu.dot_dimension_numbers<[1], [0], [0], [1], [0, 0, 1, 1], [], []>} : vector<8x16xf32>, vector<16x1xf32>, vector<8x1xf32> -> vector<8x1xf32>
    %551 = arith.index_cast %400 : i32 to index
    %c0_504 = arith.constant 0 : index
    %c0_505 = arith.constant 0 : index
    %552 = vector.load %arg11[%551, %c0_504, %c0_505] : memref<6x8x1xf32, #tpu.memory_space<vmem>>, vector<1x8x1xf32>
    %553 = vector.shape_cast %552 : vector<1x8x1xf32> to vector<8x1xf32>
    %554 = arith.addf %550, %553 : vector<8x1xf32>
    %cst_506 = arith.constant 0.000000e+00 : f32
    %555 = vector.broadcast %cst_506 : f32 to vector<8x1xf32>
    %556 = arith.maximumf %554, %555 : vector<8x1xf32>
    %557 = arith.index_cast %400 : i32 to index
    %c0_507 = arith.constant 0 : index
    %c0_508 = arith.constant 0 : index
    %558 = vector.load %arg12[%557, %c0_507, %c0_508] : memref<6x16x8xf32, #tpu.memory_space<vmem>>, vector<1x16x8xf32>
    %559 = vector.shape_cast %558 : vector<1x16x8xf32> to vector<16x8xf32>
    %cst_509 = arith.constant dense<0.000000e+00> : vector<16x1xf32>
    %560 = tpu.matmul %559, %556, %cst_509 {dimension_numbers = #tpu.dot_dimension_numbers<[1], [0], [0], [1], [0, 0, 1, 1], [], []>} : vector<16x8xf32>, vector<8x1xf32>, vector<16x1xf32> -> vector<16x1xf32>
    %561 = arith.index_cast %400 : i32 to index
    %c0_510 = arith.constant 0 : index
    %c0_511 = arith.constant 0 : index
    %562 = vector.load %arg13[%561, %c0_510, %c0_511] : memref<6x16x1xf32, #tpu.memory_space<vmem>>, vector<1x16x1xf32>
    %563 = vector.shape_cast %562 : vector<1x16x1xf32> to vector<16x1xf32>
    %564 = arith.addf %560, %563 : vector<16x1xf32>
    %565 = arith.negf %564 : vector<16x1xf32>
    %566 = math.exp %565 : vector<16x1xf32>
    %cst_512 = arith.constant 1.000000e+00 : f32
    %567 = vector.broadcast %cst_512 : f32 to vector<16x1xf32>
    %568 = arith.addf %567, %566 : vector<16x1xf32>
    %569 = arith.divf %567, %568 : vector<16x1xf32>
    %570 = vector.broadcast %569 : vector<16x1xf32> to vector<16x256xf32>
    %571 = arith.mulf %542, %570 : vector<16x256xf32>
    %572 = arith.addf %398, %571 : vector<16x256xf32>
    %573 = arith.addf %572, %4 : vector<16x256xf32>
    %c0_513 = arith.constant 0 : index
    %c0_514 = arith.constant 0 : index
    %c0_515 = arith.constant 0 : index
    %574 = vector.load %arg15[%c0_513, %c0_514, %c0_515] : memref<1x16x256xf32, #tpu.memory_space<vmem>>, vector<1x16x256xf32>
    %575 = vector.shape_cast %574 : vector<1x16x256xf32> to vector<16x256xf32>
    %576 = vector.shape_cast %573 : vector<16x256xf32> to vector<1x16x256xf32>
    tpu.vector_store %arg15[%c0_513, %c0_514, %c0_515], %576 {strides = array<i32>} : memref<1x16x256xf32, #tpu.memory_space<vmem>>, vector<1x16x256xf32>,
    return
  }
  func.func @transform_0(%arg0: i32, %arg1: i32) -> (i32, i32, i32) {
    %c0_i32 = arith.constant 0 : i32
    %c0_i32_0 = arith.constant 0 : i32
    %c0_i32_1 = arith.constant 0 : i32
    return %arg0, %c0_i32, %c0_i32_0 : i32, i32, i32
  }
  func.func @transform_1(%arg0: i32, %arg1: i32) -> (i32, i32, i32) {
    %c0_i32 = arith.constant 0 : i32
    %c0_i32_0 = arith.constant 0 : i32
    %c0_i32_1 = arith.constant 0 : i32
    %c0_i32_2 = arith.constant 0 : i32
    return %c0_i32, %c0_i32_0, %c0_i32_1 : i32, i32, i32
  }
  func.func @transform_2(%arg0: i32, %arg1: i32) -> (i32, i32, i32) {
    %c0_i32 = arith.constant 0 : i32
    %c0_i32_0 = arith.constant 0 : i32
    %c0_i32_1 = arith.constant 0 : i32
    %c0_i32_2 = arith.constant 0 : i32
    return %c0_i32, %c0_i32_0, %c0_i32_1 : i32, i32, i32
  }
  func.func @transform_3(%arg0: i32, %arg1: i32) -> (i32, i32, i32) {
    %c0_i32 = arith.constant 0 : i32
    %c0_i32_0 = arith.constant 0 : i32
    %c0_i32_1 = arith.constant 0 : i32
    %c0_i32_2 = arith.constant 0 : i32
    return %c0_i32, %c0_i32_0, %c0_i32_1 : i32, i32, i32
  }
  func.func @transform_4(%arg0: i32, %arg1: i32) -> (i32, i32, i32) {
    %c0_i32 = arith.constant 0 : i32
    %c0_i32_0 = arith.constant 0 : i32
    %c0_i32_1 = arith.constant 0 : i32
    %c0_i32_2 = arith.constant 0 : i32
    return %c0_i32, %c0_i32_0, %c0_i32_1 : i32, i32, i32
  }
  func.func @transform_5(%arg0: i32, %arg1: i32) -> (i32, i32, i32) {
    %c0_i32 = arith.constant 0 : i32
    %c0_i32_0 = arith.constant 0 : i32
    %c0_i32_1 = arith.constant 0 : i32
    %c0_i32_2 = arith.constant 0 : i32
    return %c0_i32, %c0_i32_0, %c0_i32_1 : i32, i32, i32
  }
  func.func @transform_6(%arg0: i32, %arg1: i32) -> (i32, i32, i32) {
    %c0_i32 = arith.constant 0 : i32
    %c0_i32_0 = arith.constant 0 : i32
    %c0_i32_1 = arith.constant 0 : i32
    %c0_i32_2 = arith.constant 0 : i32
    return %c0_i32, %c0_i32_0, %c0_i32_1 : i32, i32, i32
  }
  func.func @transform_7(%arg0: i32, %arg1: i32) -> (i32, i32, i32) {
    %c0_i32 = arith.constant 0 : i32
    %c0_i32_0 = arith.constant 0 : i32
    %c0_i32_1 = arith.constant 0 : i32
    %c0_i32_2 = arith.constant 0 : i32
    return %c0_i32, %c0_i32_0, %c0_i32_1 : i32, i32, i32
  }
  func.func @transform_8(%arg0: i32, %arg1: i32) -> (i32, i32, i32) {
    %c0_i32 = arith.constant 0 : i32
    %c0_i32_0 = arith.constant 0 : i32
    %c0_i32_1 = arith.constant 0 : i32
    %c0_i32_2 = arith.constant 0 : i32
    return %c0_i32, %c0_i32_0, %c0_i32_1 : i32, i32, i32
  }
  func.func @transform_9(%arg0: i32, %arg1: i32) -> (i32, i32, i32) {
    %c0_i32 = arith.constant 0 : i32
    %c0_i32_0 = arith.constant 0 : i32
    %c0_i32_1 = arith.constant 0 : i32
    %c0_i32_2 = arith.constant 0 : i32
    return %c0_i32, %c0_i32_0, %c0_i32_1 : i32, i32, i32
  }
  func.func @transform_10(%arg0: i32, %arg1: i32) -> (i32, i32, i32) {
    %c0_i32 = arith.constant 0 : i32
    %c0_i32_0 = arith.constant 0 : i32
    %c0_i32_1 = arith.constant 0 : i32
    %c0_i32_2 = arith.constant 0 : i32
    return %c0_i32, %c0_i32_0, %c0_i32_1 : i32, i32, i32
  }
  func.func @transform_11(%arg0: i32, %arg1: i32) -> (i32, i32, i32) {
    %c0_i32 = arith.constant 0 : i32
    %c0_i32_0 = arith.constant 0 : i32
    %c0_i32_1 = arith.constant 0 : i32
    %c0_i32_2 = arith.constant 0 : i32
    return %c0_i32, %c0_i32_0, %c0_i32_1 : i32, i32, i32
  }
  func.func @transform_12(%arg0: i32, %arg1: i32) -> (i32, i32) {
    %c0_i32 = arith.constant 0 : i32
    %c0_i32_0 = arith.constant 0 : i32
    %c0_i32_1 = arith.constant 0 : i32
    return %c0_i32, %c0_i32_0 : i32, i32
  }
  func.func @transform_13(%arg0: i32, %arg1: i32) -> (i32, i32, i32) {
    %c0_i32 = arith.constant 0 : i32
    %c0_i32_0 = arith.constant 0 : i32
    %c0_i32_1 = arith.constant 0 : i32
    return %arg0, %c0_i32, %c0_i32_0 : i32, i32, i32
  }
}

</mosaic_0001>

<llo_original>
// kernel: msc_group_forward.1
$region0: #{msc_group_forward.1}
  #allocation0 [shape = 'u32[]', space=smem, size = 0x4, offset = 0x4, fixed_abs, tag = 'smem constant byte address 0x4 - core index']
  #allocation1 [shape = 'u32[144,128]{1,0:T(1,128)}', space=vmem, size = 0x12000, scoped, tag = 'internal scratch']
  #allocation2 [shape = 'f32[16,358]{1,0:T(8,128)}', space=vmem, size = 0x6000, scoped, tag = 'scratch operand']
  #allocation3 [shape = 'f32[144,256]{1,0:T(8,128)}', space=vmem, size = 0x24000, scoped, tag = 'scratch operand']
  %s0 = inlined_call_operand.vmem [shape: f32[2,16,256], index: 0, kind: input, shape index: {}]
  %s1 = inlined_call_operand.vmem [shape: f32[2,24,144], index: 1, kind: input, shape index: {}]
  %s2 = inlined_call_operand.vmem [shape: f32[2,24,1], index: 2, kind: input, shape index: {}]
  %s3 = inlined_call_operand.vmem [shape: f32[6,16,72], index: 3, kind: input, shape index: {}]
  %s4 = inlined_call_operand.vmem [shape: f32[6,16,1], index: 4, kind: input, shape index: {}]
  %s5 = inlined_call_operand.vmem [shape: f32[6,16,144], index: 5, kind: input, shape index: {}]
  %s6 = inlined_call_operand.vmem [shape: f32[6,16,1], index: 6, kind: input, shape index: {}]
  %s7 = inlined_call_operand.vmem [shape: f32[6,1,18], index: 7, kind: input, shape index: {}]
  %s8 = inlined_call_operand.vmem [shape: f32[6,8,16], index: 8, kind: input, shape index: {}]
  %s9 = inlined_call_operand.vmem [shape: f32[6,8,1], index: 9, kind: input, shape index: {}]
  %s10 = inlined_call_operand.vmem [shape: f32[6,16,8], index: 10, kind: input, shape index: {}]
  %s11 = inlined_call_operand.vmem [shape: f32[6,16,1], index: 11, kind: input, shape index: {}]
  %s12 = inlined_call_operand.vmem [shape: f32[6,256], index: 12, kind: input, shape index: {}]
  %s13 = inlined_call_operand.vmem [shape: f32[2,16,256], index: 13, kind: output, shape index: {}]
  %s14 = sld [smem:[#allocation0]]
  $region89: #{msc_group_forward.1} parent=0
    _
  %s16 = ssub.s32 1, %s14
  %s17 = scalar_select 0, %s16, %s14
  loop: start=0, step=1, limit=6
  $region2: #{msc_group_forward.1} parent=0 // loop_pre_header
    _
  $region3: #{msc_group_forward.1} parent=0 // loop_header
    %s19 = sphi 0, %s23
    %p20 = scmp.ge.s32.totalorder %s19, 6
    %s26 = sphi 0, %s38
    %s27 = sphi 0, %s34
    %s28 = sphi 0, %s26
    %s29 = sphi 0, %s27
    %s30 = sphi 0, %s28
    %s31 = sphi 0, %s29
    %s41 = sphi 0, %s43
    %s44 = sphi 0, %s41
    %s45 = sphi 0, %s44
    %s61 = sphi 0, %s45
    %s65 = sphi 0, %s65
    %s67 = sphi 0, %s65
    %s68 = sphi 0, %s67
    %s82 = sphi 0, %s68
    %s86 = sphi 0, %s86
    %s88 = sphi 0, %s86
    %s89 = sphi 0, %s88
    %s103 = sphi 0, %s89
    %s107 = sphi 0, %s107
    %s109 = sphi 0, %s107
    %s110 = sphi 0, %s109
    %s124 = sphi 0, %s110
    %s128 = sphi 0, %s128
    %s130 = sphi 0, %s128
    %s131 = sphi 0, %s130
    %s145 = sphi 0, %s131
    %s149 = sphi 0, %s149
    %s151 = sphi 0, %s149
    %s152 = sphi 0, %s151
    %s166 = sphi 0, %s152
    %s170 = sphi 0, %s170
    %s172 = sphi 0, %s170
    %s173 = sphi 0, %s172
    %s187 = sphi 0, %s173
    %s191 = sphi 0, %s191
    %s193 = sphi 0, %s191
    %s194 = sphi 0, %s193
    %s208 = sphi 0, %s194
    %s212 = sphi 0, %s212
    %s214 = sphi 0, %s212
    %s215 = sphi 0, %s214
    %s229 = sphi 0, %s215
    %s233 = sphi 0, %s233
    %s235 = sphi 0, %s233
    %s236 = sphi 0, %s235
    %s250 = sphi 0, %s236
    %s254 = sphi 0, %s254
    %s256 = sphi 0, %s254
    %s257 = sphi 0, %s256
    %s271 = sphi 0, %s257
    %s275 = sphi 0, %s275
    %s277 = sphi 0, %s275
    %s278 = sphi 0, %s277
    %s292 = sphi 0, %s278
    %s296 = sphi 0, %s296
    %s298 = sphi 0, %s296
    %s299 = sphi 0, %s298
    %s313 = sphi 0, %s299
    %s319 = sphi 0, %s321
    %s322 = sphi 0, %s319
    %s323 = sphi 0, %s322
    %s339 = sphi 0, %s323
  $region4: #{msc_group_forward.1} parent=0 // loop_header_branch
    %22 = sbr.rel (%p20) target = $region8
  $region5: #{msc_group_forward.1} parent=0 // loop_body
    %s24 = ssub.s32 %s19, 1
    %s25 = ssub.s32 %s19, 2
    %s32 = sadd.s32 1, %s27
    %p33 = scmp.ge.s32.totalorder %s32, 2
    %s34 = scalar_select %p33, 0, %s32
    %s35 = sadd.s32 1, %s26
    %s36 = scalar_select %p33, %s35, %s26
    %p37 = scmp.ge.s32.totalorder %s36, 2
    %s38 = scalar_select %p37, 0, %s36
    %s39 = ssub.s32 %s26, %s38
    %p40 = scmp.eq.s32.totalorder %s39, 0
    %s42 = sadd.s32 %s41, 1
    %s43 = scalar_select %p40, %s41, %s42
    %p46 = pneg %p40
    %p47 = scmp.eq.s32.totalorder %s19, 3
    %p48 = por %p46, %p47
    %p49 = scmp.ne.s32.totalorder %s41, %s44
    %p50 = scmp.eq.s32.totalorder %s19, 0
    %p51 = por %p49, %p50
    %p52 = scmp.ne.s32.totalorder %s41, %s44
    %p53 = scmp.eq.s32.totalorder %s24, 3
    %p54 = por %p52, %p53
    %p55 = scmp.ne.s32.totalorder %s44, %s45
    %p56 = scmp.eq.s32.totalorder %s24, 0
    %p57 = por %p55, %p56
    %p58 = scmp.ne.s32.totalorder %s44, %s45
    %p59 = scmp.eq.s32.totalorder %s25, 3
    %p60 = por %p58, %p59
    %p62 = scmp.ne.s32.totalorder %s45, %s61
    %p63 = scmp.eq.s32.totalorder %s25, 0
    %p64 = por %p62, %p63
    %s66 = sadd.s32 %s65, 1
    %p69 = scmp.eq.s32.totalorder %s19, 3
    %p70 = scmp.ne.s32.totalorder %s65, %s67
    %p71 = scmp.eq.s32.totalorder %s19, 0
    %p72 = por %p70, %p71
    %p73 = scmp.ne.s32.totalorder %s65, %s67
    %p74 = scmp.eq.s32.totalorder %s24, 3
    %p75 = por %p73, %p74
    %p76 = scmp.ne.s32.totalorder %s67, %s68
    %p77 = scmp.eq.s32.totalorder %s24, 0
    %p78 = por %p76, %p77
    %p79 = scmp.ne.s32.totalorder %s67, %s68
    %p80 = scmp.eq.s32.totalorder %s25, 3
    %p81 = por %p79, %p80
    %p83 = scmp.ne.s32.totalorder %s68, %s82
    %p84 = scmp.eq.s32.totalorder %s25, 0
    %p85 = por %p83, %p84
    %s87 = sadd.s32 %s86, 1
    %p90 = scmp.eq.s32.totalorder %s19, 3
    %p91 = scmp.ne.s32.totalorder %s86, %s88
    %p92 = scmp.eq.s32.totalorder %s19, 0
    %p93 = por %p91, %p92
    %p94 = scmp.ne.s32.totalorder %s86, %s88
    %p95 = scmp.eq.s32.totalorder %s24, 3
    %p96 = por %p94, %p95
    %p97 = scmp.ne.s32.totalorder %s88, %s89
    %p98 = scmp.eq.s32.totalorder %s24, 0
    %p99 = por %p97, %p98
    %p100 = scmp.ne.s32.totalorder %s88, %s89
    %p101 = scmp.eq.s32.totalorder %s25, 3
    %p102 = por %p100, %p101
    %p104 = scmp.ne.s32.totalorder %s89, %s103
    %p105 = scmp.eq.s32.totalorder %s25, 0
    %p106 = por %p104, %p105
    %s108 = sadd.s32 %s107, 1
    %p111 = scmp.eq.s32.totalorder %s19, 3
    %p112 = scmp.ne.s32.totalorder %s107, %s109
    %p113 = scmp.eq.s32.totalorder %s19, 0
    %p114 = por %p112, %p113
    %p115 = scmp.ne.s32.totalorder %s107, %s109
    %p116 = scmp.eq.s32.totalorder %s24, 3
    %p117 = por %p115, %p116
    %p118 = scmp.ne.s32.totalorder %s109, %s110
    %p119 = scmp.eq.s32.totalorder %s24, 0
    %p120 = por %p118, %p119
    %p121 = scmp.ne.s32.totalorder %s109, %s110
    %p122 = scmp.eq.s32.totalorder %s25, 3
    %p123 = por %p121, %p122
    %p125 = scmp.ne.s32.totalorder %s110, %s124
    %p126 = scmp.eq.s32.totalorder %s25, 0
    %p127 = por %p125, %p126
    %s129 = sadd.s32 %s128, 1
    %p132 = scmp.eq.s32.totalorder %s19, 3
    %p133 = scmp.ne.s32.totalorder %s128, %s130
    %p134 = scmp.eq.s32.totalorder %s19, 0
    %p135 = por %p133, %p134
    %p136 = scmp.ne.s32.totalorder %s128, %s130
    %p137 = scmp.eq.s32.totalorder %s24, 3
    %p138 = por %p136, %p137
    %p139 = scmp.ne.s32.totalorder %s130, %s131
    %p140 = scmp.eq.s32.totalorder %s24, 0
    %p141 = por %p139, %p140
    %p142 = scmp.ne.s32.totalorder %s130, %s131
    %p143 = scmp.eq.s32.totalorder %s25, 3
    %p144 = por %p142, %p143
    %p146 = scmp.ne.s32.totalorder %s131, %s145
    %p147 = scmp.eq.s32.totalorder %s25, 0
    %p148 = por %p146, %p147
    %s150 = sadd.s32 %s149, 1
    %p153 = scmp.eq.s32.totalorder %s19, 3
    %p154 = scmp.ne.s32.totalorder %s149, %s151
    %p155 = scmp.eq.s32.totalorder %s19, 0
    %p156 = por %p154, %p155
    %p157 = scmp.ne.s32.totalorder %s149, %s151
    %p158 = scmp.eq.s32.totalorder %s24, 3
    %p159 = por %p157, %p158
    %p160 = scmp.ne.s32.totalorder %s151, %s152
    %p161 = scmp.eq.s32.totalorder %s24, 0
    %p162 = por %p160, %p161
    %p163 = scmp.ne.s32.totalorder %s151, %s152
    %p164 = scmp.eq.s32.totalorder %s25, 3
    %p165 = por %p163, %p164
    %p167 = scmp.ne.s32.totalorder %s152, %s166
    %p168 = scmp.eq.s32.totalorder %s25, 0
    %p169 = por %p167, %p168
    %s171 = sadd.s32 %s170, 1
    %p174 = scmp.eq.s32.totalorder %s19, 3
    %p175 = scmp.ne.s32.totalorder %s170, %s172
    %p176 = scmp.eq.s32.totalorder %s19, 0
    %p177 = por %p175, %p176
    %p178 = scmp.ne.s32.totalorder %s170, %s172
    %p179 = scmp.eq.s32.totalorder %s24, 3
    %p180 = por %p178, %p179
    %p181 = scmp.ne.s32.totalorder %s172, %s173
    %p182 = scmp.eq.s32.totalorder %s24, 0
    %p183 = por %p181, %p182
    %p184 = scmp.ne.s32.totalorder %s172, %s173
    %p185 = scmp.eq.s32.totalorder %s25, 3
    %p186 = por %p184, %p185
    %p188 = scmp.ne.s32.totalorder %s173, %s187
    %p189 = scmp.eq.s32.totalorder %s25, 0
    %p190 = por %p188, %p189
    %s192 = sadd.s32 %s191, 1
    %p195 = scmp.eq.s32.totalorder %s19, 3
    %p196 = scmp.ne.s32.totalorder %s191, %s193
    %p197 = scmp.eq.s32.totalorder %s19, 0
    %p198 = por %p196, %p197
    %p199 = scmp.ne.s32.totalorder %s191, %s193
    %p200 = scmp.eq.s32.totalorder %s24, 3
    %p201 = por %p199, %p200
    %p202 = scmp.ne.s32.totalorder %s193, %s194
    %p203 = scmp.eq.s32.totalorder %s24, 0
    %p204 = por %p202, %p203
    %p205 = scmp.ne.s32.totalorder %s193, %s194
    %p206 = scmp.eq.s32.totalorder %s25, 3
    %p207 = por %p205, %p206
    %p209 = scmp.ne.s32.totalorder %s194, %s208
    %p210 = scmp.eq.s32.totalorder %s25, 0
    %p211 = por %p209, %p210
    %s213 = sadd.s32 %s212, 1
    %p216 = scmp.eq.s32.totalorder %s19, 3
    %p217 = scmp.ne.s32.totalorder %s212, %s214
    %p218 = scmp.eq.s32.totalorder %s19, 0
    %p219 = por %p217, %p218
    %p220 = scmp.ne.s32.totalorder %s212, %s214
    %p221 = scmp.eq.s32.totalorder %s24, 3
    %p222 = por %p220, %p221
    %p223 = scmp.ne.s32.totalorder %s214, %s215
    %p224 = scmp.eq.s32.totalorder %s24, 0
    %p225 = por %p223, %p224
    %p226 = scmp.ne.s32.totalorder %s214, %s215
    %p227 = scmp.eq.s32.totalorder %s25, 3
    %p228 = por %p226, %p227
    %p230 = scmp.ne.s32.totalorder %s215, %s229
    %p231 = scmp.eq.s32.totalorder %s25, 0
    %p232 = por %p230, %p231
    %s234 = sadd.s32 %s233, 1
    %p237 = scmp.eq.s32.totalorder %s19, 3
    %p238 = scmp.ne.s32.totalorder %s233, %s235
    %p239 = scmp.eq.s32.totalorder %s19, 0
    %p240 = por %p238, %p239
    %p241 = scmp.ne.s32.totalorder %s233, %s235
    %p242 = scmp.eq.s32.totalorder %s24, 3
    %p243 = por %p241, %p242
    %p244 = scmp.ne.s32.totalorder %s235, %s236
    %p245 = scmp.eq.s32.totalorder %s24, 0
    %p246 = por %p244, %p245
    %p247 = scmp.ne.s32.totalorder %s235, %s236
    %p248 = scmp.eq.s32.totalorder %s25, 3
    %p249 = por %p247, %p248
    %p251 = scmp.ne.s32.totalorder %s236, %s250
    %p252 = scmp.eq.s32.totalorder %s25, 0
    %p253 = por %p251, %p252
    %s255 = sadd.s32 %s254, 1
    %p258 = scmp.eq.s32.totalorder %s19, 3
    %p259 = scmp.ne.s32.totalorder %s254, %s256
    %p260 = scmp.eq.s32.totalorder %s19, 0
    %p261 = por %p259, %p260
    %p262 = scmp.ne.s32.totalorder %s254, %s256
    %p263 = scmp.eq.s32.totalorder %s24, 3
    %p264 = por %p262, %p263
    %p265 = scmp.ne.s32.totalorder %s256, %s257
    %p266 = scmp.eq.s32.totalorder %s24, 0
    %p267 = por %p265, %p266
    %p268 = scmp.ne.s32.totalorder %s256, %s257
    %p269 = scmp.eq.s32.totalorder %s25, 3
    %p270 = por %p268, %p269
    %p272 = scmp.ne.s32.totalorder %s257, %s271
    %p273 = scmp.eq.s32.totalorder %s25, 0
    %p274 = por %p272, %p273
    %s276 = sadd.s32 %s275, 1
    %p279 = scmp.eq.s32.totalorder %s19, 3
    %p280 = scmp.ne.s32.totalorder %s275, %s277
    %p281 = scmp.eq.s32.totalorder %s19, 0
    %p282 = por %p280, %p281
    %p283 = scmp.ne.s32.totalorder %s275, %s277
    %p284 = scmp.eq.s32.totalorder %s24, 3
    %p285 = por %p283, %p284
    %p286 = scmp.ne.s32.totalorder %s277, %s278
    %p287 = scmp.eq.s32.totalorder %s24, 0
    %p288 = por %p286, %p287
    %p289 = scmp.ne.s32.totalorder %s277, %s278
    %p290 = scmp.eq.s32.totalorder %s25, 3
    %p291 = por %p289, %p290
    %p293 = scmp.ne.s32.totalorder %s278, %s292
    %p294 = scmp.eq.s32.totalorder %s25, 0
    %p295 = por %p293, %p294
    %s297 = sadd.s32 %s296, 1
    %p300 = scmp.eq.s32.totalorder %s19, 3
    %p301 = scmp.ne.s32.totalorder %s296, %s298
    %p302 = scmp.eq.s32.totalorder %s19, 0
    %p303 = por %p301, %p302
    %p304 = scmp.ne.s32.totalorder %s296, %s298
    %p305 = scmp.eq.s32.totalorder %s24, 3
    %p306 = por %p304, %p305
    %p307 = scmp.ne.s32.totalorder %s298, %s299
    %p308 = scmp.eq.s32.totalorder %s24, 0
    %p309 = por %p307, %p308
    %p310 = scmp.ne.s32.totalorder %s298, %s299
    %p311 = scmp.eq.s32.totalorder %s25, 3
    %p312 = por %p310, %p311
    %p314 = scmp.ne.s32.totalorder %s299, %s313
    %p315 = scmp.eq.s32.totalorder %s25, 0
    %p316 = por %p314, %p315
    %s317 = ssub.s32 %s26, %s38
    %p318 = scmp.eq.s32.totalorder %s317, 0
    %s320 = sadd.s32 %s319, 1
    %s321 = scalar_select %p318, %s319, %s320
    %p324 = pneg %p318
    %p325 = scmp.eq.s32.totalorder %s19, 3
    %p326 = por %p324, %p325
    %p327 = scmp.ne.s32.totalorder %s319, %s322
    %p328 = scmp.eq.s32.totalorder %s19, 0
    %p329 = por %p327, %p328
    %p330 = scmp.ne.s32.totalorder %s319, %s322
    %p331 = scmp.eq.s32.totalorder %s24, 3
    %p332 = por %p330, %p331
    %p333 = scmp.ne.s32.totalorder %s322, %s323
    %p334 = scmp.eq.s32.totalorder %s24, 0
    %p335 = por %p333, %p334
    %p336 = scmp.ne.s32.totalorder %s322, %s323
    %p337 = scmp.eq.s32.totalorder %s25, 3
    %p338 = por %p336, %p337
    %p340 = scmp.ne.s32.totalorder %s323, %s339
    %p341 = scmp.eq.s32.totalorder %s25, 0
    %p342 = por %p340, %p341
    %p343 = scmp.le.s32.totalorder 1, %s19
    %p344 = scmp.lt.s32.totalorder %s19, 5
    %p345 = pnand %p343, %p344
    %p346 = pneg %p345
    // Predicated region
    $region9: #{msc_group_forward.1} parent=5 // pred_check
      _
    $region10: #{msc_group_forward.1} parent=5 // pred_check_branch
      %348 = sbr.rel (%p345) target = $region12
    $region11: #{msc_group_forward.1} parent=5 // pred_region
      %s349 = ssub.s32 %s19, 1
      // Predicated region
      $region13: #{msc_group_forward.1} parent=11 // pred_check
        %p350 = pneg %p78
      $region14: #{msc_group_forward.1} parent=11 // pred_check_branch
        %352 = sbr.rel (%p350) target = $region16
      $region15: #{msc_group_forward.1} parent=11 // pred_region
        _
      $region16: #{msc_group_forward.1} parent=11 // pred_fallthru
        _
      // Predicated region
      $region17: #{msc_group_forward.1} parent=11 // pred_check
        %p353 = pneg %p99
      $region18: #{msc_group_forward.1} parent=11 // pred_check_branch
        %355 = sbr.rel (%p353) target = $region20
      $region19: #{msc_group_forward.1} parent=11 // pred_region
        _
      $region20: #{msc_group_forward.1} parent=11 // pred_fallthru
        _
      // Predicated region
      $region21: #{msc_group_forward.1} parent=11 // pred_check
        %p356 = pneg %p120
      $region22: #{msc_group_forward.1} parent=11 // pred_check_branch
        %358 = sbr.rel (%p356) target = $region24
      $region23: #{msc_group_forward.1} parent=11 // pred_region
        _
      $region24: #{msc_group_forward.1} parent=11 // pred_fallthru
        _
      // Predicated region
      $region25: #{msc_group_forward.1} parent=11 // pred_check
        %p359 = pneg %p141
      $region26: #{msc_group_forward.1} parent=11 // pred_check_branch
        %361 = sbr.rel (%p359) target = $region28
      $region27: #{msc_group_forward.1} parent=11 // pred_region
        _
      $region28: #{msc_group_forward.1} parent=11 // pred_fallthru
        _
      // Predicated region
      $region29: #{msc_group_forward.1} parent=11 // pred_check
        %p362 = pneg %p162
      $region30: #{msc_group_forward.1} parent=11 // pred_check_branch
        %364 = sbr.rel (%p362) target = $region32
      $region31: #{msc_group_forward.1} parent=11 // pred_region
        _
      $region32: #{msc_group_forward.1} parent=11 // pred_fallthru
        _
      // Predicated region
      $region33: #{msc_group_forward.1} parent=11 // pred_check
        %p365 = pneg %p183
      $region34: #{msc_group_forward.1} parent=11 // pred_check_branch
        %367 = sbr.rel (%p365) target = $region36
      $region35: #{msc_group_forward.1} parent=11 // pred_region
        _
      $region36: #{msc_group_forward.1} parent=11 // pred_fallthru
        _
      // Predicated region
      $region37: #{msc_group_forward.1} parent=11 // pred_check
        %p368 = pneg %p204
      $region38: #{msc_group_forward.1} parent=11 // pred_check_branch
        %370 = sbr.rel (%p368) target = $region40
      $region39: #{msc_group_forward.1} parent=11 // pred_region
        _
      $region40: #{msc_group_forward.1} parent=11 // pred_fallthru
        _
      // Predicated region
      $region41: #{msc_group_forward.1} parent=11 // pred_check
        %p371 = pneg %p225
      $region42: #{msc_group_forward.1} parent=11 // pred_check_branch
        %373 = sbr.rel (%p371) target = $region44
      $region43: #{msc_group_forward.1} parent=11 // pred_region
        _
      $region44: #{msc_group_forward.1} parent=11 // pred_fallthru
        _
      // Predicated region
      $region45: #{msc_group_forward.1} parent=11 // pred_check
        %p374 = pneg %p246
      $region46: #{msc_group_forward.1} parent=11 // pred_check_branch
        %376 = sbr.rel (%p374) target = $region48
      $region47: #{msc_group_forward.1} parent=11 // pred_region
        _
      $region48: #{msc_group_forward.1} parent=11 // pred_fallthru
        _
      // Predicated region
      $region49: #{msc_group_forward.1} parent=11 // pred_check
        %p377 = pneg %p267
      $region50: #{msc_group_forward.1} parent=11 // pred_check_branch
        %379 = sbr.rel (%p377) target = $region52
      $region51: #{msc_group_forward.1} parent=11 // pred_region
        _
      $region52: #{msc_group_forward.1} parent=11 // pred_fallthru
        _
      // Predicated region
      $region53: #{msc_group_forward.1} parent=11 // pred_check
        %p380 = pneg %p288
      $region54: #{msc_group_forward.1} parent=11 // pred_check_branch
        %382 = sbr.rel (%p380) target = $region56
      $region55: #{msc_group_forward.1} parent=11 // pred_region
        _
      $region56: #{msc_group_forward.1} parent=11 // pred_fallthru
        _
      // Predicated region
      $region57: #{msc_group_forward.1} parent=11 // pred_check
        %p383 = pneg %p309
      $region58: #{msc_group_forward.1} parent=11 // pred_check_branch
        %385 = sbr.rel (%p383) target = $region60
      $region59: #{msc_group_forward.1} parent=11 // pred_region
        _
      $region60: #{msc_group_forward.1} parent=11 // pred_fallthru
        _
    $region12: #{msc_group_forward.1} parent=5 // pred_fallthru
      _
    %p386 = scmp.lt.s32.totalorder %s19, 4
    // Predicated region
    $region61: #{msc_group_forward.1} parent=5 // pred_check
      %p387 = pneg %p386
    $region62: #{msc_group_forward.1} parent=5 // pred_check_branch
      %389 = sbr.rel (%p387) target = $region64
    $region63: #{msc_group_forward.1} parent=5 // pred_region
      // Predicated region
      $region65: #{msc_group_forward.1} parent=63 // pred_check
        %p390 = pneg %p51
      $region66: #{msc_group_forward.1} parent=63 // pred_check_branch
        %392 = sbr.rel (%p390) target = $region68
      $region67: #{msc_group_forward.1} parent=63 // pred_region
        %p393 = scmp.lt.s32.totalorder %s26, 1
        %s394 = scalar_select %p393, %s26, 1
        %s395 = smul.addr %s394, 4
        %s396 = smul.addr %s395, 8
        %s397 = scalar_lea.vmem %s0, %s396
      $region68: #{msc_group_forward.1} parent=63 // pred_fallthru
        _
    $region64: #{msc_group_forward.1} parent=5 // pred_fallthru
      _
    %p398 = scmp.le.s32.totalorder 1, %s19
    %p399 = scmp.lt.s32.totalorder %s19, 5
    %p400 = pnand %p398, %p399
    %p401 = pneg %p400
    // Predicated region
    $region69: #{msc_group_forward.1} parent=5 // pred_check
      _
    $region70: #{msc_group_forward.1} parent=5 // pred_check_branch
      %403 = sbr.rel (%p400) target = $region72
    $region71: #{msc_group_forward.1} parent=5 // pred_region
      %s404 = ssub.s32 %s19, 1
      %p405 = scmp.lt.s32.totalorder %s28, 1
      %s406 = scalar_select %p405, %s28, 1
      %s407 = smul.addr %s406, 4
      %s408 = smul.addr %s407, 8
      %s409 = scalar_lea.vmem %s0, %s408
      %p410 = pneg %p57
      %p411 = pneg %p54
      %p412 = pneg %p78
      %p413 = pneg %p75
      %p414 = pneg %p99
      %p415 = pneg %p96
      %p416 = pneg %p120
      %p417 = pneg %p117
      %p418 = pneg %p141
      %p419 = pneg %p138
      %p420 = pneg %p162
      %p421 = pneg %p159
      %p422 = pneg %p183
      %p423 = pneg %p180
      %p424 = pneg %p204
      %p425 = pneg %p201
      %p426 = pneg %p225
      %p427 = pneg %p222
      %p428 = pneg %p246
      %p429 = pneg %p243
      %p430 = pneg %p267
      %p431 = pneg %p264
      %p432 = pneg %p288
      %p433 = pneg %p285
      %p434 = pneg %p309
      %p435 = pneg %p306
      %p436 = pneg %p335
      %p437 = pneg %p332
      %p438 = scmp.lt.s32.totalorder %s28, 1
      %s439 = scalar_select %p438, %s28, 1
      %s440 = smul.addr %s439, 4
      %s441 = smul.addr %s440, 8
      %s442 = scalar_lea.vmem %s13, %s441
      %p443 = scmp.lt.s32.totalorder %s28, 1
      %s444 = scalar_select %p443, %s28, 1
      %s445 = smul.addr %s444, 4
      %s446 = smul.addr %s445, 8
      %s447 = scalar_lea.vmem %s0, %s446
      %p448 = scmp.lt.s32.totalorder %s28, 1
      %s449 = scalar_select %p448, %s28, 1
      %s450 = smul.addr %s449, 4
      %s451 = smul.addr %s450, 8
      %s452 = scalar_lea.vmem %s13, %s451
      %p453 = scmp.eq.s32.totalorder %s29, 0
      // Predicated region
      $region73: #{msc_group_forward.1} parent=71 // pred_check
        %p454 = pneg %p453
      $region74: #{msc_group_forward.1} parent=71 // pred_check_branch
        %456 = sbr.rel (%p454) target = $region76
      $region75: #{msc_group_forward.1} parent=71 // pred_region
        %457 = vst [vmem:[#allocation2] sm:$0xff] 0.0
        %458 = vst [vmem:[#allocation2 + $0x8] sm:$0xff] 0.0
        %vm459 = vcmask 834560
        %460 = vst.msk [vmem:[#allocation2 + $0x10] sm:$0xff] %vm459, 0.0
        %461 = vst [vmem:[#allocation2 + $0x18] sm:$0xff] 0.0
        %462 = vst [vmem:[#allocation2 + $0x20] sm:$0xff] 0.0
        %463 = vst.msk [vmem:[#allocation2 + $0x28] sm:$0xff] %vm459, 0.0
        %v464 = vld [vmem:[%s447] sm:$0xff]
        %v465 = vld [vmem:[%s447 + $0x8] sm:$0xff]
        %v466 = vld [vmem:[%s447 + $0x10] sm:$0xff]
        %v467 = vld [vmem:[%s447 + $0x18] sm:$0xff]
        %468 = vst [vmem:[%s452] sm:$0xff] %v464
        %469 = vst [vmem:[%s452 + $0x8] sm:$0xff] %v465
        %470 = vst [vmem:[%s452 + $0x10] sm:$0xff] %v466
        %471 = vst [vmem:[%s452 + $0x18] sm:$0xff] %v467
      $region76: #{msc_group_forward.1} parent=71 // pred_fallthru
        _
      %v472 = vld [vmem:[%s452] sm:$0xff]
      %v473 = vld [vmem:[%s452 + $0x8] sm:$0xff]
      %v474 = vld [vmem:[%s452 + $0x10] sm:$0xff]
      %v475 = vld [vmem:[%s452 + $0x18] sm:$0xff]
      %s476 = smul.u32 %s29, 6
      %s477 = smul.addr %s476, 8
      %s478 = scalar_lea.vmem %s1, %s477
      %v479 = vld [vmem:[%s478] sm:$0xff]
      %v480 = vld [vmem:[%s478 + $0x8] sm:$0xff]
      %v481 = vld [vmem:[%s478 + $0x10] sm:$0xff]
      %v482 = vld [vmem:[%s478 + $0x18] sm:$0xff]
      %v483 = vld [vmem:[%s478 + $0x20] sm:$0xff]
      %v484 = vld [vmem:[%s478 + $0x28] sm:$0xff]
      %s485 = smul.u32 %s29, 24
      %s486 = scalar_lea.vmem %s2, %s485
      %v487 = vld [vmem:[%s486] sm:$0xff]
      %v488 = vld [vmem:[%s486 + $0x8] sm:$0xff]
      %v489 = vld [vmem:[%s486 + $0x10] sm:$0xff]
      %v490 = vld [vmem:[%s12] ss:$8 sm:$0x3]
      %s491 = scalar_lea.vmem %s12, 1
      %v492 = vld [vmem:[%s491] ss:$8 sm:$0x3]
      %497 = vrot.lane.b32.xlu0 %v472, 51
      %v498 = vpop.permute.xlu0 %497
      %499 = vrot.lane.b32.xlu0 %v473, 51
      %v500 = vpop.permute.xlu0 %499
      %501 = vrot.lane.b32.xlu0 %v474, 51
      %v502 = vpop.permute.xlu0 %501
      %503 = vrot.lane.b32.xlu0 %v475, 51
      %v504 = vpop.permute.xlu0 %503
      %vm505 = vcmask 416768
      %v506 = vsel %vm505, %v498, %v500
      %v507 = vsel %vm505, %v502, %v504
      %vm514 = vcmask 1047960
      %515 = vst.msk [vmem:[#allocation2] sm:$0xff] %vm514, %v498
      %516 = vst [vmem:[#allocation2 + $0x8] sm:$0xff] %v506
      %517 = vst.msk [vmem:[#allocation2 + $0x10] sm:$0xff] %vm505, %v500
      %518 = vst.msk [vmem:[#allocation2 + $0x18] sm:$0xff] %vm514, %v502
      %519 = vst [vmem:[#allocation2 + $0x20] sm:$0xff] %v507
      %520 = vst.msk [vmem:[#allocation2 + $0x28] sm:$0xff] %vm505, %v504
      %v521 = vld [vmem:[#allocation2] sm:$0xff]
      %v522 = vld [vmem:[#allocation2 + $0x8] sm:$0xff]
      %v523 = vld [vmem:[#allocation2 + $0x10] sm:$0xff]
      %v524 = vld [vmem:[#allocation2 + $0x18] sm:$0xff]
      %v525 = vld [vmem:[#allocation2 + $0x20] sm:$0xff]
      %v526 = vld [vmem:[#allocation2 + $0x28] sm:$0xff]
      %v528 = vlaneseq
      %v529 = vshrl.u32 %v528, 7
      %v530 = vsub.s32 0, %v529
      %v531 = vrot.slane %v490, %v530
      %v532 = vlaneseq
      %v533 = vshrl.u32 %v532, 7
      %v534 = vsub.s32 1, %v533
      %v535 = vrot.slane %v490, %v534
      %536 = vrot.lane.b32.xlu0 %v531, 34
      %v537 = vpop.permute.xlu0 %536
      %538 = vrot.lane.b32.xlu0 %v535, 34
      %v539 = vpop.permute.xlu0 %538
      %vm540 = vcmask 277504
      %v541 = vsel %vm540, %v537, %v539
      %v545 = vmul.f32 %v521, %v537
      %v546 = vmul.f32 %v522, %v541
      %v547 = vmul.f32 %v523, %v539
      %v548 = vmul.f32 %v524, %v537
      %v549 = vmul.f32 %v525, %v541
      %v550 = vmul.f32 %v526, %v539
      %557 = vrot.lane.b32.xlu0 %v545, 94
      %v558 = vpop.permute.xlu0 %557
      %559 = vrot.lane.b32.xlu0 %v546, 94
      %v560 = vpop.permute.xlu0 %559
      %561 = vrot.lane.b32.xlu0 %v547, 94
      %v562 = vpop.permute.xlu0 %561
      %563 = vrot.lane.b32.xlu0 %v548, 94
      %v564 = vpop.permute.xlu0 %563
      %565 = vrot.lane.b32.xlu0 %v549, 94
      %v566 = vpop.permute.xlu0 %565
      %567 = vrot.lane.b32.xlu0 %v550, 94
      %v568 = vpop.permute.xlu0 %567
      %vm569 = vcmask 769024
      %v570 = vsel %vm569, %v558, %v560
      %v571 = vsel %vm569, %v560, %v562
      %v572 = vsel %vm569, %v564, %v566
      %v573 = vsel %vm569, %v566, %v568
      %578 = vst [vmem:[#allocation3] sm:$0xff] %v570
      %579 = vst [vmem:[#allocation3 + $0x8] sm:$0xff] %v571
      %580 = vst [vmem:[#allocation3 + $0x10] sm:$0xff] %v572
      %581 = vst [vmem:[#allocation3 + $0x18] sm:$0xff] %v573
      %v582 = vld [vmem:[#allocation2] sm:$0xff]
      %v583 = vld [vmem:[#allocation2 + $0x8] sm:$0xff]
      %v584 = vld [vmem:[#allocation2 + $0x10] sm:$0xff]
      %v585 = vld [vmem:[#allocation2 + $0x18] sm:$0xff]
      %v586 = vld [vmem:[#allocation2 + $0x20] sm:$0xff]
      %v587 = vld [vmem:[#allocation2 + $0x28] sm:$0xff]
      %594 = vrot.lane.b32.xlu0 %v582, 93
      %v595 = vpop.permute.xlu0 %594
      %596 = vrot.lane.b32.xlu0 %v583, 93
      %v597 = vpop.permute.xlu0 %596
      %598 = vrot.lane.b32.xlu0 %v584, 93
      %v599 = vpop.permute.xlu0 %598
      %600 = vrot.lane.b32.xlu0 %v585, 93
      %v601 = vpop.permute.xlu0 %600
      %602 = vrot.lane.b32.xlu0 %v586, 93
      %v603 = vpop.permute.xlu0 %602
      %604 = vrot.lane.b32.xlu0 %v587, 93
      %v605 = vpop.permute.xlu0 %604
      %vm606 = vcmask 760832
      %v607 = vsel %vm606, %v595, %v597
      %v608 = vsel %vm606, %v597, %v599
      %v609 = vsel %vm606, %v601, %v603
      %v610 = vsel %vm606, %v603, %v605
      %615 = vst [vmem:[#allocation3 + $0x20] sm:$0xff] %v607
      %616 = vst [vmem:[#allocation3 + $0x28] sm:$0xff] %v608
      %617 = vst [vmem:[#allocation3 + $0x30] sm:$0xff] %v609
      %618 = vst [vmem:[#allocation3 + $0x38] sm:$0xff] %v610
      %v619 = vld [vmem:[#allocation2] sm:$0xff]
      %v620 = vld [vmem:[#allocation2 + $0x8] sm:$0xff]
      %v621 = vld [vmem:[#allocation2 + $0x10] sm:$0xff]
      %v622 = vld [vmem:[#allocation2 + $0x18] sm:$0xff]
      %v623 = vld [vmem:[#allocation2 + $0x20] sm:$0xff]
      %v624 = vld [vmem:[#allocation2 + $0x28] sm:$0xff]
      %v626 = vlaneseq
      %v627 = vshrl.u32 %v626, 7
      %v628 = vsub.s32 0, %v627
      %v629 = vrot.slane %v492, %v628
      %v630 = vlaneseq
      %v631 = vshrl.u32 %v630, 7
      %v632 = vsub.s32 1, %v631
      %v633 = vrot.slane %v492, %v632
      %634 = vrot.lane.b32.xlu0 %v629, 36
      %v635 = vpop.permute.xlu0 %634
      %636 = vrot.lane.b32.xlu0 %v633, 36
      %v637 = vpop.permute.xlu0 %636
      %vm638 = vcmask 293888
      %v639 = vsel %vm638, %v635, %v637
      %v643 = vmul.f32 %v619, %v635
      %v644 = vmul.f32 %v620, %v639
      %v645 = vmul.f32 %v621, %v637
      %v646 = vmul.f32 %v622, %v635
      %v647 = vmul.f32 %v623, %v639
      %v648 = vmul.f32 %v624, %v637
      %655 = vrot.lane.b32.xlu0 %v643, 92
      %v656 = vpop.permute.xlu0 %655
      %657 = vrot.lane.b32.xlu0 %v644, 92
      %v658 = vpop.permute.xlu0 %657
      %659 = vrot.lane.b32.xlu0 %v645, 92
      %v660 = vpop.permute.xlu0 %659
      %661 = vrot.lane.b32.xlu0 %v646, 92
      %v662 = vpop.permute.xlu0 %661
      %663 = vrot.lane.b32.xlu0 %v647, 92
      %v664 = vpop.permute.xlu0 %663
      %665 = vrot.lane.b32.xlu0 %v648, 92
      %v666 = vpop.permute.xlu0 %665
      %vm667 = vcmask 752640
      %v668 = vsel %vm667, %v656, %v658
      %v669 = vsel %vm667, %v658, %v660
      %v670 = vsel %vm667, %v662, %v664
      %v671 = vsel %vm667, %v664, %v666
      %676 = vst [vmem:[#allocation3 + $0x40] sm:$0xff] %v668
      %677 = vst [vmem:[#allocation3 + $0x48] sm:$0xff] %v669
      %678 = vst [vmem:[#allocation3 + $0x50] sm:$0xff] %v670
      %679 = vst [vmem:[#allocation3 + $0x58] sm:$0xff] %v671
      %v680 = vld [vmem:[#allocation2] sm:$0xff]
      %v681 = vld [vmem:[#allocation2 + $0x8] sm:$0xff]
      %v682 = vld [vmem:[#allocation2 + $0x10] sm:$0xff]
      %v683 = vld [vmem:[#allocation2 + $0x18] sm:$0xff]
      %v684 = vld [vmem:[#allocation2 + $0x20] sm:$0xff]
      %v685 = vld [vmem:[#allocation2 + $0x28] sm:$0xff]
      %686 = vrot.lane.b32.xlu0 %v531, 50
      %v687 = vpop.permute.xlu0 %686
      %688 = vrot.lane.b32.xlu0 %v535, 50
      %v689 = vpop.permute.xlu0 %688
      %vm690 = vcmask 408576
      %v691 = vsel %vm690, %v687, %v689
      %v695 = vmul.f32 %v680, %v687
      %v696 = vmul.f32 %v681, %v691
      %v697 = vmul.f32 %v682, %v689
      %v698 = vmul.f32 %v683, %v687
      %v699 = vmul.f32 %v684, %v691
      %v700 = vmul.f32 %v685, %v689
      %707 = vrot.lane.b32.xlu0 %v695, 78
      %v708 = vpop.permute.xlu0 %707
      %709 = vrot.lane.b32.xlu0 %v696, 78
      %v710 = vpop.permute.xlu0 %709
      %711 = vrot.lane.b32.xlu0 %v697, 78
      %v712 = vpop.permute.xlu0 %711
      %713 = vrot.lane.b32.xlu0 %v698, 78
      %v714 = vpop.permute.xlu0 %713
      %715 = vrot.lane.b32.xlu0 %v699, 78
      %v716 = vpop.permute.xlu0 %715
      %717 = vrot.lane.b32.xlu0 %v700, 78
      %v718 = vpop.permute.xlu0 %717
      %vm719 = vcmask 637952
      %v720 = vsel %vm719, %v708, %v710
      %v721 = vsel %vm719, %v710, %v712
      %v722 = vsel %vm719, %v714, %v716
      %v723 = vsel %vm719, %v716, %v718
      %728 = vst [vmem:[#allocation3 + $0x60] sm:$0xff] %v720
      %729 = vst [vmem:[#allocation3 + $0x68] sm:$0xff] %v721
      %730 = vst [vmem:[#allocation3 + $0x70] sm:$0xff] %v722
      %731 = vst [vmem:[#allocation3 + $0x78] sm:$0xff] %v723
      %v732 = vld [vmem:[#allocation2] sm:$0xff]
      %v733 = vld [vmem:[#allocation2 + $0x8] sm:$0xff]
      %v734 = vld [vmem:[#allocation2 + $0x10] sm:$0xff]
      %v735 = vld [vmem:[#allocation2 + $0x18] sm:$0xff]
      %v736 = vld [vmem:[#allocation2 + $0x20] sm:$0xff]
      %v737 = vld [vmem:[#allocation2 + $0x28] sm:$0xff]
      %744 = vrot.lane.b32.xlu0 %v732, 77
      %v745 = vpop.permute.xlu0 %744
      %746 = vrot.lane.b32.xlu0 %v733, 77
      %v747 = vpop.permute.xlu0 %746
      %748 = vrot.lane.b32.xlu0 %v734, 77
      %v749 = vpop.permute.xlu0 %748
      %750 = vrot.lane.b32.xlu0 %v735, 77
      %v751 = vpop.permute.xlu0 %750
      %752 = vrot.lane.b32.xlu0 %v736, 77
      %v753 = vpop.permute.xlu0 %752
      %754 = vrot.lane.b32.xlu0 %v737, 77
      %v755 = vpop.permute.xlu0 %754
      %vm756 = vcmask 629760
      %v757 = vsel %vm756, %v745, %v747
      %v758 = vsel %vm756, %v747, %v749
      %v759 = vsel %vm756, %v751, %v753
      %v760 = vsel %vm756, %v753, %v755
      %765 = vst [vmem:[#allocation3 + $0x80] sm:$0xff] %v757
      %766 = vst [vmem:[#allocation3 + $0x88] sm:$0xff] %v758
      %767 = vst [vmem:[#allocation3 + $0x90] sm:$0xff] %v759
      %768 = vst [vmem:[#allocation3 + $0x98] sm:$0xff] %v760
      %v769 = vld [vmem:[#allocation2] sm:$0xff]
      %v770 = vld [vmem:[#allocation2 + $0x8] sm:$0xff]
      %v771 = vld [vmem:[#allocation2 + $0x10] sm:$0xff]
      %v772 = vld [vmem:[#allocation2 + $0x18] sm:$0xff]
      %v773 = vld [vmem:[#allocation2 + $0x20] sm:$0xff]
      %v774 = vld [vmem:[#allocation2 + $0x28] sm:$0xff]
      %775 = vrot.lane.b32.xlu0 %v629, 52
      %v776 = vpop.permute.xlu0 %775
      %777 = vrot.lane.b32.xlu0 %v633, 52
      %v778 = vpop.permute.xlu0 %777
      %vm779 = vcmask 424960
      %v780 = vsel %vm779, %v776, %v778
      %v784 = vmul.f32 %v769, %v776
      %v785 = vmul.f32 %v770, %v780
      %v786 = vmul.f32 %v771, %v778
      %v787 = vmul.f32 %v772, %v776
      %v788 = vmul.f32 %v773, %v780
      %v789 = vmul.f32 %v774, %v778
      %796 = vrot.lane.b32.xlu0 %v784, 76
      %v797 = vpop.permute.xlu0 %796
      %798 = vrot.lane.b32.xlu0 %v785, 76
      %v799 = vpop.permute.xlu0 %798
      %800 = vrot.lane.b32.xlu0 %v786, 76
      %v801 = vpop.permute.xlu0 %800
      %802 = vrot.lane.b32.xlu0 %v787, 76
      %v803 = vpop.permute.xlu0 %802
      %804 = vrot.lane.b32.xlu0 %v788, 76
      %v805 = vpop.permute.xlu0 %804
      %806 = vrot.lane.b32.xlu0 %v789, 76
      %v807 = vpop.permute.xlu0 %806
      %vm808 = vcmask 621568
      %v809 = vsel %vm808, %v797, %v799
      %v810 = vsel %vm808, %v799, %v801
      %v811 = vsel %vm808, %v803, %v805
      %v812 = vsel %vm808, %v805, %v807
      %817 = vst [vmem:[#allocation3 + $0xa0] sm:$0xff] %v809
      %818 = vst [vmem:[#allocation3 + $0xa8] sm:$0xff] %v810
      %819 = vst [vmem:[#allocation3 + $0xb0] sm:$0xff] %v811
      %820 = vst [vmem:[#allocation3 + $0xb8] sm:$0xff] %v812
      %v821 = vld [vmem:[#allocation2] sm:$0xff]
      %v822 = vld [vmem:[#allocation2 + $0x8] sm:$0xff]
      %v823 = vld [vmem:[#allocation2 + $0x10] sm:$0xff]
      %v824 = vld [vmem:[#allocation2 + $0x18] sm:$0xff]
      %v825 = vld [vmem:[#allocation2 + $0x20] sm:$0xff]
      %v826 = vld [vmem:[#allocation2 + $0x28] sm:$0xff]
      %827 = vrot.lane.b32.xlu0 %v531, 66
      %v828 = vpop.permute.xlu0 %827
      %829 = vrot.lane.b32.xlu0 %v535, 66
      %v830 = vpop.permute.xlu0 %829
      %vm831 = vcmask 539648
      %v832 = vsel %vm831, %v828, %v830
      %v836 = vmul.f32 %v821, %v828
      %v837 = vmul.f32 %v822, %v832
      %v838 = vmul.f32 %v823, %v830
      %v839 = vmul.f32 %v824, %v828
      %v840 = vmul.f32 %v825, %v832
      %v841 = vmul.f32 %v826, %v830
      %848 = vrot.lane.b32.xlu0 %v836, 62
      %v849 = vpop.permute.xlu0 %848
      %850 = vrot.lane.b32.xlu0 %v837, 62
      %v851 = vpop.permute.xlu0 %850
      %852 = vrot.lane.b32.xlu0 %v838, 62
      %v853 = vpop.permute.xlu0 %852
      %854 = vrot.lane.b32.xlu0 %v839, 62
      %v855 = vpop.permute.xlu0 %854
      %856 = vrot.lane.b32.xlu0 %v840, 62
      %v857 = vpop.permute.xlu0 %856
      %858 = vrot.lane.b32.xlu0 %v841, 62
      %v859 = vpop.permute.xlu0 %858
      %vm860 = vcmask 506880
      %v861 = vsel %vm860, %v849, %v851
      %v862 = vsel %vm860, %v851, %v853
      %v863 = vsel %vm860, %v855, %v857
      %v864 = vsel %vm860, %v857, %v859
      %869 = vst [vmem:[#allocation3 + $0xc0] sm:$0xff] %v861
      %870 = vst [vmem:[#allocation3 + $0xc8] sm:$0xff] %v862
      %871 = vst [vmem:[#allocation3 + $0xd0] sm:$0xff] %v863
      %872 = vst [vmem:[#allocation3 + $0xd8] sm:$0xff] %v864
      %v873 = vld [vmem:[#allocation2] sm:$0xff]
      %v874 = vld [vmem:[#allocation2 + $0x8] sm:$0xff]
      %v875 = vld [vmem:[#allocation2 + $0x10] sm:$0xff]
      %v876 = vld [vmem:[#allocation2 + $0x18] sm:$0xff]
      %v877 = vld [vmem:[#allocation2 + $0x20] sm:$0xff]
      %v878 = vld [vmem:[#allocation2 + $0x28] sm:$0xff]
      %885 = vrot.lane.b32.xlu0 %v873, 61
      %v886 = vpop.permute.xlu0 %885
      %887 = vrot.lane.b32.xlu0 %v874, 61
      %v888 = vpop.permute.xlu0 %887
      %889 = vrot.lane.b32.xlu0 %v875, 61
      %v890 = vpop.permute.xlu0 %889
      %891 = vrot.lane.b32.xlu0 %v876, 61
      %v892 = vpop.permute.xlu0 %891
      %893 = vrot.lane.b32.xlu0 %v877, 61
      %v894 = vpop.permute.xlu0 %893
      %895 = vrot.lane.b32.xlu0 %v878, 61
      %v896 = vpop.permute.xlu0 %895
      %vm897 = vcmask 498688
      %v898 = vsel %vm897, %v886, %v888
      %v899 = vsel %vm897, %v888, %v890
      %v900 = vsel %vm897, %v892, %v894
      %v901 = vsel %vm897, %v894, %v896
      %906 = vst [vmem:[#allocation3 + $0xe0] sm:$0xff] %v898
      %907 = vst [vmem:[#allocation3 + $0xe8] sm:$0xff] %v899
      %908 = vst [vmem:[#allocation3 + $0xf0] sm:$0xff] %v900
      %909 = vst [vmem:[#allocation3 + $0xf8] sm:$0xff] %v901
      %v910 = vld [vmem:[#allocation2] sm:$0xff]
      %v911 = vld [vmem:[#allocation2 + $0x8] sm:$0xff]
      %v912 = vld [vmem:[#allocation2 + $0x10] sm:$0xff]
      %v913 = vld [vmem:[#allocation2 + $0x18] sm:$0xff]
      %v914 = vld [vmem:[#allocation2 + $0x20] sm:$0xff]
      %v915 = vld [vmem:[#allocation2 + $0x28] sm:$0xff]
      %916 = vrot.lane.b32.xlu0 %v629, 68
      %v917 = vpop.permute.xlu0 %916
      %918 = vrot.lane.b32.xlu0 %v633, 68
      %v919 = vpop.permute.xlu0 %918
      %vm920 = vcmask 556032
      %v921 = vsel %vm920, %v917, %v919
      %v925 = vmul.f32 %v910, %v917
      %v926 = vmul.f32 %v911, %v921
      %v927 = vmul.f32 %v912, %v919
      %v928 = vmul.f32 %v913, %v917
      %v929 = vmul.f32 %v914, %v921
      %v930 = vmul.f32 %v915, %v919
      %937 = vrot.lane.b32.xlu0 %v925, 60
      %v938 = vpop.permute.xlu0 %937
      %939 = vrot.lane.b32.xlu0 %v926, 60
      %v940 = vpop.permute.xlu0 %939
      %941 = vrot.lane.b32.xlu0 %v927, 60
      %v942 = vpop.permute.xlu0 %941
      %943 = vrot.lane.b32.xlu0 %v928, 60
      %v944 = vpop.permute.xlu0 %943
      %945 = vrot.lane.b32.xlu0 %v929, 60
      %v946 = vpop.permute.xlu0 %945
      %947 = vrot.lane.b32.xlu0 %v930, 60
      %v948 = vpop.permute.xlu0 %947
      %vm949 = vcmask 490496
      %v950 = vsel %vm949, %v938, %v940
      %v951 = vsel %vm949, %v940, %v942
      %v952 = vsel %vm949, %v944, %v946
      %v953 = vsel %vm949, %v946, %v948
      %958 = vst [vmem:[#allocation3 + $0x100] sm:$0xff] %v950
      %959 = vst [vmem:[#allocation3 + $0x108] sm:$0xff] %v951
      %960 = vst [vmem:[#allocation3 + $0x110] sm:$0xff] %v952
      %961 = vst [vmem:[#allocation3 + $0x118] sm:$0xff] %v953
      %v962 = vld [vmem:[#allocation3] sm:$0xff]
      %v963 = vld [vmem:[#allocation3 + $0x8] sm:$0xff]
      %v964 = vld [vmem:[#allocation3 + $0x10] sm:$0xff]
      %v965 = vld [vmem:[#allocation3 + $0x18] sm:$0xff]
      %v966 = vld [vmem:[#allocation3 + $0x20] sm:$0xff]
      %v967 = vld [vmem:[#allocation3 + $0x28] sm:$0xff]
      %v968 = vld [vmem:[#allocation3 + $0x30] sm:$0xff]
      %v969 = vld [vmem:[#allocation3 + $0x38] sm:$0xff]
      %v970 = vld [vmem:[#allocation3 + $0x40] sm:$0xff]
      %v971 = vld [vmem:[#allocation3 + $0x48] sm:$0xff]
      %v972 = vld [vmem:[#allocation3 + $0x50] sm:$0xff]
      %v973 = vld [vmem:[#allocation3 + $0x58] sm:$0xff]
      %v974 = vld [vmem:[#allocation3 + $0x60] sm:$0xff]
      %v975 = vld [vmem:[#allocation3 + $0x68] sm:$0xff]
      %v976 = vld [vmem:[#allocation3 + $0x70] sm:$0xff]
      %v977 = vld [vmem:[#allocation3 + $0x78] sm:$0xff]
      %v978 = vld [vmem:[#allocation3 + $0x80] sm:$0xff]
      %v979 = vld [vmem:[#allocation3 + $0x88] sm:$0xff]
      %v980 = vld [vmem:[#allocation3 + $0x90] sm:$0xff]
      %v981 = vld [vmem:[#allocation3 + $0x98] sm:$0xff]
      %v982 = vld [vmem:[#allocation3 + $0xa0] sm:$0xff]
      %v983 = vld [vmem:[#allocation3 + $0xa8] sm:$0xff]
      %v984 = vld [vmem:[#allocation3 + $0xb0] sm:$0xff]
      %v985 = vld [vmem:[#allocation3 + $0xb8] sm:$0xff]
      %v986 = vld [vmem:[#allocation3 + $0xc0] sm:$0xff]
      %v987 = vld [vmem:[#allocation3 + $0xc8] sm:$0xff]
      %v988 = vld [vmem:[#allocation3 + $0xd0] sm:$0xff]
      %v989 = vld [vmem:[#allocation3 + $0xd8] sm:$0xff]
      %v990 = vld [vmem:[#allocation3 + $0xe0] sm:$0xff]
      %v991 = vld [vmem:[#allocation3 + $0xe8] sm:$0xff]
      %v992 = vld [vmem:[#allocation3 + $0xf0] sm:$0xff]
      %v993 = vld [vmem:[#allocation3 + $0xf8] sm:$0xff]
      %v994 = vld [vmem:[#allocation3 + $0x100] sm:$0xff]
      %v995 = vld [vmem:[#allocation3 + $0x108] sm:$0xff]
      %v996 = vld [vmem:[#allocation3 + $0x110] sm:$0xff]
      %v997 = vld [vmem:[#allocation3 + $0x118] sm:$0xff]
      %999 = vset.pattern.permute.xlu0 0
      %1000 = vperm.xlu0 %999, %v487
      %v1001 = vpop.permute.xlu0 %1000
      %1004 = vset.pattern.permute.xlu0 0
      %1005 = vperm.xlu0 %1004, %v488
      %v1006 = vpop.permute.xlu0 %1005
      %1009 = vset.pattern.permute.xlu0 0
      %1010 = vperm.xlu0 %1009, %v489
      %v1011 = vpop.permute.xlu0 %1010
      %vm1013 = vcmask 130048
      %v1015 = vsel %vm1013, %v480, 0
      %v1018 = vsel %vm1013, %v482, 0
      %v1021 = vsel %vm1013, %v484, 0
      %1023 = vmatprep.subr.mxu0 %v963
      %1024 = vmatpush1.msra.mxu0 %v962
      %1025 = vmatprep.subr.mxu0 %v965
      %1026 = vmatpush1.msra.mxu0 %v964
      %1027 = vmatprep.subr.mxu0 %v967
      %1028 = vmatpush1.msra.mxu0 %v966
      %1029 = vmatprep.subr.mxu0 %v969
      %1030 = vmatpush1.msra.mxu0 %v968
      %1031 = vmatprep.subr.mxu0 %v971
      %1032 = vmatpush1.msra.mxu0 %v970
      %1033 = vmatprep.subr.mxu0 %v973
      %1034 = vmatpush1.msra.mxu0 %v972
      %1035 = vmatprep.subr.mxu0 %v975
      %1036 = vmatpush1.msra.mxu0 %v974
      %1037 = vmatprep.subr.mxu0 %v977
      %1038 = vmatpush1.msra.mxu0 %v976
      %1039 = vmatprep.subr.mxu0 %v979
      %1040 = vmatpush1.msra.mxu0 %v978
      %1041 = vmatprep.subr.mxu0 %v981
      %1042 = vmatpush1.msra.mxu0 %v980
      %1043 = vmatprep.subr.mxu0 %v983
      %1044 = vmatpush1.msra.mxu0 %v982
      %1045 = vmatprep.subr.mxu0 %v985
      %1046 = vmatpush1.msra.mxu0 %v984
      %1047 = vmatprep.subr.mxu0 %v987
      %1048 = vmatpush1.msra.mxu0 %v986
      %1049 = vmatprep.subr.mxu0 %v989
      %1050 = vmatpush1.msra.mxu0 %v988
      %1051 = vmatprep.subr.mxu0 %v991
      %1052 = vmatpush1.msra.mxu0 %v990
      %1053 = vmatprep.subr.mxu0 %v993
      %1054 = vmatpush1.msra.mxu0 %v992
      %1055 = vmatprep.subr.mxu0 %v995
      %1056 = vmatpush1.msra.mxu0 %v994
      %1057 = vmatprep.subr.mxu0 %v997
      %1058 = vmatpush1.msra.mxu0 %v996
      %1059 = vmatprep.subr.mxu0 0.0
      %1060 = vmatpush1.msra.mxu0 0.0
      %1061 = vmatprep.subr.mxu0 0.0
      %1062 = vmatpush1.msra.mxu0 0.0
      %1063 = vmatprep.subr.mxu0 0.0
      %1064 = vmatpush1.msra.mxu0 0.0
      %1065 = vmatprep.subr.mxu0 0.0
      %1066 = vmatpush1.msra.mxu0 0.0
      %1067 = vmatprep.subr.mxu0 0.0
      %1068 = vmatpush1.msra.mxu0 0.0
      %1069 = vmatprep.subr.mxu0 0.0
      %1070 = vmatpush1.msra.mxu0 0.0
      %1071 = vmatprep.subr.mxu0 0.0
      %1072 = vmatpush1.msra.mxu0 0.0
      %1073 = vmatprep.subr.mxu0 0.0
      %1074 = vmatpush1.msra.mxu0 0.0
      %1075 = vmatprep.subr.mxu0 0.0
      %1076 = vmatpush1.msra.mxu0 0.0
      %1077 = vmatprep.subr.mxu0 0.0
      %1078 = vmatpush1.msra.mxu0 0.0
      %1079 = vmatprep.subr.mxu0 0.0
      %1080 = vmatpush1.msra.mxu0 0.0
      %1081 = vmatprep.subr.mxu0 0.0
      %1082 = vmatpush1.msra.mxu0 0.0
      %1083 = vmatprep.subr.mxu0 0.0
      %1084 = vmatpush1.msra.mxu0 0.0
      %1085 = vmatprep.subr.mxu0 0.0
      %1086 = vmatpush1.msra.mxu0 0.0
      %1087 = vmatprep.mubr.f32.mxu0 %v1015
      %1088 = vmatmul.mubr.f32.gmra.mrb[0].mxu0 %v479
      %v1089 = vpop.f32.mrb[0].mxu0
      %v1090 = vadd.f32 %v1001, %v1089
      %v1091 = vpop.f32.mrb[0].mxu0
      %v1092 = vadd.f32 %v1001, %v1091
      %1093 = vmatprep.mubr.f32.mxu0 %v1018
      %1094 = vmatmul.mubr.f32.gmra.mrb[0].mxu0 %v481
      %v1095 = vpop.f32.mrb[0].mxu0
      %v1096 = vadd.f32 %v1006, %v1095
      %v1097 = vpop.f32.mrb[0].mxu0
      %v1098 = vadd.f32 %v1006, %v1097
      %1099 = vmatprep.mubr.f32.mxu0 %v1021
      %1100 = vmatmul.mubr.f32.gmra.mrb[0].mxu0 %v483
      %v1101 = vpop.f32.mrb[0].mxu0
      %v1102 = vadd.f32 %v1011, %v1101
      %v1103 = vpop.f32.mrb[0].mxu0
      %v1104 = vadd.f32 %v1011, %v1103
      %1105 = vdwg.mxu0
      %v1106 = vmax.f32 %v1090, 0.0
      %v1107 = vmax.f32 %v1092, 0.0
      %v1108 = vmax.f32 %v1096, 0.0
      %v1109 = vmax.f32 %v1098, 0.0
      %v1110 = vmax.f32 %v1102, 0.0
      %v1111 = vmax.f32 %v1104, 0.0
      %s1112 = smul.u32 %s29, 3
      %s1113 = smul.u32 %s1112, 16
      %s1114 = scalar_lea.vmem %s3, %s1113
      %v1115 = vld [vmem:[%s1114] sm:$0xff]
      %v1116 = vld [vmem:[%s1114 + $0x8] sm:$0xff]
      %s1117 = scalar_lea.vmem %s4, %s1113
      %v1118 = vld [vmem:[%s1117] sm:$0xff]
      %v1119 = vld [vmem:[%s1117 + $0x8] sm:$0xff]
      %v1120 = vld [vmem:[%s12] ss:$8 sm:$0x3]
      %v1121 = vld [vmem:[%s491] ss:$8 sm:$0x3]
      %1124 = vrot.lane.b32.xlu0 %v1106, 51
      %v1125 = vpop.permute.xlu0 %1124
      %1126 = vrot.lane.b32.xlu0 %v1107, 51
      %v1127 = vpop.permute.xlu0 %1126
      %v1128 = vsel %vm505, %v1125, %v1127
      %1132 = vst.msk [vmem:[#allocation2] sm:$0xff] %vm514, %v1125
      %1133 = vst [vmem:[#allocation2 + $0x8] sm:$0xff] %v1128
      %1134 = vst.msk [vmem:[#allocation2 + $0x10] sm:$0xff] %vm505, %v1127
      %v1135 = vld [vmem:[#allocation2] sm:$0xff]
      %v1136 = vld [vmem:[#allocation2 + $0x8] sm:$0xff]
      %v1137 = vld [vmem:[#allocation2 + $0x10] sm:$0xff]
      %v1139 = vlaneseq
      %v1140 = vshrl.u32 %v1139, 7
      %v1141 = vsub.s32 0, %v1140
      %v1142 = vrot.slane %v1120, %v1141
      %v1143 = vlaneseq
      %v1144 = vshrl.u32 %v1143, 7
      %v1145 = vsub.s32 1, %v1144
      %v1146 = vrot.slane %v1120, %v1145
      %1147 = vrot.lane.b32.xlu0 %v1142, 34
      %v1148 = vpop.permute.xlu0 %1147
      %1149 = vrot.lane.b32.xlu0 %v1146, 34
      %v1150 = vpop.permute.xlu0 %1149
      %v1151 = vsel %vm540, %v1148, %v1150
      %v1155 = vmul.f32 %v1135, %v1148
      %v1156 = vmul.f32 %v1136, %v1151
      %v1157 = vmul.f32 %v1137, %v1150
      %1161 = vrot.lane.b32.xlu0 %v1155, 94
      %v1162 = vpop.permute.xlu0 %1161
      %1163 = vrot.lane.b32.xlu0 %v1156, 94
      %v1164 = vpop.permute.xlu0 %1163
      %1165 = vrot.lane.b32.xlu0 %v1157, 94
      %v1166 = vpop.permute.xlu0 %1165
      %v1167 = vsel %vm569, %v1162, %v1164
      %v1168 = vsel %vm569, %v1164, %v1166
      %1171 = vst [vmem:[#allocation3] sm:$0xff] %v1167
      %1172 = vst [vmem:[#allocation3 + $0x8] sm:$0xff] %v1168
      %v1173 = vld [vmem:[#allocation2] sm:$0xff]
      %v1174 = vld [vmem:[#allocation2 + $0x8] sm:$0xff]
      %v1175 = vld [vmem:[#allocation2 + $0x10] sm:$0xff]
      %1179 = vrot.lane.b32.xlu0 %v1173, 93
      %v1180 = vpop.permute.xlu0 %1179
      %1181 = vrot.lane.b32.xlu0 %v1174, 93
      %v1182 = vpop.permute.xlu0 %1181
      %1183 = vrot.lane.b32.xlu0 %v1175, 93
      %v1184 = vpop.permute.xlu0 %1183
      %v1185 = vsel %vm606, %v1180, %v1182
      %v1186 = vsel %vm606, %v1182, %v1184
      %1189 = vst [vmem:[#allocation3 + $0x10] sm:$0xff] %v1185
      %1190 = vst [vmem:[#allocation3 + $0x18] sm:$0xff] %v1186
      %v1191 = vld [vmem:[#allocation2] sm:$0xff]
      %v1192 = vld [vmem:[#allocation2 + $0x8] sm:$0xff]
      %v1193 = vld [vmem:[#allocation2 + $0x10] sm:$0xff]
      %v1195 = vlaneseq
      %v1196 = vshrl.u32 %v1195, 7
      %v1197 = vsub.s32 0, %v1196
      %v1198 = vrot.slane %v1121, %v1197
      %v1199 = vlaneseq
      %v1200 = vshrl.u32 %v1199, 7
      %v1201 = vsub.s32 1, %v1200
      %v1202 = vrot.slane %v1121, %v1201
      %1203 = vrot.lane.b32.xlu0 %v1198, 36
      %v1204 = vpop.permute.xlu0 %1203
      %1205 = vrot.lane.b32.xlu0 %v1202, 36
      %v1206 = vpop.permute.xlu0 %1205
      %v1207 = vsel %vm638, %v1204, %v1206
      %v1211 = vmul.f32 %v1191, %v1204
      %v1212 = vmul.f32 %v1192, %v1207
      %v1213 = vmul.f32 %v1193, %v1206
      %1217 = vrot.lane.b32.xlu0 %v1211, 92
      %v1218 = vpop.permute.xlu0 %1217
      %1219 = vrot.lane.b32.xlu0 %v1212, 92
      %v1220 = vpop.permute.xlu0 %1219
      %1221 = vrot.lane.b32.xlu0 %v1213, 92
      %v1222 = vpop.permute.xlu0 %1221
      %v1223 = vsel %vm667, %v1218, %v1220
      %v1224 = vsel %vm667, %v1220, %v1222
      %1227 = vst [vmem:[#allocation3 + $0x20] sm:$0xff] %v1223
      %1228 = vst [vmem:[#allocation3 + $0x28] sm:$0xff] %v1224
      %v1229 = vld [vmem:[#allocation2] sm:$0xff]
      %v1230 = vld [vmem:[#allocation2 + $0x8] sm:$0xff]
      %v1231 = vld [vmem:[#allocation2 + $0x10] sm:$0xff]
      %1232 = vrot.lane.b32.xlu0 %v1142, 50
      %v1233 = vpop.permute.xlu0 %1232
      %1234 = vrot.lane.b32.xlu0 %v1146, 50
      %v1235 = vpop.permute.xlu0 %1234
      %v1236 = vsel %vm690, %v1233, %v1235
      %v1240 = vmul.f32 %v1229, %v1233
      %v1241 = vmul.f32 %v1230, %v1236
      %v1242 = vmul.f32 %v1231, %v1235
      %1246 = vrot.lane.b32.xlu0 %v1240, 78
      %v1247 = vpop.permute.xlu0 %1246
      %1248 = vrot.lane.b32.xlu0 %v1241, 78
      %v1249 = vpop.permute.xlu0 %1248
      %1250 = vrot.lane.b32.xlu0 %v1242, 78
      %v1251 = vpop.permute.xlu0 %1250
      %v1252 = vsel %vm719, %v1247, %v1249
      %v1253 = vsel %vm719, %v1249, %v1251
      %1256 = vst [vmem:[#allocation3 + $0x30] sm:$0xff] %v1252
      %1257 = vst [vmem:[#allocation3 + $0x38] sm:$0xff] %v1253
      %v1258 = vld [vmem:[#allocation2] sm:$0xff]
      %v1259 = vld [vmem:[#allocation2 + $0x8] sm:$0xff]
      %v1260 = vld [vmem:[#allocation2 + $0x10] sm:$0xff]
      %1264 = vrot.lane.b32.xlu0 %v1258, 77
      %v1265 = vpop.permute.xlu0 %1264
      %1266 = vrot.lane.b32.xlu0 %v1259, 77
      %v1267 = vpop.permute.xlu0 %1266
      %1268 = vrot.lane.b32.xlu0 %v1260, 77
      %v1269 = vpop.permute.xlu0 %1268
      %v1270 = vsel %vm756, %v1265, %v1267
      %v1271 = vsel %vm756, %v1267, %v1269
      %1274 = vst [vmem:[#allocation3 + $0x40] sm:$0xff] %v1270
      %1275 = vst [vmem:[#allocation3 + $0x48] sm:$0xff] %v1271
      %v1276 = vld [vmem:[#allocation2] sm:$0xff]
      %v1277 = vld [vmem:[#allocation2 + $0x8] sm:$0xff]
      %v1278 = vld [vmem:[#allocation2 + $0x10] sm:$0xff]
      %1279 = vrot.lane.b32.xlu0 %v1198, 52
      %v1280 = vpop.permute.xlu0 %1279
      %1281 = vrot.lane.b32.xlu0 %v1202, 52
      %v1282 = vpop.permute.xlu0 %1281
      %v1283 = vsel %vm779, %v1280, %v1282
      %v1287 = vmul.f32 %v1276, %v1280
      %v1288 = vmul.f32 %v1277, %v1283
      %v1289 = vmul.f32 %v1278, %v1282
      %1293 = vrot.lane.b32.xlu0 %v1287, 76
      %v1294 = vpop.permute.xlu0 %1293
      %1295 = vrot.lane.b32.xlu0 %v1288, 76
      %v1296 = vpop.permute.xlu0 %1295
      %1297 = vrot.lane.b32.xlu0 %v1289, 76
      %v1298 = vpop.permute.xlu0 %1297
      %v1299 = vsel %vm808, %v1294, %v1296
      %v1300 = vsel %vm808, %v1296, %v1298
      %1303 = vst [vmem:[#allocation3 + $0x50] sm:$0xff] %v1299
      %1304 = vst [vmem:[#allocation3 + $0x58] sm:$0xff] %v1300
      %v1305 = vld [vmem:[#allocation2] sm:$0xff]
      %v1306 = vld [vmem:[#allocation2 + $0x8] sm:$0xff]
      %v1307 = vld [vmem:[#allocation2 + $0x10] sm:$0xff]
      %1308 = vrot.lane.b32.xlu0 %v1142, 66
      %v1309 = vpop.permute.xlu0 %1308
      %1310 = vrot.lane.b32.xlu0 %v1146, 66
      %v1311 = vpop.permute.xlu0 %1310
      %v1312 = vsel %vm831, %v1309, %v1311
      %v1316 = vmul.f32 %v1305, %v1309
      %v1317 = vmul.f32 %v1306, %v1312
      %v1318 = vmul.f32 %v1307, %v1311
      %1322 = vrot.lane.b32.xlu0 %v1316, 62
      %v1323 = vpop.permute.xlu0 %1322
      %1324 = vrot.lane.b32.xlu0 %v1317, 62
      %v1325 = vpop.permute.xlu0 %1324
      %1326 = vrot.lane.b32.xlu0 %v1318, 62
      %v1327 = vpop.permute.xlu0 %1326
      %v1328 = vsel %vm860, %v1323, %v1325
      %v1329 = vsel %vm860, %v1325, %v1327
      %1332 = vst [vmem:[#allocation3 + $0x60] sm:$0xff] %v1328
      %1333 = vst [vmem:[#allocation3 + $0x68] sm:$0xff] %v1329
      %v1334 = vld [vmem:[#allocation2] sm:$0xff]
      %v1335 = vld [vmem:[#allocation2 + $0x8] sm:$0xff]
      %v1336 = vld [vmem:[#allocation2 + $0x10] sm:$0xff]
      %1340 = vrot.lane.b32.xlu0 %v1334, 61
      %v1341 = vpop.permute.xlu0 %1340
      %1342 = vrot.lane.b32.xlu0 %v1335, 61
      %v1343 = vpop.permute.xlu0 %1342
      %1344 = vrot.lane.b32.xlu0 %v1336, 61
      %v1345 = vpop.permute.xlu0 %1344
      %v1346 = vsel %vm897, %v1341, %v1343
      %v1347 = vsel %vm897, %v1343, %v1345
      %1350 = vst [vmem:[#allocation3 + $0x70] sm:$0xff] %v1346
      %1351 = vst [vmem:[#allocation3 + $0x78] sm:$0xff] %v1347
      %v1352 = vld [vmem:[#allocation2] sm:$0xff]
      %v1353 = vld [vmem:[#allocation2 + $0x8] sm:$0xff]
      %v1354 = vld [vmem:[#allocation2 + $0x10] sm:$0xff]
      %1355 = vrot.lane.b32.xlu0 %v1198, 68
      %v1356 = vpop.permute.xlu0 %1355
      %1357 = vrot.lane.b32.xlu0 %v1202, 68
      %v1358 = vpop.permute.xlu0 %1357
      %v1359 = vsel %vm920, %v1356, %v1358
      %v1363 = vmul.f32 %v1352, %v1356
      %v1364 = vmul.f32 %v1353, %v1359
      %v1365 = vmul.f32 %v1354, %v1358
      %1369 = vrot.lane.b32.xlu0 %v1363, 60
      %v1370 = vpop.permute.xlu0 %1369
      %1371 = vrot.lane.b32.xlu0 %v1364, 60
      %v1372 = vpop.permute.xlu0 %1371
      %1373 = vrot.lane.b32.xlu0 %v1365, 60
      %v1374 = vpop.permute.xlu0 %1373
      %v1375 = vsel %vm949, %v1370, %v1372
      %v1376 = vsel %vm949, %v1372, %v1374
      %1379 = vst [vmem:[#allocation3 + $0x80] sm:$0xff] %v1375
      %1380 = vst [vmem:[#allocation3 + $0x88] sm:$0xff] %v1376
      %v1381 = vld [vmem:[#allocation3] sm:$0xff]
      %v1382 = vld [vmem:[#allocation3 + $0x8] sm:$0xff]
      %v1383 = vld [vmem:[#allocation3 + $0x10] sm:$0xff]
      %v1384 = vld [vmem:[#allocation3 + $0x18] sm:$0xff]
      %v1385 = vld [vmem:[#allocation3 + $0x20] sm:$0xff]
      %v1386 = vld [vmem:[#allocation3 + $0x28] sm:$0xff]
      %v1387 = vld [vmem:[#allocation3 + $0x30] sm:$0xff]
      %v1388 = vld [vmem:[#allocation3 + $0x38] sm:$0xff]
      %v1389 = vld [vmem:[#allocation3 + $0x40] sm:$0xff]
      %v1390 = vld [vmem:[#allocation3 + $0x48] sm:$0xff]
      %v1391 = vld [vmem:[#allocation3 + $0x50] sm:$0xff]
      %v1392 = vld [vmem:[#allocation3 + $0x58] sm:$0xff]
      %v1393 = vld [vmem:[#allocation3 + $0x60] sm:$0xff]
      %v1394 = vld [vmem:[#allocation3 + $0x68] sm:$0xff]
      %v1395 = vld [vmem:[#allocation3 + $0x70] sm:$0xff]
      %v1396 = vld [vmem:[#allocation3 + $0x78] sm:$0xff]
      %v1397 = vld [vmem:[#allocation3 + $0x80] sm:$0xff]
      %v1398 = vld [vmem:[#allocation3 + $0x88] sm:$0xff]
      %1400 = vset.pattern.permute.xlu0 0
      %1401 = vperm.xlu0 %1400, %v1118
      %v1402 = vpop.permute.xlu0 %1401
      %1405 = vset.pattern.permute.xlu0 0
      %1406 = vperm.xlu0 %1405, %v1119
      %v1407 = vpop.permute.xlu0 %1406
      %vm1409 = vcmask 588800
      %v1411 = vsel %vm1409, %v1115, 0
      %v1414 = vsel %vm1409, %v1116, 0
      %1416 = vmatprep.subr.mxu0 %v1382
      %1417 = vmatpush1.msra.mxu0 %v1381
      %1418 = vmatprep.subr.mxu0 %v1384
      %1419 = vmatpush1.msra.mxu0 %v1383
      %1420 = vmatprep.subr.mxu0 %v1386
      %1421 = vmatpush1.msra.mxu0 %v1385
      %1422 = vmatprep.subr.mxu0 %v1388
      %1423 = vmatpush1.msra.mxu0 %v1387
      %1424 = vmatprep.subr.mxu0 %v1390
      %1425 = vmatpush1.msra.mxu0 %v1389
      %1426 = vmatprep.subr.mxu0 %v1392
      %1427 = vmatpush1.msra.mxu0 %v1391
      %1428 = vmatprep.subr.mxu0 %v1394
      %1429 = vmatpush1.msra.mxu0 %v1393
      %1430 = vmatprep.subr.mxu0 %v1396
      %1431 = vmatpush1.msra.mxu0 %v1395
      %1432 = vmatprep.subr.mxu0 %v1398
      %1433 = vmatpush1.msra.mxu0 %v1397
      %1434 = vmatprep.subr.mxu0 0.0
      %1435 = vmatpush1.msra.mxu0 0.0
      %1436 = vmatprep.subr.mxu0 0.0
      %1437 = vmatpush1.msra.mxu0 0.0
      %1438 = vmatprep.subr.mxu0 0.0
      %1439 = vmatpush1.msra.mxu0 0.0
      %1440 = vmatprep.subr.mxu0 0.0
      %1441 = vmatpush1.msra.mxu0 0.0
      %1442 = vmatprep.subr.mxu0 0.0
      %1443 = vmatpush1.msra.mxu0 0.0
      %1444 = vmatprep.subr.mxu0 0.0
      %1445 = vmatpush1.msra.mxu0 0.0
      %1446 = vmatprep.subr.mxu0 0.0
      %1447 = vmatpush1.msra.mxu0 0.0
      %1448 = vmatprep.subr.mxu0 0.0
      %1449 = vmatpush1.msra.mxu0 0.0
      %1450 = vmatprep.subr.mxu0 0.0
      %1451 = vmatpush1.msra.mxu0 0.0
      %1452 = vmatprep.subr.mxu0 0.0
      %1453 = vmatpush1.msra.mxu0 0.0
      %1454 = vmatprep.subr.mxu0 0.0
      %1455 = vmatpush1.msra.mxu0 0.0
      %1456 = vmatprep.subr.mxu0 0.0
      %1457 = vmatpush1.msra.mxu0 0.0
      %1458 = vmatprep.subr.mxu0 0.0
      %1459 = vmatpush1.msra.mxu0 0.0
      %1460 = vmatprep.subr.mxu0 0.0
      %1461 = vmatpush1.msra.mxu0 0.0
      %1462 = vmatprep.subr.mxu0 0.0
      %1463 = vmatpush1.msra.mxu0 0.0
      %1464 = vmatprep.subr.mxu0 0.0
      %1465 = vmatpush1.msra.mxu0 0.0
      %1466 = vmatprep.subr.mxu0 0.0
      %1467 = vmatpush1.msra.mxu0 0.0
      %1468 = vmatprep.subr.mxu0 0.0
      %1469 = vmatpush1.msra.mxu0 0.0
      %1470 = vmatprep.subr.mxu0 0.0
      %1471 = vmatpush1.msra.mxu0 0.0
      %1472 = vmatprep.subr.mxu0 0.0
      %1473 = vmatpush1.msra.mxu0 0.0
      %1474 = vmatprep.subr.mxu0 0.0
      %1475 = vmatpush1.msra.mxu0 0.0
      %1476 = vmatprep.subr.mxu0 0.0
      %1477 = vmatpush1.msra.mxu0 0.0
      %1478 = vmatprep.subr.mxu0 0.0
      %1479 = vmatpush1.msra.mxu0 0.0
      %1480 = vmatprep.mubr.f32.mxu0 0.0
      %1481 = vmatmul.mubr.f32.gmra.mrb[0].mxu0 %v1411
      %v1482 = vpop.f32.mrb[0].mxu0
      %v1483 = vadd.f32 %v1402, %v1482
      %v1484 = vpop.f32.mrb[0].mxu0
      %v1485 = vadd.f32 %v1402, %v1484
      %1486 = vmatprep.mubr.f32.mxu0 0.0
      %1487 = vmatmul.mubr.f32.gmra.mrb[0].mxu0 %v1414
      %v1488 = vpop.f32.mrb[0].mxu0
      %v1489 = vadd.f32 %v1407, %v1488
      %v1490 = vpop.f32.mrb[0].mxu0
      %v1491 = vadd.f32 %v1407, %v1490
      %1492 = vdwg.mxu0
      %v1493 = vadd.f32 %v1483, %v472
      %v1494 = vadd.f32 %v1485, %v473
      %v1495 = vadd.f32 %v1489, %v474
      %v1496 = vadd.f32 %v1491, %v475
      %v1497 = vmax.f32 %v1493, 0.0
      %v1498 = vmax.f32 %v1494, 0.0
      %v1499 = vmax.f32 %v1495, 0.0
      %v1500 = vmax.f32 %v1496, 0.0
      %s1501 = smul.u32 %s1112, 4
      %s1502 = smul.addr %s1501, 8
      %s1503 = scalar_lea.vmem %s5, %s1502
      %v1504 = vld [vmem:[%s1503] sm:$0xff]
      %v1505 = vld [vmem:[%s1503 + $0x8] sm:$0xff]
      %v1506 = vld [vmem:[%s1503 + $0x10] sm:$0xff]
      %v1507 = vld [vmem:[%s1503 + $0x18] sm:$0xff]
      %s1508 = scalar_lea.vmem %s6, %s1113
      %v1509 = vld [vmem:[%s1508] sm:$0xff]
      %v1510 = vld [vmem:[%s1508 + $0x8] sm:$0xff]
      %v1511 = vld [vmem:[%s12] ss:$8 sm:$0x3]
      %v1512 = vld [vmem:[%s491] ss:$8 sm:$0x3]
      %1517 = vrot.lane.b32.xlu0 %v1497, 51
      %v1518 = vpop.permute.xlu0 %1517
      %1519 = vrot.lane.b32.xlu0 %v1498, 51
      %v1520 = vpop.permute.xlu0 %1519
      %1521 = vrot.lane.b32.xlu0 %v1499, 51
      %v1522 = vpop.permute.xlu0 %1521
      %1523 = vrot.lane.b32.xlu0 %v1500, 51
      %v1524 = vpop.permute.xlu0 %1523
      %v1525 = vsel %vm505, %v1518, %v1520
      %v1526 = vsel %vm505, %v1522, %v1524
      %1533 = vst.msk [vmem:[#allocation2] sm:$0xff] %vm514, %v1518
      %1534 = vst [vmem:[#allocation2 + $0x8] sm:$0xff] %v1525
      %1535 = vst.msk [vmem:[#allocation2 + $0x10] sm:$0xff] %vm505, %v1520
      %1536 = vst.msk [vmem:[#allocation2 + $0x18] sm:$0xff] %vm514, %v1522
      %1537 = vst [vmem:[#allocation2 + $0x20] sm:$0xff] %v1526
      %1538 = vst.msk [vmem:[#allocation2 + $0x28] sm:$0xff] %vm505, %v1524
      %v1539 = vld [vmem:[#allocation2] sm:$0xff]
      %v1540 = vld [vmem:[#allocation2 + $0x8] sm:$0xff]
      %v1541 = vld [vmem:[#allocation2 + $0x10] sm:$0xff]
      %v1542 = vld [vmem:[#allocation2 + $0x18] sm:$0xff]
      %v1543 = vld [vmem:[#allocation2 + $0x20] sm:$0xff]
      %v1544 = vld [vmem:[#allocation2 + $0x28] sm:$0xff]
      %v1546 = vlaneseq
      %v1547 = vshrl.u32 %v1546, 7
      %v1548 = vsub.s32 0, %v1547
      %v1549 = vrot.slane %v1511, %v1548
      %v1550 = vlaneseq
      %v1551 = vshrl.u32 %v1550, 7
      %v1552 = vsub.s32 1, %v1551
      %v1553 = vrot.slane %v1511, %v1552
      %1554 = vrot.lane.b32.xlu0 %v1549, 34
      %v1555 = vpop.permute.xlu0 %1554
      %1556 = vrot.lane.b32.xlu0 %v1553, 34
      %v1557 = vpop.permute.xlu0 %1556
      %v1558 = vsel %vm540, %v1555, %v1557
      %v1562 = vmul.f32 %v1539, %v1555
      %v1563 = vmul.f32 %v1540, %v1558
      %v1564 = vmul.f32 %v1541, %v1557
      %v1565 = vmul.f32 %v1542, %v1555
      %v1566 = vmul.f32 %v1543, %v1558
      %v1567 = vmul.f32 %v1544, %v1557
      %1574 = vrot.lane.b32.xlu0 %v1562, 94
      %v1575 = vpop.permute.xlu0 %1574
      %1576 = vrot.lane.b32.xlu0 %v1563, 94
      %v1577 = vpop.permute.xlu0 %1576
      %1578 = vrot.lane.b32.xlu0 %v1564, 94
      %v1579 = vpop.permute.xlu0 %1578
      %1580 = vrot.lane.b32.xlu0 %v1565, 94
      %v1581 = vpop.permute.xlu0 %1580
      %1582 = vrot.lane.b32.xlu0 %v1566, 94
      %v1583 = vpop.permute.xlu0 %1582
      %1584 = vrot.lane.b32.xlu0 %v1567, 94
      %v1585 = vpop.permute.xlu0 %1584
      %v1586 = vsel %vm569, %v1575, %v1577
      %v1587 = vsel %vm569, %v1577, %v1579
      %v1588 = vsel %vm569, %v1581, %v1583
      %v1589 = vsel %vm569, %v1583, %v1585
      %1594 = vst [vmem:[#allocation3] sm:$0xff] %v1586
      %1595 = vst [vmem:[#allocation3 + $0x8] sm:$0xff] %v1587
      %1596 = vst [vmem:[#allocation3 + $0x10] sm:$0xff] %v1588
      %1597 = vst [vmem:[#allocation3 + $0x18] sm:$0xff] %v1589
      %v1598 = vld [vmem:[#allocation2] sm:$0xff]
      %v1599 = vld [vmem:[#allocation2 + $0x8] sm:$0xff]
      %v1600 = vld [vmem:[#allocation2 + $0x10] sm:$0xff]
      %v1601 = vld [vmem:[#allocation2 + $0x18] sm:$0xff]
      %v1602 = vld [vmem:[#allocation2 + $0x20] sm:$0xff]
      %v1603 = vld [vmem:[#allocation2 + $0x28] sm:$0xff]
      %1610 = vrot.lane.b32.xlu0 %v1598, 93
      %v1611 = vpop.permute.xlu0 %1610
      %1612 = vrot.lane.b32.xlu0 %v1599, 93
      %v1613 = vpop.permute.xlu0 %1612
      %1614 = vrot.lane.b32.xlu0 %v1600, 93
      %v1615 = vpop.permute.xlu0 %1614
      %1616 = vrot.lane.b32.xlu0 %v1601, 93
      %v1617 = vpop.permute.xlu0 %1616
      %1618 = vrot.lane.b32.xlu0 %v1602, 93
      %v1619 = vpop.permute.xlu0 %1618
      %1620 = vrot.lane.b32.xlu0 %v1603, 93
      %v1621 = vpop.permute.xlu0 %1620
      %v1622 = vsel %vm606, %v1611, %v1613
      %v1623 = vsel %vm606, %v1613, %v1615
      %v1624 = vsel %vm606, %v1617, %v1619
      %v1625 = vsel %vm606, %v1619, %v1621
      %1630 = vst [vmem:[#allocation3 + $0x20] sm:$0xff] %v1622
      %1631 = vst [vmem:[#allocation3 + $0x28] sm:$0xff] %v1623
      %1632 = vst [vmem:[#allocation3 + $0x30] sm:$0xff] %v1624
      %1633 = vst [vmem:[#allocation3 + $0x38] sm:$0xff] %v1625
      %v1634 = vld [vmem:[#allocation2] sm:$0xff]
      %v1635 = vld [vmem:[#allocation2 + $0x8] sm:$0xff]
      %v1636 = vld [vmem:[#allocation2 + $0x10] sm:$0xff]
      %v1637 = vld [vmem:[#allocation2 + $0x18] sm:$0xff]
      %v1638 = vld [vmem:[#allocation2 + $0x20] sm:$0xff]
      %v1639 = vld [vmem:[#allocation2 + $0x28] sm:$0xff]
      %v1641 = vlaneseq
      %v1642 = vshrl.u32 %v1641, 7
      %v1643 = vsub.s32 0, %v1642
      %v1644 = vrot.slane %v1512, %v1643
      %v1645 = vlaneseq
      %v1646 = vshrl.u32 %v1645, 7
      %v1647 = vsub.s32 1, %v1646
      %v1648 = vrot.slane %v1512, %v1647
      %1649 = vrot.lane.b32.xlu0 %v1644, 36
      %v1650 = vpop.permute.xlu0 %1649
      %1651 = vrot.lane.b32.xlu0 %v1648, 36
      %v1652 = vpop.permute.xlu0 %1651
      %v1653 = vsel %vm638, %v1650, %v1652
      %v1657 = vmul.f32 %v1634, %v1650
      %v1658 = vmul.f32 %v1635, %v1653
      %v1659 = vmul.f32 %v1636, %v1652
      %v1660 = vmul.f32 %v1637, %v1650
      %v1661 = vmul.f32 %v1638, %v1653
      %v1662 = vmul.f32 %v1639, %v1652
      %1669 = vrot.lane.b32.xlu0 %v1657, 92
      %v1670 = vpop.permute.xlu0 %1669
      %1671 = vrot.lane.b32.xlu0 %v1658, 92
      %v1672 = vpop.permute.xlu0 %1671
      %1673 = vrot.lane.b32.xlu0 %v1659, 92
      %v1674 = vpop.permute.xlu0 %1673
      %1675 = vrot.lane.b32.xlu0 %v1660, 92
      %v1676 = vpop.permute.xlu0 %1675
      %1677 = vrot.lane.b32.xlu0 %v1661, 92
      %v1678 = vpop.permute.xlu0 %1677
      %1679 = vrot.lane.b32.xlu0 %v1662, 92
      %v1680 = vpop.permute.xlu0 %1679
      %v1681 = vsel %vm667, %v1670, %v1672
      %v1682 = vsel %vm667, %v1672, %v1674
      %v1683 = vsel %vm667, %v1676, %v1678
      %v1684 = vsel %vm667, %v1678, %v1680
      %1689 = vst [vmem:[#allocation3 + $0x40] sm:$0xff] %v1681
      %1690 = vst [vmem:[#allocation3 + $0x48] sm:$0xff] %v1682
      %1691 = vst [vmem:[#allocation3 + $0x50] sm:$0xff] %v1683
      %1692 = vst [vmem:[#allocation3 + $0x58] sm:$0xff] %v1684
      %v1693 = vld [vmem:[#allocation2] sm:$0xff]
      %v1694 = vld [vmem:[#allocation2 + $0x8] sm:$0xff]
      %v1695 = vld [vmem:[#allocation2 + $0x10] sm:$0xff]
      %v1696 = vld [vmem:[#allocation2 + $0x18] sm:$0xff]
      %v1697 = vld [vmem:[#allocation2 + $0x20] sm:$0xff]
      %v1698 = vld [vmem:[#allocation2 + $0x28] sm:$0xff]
      %1699 = vrot.lane.b32.xlu0 %v1549, 50
      %v1700 = vpop.permute.xlu0 %1699
      %1701 = vrot.lane.b32.xlu0 %v1553, 50
      %v1702 = vpop.permute.xlu0 %1701
      %v1703 = vsel %vm690, %v1700, %v1702
      %v1707 = vmul.f32 %v1693, %v1700
      %v1708 = vmul.f32 %v1694, %v1703
      %v1709 = vmul.f32 %v1695, %v1702
      %v1710 = vmul.f32 %v1696, %v1700
      %v1711 = vmul.f32 %v1697, %v1703
      %v1712 = vmul.f32 %v1698, %v1702
      %1719 = vrot.lane.b32.xlu0 %v1707, 78
      %v1720 = vpop.permute.xlu0 %1719
      %1721 = vrot.lane.b32.xlu0 %v1708, 78
      %v1722 = vpop.permute.xlu0 %1721
      %1723 = vrot.lane.b32.xlu0 %v1709, 78
      %v1724 = vpop.permute.xlu0 %1723
      %1725 = vrot.lane.b32.xlu0 %v1710, 78
      %v1726 = vpop.permute.xlu0 %1725
      %1727 = vrot.lane.b32.xlu0 %v1711, 78
      %v1728 = vpop.permute.xlu0 %1727
      %1729 = vrot.lane.b32.xlu0 %v1712, 78
      %v1730 = vpop.permute.xlu0 %1729
      %v1731 = vsel %vm719, %v1720, %v1722
      %v1732 = vsel %vm719, %v1722, %v1724
      %v1733 = vsel %vm719, %v1726, %v1728
      %v1734 = vsel %vm719, %v1728, %v1730
      %1739 = vst [vmem:[#allocation3 + $0x60] sm:$0xff] %v1731
      %1740 = vst [vmem:[#allocation3 + $0x68] sm:$0xff] %v1732
      %1741 = vst [vmem:[#allocation3 + $0x70] sm:$0xff] %v1733
      %1742 = vst [vmem:[#allocation3 + $0x78] sm:$0xff] %v1734
      %v1743 = vld [vmem:[#allocation2] sm:$0xff]
      %v1744 = vld [vmem:[#allocation2 + $0x8] sm:$0xff]
      %v1745 = vld [vmem:[#allocation2 + $0x10] sm:$0xff]
      %v1746 = vld [vmem:[#allocation2 + $0x18] sm:$0xff]
      %v1747 = vld [vmem:[#allocation2 + $0x20] sm:$0xff]
      %v1748 = vld [vmem:[#allocation2 + $0x28] sm:$0xff]
      %1755 = vrot.lane.b32.xlu0 %v1743, 77
      %v1756 = vpop.permute.xlu0 %1755
      %1757 = vrot.lane.b32.xlu0 %v1744, 77
      %v1758 = vpop.permute.xlu0 %1757
      %1759 = vrot.lane.b32.xlu0 %v1745, 77
      %v1760 = vpop.permute.xlu0 %1759
      %1761 = vrot.lane.b32.xlu0 %v1746, 77
      %v1762 = vpop.permute.xlu0 %1761
      %1763 = vrot.lane.b32.xlu0 %v1747, 77
      %v1764 = vpop.permute.xlu0 %1763
      %1765 = vrot.lane.b32.xlu0 %v1748, 77
      %v1766 = vpop.permute.xlu0 %1765
      %v1767 = vsel %vm756, %v1756, %v1758
      %v1768 = vsel %vm756, %v1758, %v1760
      %v1769 = vsel %vm756, %v1762, %v1764
      %v1770 = vsel %vm756, %v1764, %v1766
      %1775 = vst [vmem:[#allocation3 + $0x80] sm:$0xff] %v1767
      %1776 = vst [vmem:[#allocation3 + $0x88] sm:$0xff] %v1768
      %1777 = vst [vmem:[#allocation3 + $0x90] sm:$0xff] %v1769
      %1778 = vst [vmem:[#allocation3 + $0x98] sm:$0xff] %v1770
      %v1779 = vld [vmem:[#allocation2] sm:$0xff]
      %v1780 = vld [vmem:[#allocation2 + $0x8] sm:$0xff]
      %v1781 = vld [vmem:[#allocation2 + $0x10] sm:$0xff]
      %v1782 = vld [vmem:[#allocation2 + $0x18] sm:$0xff]
      %v1783 = vld [vmem:[#allocation2 + $0x20] sm:$0xff]
      %v1784 = vld [vmem:[#allocation2 + $0x28] sm:$0xff]
      %1785 = vrot.lane.b32.xlu0 %v1644, 52
      %v1786 = vpop.permute.xlu0 %1785
      %1787 = vrot.lane.b32.xlu0 %v1648, 52
      %v1788 = vpop.permute.xlu0 %1787
      %v1789 = vsel %vm779, %v1786, %v1788
      %v1793 = vmul.f32 %v1779, %v1786
      %v1794 = vmul.f32 %v1780, %v1789
      %v1795 = vmul.f32 %v1781, %v1788
      %v1796 = vmul.f32 %v1782, %v1786
      %v1797 = vmul.f32 %v1783, %v1789
      %v1798 = vmul.f32 %v1784, %v1788
      %1805 = vrot.lane.b32.xlu0 %v1793, 76
      %v1806 = vpop.permute.xlu0 %1805
      %1807 = vrot.lane.b32.xlu0 %v1794, 76
      %v1808 = vpop.permute.xlu0 %1807
      %1809 = vrot.lane.b32.xlu0 %v1795, 76
      %v1810 = vpop.permute.xlu0 %1809
      %1811 = vrot.lane.b32.xlu0 %v1796, 76
      %v1812 = vpop.permute.xlu0 %1811
      %1813 = vrot.lane.b32.xlu0 %v1797, 76
      %v1814 = vpop.permute.xlu0 %1813
      %1815 = vrot.lane.b32.xlu0 %v1798, 76
      %v1816 = vpop.permute.xlu0 %1815
      %v1817 = vsel %vm808, %v1806, %v1808
      %v1818 = vsel %vm808, %v1808, %v1810
      %v1819 = vsel %vm808, %v1812, %v1814
      %v1820 = vsel %vm808, %v1814, %v1816
      %1825 = vst [vmem:[#allocation3 + $0xa0] sm:$0xff] %v1817
      %1826 = vst [vmem:[#allocation3 + $0xa8] sm:$0xff] %v1818
      %1827 = vst [vmem:[#allocation3 + $0xb0] sm:$0xff] %v1819
      %1828 = vst [vmem:[#allocation3 + $0xb8] sm:$0xff] %v1820
      %v1829 = vld [vmem:[#allocation2] sm:$0xff]
      %v1830 = vld [vmem:[#allocation2 + $0x8] sm:$0xff]
      %v1831 = vld [vmem:[#allocation2 + $0x10] sm:$0xff]
      %v1832 = vld [vmem:[#allocation2 + $0x18] sm:$0xff]
      %v1833 = vld [vmem:[#allocation2 + $0x20] sm:$0xff]
      %v1834 = vld [vmem:[#allocation2 + $0x28] sm:$0xff]
      %1835 = vrot.lane.b32.xlu0 %v1549, 66
      %v1836 = vpop.permute.xlu0 %1835
      %1837 = vrot.lane.b32.xlu0 %v1553, 66
      %v1838 = vpop.permute.xlu0 %1837
      %v1839 = vsel %vm831, %v1836, %v1838
      %v1843 = vmul.f32 %v1829, %v1836
      %v1844 = vmul.f32 %v1830, %v1839
      %v1845 = vmul.f32 %v1831, %v1838
      %v1846 = vmul.f32 %v1832, %v1836
      %v1847 = vmul.f32 %v1833, %v1839
      %v1848 = vmul.f32 %v1834, %v1838
      %1855 = vrot.lane.b32.xlu0 %v1843, 62
      %v1856 = vpop.permute.xlu0 %1855
      %1857 = vrot.lane.b32.xlu0 %v1844, 62
      %v1858 = vpop.permute.xlu0 %1857
      %1859 = vrot.lane.b32.xlu0 %v1845, 62
      %v1860 = vpop.permute.xlu0 %1859
      %1861 = vrot.lane.b32.xlu0 %v1846, 62
      %v1862 = vpop.permute.xlu0 %1861
      %1863 = vrot.lane.b32.xlu0 %v1847, 62
      %v1864 = vpop.permute.xlu0 %1863
      %1865 = vrot.lane.b32.xlu0 %v1848, 62
      %v1866 = vpop.permute.xlu0 %1865
      %v1867 = vsel %vm860, %v1856, %v1858
      %v1868 = vsel %vm860, %v1858, %v1860
      %v1869 = vsel %vm860, %v1862, %v1864
      %v1870 = vsel %vm860, %v1864, %v1866
      %1875 = vst [vmem:[#allocation3 + $0xc0] sm:$0xff] %v1867
      %1876 = vst [vmem:[#allocation3 + $0xc8] sm:$0xff] %v1868
      %1877 = vst [vmem:[#allocation3 + $0xd0] sm:$0xff] %v1869
      %1878 = vst [vmem:[#allocation3 + $0xd8] sm:$0xff] %v1870
      %v1879 = vld [vmem:[#allocation2] sm:$0xff]
      %v1880 = vld [vmem:[#allocation2 + $0x8] sm:$0xff]
      %v1881 = vld [vmem:[#allocation2 + $0x10] sm:$0xff]
      %v1882 = vld [vmem:[#allocation2 + $0x18] sm:$0xff]
      %v1883 = vld [vmem:[#allocation2 + $0x20] sm:$0xff]
      %v1884 = vld [vmem:[#allocation2 + $0x28] sm:$0xff]
      %1891 = vrot.lane.b32.xlu0 %v1879, 61
      %v1892 = vpop.permute.xlu0 %1891
      %1893 = vrot.lane.b32.xlu0 %v1880, 61
      %v1894 = vpop.permute.xlu0 %1893
      %1895 = vrot.lane.b32.xlu0 %v1881, 61
      %v1896 = vpop.permute.xlu0 %1895
      %1897 = vrot.lane.b32.xlu0 %v1882, 61
      %v1898 = vpop.permute.xlu0 %1897
      %1899 = vrot.lane.b32.xlu0 %v1883, 61
      %v1900 = vpop.permute.xlu0 %1899
      %1901 = vrot.lane.b32.xlu0 %v1884, 61
      %v1902 = vpop.permute.xlu0 %1901
      %v1903 = vsel %vm897, %v1892, %v1894
      %v1904 = vsel %vm897, %v1894, %v1896
      %v1905 = vsel %vm897, %v1898, %v1900
      %v1906 = vsel %vm897, %v1900, %v1902
      %1911 = vst [vmem:[#allocation3 + $0xe0] sm:$0xff] %v1903
      %1912 = vst [vmem:[#allocation3 + $0xe8] sm:$0xff] %v1904
      %1913 = vst [vmem:[#allocation3 + $0xf0] sm:$0xff] %v1905
      %1914 = vst [vmem:[#allocation3 + $0xf8] sm:$0xff] %v1906
      %v1915 = vld [vmem:[#allocation2] sm:$0xff]
      %v1916 = vld [vmem:[#allocation2 + $0x8] sm:$0xff]
      %v1917 = vld [vmem:[#allocation2 + $0x10] sm:$0xff]
      %v1918 = vld [vmem:[#allocation2 + $0x18] sm:$0xff]
      %v1919 = vld [vmem:[#allocation2 + $0x20] sm:$0xff]
      %v1920 = vld [vmem:[#allocation2 + $0x28] sm:$0xff]
      %1921 = vrot.lane.b32.xlu0 %v1644, 68
      %v1922 = vpop.permute.xlu0 %1921
      %1923 = vrot.lane.b32.xlu0 %v1648, 68
      %v1924 = vpop.permute.xlu0 %1923
      %v1925 = vsel %vm920, %v1922, %v1924
      %v1929 = vmul.f32 %v1915, %v1922
      %v1930 = vmul.f32 %v1916, %v1925
      %v1931 = vmul.f32 %v1917, %v1924
      %v1932 = vmul.f32 %v1918, %v1922
      %v1933 = vmul.f32 %v1919, %v1925
      %v1934 = vmul.f32 %v1920, %v1924
      %1941 = vrot.lane.b32.xlu0 %v1929, 60
      %v1942 = vpop.permute.xlu0 %1941
      %1943 = vrot.lane.b32.xlu0 %v1930, 60
      %v1944 = vpop.permute.xlu0 %1943
      %1945 = vrot.lane.b32.xlu0 %v1931, 60
      %v1946 = vpop.permute.xlu0 %1945
      %1947 = vrot.lane.b32.xlu0 %v1932, 60
      %v1948 = vpop.permute.xlu0 %1947
      %1949 = vrot.lane.b32.xlu0 %v1933, 60
      %v1950 = vpop.permute.xlu0 %1949
      %1951 = vrot.lane.b32.xlu0 %v1934, 60
      %v1952 = vpop.permute.xlu0 %1951
      %v1953 = vsel %vm949, %v1942, %v1944
      %v1954 = vsel %vm949, %v1944, %v1946
      %v1955 = vsel %vm949, %v1948, %v1950
      %v1956 = vsel %vm949, %v1950, %v1952
      %1961 = vst [vmem:[#allocation3 + $0x100] sm:$0xff] %v1953
      %1962 = vst [vmem:[#allocation3 + $0x108] sm:$0xff] %v1954
      %1963 = vst [vmem:[#allocation3 + $0x110] sm:$0xff] %v1955
      %1964 = vst [vmem:[#allocation3 + $0x118] sm:$0xff] %v1956
      %v1965 = vld [vmem:[#allocation3] sm:$0xff]
      %v1966 = vld [vmem:[#allocation3 + $0x8] sm:$0xff]
      %v1967 = vld [vmem:[#allocation3 + $0x10] sm:$0xff]
      %v1968 = vld [vmem:[#allocation3 + $0x18] sm:$0xff]
      %v1969 = vld [vmem:[#allocation3 + $0x20] sm:$0xff]
      %v1970 = vld [vmem:[#allocation3 + $0x28] sm:$0xff]
      %v1971 = vld [vmem:[#allocation3 + $0x30] sm:$0xff]
      %v1972 = vld [vmem:[#allocation3 + $0x38] sm:$0xff]
      %v1973 = vld [vmem:[#allocation3 + $0x40] sm:$0xff]
      %v1974 = vld [vmem:[#allocation3 + $0x48] sm:$0xff]
      %v1975 = vld [vmem:[#allocation3 + $0x50] sm:$0xff]
      %v1976 = vld [vmem:[#allocation3 + $0x58] sm:$0xff]
      %v1977 = vld [vmem:[#allocation3 + $0x60] sm:$0xff]
      %v1978 = vld [vmem:[#allocation3 + $0x68] sm:$0xff]
      %v1979 = vld [vmem:[#allocation3 + $0x70] sm:$0xff]
      %v1980 = vld [vmem:[#allocation3 + $0x78] sm:$0xff]
      %v1981 = vld [vmem:[#allocation3 + $0x80] sm:$0xff]
      %v1982 = vld [vmem:[#allocation3 + $0x88] sm:$0xff]
      %v1983 = vld [vmem:[#allocation3 + $0x90] sm:$0xff]
      %v1984 = vld [vmem:[#allocation3 + $0x98] sm:$0xff]
      %v1985 = vld [vmem:[#allocation3 + $0xa0] sm:$0xff]
      %v1986 = vld [vmem:[#allocation3 + $0xa8] sm:$0xff]
      %v1987 = vld [vmem:[#allocation3 + $0xb0] sm:$0xff]
      %v1988 = vld [vmem:[#allocation3 + $0xb8] sm:$0xff]
      %v1989 = vld [vmem:[#allocation3 + $0xc0] sm:$0xff]
      %v1990 = vld [vmem:[#allocation3 + $0xc8] sm:$0xff]
      %v1991 = vld [vmem:[#allocation3 + $0xd0] sm:$0xff]
      %v1992 = vld [vmem:[#allocation3 + $0xd8] sm:$0xff]
      %v1993 = vld [vmem:[#allocation3 + $0xe0] sm:$0xff]
      %v1994 = vld [vmem:[#allocation3 + $0xe8] sm:$0xff]
      %v1995 = vld [vmem:[#allocation3 + $0xf0] sm:$0xff]
      %v1996 = vld [vmem:[#allocation3 + $0xf8] sm:$0xff]
      %v1997 = vld [vmem:[#allocation3 + $0x100] sm:$0xff]
      %v1998 = vld [vmem:[#allocation3 + $0x108] sm:$0xff]
      %v1999 = vld [vmem:[#allocation3 + $0x110] sm:$0xff]
      %v2000 = vld [vmem:[#allocation3 + $0x118] sm:$0xff]
      %2002 = vset.pattern.permute.xlu0 0
      %2003 = vperm.xlu0 %2002, %v1509
      %v2004 = vpop.permute.xlu0 %2003
      %2007 = vset.pattern.permute.xlu0 0
      %2008 = vperm.xlu0 %2007, %v1510
      %v2009 = vpop.permute.xlu0 %2008
      %v2012 = vsel %vm1013, %v1505, 0
      %v2015 = vsel %vm1013, %v1507, 0
      %2017 = vmatprep.subr.mxu0 %v1966
      %2018 = vmatpush1.msra.mxu0 %v1965
      %2019 = vmatprep.subr.mxu0 %v1968
      %2020 = vmatpush1.msra.mxu0 %v1967
      %2021 = vmatprep.subr.mxu0 %v1970
      %2022 = vmatpush1.msra.mxu0 %v1969
      %2023 = vmatprep.subr.mxu0 %v1972
      %2024 = vmatpush1.msra.mxu0 %v1971
      %2025 = vmatprep.subr.mxu0 %v1974
      %2026 = vmatpush1.msra.mxu0 %v1973
      %2027 = vmatprep.subr.mxu0 %v1976
      %2028 = vmatpush1.msra.mxu0 %v1975
      %2029 = vmatprep.subr.mxu0 %v1978
      %2030 = vmatpush1.msra.mxu0 %v1977
      %2031 = vmatprep.subr.mxu0 %v1980
      %2032 = vmatpush1.msra.mxu0 %v1979
      %2033 = vmatprep.subr.mxu0 %v1982
      %2034 = vmatpush1.msra.mxu0 %v1981
      %2035 = vmatprep.subr.mxu0 %v1984
      %2036 = vmatpush1.msra.mxu0 %v1983
      %2037 = vmatprep.subr.mxu0 %v1986
      %2038 = vmatpush1.msra.mxu0 %v1985
      %2039 = vmatprep.subr.mxu0 %v1988
      %2040 = vmatpush1.msra.mxu0 %v1987
      %2041 = vmatprep.subr.mxu0 %v1990
      %2042 = vmatpush1.msra.mxu0 %v1989
      %2043 = vmatprep.subr.mxu0 %v1992
      %2044 = vmatpush1.msra.mxu0 %v1991
      %2045 = vmatprep.subr.mxu0 %v1994
      %2046 = vmatpush1.msra.mxu0 %v1993
      %2047 = vmatprep.subr.mxu0 %v1996
      %2048 = vmatpush1.msra.mxu0 %v1995
      %2049 = vmatprep.subr.mxu0 %v1998
      %2050 = vmatpush1.msra.mxu0 %v1997
      %2051 = vmatprep.subr.mxu0 %v2000
      %2052 = vmatpush1.msra.mxu0 %v1999
      %2053 = vmatprep.subr.mxu0 0.0
      %2054 = vmatpush1.msra.mxu0 0.0
      %2055 = vmatprep.subr.mxu0 0.0
      %2056 = vmatpush1.msra.mxu0 0.0
      %2057 = vmatprep.subr.mxu0 0.0
      %2058 = vmatpush1.msra.mxu0 0.0
      %2059 = vmatprep.subr.mxu0 0.0
      %2060 = vmatpush1.msra.mxu0 0.0
      %2061 = vmatprep.subr.mxu0 0.0
      %2062 = vmatpush1.msra.mxu0 0.0
      %2063 = vmatprep.subr.mxu0 0.0
      %2064 = vmatpush1.msra.mxu0 0.0
      %2065 = vmatprep.subr.mxu0 0.0
      %2066 = vmatpush1.msra.mxu0 0.0
      %2067 = vmatprep.subr.mxu0 0.0
      %2068 = vmatpush1.msra.mxu0 0.0
      %2069 = vmatprep.subr.mxu0 0.0
      %2070 = vmatpush1.msra.mxu0 0.0
      %2071 = vmatprep.subr.mxu0 0.0
      %2072 = vmatpush1.msra.mxu0 0.0
      %2073 = vmatprep.subr.mxu0 0.0
      %2074 = vmatpush1.msra.mxu0 0.0
      %2075 = vmatprep.subr.mxu0 0.0
      %2076 = vmatpush1.msra.mxu0 0.0
      %2077 = vmatprep.subr.mxu0 0.0
      %2078 = vmatpush1.msra.mxu0 0.0
      %2079 = vmatprep.subr.mxu0 0.0
      %2080 = vmatpush1.msra.mxu0 0.0
      %2081 = vmatprep.mubr.f32.mxu0 %v2012
      %2082 = vmatmul.mubr.f32.gmra.mrb[0].mxu0 %v1504
      %v2083 = vpop.f32.mrb[0].mxu0
      %v2084 = vadd.f32 %v2004, %v2083
      %v2085 = vpop.f32.mrb[0].mxu0
      %v2086 = vadd.f32 %v2004, %v2085
      %2087 = vmatprep.mubr.f32.mxu0 %v2015
      %2088 = vmatmul.mubr.f32.gmra.mrb[0].mxu0 %v1506
      %v2089 = vpop.f32.mrb[0].mxu0
      %v2090 = vadd.f32 %v2009, %v2089
      %v2091 = vpop.f32.mrb[0].mxu0
      %v2092 = vadd.f32 %v2009, %v2091
      %2093 = vdwg.mxu0
      %v2094 = vadd.f32 %v2084, %v2090
      %v2095 = vrot.slane %v2094, 4
      %v2096 = vadd.f32 %v2094, %v2095
      %v2097 = vrot.slane %v2096, 2
      %v2098 = vadd.f32 %v2096, %v2097
      %v2099 = vrot.slane %v2098, 1
      %v2100 = vadd.f32 %v2098, %v2099
      %v2101 = vadd.f32 %v2086, %v2092
      %v2102 = vrot.slane %v2101, 4
      %v2103 = vadd.f32 %v2101, %v2102
      %v2104 = vrot.slane %v2103, 2
      %v2105 = vadd.f32 %v2103, %v2104
      %v2106 = vrot.slane %v2105, 1
      %v2107 = vadd.f32 %v2105, %v2106
      %v2108 = vrcp.pop 16.0
      %v2109 = vmul.f32 %v2100, %v2108
      %v2110 = vmul.f32 %v2107, %v2108
      %v2113 = vcombine.low %v2109, %v2110
      %v2115 = vunpack.c.l.s4 1966171168
      %v2116 = vunpack.c.0.s8 %v2115
      %v2117 = vlaneseq
      %v2118 = vshrl.u32 %v2117, 7
      %v2119 = vsub.s32 %v2116, %v2118
      %v2120 = vrot.slane %v2113, %v2119
      %v2122 = vunpack.c.l.s4 1966171168
      %v2123 = vunpack.c.0.s8 %v2122
      %v2124 = vlaneseq
      %v2125 = vshrl.u32 %v2124, 7
      %v2126 = vsub.s32 %v2123, %v2125
      %v2127 = vrot.slane %v2120, %v2126
      %2128 = vrot.lane.b32.xlu0 %v2127, 51
      %v2129 = vpop.permute.xlu0 %2128
      %v2130 = vrot.slane %v2129, 7
      %v2131 = vsel %vm505, %v2130, %v2129
      %v2133 = vlaneseq
      %vm2134 = vcmp.ge.s32.totalorder %v2133, 51
      %vm2135 = vcmp.lt.s32.totalorder %v2133, 307
      %vm2136 = vmand %vm2134, %vm2135
      %2137 = vst.msk [vmem:[#allocation2] ss:$8 sm:$0x7] %vm2136, %v2131
      %2138 = vst.msk [vmem:[#allocation2] ss:$8 sm:$0x0] %vm2136, %v2131
      %v2139 = vmax.f32 %v2084, %v2090
      %v2140 = vrot.slane %v2139, 4
      %v2141 = vmax.f32 %v2139, %v2140
      %v2142 = vrot.slane %v2141, 2
      %v2143 = vmax.f32 %v2141, %v2142
      %v2144 = vrot.slane %v2143, 1
      %v2145 = vmax.f32 %v2143, %v2144
      %v2146 = vmax.f32 %v2086, %v2092
      %v2147 = vrot.slane %v2146, 4
      %v2148 = vmax.f32 %v2146, %v2147
      %v2149 = vrot.slane %v2148, 2
      %v2150 = vmax.f32 %v2148, %v2149
      %v2151 = vrot.slane %v2150, 1
      %v2152 = vmax.f32 %v2150, %v2151
      %v2155 = vcombine.low %v2145, %v2152
      %v2157 = vunpack.c.l.s4 1966171168
      %v2158 = vunpack.c.0.s8 %v2157
      %v2159 = vlaneseq
      %v2160 = vshrl.u32 %v2159, 7
      %v2161 = vsub.s32 %v2158, %v2160
      %v2162 = vrot.slane %v2155, %v2161
      %v2164 = vunpack.c.l.s4 1966171168
      %v2165 = vunpack.c.0.s8 %v2164
      %v2166 = vlaneseq
      %v2167 = vshrl.u32 %v2166, 7
      %v2168 = vsub.s32 %v2165, %v2167
      %v2169 = vrot.slane %v2162, %v2168
      %2170 = vrot.lane.b32.xlu0 %v2169, 51
      %v2171 = vpop.permute.xlu0 %2170
      %v2172 = vrot.slane %v2171, 7
      %v2173 = vsel %vm505, %v2172, %v2171
      %s2175 = scalar_lea.vmem [#allocation2], 1
      %2176 = vst.msk [vmem:[%s2175] ss:$8 sm:$0x7] %vm2136, %v2173
      %2177 = vst.msk [vmem:[%s2175] ss:$8 sm:$0x0] %vm2136, %v2173
      %s2178 = scalar_lea.vmem %s7, %s1112
      %v2179 = vld [vmem:[%s2178] sm:$0x1]
      %v2180 = vld [vmem:[%s12] ss:$8 sm:$0x3]
      %v2181 = vld [vmem:[%s491] ss:$8 sm:$0x3]
      %v2182 = vld [vmem:[#allocation2] sm:$0x3]
      %v2183 = vld [vmem:[#allocation2 + $0x8] sm:$0x3]
      %v2184 = vld [vmem:[#allocation2 + $0x10] sm:$0x3]
      %v2186 = vlaneseq
      %v2187 = vshrl.u32 %v2186, 7
      %v2188 = vsub.s32 0, %v2187
      %v2189 = vrot.slane %v2180, %v2188
      %v2190 = vlaneseq
      %v2191 = vshrl.u32 %v2190, 7
      %v2192 = vsub.s32 1, %v2191
      %v2193 = vrot.slane %v2180, %v2192
      %2194 = vrot.lane.b32.xlu0 %v2189, 34
      %v2195 = vpop.permute.xlu0 %2194
      %2196 = vrot.lane.b32.xlu0 %v2193, 34
      %v2197 = vpop.permute.xlu0 %2196
      %v2198 = vsel %vm540, %v2195, %v2197
      %v2202 = vmul.f32 %v2182, %v2195
      %v2203 = vmul.f32 %v2183, %v2198
      %v2204 = vmul.f32 %v2184, %v2197
      %2208 = vrot.lane.b32.xlu0 %v2202, 94
      %v2209 = vpop.permute.xlu0 %2208
      %2210 = vrot.lane.b32.xlu0 %v2203, 94
      %v2211 = vpop.permute.xlu0 %2210
      %2212 = vrot.lane.b32.xlu0 %v2204, 94
      %v2213 = vpop.permute.xlu0 %2212
      %v2214 = vsel %vm569, %v2209, %v2211
      %v2215 = vsel %vm569, %v2211, %v2213
      %2218 = vst [vmem:[#allocation3] sm:$0x3] %v2214
      %2219 = vst [vmem:[#allocation3 + $0x8] sm:$0x3] %v2215
      %v2220 = vld [vmem:[#allocation2] sm:$0x3]
      %v2221 = vld [vmem:[#allocation2 + $0x8] sm:$0x3]
      %v2222 = vld [vmem:[#allocation2 + $0x10] sm:$0x3]
      %v2226 = vrot.slane %v2220, 6
      %v2227 = vrot.slane %v2221, 6
      %v2228 = vrot.slane %v2222, 6
      %2229 = vrot.lane.b32.xlu0 %v2226, 93
      %v2230 = vpop.permute.xlu0 %2229
      %2231 = vrot.lane.b32.xlu0 %v2227, 93
      %v2232 = vpop.permute.xlu0 %2231
      %2233 = vrot.lane.b32.xlu0 %v2228, 93
      %v2234 = vpop.permute.xlu0 %2233
      %v2235 = vsel %vm606, %v2230, %v2232
      %v2236 = vsel %vm606, %v2232, %v2234
      %2239 = vst [vmem:[#allocation3] sm:$0xc] %v2235
      %2240 = vst [vmem:[#allocation3 + $0x8] sm:$0xc] %v2236
      %v2241 = vld [vmem:[#allocation2] sm:$0x3]
      %v2242 = vld [vmem:[#allocation2 + $0x8] sm:$0x3]
      %v2243 = vld [vmem:[#allocation2 + $0x10] sm:$0x3]
      %v2245 = vlaneseq
      %v2246 = vshrl.u32 %v2245, 7
      %v2247 = vsub.s32 0, %v2246
      %v2248 = vrot.slane %v2181, %v2247
      %v2249 = vlaneseq
      %v2250 = vshrl.u32 %v2249, 7
      %v2251 = vsub.s32 1, %v2250
      %v2252 = vrot.slane %v2181, %v2251
      %2253 = vrot.lane.b32.xlu0 %v2248, 36
      %v2254 = vpop.permute.xlu0 %2253
      %2255 = vrot.lane.b32.xlu0 %v2252, 36
      %v2256 = vpop.permute.xlu0 %2255
      %v2257 = vsel %vm638, %v2254, %v2256
      %v2261 = vmul.f32 %v2241, %v2254
      %v2262 = vmul.f32 %v2242, %v2257
      %v2263 = vmul.f32 %v2243, %v2256
      %v2267 = vrot.slane %v2261, 4
      %v2268 = vrot.slane %v2262, 4
      %v2269 = vrot.slane %v2263, 4
      %2270 = vrot.lane.b32.xlu0 %v2267, 92
      %v2271 = vpop.permute.xlu0 %2270
      %2272 = vrot.lane.b32.xlu0 %v2268, 92
      %v2273 = vpop.permute.xlu0 %2272
      %2274 = vrot.lane.b32.xlu0 %v2269, 92
      %v2275 = vpop.permute.xlu0 %2274
      %v2276 = vsel %vm667, %v2271, %v2273
      %v2277 = vsel %vm667, %v2273, %v2275
      %2280 = vst [vmem:[#allocation3] sm:$0x30] %v2276
      %2281 = vst [vmem:[#allocation3 + $0x8] sm:$0x30] %v2277
      %v2282 = vld [vmem:[#allocation2] sm:$0x3]
      %v2283 = vld [vmem:[#allocation2 + $0x8] sm:$0x3]
      %v2284 = vld [vmem:[#allocation2 + $0x10] sm:$0x3]
      %2285 = vrot.lane.b32.xlu0 %v2189, 50
      %v2286 = vpop.permute.xlu0 %2285
      %2287 = vrot.lane.b32.xlu0 %v2193, 50
      %v2288 = vpop.permute.xlu0 %2287
      %v2289 = vsel %vm690, %v2286, %v2288
      %v2293 = vmul.f32 %v2282, %v2286
      %v2294 = vmul.f32 %v2283, %v2289
      %v2295 = vmul.f32 %v2284, %v2288
      %v2299 = vrot.slane %v2293, 2
      %v2300 = vrot.slane %v2294, 2
      %v2301 = vrot.slane %v2295, 2
      %2302 = vrot.lane.b32.xlu0 %v2299, 78
      %v2303 = vpop.permute.xlu0 %2302
      %2304 = vrot.lane.b32.xlu0 %v2300, 78
      %v2305 = vpop.permute.xlu0 %2304
      %2306 = vrot.lane.b32.xlu0 %v2301, 78
      %v2307 = vpop.permute.xlu0 %2306
      %v2308 = vsel %vm719, %v2303, %v2305
      %v2309 = vsel %vm719, %v2305, %v2307
      %2312 = vst [vmem:[#allocation3] sm:$0xc0] %v2308
      %2313 = vst [vmem:[#allocation3 + $0x8] sm:$0xc0] %v2309
      %v2314 = vld [vmem:[#allocation2] sm:$0x3]
      %v2315 = vld [vmem:[#allocation2 + $0x8] sm:$0x3]
      %v2316 = vld [vmem:[#allocation2 + $0x10] sm:$0x3]
      %2320 = vrot.lane.b32.xlu0 %v2314, 77
      %v2321 = vpop.permute.xlu0 %2320
      %2322 = vrot.lane.b32.xlu0 %v2315, 77
      %v2323 = vpop.permute.xlu0 %2322
      %2324 = vrot.lane.b32.xlu0 %v2316, 77
      %v2325 = vpop.permute.xlu0 %2324
      %v2326 = vsel %vm756, %v2321, %v2323
      %v2327 = vsel %vm756, %v2323, %v2325
      %2330 = vst [vmem:[#allocation3 + $0x10] sm:$0x3] %v2326
      %2331 = vst [vmem:[#allocation3 + $0x18] sm:$0x3] %v2327
      %v2332 = vld [vmem:[#allocation2] sm:$0x3]
      %v2333 = vld [vmem:[#allocation2 + $0x8] sm:$0x3]
      %v2334 = vld [vmem:[#allocation2 + $0x10] sm:$0x3]
      %2335 = vrot.lane.b32.xlu0 %v2248, 52
      %v2336 = vpop.permute.xlu0 %2335
      %2337 = vrot.lane.b32.xlu0 %v2252, 52
      %v2338 = vpop.permute.xlu0 %2337
      %v2339 = vsel %vm779, %v2336, %v2338
      %v2343 = vmul.f32 %v2332, %v2336
      %v2344 = vmul.f32 %v2333, %v2339
      %v2345 = vmul.f32 %v2334, %v2338
      %v2349 = vrot.slane %v2343, 6
      %v2350 = vrot.slane %v2344, 6
      %v2351 = vrot.slane %v2345, 6
      %2352 = vrot.lane.b32.xlu0 %v2349, 76
      %v2353 = vpop.permute.xlu0 %2352
      %2354 = vrot.lane.b32.xlu0 %v2350, 76
      %v2355 = vpop.permute.xlu0 %2354
      %2356 = vrot.lane.b32.xlu0 %v2351, 76
      %v2357 = vpop.permute.xlu0 %2356
      %v2358 = vsel %vm808, %v2353, %v2355
      %v2359 = vsel %vm808, %v2355, %v2357
      %2362 = vst [vmem:[#allocation3 + $0x10] sm:$0xc] %v2358
      %2363 = vst [vmem:[#allocation3 + $0x18] sm:$0xc] %v2359
      %v2364 = vld [vmem:[#allocation2] sm:$0x3]
      %v2365 = vld [vmem:[#allocation2 + $0x8] sm:$0x3]
      %v2366 = vld [vmem:[#allocation2 + $0x10] sm:$0x3]
      %2367 = vrot.lane.b32.xlu0 %v2189, 66
      %v2368 = vpop.permute.xlu0 %2367
      %2369 = vrot.lane.b32.xlu0 %v2193, 66
      %v2370 = vpop.permute.xlu0 %2369
      %v2371 = vsel %vm831, %v2368, %v2370
      %v2375 = vmul.f32 %v2364, %v2368
      %v2376 = vmul.f32 %v2365, %v2371
      %v2377 = vmul.f32 %v2366, %v2370
      %v2381 = vrot.slane %v2375, 4
      %v2382 = vrot.slane %v2376, 4
      %v2383 = vrot.slane %v2377, 4
      %2384 = vrot.lane.b32.xlu0 %v2381, 62
      %v2385 = vpop.permute.xlu0 %2384
      %2386 = vrot.lane.b32.xlu0 %v2382, 62
      %v2387 = vpop.permute.xlu0 %2386
      %2388 = vrot.lane.b32.xlu0 %v2383, 62
      %v2389 = vpop.permute.xlu0 %2388
      %v2390 = vsel %vm860, %v2385, %v2387
      %v2391 = vsel %vm860, %v2387, %v2389
      %2394 = vst [vmem:[#allocation3 + $0x10] sm:$0x30] %v2390
      %2395 = vst [vmem:[#allocation3 + $0x18] sm:$0x30] %v2391
      %v2396 = vld [vmem:[#allocation2] sm:$0x3]
      %v2397 = vld [vmem:[#allocation2 + $0x8] sm:$0x3]
      %v2398 = vld [vmem:[#allocation2 + $0x10] sm:$0x3]
      %v2402 = vrot.slane %v2396, 2
      %v2403 = vrot.slane %v2397, 2
      %v2404 = vrot.slane %v2398, 2
      %2405 = vrot.lane.b32.xlu0 %v2402, 61
      %v2406 = vpop.permute.xlu0 %2405
      %2407 = vrot.lane.b32.xlu0 %v2403, 61
      %v2408 = vpop.permute.xlu0 %2407
      %2409 = vrot.lane.b32.xlu0 %v2404, 61
      %v2410 = vpop.permute.xlu0 %2409
      %v2411 = vsel %vm897, %v2406, %v2408
      %v2412 = vsel %vm897, %v2408, %v2410
      %2415 = vst [vmem:[#allocation3 + $0x10] sm:$0xc0] %v2411
      %2416 = vst [vmem:[#allocation3 + $0x18] sm:$0xc0] %v2412
      %v2417 = vld [vmem:[#allocation2] sm:$0x3]
      %v2418 = vld [vmem:[#allocation2 + $0x8] sm:$0x3]
      %v2419 = vld [vmem:[#allocation2 + $0x10] sm:$0x3]
      %2420 = vrot.lane.b32.xlu0 %v2248, 68
      %v2421 = vpop.permute.xlu0 %2420
      %2422 = vrot.lane.b32.xlu0 %v2252, 68
      %v2423 = vpop.permute.xlu0 %2422
      %v2424 = vsel %vm920, %v2421, %v2423
      %v2428 = vmul.f32 %v2417, %v2421
      %v2429 = vmul.f32 %v2418, %v2424
      %v2430 = vmul.f32 %v2419, %v2423
      %2434 = vrot.lane.b32.xlu0 %v2428, 60
      %v2435 = vpop.permute.xlu0 %2434
      %2436 = vrot.lane.b32.xlu0 %v2429, 60
      %v2437 = vpop.permute.xlu0 %2436
      %2438 = vrot.lane.b32.xlu0 %v2430, 60
      %v2439 = vpop.permute.xlu0 %2438
      %v2440 = vsel %vm949, %v2435, %v2437
      %v2441 = vsel %vm949, %v2437, %v2439
      %2444 = vst [vmem:[#allocation3 + $0x20] sm:$0x3] %v2440
      %2445 = vst [vmem:[#allocation3 + $0x28] sm:$0x3] %v2441
      %v2446 = vld [vmem:[#allocation3] sm:$0xff]
      %v2447 = vld [vmem:[#allocation3 + $0x8] sm:$0xff]
      %v2448 = vld [vmem:[#allocation3 + $0x10] sm:$0xff]
      %v2449 = vld [vmem:[#allocation3 + $0x18] sm:$0xff]
      %v2450 = vld [vmem:[#allocation3 + $0x20] sm:$0x3]
      %v2451 = vld [vmem:[#allocation3 + $0x28] sm:$0x3]
      %vm2452 = vcmask 146432
      %v2454 = vsel %vm2452, %v2179, 0
      %vm2456 = vcmask 1041408
      %v2458 = vsel %vm2456, %v2450, 0
      %v2461 = vsel %vm2456, %v2451, 0
      %2463 = vmatprep.subr.mxu0 %v2447
      %2464 = vmatpush1.msra.mxu0 %v2446
      %2465 = vmatprep.subr.mxu0 %v2449
      %2466 = vmatpush1.msra.mxu0 %v2448
      %2467 = vmatprep.subr.mxu0 %v2461
      %2468 = vmatpush1.msra.mxu0 %v2458
      %2469 = vmatprep.subr.mxu0 0.0
      %2470 = vmatpush1.msra.mxu0 0.0
      %2471 = vmatprep.subr.mxu0 0.0
      %2472 = vmatpush1.msra.mxu0 0.0
      %2473 = vmatprep.subr.mxu0 0.0
      %2474 = vmatpush1.msra.mxu0 0.0
      %2475 = vmatprep.subr.mxu0 0.0
      %2476 = vmatpush1.msra.mxu0 0.0
      %2477 = vmatprep.subr.mxu0 0.0
      %2478 = vmatpush1.msra.mxu0 0.0
      %2479 = vmatprep.subr.mxu0 0.0
      %2480 = vmatpush1.msra.mxu0 0.0
      %2481 = vmatprep.subr.mxu0 0.0
      %2482 = vmatpush1.msra.mxu0 0.0
      %2483 = vmatprep.subr.mxu0 0.0
      %2484 = vmatpush1.msra.mxu0 0.0
      %2485 = vmatprep.subr.mxu0 0.0
      %2486 = vmatpush1.msra.mxu0 0.0
      %2487 = vmatprep.subr.mxu0 0.0
      %2488 = vmatpush1.msra.mxu0 0.0
      %2489 = vmatprep.subr.mxu0 0.0
      %2490 = vmatpush1.msra.mxu0 0.0
      %2491 = vmatprep.subr.mxu0 0.0
      %2492 = vmatpush1.msra.mxu0 0.0
      %2493 = vmatprep.subr.mxu0 0.0
      %2494 = vmatpush1.msra.mxu0 0.0
      %2495 = vmatprep.subr.mxu0 0.0
      %2496 = vmatpush1.msra.mxu0 0.0
      %2497 = vmatprep.subr.mxu0 0.0
      %2498 = vmatpush1.msra.mxu0 0.0
      %2499 = vmatprep.subr.mxu0 0.0
      %2500 = vmatpush1.msra.mxu0 0.0
      %2501 = vmatprep.subr.mxu0 0.0
      %2502 = vmatpush1.msra.mxu0 0.0
      %2503 = vmatprep.subr.mxu0 0.0
      %2504 = vmatpush1.msra.mxu0 0.0
      %2505 = vmatprep.subr.mxu0 0.0
      %2506 = vmatpush1.msra.mxu0 0.0
      %2507 = vmatprep.subr.mxu0 0.0
      %2508 = vmatpush1.msra.mxu0 0.0
      %2509 = vmatprep.subr.mxu0 0.0
      %2510 = vmatpush1.msra.mxu0 0.0
      %2511 = vmatprep.subr.mxu0 0.0
      %2512 = vmatpush1.msra.mxu0 0.0
      %2513 = vmatprep.subr.mxu0 0.0
      %2514 = vmatpush1.msra.mxu0 0.0
      %2515 = vmatprep.subr.mxu0 0.0
      %2516 = vmatpush1.msra.mxu0 0.0
      %2517 = vmatprep.subr.mxu0 0.0
      %2518 = vmatpush1.msra.mxu0 0.0
      %2519 = vmatprep.subr.mxu0 0.0
      %2520 = vmatpush1.msra.mxu0 0.0
      %2521 = vmatprep.subr.mxu0 0.0
      %2522 = vmatpush1.msra.mxu0 0.0
      %2523 = vmatprep.subr.mxu0 0.0
      %2524 = vmatpush1.msra.mxu0 0.0
      %2525 = vmatprep.subr.mxu0 0.0
      %2526 = vmatpush1.msra.mxu0 0.0
      %2527 = vmatprep.mubr.f32.mxu0 0.0
      %2528 = vmatmul.mubr.f32.gmra.mrb[0].mxu0 %v2454
      %v2529 = vpop.f32.mrb[0].mxu0
      %v2530 = vadd.f32 0.0, %v2529
      %v2531 = vpop.f32.mrb[0].mxu0
      %v2532 = vadd.f32 0.0, %v2531
      %2533 = vdwg.mxu0
      %v2534 = vxor.u32 %v2530, 2147483648
      %v2535 = vxor.u32 %v2532, 2147483648
      %v2536 = vmul.f32 %v2534, 1.442695
      %v2537 = vpow.pop %v2536
      %v2538 = vmul.f32 %v2535, 1.442695
      %v2539 = vpow.pop %v2538
      %v2540 = vadd.f32 %v2537, 1.0
      %v2541 = vadd.f32 %v2539, 1.0
      %v2542 = vrcp.pop %v2540
      %v2543 = vmul.f32 1.0, %v2542
      %v2544 = vrcp.pop %v2541
      %v2545 = vmul.f32 1.0, %v2544
      %v2546 = vlaneseq
      %v2547 = vshrl.u32 %v2546, 7
      %v2548 = vsub.s32 0, %v2547
      %v2549 = vrot.slane %v2543, %v2548
      %v2550 = vlaneseq
      %v2551 = vshrl.u32 %v2550, 7
      %v2552 = vsub.s32 0, %v2551
      %v2553 = vrot.slane %v2545, %v2552
      %v2554 = vmul.f32 %v2084, %v2549
      %v2555 = vmul.f32 %v2086, %v2553
      %v2556 = vmul.f32 %v2090, %v2549
      %v2557 = vmul.f32 %v2092, %v2553
      %v2558 = vadd.f32 %v2554, %v2555
      %2559 = vadd.xlane.f32.xlu0 %v2558
      %v2560 = vpop.xlane.xlu0 %2559
      %v2561 = vadd.f32 %v2556, %v2557
      %2562 = vadd.xlane.f32.xlu0 %v2561
      %v2563 = vpop.xlane.xlu0 %2562
      %v2564 = vrcp.pop 256.0
      %v2565 = vmul.f32 %v2560, %v2564
      %v2566 = vmul.f32 %v2563, %v2564
      %s2567 = smul.u32 %s1112, 8
      %s2568 = scalar_lea.vmem %s8, %s2567
      %v2569 = vld [vmem:[%s2568] sm:$0xff]
      %s2570 = scalar_lea.vmem %s9, %s2567
      %v2571 = vld [vmem:[%s2570] sm:$0xff]
      %v2573 = vsel %vm1013, %v2569, 0
      %2575 = vmatprep.subr.mxu0 0.0
      %2576 = vmatpush1.msra.mxu0 %v2565
      %2577 = vmatprep.subr.mxu0 0.0
      %2578 = vmatpush1.msra.mxu0 %v2566
      %2579 = vmatprep.subr.mxu0 0.0
      %2580 = vmatpush1.msra.mxu0 0.0
      %2581 = vmatprep.subr.mxu0 0.0
      %2582 = vmatpush1.msra.mxu0 0.0
      %2583 = vmatprep.subr.mxu0 0.0
      %2584 = vmatpush1.msra.mxu0 0.0
      %2585 = vmatprep.subr.mxu0 0.0
      %2586 = vmatpush1.msra.mxu0 0.0
      %2587 = vmatprep.subr.mxu0 0.0
      %2588 = vmatpush1.msra.mxu0 0.0
      %2589 = vmatprep.subr.mxu0 0.0
      %2590 = vmatpush1.msra.mxu0 0.0
      %2591 = vmatprep.subr.mxu0 0.0
      %2592 = vmatpush1.msra.mxu0 0.0
      %2593 = vmatprep.subr.mxu0 0.0
      %2594 = vmatpush1.msra.mxu0 0.0
      %2595 = vmatprep.subr.mxu0 0.0
      %2596 = vmatpush1.msra.mxu0 0.0
      %2597 = vmatprep.subr.mxu0 0.0
      %2598 = vmatpush1.msra.mxu0 0.0
      %2599 = vmatprep.subr.mxu0 0.0
      %2600 = vmatpush1.msra.mxu0 0.0
      %2601 = vmatprep.subr.mxu0 0.0
      %2602 = vmatpush1.msra.mxu0 0.0
      %2603 = vmatprep.subr.mxu0 0.0
      %2604 = vmatpush1.msra.mxu0 0.0
      %2605 = vmatprep.subr.mxu0 0.0
      %2606 = vmatpush1.msra.mxu0 0.0
      %2607 = vmatprep.subr.mxu0 0.0
      %2608 = vmatpush1.msra.mxu0 0.0
      %2609 = vmatprep.subr.mxu0 0.0
      %2610 = vmatpush1.msra.mxu0 0.0
      %2611 = vmatprep.subr.mxu0 0.0
      %2612 = vmatpush1.msra.mxu0 0.0
      %2613 = vmatprep.subr.mxu0 0.0
      %2614 = vmatpush1.msra.mxu0 0.0
      %2615 = vmatprep.subr.mxu0 0.0
      %2616 = vmatpush1.msra.mxu0 0.0
      %2617 = vmatprep.subr.mxu0 0.0
      %2618 = vmatpush1.msra.mxu0 0.0
      %2619 = vmatprep.subr.mxu0 0.0
      %2620 = vmatpush1.msra.mxu0 0.0
      %2621 = vmatprep.subr.mxu0 0.0
      %2622 = vmatpush1.msra.mxu0 0.0
      %2623 = vmatprep.subr.mxu0 0.0
      %2624 = vmatpush1.msra.mxu0 0.0
      %2625 = vmatprep.subr.mxu0 0.0
      %2626 = vmatpush1.msra.mxu0 0.0
      %2627 = vmatprep.subr.mxu0 0.0
      %2628 = vmatpush1.msra.mxu0 0.0
      %2629 = vmatprep.subr.mxu0 0.0
      %2630 = vmatpush1.msra.mxu0 0.0
      %2631 = vmatprep.subr.mxu0 0.0
      %2632 = vmatpush1.msra.mxu0 0.0
      %2633 = vmatprep.subr.mxu0 0.0
      %2634 = vmatpush1.msra.mxu0 0.0
      %2635 = vmatprep.subr.mxu0 0.0
      %2636 = vmatpush1.msra.mxu0 0.0
      %2637 = vmatprep.subr.mxu0 0.0
      %2638 = vmatpush1.msra.mxu0 0.0
      %2639 = vmatprep.mubr.f32.mxu0 0.0
      %2640 = vmatmul.mubr.f32.gmra.mrb[0].mxu0 %v2573
      %v2641 = vpop.f32.mrb[0].mxu0
      %v2642 = vadd.f32 %v2571, %v2641
      %v2643 = vpop.f32.mrb[0].mxu0
      %2644 = vdwg.mxu0
      %v2645 = vmax.f32 %v2642, 0.0
      %s2646 = scalar_lea.vmem %s10, %s1113
      %v2647 = vld [vmem:[%s2646] sm:$0xff]
      %v2648 = vld [vmem:[%s2646 + $0x8] sm:$0xff]
      %s2649 = scalar_lea.vmem %s11, %s1113
      %v2650 = vld [vmem:[%s2649] sm:$0xff]
      %v2651 = vld [vmem:[%s2649 + $0x8] sm:$0xff]
      %vm2652 = vcmask 64512
      %v2654 = vsel %vm2652, %v2647, 0
      %v2657 = vsel %vm2652, %v2648, 0
      %2659 = vmatprep.subr.mxu0 0.0
      %2660 = vmatpush1.msra.mxu0 %v2645
      %2661 = vmatprep.subr.mxu0 0.0
      %2662 = vmatpush1.msra.mxu0 0.0
      %2663 = vmatprep.subr.mxu0 0.0
      %2664 = vmatpush1.msra.mxu0 0.0
      %2665 = vmatprep.subr.mxu0 0.0
      %2666 = vmatpush1.msra.mxu0 0.0
      %2667 = vmatprep.subr.mxu0 0.0
      %2668 = vmatpush1.msra.mxu0 0.0
      %2669 = vmatprep.subr.mxu0 0.0
      %2670 = vmatpush1.msra.mxu0 0.0
      %2671 = vmatprep.subr.mxu0 0.0
      %2672 = vmatpush1.msra.mxu0 0.0
      %2673 = vmatprep.subr.mxu0 0.0
      %2674 = vmatpush1.msra.mxu0 0.0
      %2675 = vmatprep.subr.mxu0 0.0
      %2676 = vmatpush1.msra.mxu0 0.0
      %2677 = vmatprep.subr.mxu0 0.0
      %2678 = vmatpush1.msra.mxu0 0.0
      %2679 = vmatprep.subr.mxu0 0.0
      %2680 = vmatpush1.msra.mxu0 0.0
      %2681 = vmatprep.subr.mxu0 0.0
      %2682 = vmatpush1.msra.mxu0 0.0
      %2683 = vmatprep.subr.mxu0 0.0
      %2684 = vmatpush1.msra.mxu0 0.0
      %2685 = vmatprep.subr.mxu0 0.0
      %2686 = vmatpush1.msra.mxu0 0.0
      %2687 = vmatprep.subr.mxu0 0.0
      %2688 = vmatpush1.msra.mxu0 0.0
      %2689 = vmatprep.subr.mxu0 0.0
      %2690 = vmatpush1.msra.mxu0 0.0
      %2691 = vmatprep.subr.mxu0 0.0
      %2692 = vmatpush1.msra.mxu0 0.0
      %2693 = vmatprep.subr.mxu0 0.0
      %2694 = vmatpush1.msra.mxu0 0.0
      %2695 = vmatprep.subr.mxu0 0.0
      %2696 = vmatpush1.msra.mxu0 0.0
      %2697 = vmatprep.subr.mxu0 0.0
      %2698 = vmatpush1.msra.mxu0 0.0
      %2699 = vmatprep.subr.mxu0 0.0
      %2700 = vmatpush1.msra.mxu0 0.0
      %2701 = vmatprep.subr.mxu0 0.0
      %2702 = vmatpush1.msra.mxu0 0.0
      %2703 = vmatprep.subr.mxu0 0.0
      %2704 = vmatpush1.msra.mxu0 0.0
      %2705 = vmatprep.subr.mxu0 0.0
      %2706 = vmatpush1.msra.mxu0 0.0
      %2707 = vmatprep.subr.mxu0 0.0
      %2708 = vmatpush1.msra.mxu0 0.0
      %2709 = vmatprep.subr.mxu0 0.0
      %2710 = vmatpush1.msra.mxu0 0.0
      %2711 = vmatprep.subr.mxu0 0.0
      %2712 = vmatpush1.msra.mxu0 0.0
      %2713 = vmatprep.subr.mxu0 0.0
      %2714 = vmatpush1.msra.mxu0 0.0
      %2715 = vmatprep.subr.mxu0 0.0
      %2716 = vmatpush1.msra.mxu0 0.0
      %2717 = vmatprep.subr.mxu0 0.0
      %2718 = vmatpush1.msra.mxu0 0.0
      %2719 = vmatprep.subr.mxu0 0.0
      %2720 = vmatpush1.msra.mxu0 0.0
      %2721 = vmatprep.subr.mxu0 0.0
      %2722 = vmatpush1.msra.mxu0 0.0
      %2723 = vmatprep.mubr.f32.mxu0 0.0
      %2724 = vmatmul.mubr.f32.gmra.mrb[0].mxu0 %v2654
      %v2725 = vpop.f32.mrb[0].mxu0
      %v2726 = vadd.f32 %v2650, %v2725
      %v2727 = vpop.f32.mrb[0].mxu0
      %2728 = vmatprep.mubr.f32.mxu0 0.0
      %2729 = vmatmul.mubr.f32.gmra.mrb[0].mxu0 %v2657
      %v2730 = vpop.f32.mrb[0].mxu0
      %v2731 = vadd.f32 %v2651, %v2730
      %v2732 = vpop.f32.mrb[0].mxu0
      %2733 = vdwg.mxu0
      %v2734 = vxor.u32 %v2726, 2147483648
      %v2735 = vxor.u32 %v2731, 2147483648
      %v2736 = vmul.f32 %v2734, 1.442695
      %v2737 = vpow.pop %v2736
      %v2738 = vmul.f32 %v2735, 1.442695
      %v2739 = vpow.pop %v2738
      %v2740 = vadd.f32 %v2737, 1.0
      %v2741 = vadd.f32 %v2739, 1.0
      %v2742 = vrcp.pop %v2740
      %v2743 = vmul.f32 1.0, %v2742
      %v2744 = vrcp.pop %v2741
      %v2745 = vmul.f32 1.0, %v2744
      %2747 = vset.pattern.permute.xlu0 0
      %2748 = vperm.xlu0 %2747, %v2743
      %v2749 = vpop.permute.xlu0 %2748
      %2752 = vset.pattern.permute.xlu0 0
      %2753 = vperm.xlu0 %2752, %v2745
      %v2754 = vpop.permute.xlu0 %2753
      %v2756 = vmul.f32 %v2554, %v2749
      %v2757 = vmul.f32 %v2555, %v2749
      %v2758 = vmul.f32 %v2556, %v2754
      %v2759 = vmul.f32 %v2557, %v2754
      %v2760 = vadd.f32 %v2756, 0.0
      %v2761 = vadd.f32 %v2757, 0.0
      %v2762 = vadd.f32 %v2758, 0.0
      %v2763 = vadd.f32 %v2759, 0.0
      %s2764 = sadd.s32 %s1112, 1
      %s2765 = smul.u32 %s2764, 16
      %s2766 = scalar_lea.vmem %s3, %s2765
      %v2767 = vld [vmem:[%s2766] sm:$0xff]
      %v2768 = vld [vmem:[%s2766 + $0x8] sm:$0xff]
      %s2769 = scalar_lea.vmem %s4, %s2765
      %v2770 = vld [vmem:[%s2769] sm:$0xff]
      %v2771 = vld [vmem:[%s2769 + $0x8] sm:$0xff]
      %s2772 = scalar_lea.vmem %s12, 2
      %v2773 = vld [vmem:[%s2772] ss:$8 sm:$0x3]
      %s2774 = scalar_lea.vmem %s12, 3
      %v2775 = vld [vmem:[%s2774] ss:$8 sm:$0x3]
      %2778 = vrot.lane.b32.xlu0 %v1108, 51
      %v2779 = vpop.permute.xlu0 %2778
      %2780 = vrot.lane.b32.xlu0 %v1109, 51
      %v2781 = vpop.permute.xlu0 %2780
      %v2782 = vsel %vm505, %v2779, %v2781
      %2786 = vst.msk [vmem:[#allocation2] sm:$0xff] %vm514, %v2779
      %2787 = vst [vmem:[#allocation2 + $0x8] sm:$0xff] %v2782
      %2788 = vst.msk [vmem:[#allocation2 + $0x10] sm:$0xff] %vm505, %v2781
      %v2789 = vld [vmem:[#allocation2] sm:$0xff]
      %v2790 = vld [vmem:[#allocation2 + $0x8] sm:$0xff]
      %v2791 = vld [vmem:[#allocation2 + $0x10] sm:$0xff]
      %v2793 = vlaneseq
      %v2794 = vshrl.u32 %v2793, 7
      %v2795 = vsub.s32 0, %v2794
      %v2796 = vrot.slane %v2773, %v2795
      %v2797 = vlaneseq
      %v2798 = vshrl.u32 %v2797, 7
      %v2799 = vsub.s32 1, %v2798
      %v2800 = vrot.slane %v2773, %v2799
      %2801 = vrot.lane.b32.xlu0 %v2796, 17
      %v2802 = vpop.permute.xlu0 %2801
      %2803 = vrot.lane.b32.xlu0 %v2800, 17
      %v2804 = vpop.permute.xlu0 %2803
      %vm2805 = vcmask 138240
      %v2806 = vsel %vm2805, %v2802, %v2804
      %v2810 = vmul.f32 %v2789, %v2802
      %v2811 = vmul.f32 %v2790, %v2806
      %v2812 = vmul.f32 %v2791, %v2804
      %2816 = vrot.lane.b32.xlu0 %v2810, 111
      %v2817 = vpop.permute.xlu0 %2816
      %2818 = vrot.lane.b32.xlu0 %v2811, 111
      %v2819 = vpop.permute.xlu0 %2818
      %2820 = vrot.lane.b32.xlu0 %v2812, 111
      %v2821 = vpop.permute.xlu0 %2820
      %vm2822 = vcmask 908288
      %v2823 = vsel %vm2822, %v2817, %v2819
      %v2824 = vsel %vm2822, %v2819, %v2821
      %2827 = vst [vmem:[#allocation3] sm:$0xff] %v2823
      %2828 = vst [vmem:[#allocation3 + $0x8] sm:$0xff] %v2824
      %v2829 = vld [vmem:[#allocation2] sm:$0xff]
      %v2830 = vld [vmem:[#allocation2 + $0x8] sm:$0xff]
      %v2831 = vld [vmem:[#allocation2 + $0x10] sm:$0xff]
      %2835 = vrot.lane.b32.xlu0 %v2829, 109
      %v2836 = vpop.permute.xlu0 %2835
      %2837 = vrot.lane.b32.xlu0 %v2830, 109
      %v2838 = vpop.permute.xlu0 %2837
      %2839 = vrot.lane.b32.xlu0 %v2831, 109
      %v2840 = vpop.permute.xlu0 %2839
      %vm2841 = vcmask 891904
      %v2842 = vsel %vm2841, %v2836, %v2838
      %v2843 = vsel %vm2841, %v2838, %v2840
      %2846 = vst [vmem:[#allocation3 + $0x10] sm:$0xff] %v2842
      %2847 = vst [vmem:[#allocation3 + $0x18] sm:$0xff] %v2843
      %v2848 = vld [vmem:[#allocation2] sm:$0xff]
      %v2849 = vld [vmem:[#allocation2 + $0x8] sm:$0xff]
      %v2850 = vld [vmem:[#allocation2 + $0x10] sm:$0xff]
      %v2852 = vlaneseq
      %v2853 = vshrl.u32 %v2852, 7
      %v2854 = vsub.s32 0, %v2853
      %v2855 = vrot.slane %v2775, %v2854
      %v2856 = vlaneseq
      %v2857 = vshrl.u32 %v2856, 7
      %v2858 = vsub.s32 1, %v2857
      %v2859 = vrot.slane %v2775, %v2858
      %2860 = vrot.lane.b32.xlu0 %v2855, 21
      %v2861 = vpop.permute.xlu0 %2860
      %2862 = vrot.lane.b32.xlu0 %v2859, 21
      %v2863 = vpop.permute.xlu0 %2862
      %vm2864 = vcmask 171008
      %v2865 = vsel %vm2864, %v2861, %v2863
      %v2869 = vmul.f32 %v2848, %v2861
      %v2870 = vmul.f32 %v2849, %v2865
      %v2871 = vmul.f32 %v2850, %v2863
      %2875 = vrot.lane.b32.xlu0 %v2869, 107
      %v2876 = vpop.permute.xlu0 %2875
      %2877 = vrot.lane.b32.xlu0 %v2870, 107
      %v2878 = vpop.permute.xlu0 %2877
      %2879 = vrot.lane.b32.xlu0 %v2871, 107
      %v2880 = vpop.permute.xlu0 %2879
      %vm2881 = vcmask 875520
      %v2882 = vsel %vm2881, %v2876, %v2878
      %v2883 = vsel %vm2881, %v2878, %v2880
      %2886 = vst [vmem:[#allocation3 + $0x20] sm:$0xff] %v2882
      %2887 = vst [vmem:[#allocation3 + $0x28] sm:$0xff] %v2883
      %v2888 = vld [vmem:[#allocation2] sm:$0xff]
      %v2889 = vld [vmem:[#allocation2 + $0x8] sm:$0xff]
      %v2890 = vld [vmem:[#allocation2 + $0x10] sm:$0xff]
      %2891 = vrot.lane.b32.xlu0 %v2796, 49
      %v2892 = vpop.permute.xlu0 %2891
      %2893 = vrot.lane.b32.xlu0 %v2800, 49
      %v2894 = vpop.permute.xlu0 %2893
      %vm2895 = vcmask 400384
      %v2896 = vsel %vm2895, %v2892, %v2894
      %v2900 = vmul.f32 %v2888, %v2892
      %v2901 = vmul.f32 %v2889, %v2896
      %v2902 = vmul.f32 %v2890, %v2894
      %2906 = vrot.lane.b32.xlu0 %v2900, 79
      %v2907 = vpop.permute.xlu0 %2906
      %2908 = vrot.lane.b32.xlu0 %v2901, 79
      %v2909 = vpop.permute.xlu0 %2908
      %2910 = vrot.lane.b32.xlu0 %v2902, 79
      %v2911 = vpop.permute.xlu0 %2910
      %vm2912 = vcmask 646144
      %v2913 = vsel %vm2912, %v2907, %v2909
      %v2914 = vsel %vm2912, %v2909, %v2911
      %2917 = vst [vmem:[#allocation3 + $0x30] sm:$0xff] %v2913
      %2918 = vst [vmem:[#allocation3 + $0x38] sm:$0xff] %v2914
      %v2919 = vld [vmem:[#allocation2] sm:$0xff]
      %v2920 = vld [vmem:[#allocation2 + $0x8] sm:$0xff]
      %v2921 = vld [vmem:[#allocation2 + $0x10] sm:$0xff]
      %2925 = vrot.lane.b32.xlu0 %v2919, 77
      %v2926 = vpop.permute.xlu0 %2925
      %2927 = vrot.lane.b32.xlu0 %v2920, 77
      %v2928 = vpop.permute.xlu0 %2927
      %2929 = vrot.lane.b32.xlu0 %v2921, 77
      %v2930 = vpop.permute.xlu0 %2929
      %v2931 = vsel %vm756, %v2926, %v2928
      %v2932 = vsel %vm756, %v2928, %v2930
      %2935 = vst [vmem:[#allocation3 + $0x40] sm:$0xff] %v2931
      %2936 = vst [vmem:[#allocation3 + $0x48] sm:$0xff] %v2932
      %v2937 = vld [vmem:[#allocation2] sm:$0xff]
      %v2938 = vld [vmem:[#allocation2 + $0x8] sm:$0xff]
      %v2939 = vld [vmem:[#allocation2 + $0x10] sm:$0xff]
      %2940 = vrot.lane.b32.xlu0 %v2855, 53
      %v2941 = vpop.permute.xlu0 %2940
      %2942 = vrot.lane.b32.xlu0 %v2859, 53
      %v2943 = vpop.permute.xlu0 %2942
      %vm2944 = vcmask 433152
      %v2945 = vsel %vm2944, %v2941, %v2943
      %v2949 = vmul.f32 %v2937, %v2941
      %v2950 = vmul.f32 %v2938, %v2945
      %v2951 = vmul.f32 %v2939, %v2943
      %2955 = vrot.lane.b32.xlu0 %v2949, 75
      %v2956 = vpop.permute.xlu0 %2955
      %2957 = vrot.lane.b32.xlu0 %v2950, 75
      %v2958 = vpop.permute.xlu0 %2957
      %2959 = vrot.lane.b32.xlu0 %v2951, 75
      %v2960 = vpop.permute.xlu0 %2959
      %vm2961 = vcmask 613376
      %v2962 = vsel %vm2961, %v2956, %v2958
      %v2963 = vsel %vm2961, %v2958, %v2960
      %2966 = vst [vmem:[#allocation3 + $0x50] sm:$0xff] %v2962
      %2967 = vst [vmem:[#allocation3 + $0x58] sm:$0xff] %v2963
      %v2968 = vld [vmem:[#allocation2] sm:$0xff]
      %v2969 = vld [vmem:[#allocation2 + $0x8] sm:$0xff]
      %v2970 = vld [vmem:[#allocation2 + $0x10] sm:$0xff]
      %2971 = vrot.lane.b32.xlu0 %v2796, 81
      %v2972 = vpop.permute.xlu0 %2971
      %2973 = vrot.lane.b32.xlu0 %v2800, 81
      %v2974 = vpop.permute.xlu0 %2973
      %vm2975 = vcmask 662528
      %v2976 = vsel %vm2975, %v2972, %v2974
      %v2980 = vmul.f32 %v2968, %v2972
      %v2981 = vmul.f32 %v2969, %v2976
      %v2982 = vmul.f32 %v2970, %v2974
      %2986 = vrot.lane.b32.xlu0 %v2980, 47
      %v2987 = vpop.permute.xlu0 %2986
      %2988 = vrot.lane.b32.xlu0 %v2981, 47
      %v2989 = vpop.permute.xlu0 %2988
      %2990 = vrot.lane.b32.xlu0 %v2982, 47
      %v2991 = vpop.permute.xlu0 %2990
      %vm2992 = vcmask 384000
      %v2993 = vsel %vm2992, %v2987, %v2989
      %v2994 = vsel %vm2992, %v2989, %v2991
      %2997 = vst [vmem:[#allocation3 + $0x60] sm:$0xff] %v2993
      %2998 = vst [vmem:[#allocation3 + $0x68] sm:$0xff] %v2994
      %v2999 = vld [vmem:[#allocation2] sm:$0xff]
      %v3000 = vld [vmem:[#allocation2 + $0x8] sm:$0xff]
      %v3001 = vld [vmem:[#allocation2 + $0x10] sm:$0xff]
      %3005 = vrot.lane.b32.xlu0 %v2999, 45
      %v3006 = vpop.permute.xlu0 %3005
      %3007 = vrot.lane.b32.xlu0 %v3000, 45
      %v3008 = vpop.permute.xlu0 %3007
      %3009 = vrot.lane.b32.xlu0 %v3001, 45
      %v3010 = vpop.permute.xlu0 %3009
      %vm3011 = vcmask 367616
      %v3012 = vsel %vm3011, %v3006, %v3008
      %v3013 = vsel %vm3011, %v3008, %v3010
      %3016 = vst [vmem:[#allocation3 + $0x70] sm:$0xff] %v3012
      %3017 = vst [vmem:[#allocation3 + $0x78] sm:$0xff] %v3013
      %v3018 = vld [vmem:[#allocation2] sm:$0xff]
      %v3019 = vld [vmem:[#allocation2 + $0x8] sm:$0xff]
      %v3020 = vld [vmem:[#allocation2 + $0x10] sm:$0xff]
      %3021 = vrot.lane.b32.xlu0 %v2855, 85
      %v3022 = vpop.permute.xlu0 %3021
      %3023 = vrot.lane.b32.xlu0 %v2859, 85
      %v3024 = vpop.permute.xlu0 %3023
      %vm3025 = vcmask 695296
      %v3026 = vsel %vm3025, %v3022, %v3024
      %v3030 = vmul.f32 %v3018, %v3022
      %v3031 = vmul.f32 %v3019, %v3026
      %v3032 = vmul.f32 %v3020, %v3024
      %3036 = vrot.lane.b32.xlu0 %v3030, 43
      %v3037 = vpop.permute.xlu0 %3036
      %3038 = vrot.lane.b32.xlu0 %v3031, 43
      %v3039 = vpop.permute.xlu0 %3038
      %3040 = vrot.lane.b32.xlu0 %v3032, 43
      %v3041 = vpop.permute.xlu0 %3040
      %vm3042 = vcmask 351232
      %v3043 = vsel %vm3042, %v3037, %v3039
      %v3044 = vsel %vm3042, %v3039, %v3041
      %3047 = vst [vmem:[#allocation3 + $0x80] sm:$0xff] %v3043
      %3048 = vst [vmem:[#allocation3 + $0x88] sm:$0xff] %v3044
      %v3049 = vld [vmem:[#allocation3] sm:$0xff]
      %v3050 = vld [vmem:[#allocation3 + $0x8] sm:$0xff]
      %v3051 = vld [vmem:[#allocation3 + $0x10] sm:$0xff]
      %v3052 = vld [vmem:[#allocation3 + $0x18] sm:$0xff]
      %v3053 = vld [vmem:[#allocation3 + $0x20] sm:$0xff]
      %v3054 = vld [vmem:[#allocation3 + $0x28] sm:$0xff]
      %v3055 = vld [vmem:[#allocation3 + $0x30] sm:$0xff]
      %v3056 = vld [vmem:[#allocation3 + $0x38] sm:$0xff]
      %v3057 = vld [vmem:[#allocation3 + $0x40] sm:$0xff]
      %v3058 = vld [vmem:[#allocation3 + $0x48] sm:$0xff]
      %v3059 = vld [vmem:[#allocation3 + $0x50] sm:$0xff]
      %v3060 = vld [vmem:[#allocation3 + $0x58] sm:$0xff]
      %v3061 = vld [vmem:[#allocation3 + $0x60] sm:$0xff]
      %v3062 = vld [vmem:[#allocation3 + $0x68] sm:$0xff]
      %v3063 = vld [vmem:[#allocation3 + $0x70] sm:$0xff]
      %v3064 = vld [vmem:[#allocation3 + $0x78] sm:$0xff]
      %v3065 = vld [vmem:[#allocation3 + $0x80] sm:$0xff]
      %v3066 = vld [vmem:[#allocation3 + $0x88] sm:$0xff]
      %3068 = vset.pattern.permute.xlu0 0
      %3069 = vperm.xlu0 %3068, %v2770
      %v3070 = vpop.permute.xlu0 %3069
      %3073 = vset.pattern.permute.xlu0 0
      %3074 = vperm.xlu0 %3073, %v2771
      %v3075 = vpop.permute.xlu0 %3074
      %v3078 = vsel %vm1409, %v2767, 0
      %v3081 = vsel %vm1409, %v2768, 0
      %3083 = vmatprep.subr.mxu0 %v3050
      %3084 = vmatpush1.msra.mxu0 %v3049
      %3085 = vmatprep.subr.mxu0 %v3052
      %3086 = vmatpush1.msra.mxu0 %v3051
      %3087 = vmatprep.subr.mxu0 %v3054
      %3088 = vmatpush1.msra.mxu0 %v3053
      %3089 = vmatprep.subr.mxu0 %v3056
      %3090 = vmatpush1.msra.mxu0 %v3055
      %3091 = vmatprep.subr.mxu0 %v3058
      %3092 = vmatpush1.msra.mxu0 %v3057
      %3093 = vmatprep.subr.mxu0 %v3060
      %3094 = vmatpush1.msra.mxu0 %v3059
      %3095 = vmatprep.subr.mxu0 %v3062
      %3096 = vmatpush1.msra.mxu0 %v3061
      %3097 = vmatprep.subr.mxu0 %v3064
      %3098 = vmatpush1.msra.mxu0 %v3063
      %3099 = vmatprep.subr.mxu0 %v3066
      %3100 = vmatpush1.msra.mxu0 %v3065
      %3101 = vmatprep.subr.mxu0 0.0
      %3102 = vmatpush1.msra.mxu0 0.0
      %3103 = vmatprep.subr.mxu0 0.0
      %3104 = vmatpush1.msra.mxu0 0.0
      %3105 = vmatprep.subr.mxu0 0.0
      %3106 = vmatpush1.msra.mxu0 0.0
      %3107 = vmatprep.subr.mxu0 0.0
      %3108 = vmatpush1.msra.mxu0 0.0
      %3109 = vmatprep.subr.mxu0 0.0
      %3110 = vmatpush1.msra.mxu0 0.0
      %3111 = vmatprep.subr.mxu0 0.0
      %3112 = vmatpush1.msra.mxu0 0.0
      %3113 = vmatprep.subr.mxu0 0.0
      %3114 = vmatpush1.msra.mxu0 0.0
      %3115 = vmatprep.subr.mxu0 0.0
      %3116 = vmatpush1.msra.mxu0 0.0
      %3117 = vmatprep.subr.mxu0 0.0
      %3118 = vmatpush1.msra.mxu0 0.0
      %3119 = vmatprep.subr.mxu0 0.0
      %3120 = vmatpush1.msra.mxu0 0.0
      %3121 = vmatprep.subr.mxu0 0.0
      %3122 = vmatpush1.msra.mxu0 0.0
      %3123 = vmatprep.subr.mxu0 0.0
      %3124 = vmatpush1.msra.mxu0 0.0
      %3125 = vmatprep.subr.mxu0 0.0
      %3126 = vmatpush1.msra.mxu0 0.0
      %3127 = vmatprep.subr.mxu0 0.0
      %3128 = vmatpush1.msra.mxu0 0.0
      %3129 = vmatprep.subr.mxu0 0.0
      %3130 = vmatpush1.msra.mxu0 0.0
      %3131 = vmatprep.subr.mxu0 0.0
      %3132 = vmatpush1.msra.mxu0 0.0
      %3133 = vmatprep.subr.mxu0 0.0
      %3134 = vmatpush1.msra.mxu0 0.0
      %3135 = vmatprep.subr.mxu0 0.0
      %3136 = vmatpush1.msra.mxu0 0.0
      %3137 = vmatprep.subr.mxu0 0.0
      %3138 = vmatpush1.msra.mxu0 0.0
      %3139 = vmatprep.subr.mxu0 0.0
      %3140 = vmatpush1.msra.mxu0 0.0
      %3141 = vmatprep.subr.mxu0 0.0
      %3142 = vmatpush1.msra.mxu0 0.0
      %3143 = vmatprep.subr.mxu0 0.0
      %3144 = vmatpush1.msra.mxu0 0.0
      %3145 = vmatprep.subr.mxu0 0.0
      %3146 = vmatpush1.msra.mxu0 0.0
      %3147 = vmatprep.mubr.f32.mxu0 0.0
      %3148 = vmatmul.mubr.f32.gmra.mrb[0].mxu0 %v3078
      %v3149 = vpop.f32.mrb[0].mxu0
      %v3150 = vadd.f32 %v3070, %v3149
      %v3151 = vpop.f32.mrb[0].mxu0
      %v3152 = vadd.f32 %v3070, %v3151
      %3153 = vmatprep.mubr.f32.mxu0 0.0
      %3154 = vmatmul.mubr.f32.gmra.mrb[0].mxu0 %v3081
      %v3155 = vpop.f32.mrb[0].mxu0
      %v3156 = vadd.f32 %v3075, %v3155
      %v3157 = vpop.f32.mrb[0].mxu0
      %v3158 = vadd.f32 %v3075, %v3157
      %3159 = vdwg.mxu0
      %v3160 = vadd.f32 %v3150, %v472
      %v3161 = vadd.f32 %v3152, %v473
      %v3162 = vadd.f32 %v3156, %v474
      %v3163 = vadd.f32 %v3158, %v475
      %v3164 = vmax.f32 %v3160, 0.0
      %v3165 = vmax.f32 %v3161, 0.0
      %v3166 = vmax.f32 %v3162, 0.0
      %v3167 = vmax.f32 %v3163, 0.0
      %s3168 = smul.u32 %s2764, 4
      %s3169 = smul.addr %s3168, 8
      %s3170 = scalar_lea.vmem %s5, %s3169
      %v3171 = vld [vmem:[%s3170] sm:$0xff]
      %v3172 = vld [vmem:[%s3170 + $0x8] sm:$0xff]
      %v3173 = vld [vmem:[%s3170 + $0x10] sm:$0xff]
      %v3174 = vld [vmem:[%s3170 + $0x18] sm:$0xff]
      %s3175 = scalar_lea.vmem %s6, %s2765
      %v3176 = vld [vmem:[%s3175] sm:$0xff]
      %v3177 = vld [vmem:[%s3175 + $0x8] sm:$0xff]
      %v3178 = vld [vmem:[%s12] ss:$8 sm:$0x3]
      %v3179 = vld [vmem:[%s491] ss:$8 sm:$0x3]
      %3184 = vrot.lane.b32.xlu0 %v3164, 51
      %v3185 = vpop.permute.xlu0 %3184
      %3186 = vrot.lane.b32.xlu0 %v3165, 51
      %v3187 = vpop.permute.xlu0 %3186
      %3188 = vrot.lane.b32.xlu0 %v3166, 51
      %v3189 = vpop.permute.xlu0 %3188
      %3190 = vrot.lane.b32.xlu0 %v3167, 51
      %v3191 = vpop.permute.xlu0 %3190
      %v3192 = vsel %vm505, %v3185, %v3187
      %v3193 = vsel %vm505, %v3189, %v3191
      %3200 = vst.msk [vmem:[#allocation2] sm:$0xff] %vm514, %v3185
      %3201 = vst [vmem:[#allocation2 + $0x8] sm:$0xff] %v3192
      %3202 = vst.msk [vmem:[#allocation2 + $0x10] sm:$0xff] %vm505, %v3187
      %3203 = vst.msk [vmem:[#allocation2 + $0x18] sm:$0xff] %vm514, %v3189
      %3204 = vst [vmem:[#allocation2 + $0x20] sm:$0xff] %v3193
      %3205 = vst.msk [vmem:[#allocation2 + $0x28] sm:$0xff] %vm505, %v3191
      %v3206 = vld [vmem:[#allocation2] sm:$0xff]
      %v3207 = vld [vmem:[#allocation2 + $0x8] sm:$0xff]
      %v3208 = vld [vmem:[#allocation2 + $0x10] sm:$0xff]
      %v3209 = vld [vmem:[#allocation2 + $0x18] sm:$0xff]
      %v3210 = vld [vmem:[#allocation2 + $0x20] sm:$0xff]
      %v3211 = vld [vmem:[#allocation2 + $0x28] sm:$0xff]
      %v3213 = vlaneseq
      %v3214 = vshrl.u32 %v3213, 7
      %v3215 = vsub.s32 0, %v3214
      %v3216 = vrot.slane %v3178, %v3215
      %v3217 = vlaneseq
      %v3218 = vshrl.u32 %v3217, 7
      %v3219 = vsub.s32 1, %v3218
      %v3220 = vrot.slane %v3178, %v3219
      %3221 = vrot.lane.b32.xlu0 %v3216, 34
      %v3222 = vpop.permute.xlu0 %3221
      %3223 = vrot.lane.b32.xlu0 %v3220, 34
      %v3224 = vpop.permute.xlu0 %3223
      %v3225 = vsel %vm540, %v3222, %v3224
      %v3229 = vmul.f32 %v3206, %v3222
      %v3230 = vmul.f32 %v3207, %v3225
      %v3231 = vmul.f32 %v3208, %v3224
      %v3232 = vmul.f32 %v3209, %v3222
      %v3233 = vmul.f32 %v3210, %v3225
      %v3234 = vmul.f32 %v3211, %v3224
      %3241 = vrot.lane.b32.xlu0 %v3229, 94
      %v3242 = vpop.permute.xlu0 %3241
      %3243 = vrot.lane.b32.xlu0 %v3230, 94
      %v3244 = vpop.permute.xlu0 %3243
      %3245 = vrot.lane.b32.xlu0 %v3231, 94
      %v3246 = vpop.permute.xlu0 %3245
      %3247 = vrot.lane.b32.xlu0 %v3232, 94
      %v3248 = vpop.permute.xlu0 %3247
      %3249 = vrot.lane.b32.xlu0 %v3233, 94
      %v3250 = vpop.permute.xlu0 %3249
      %3251 = vrot.lane.b32.xlu0 %v3234, 94
      %v3252 = vpop.permute.xlu0 %3251
      %v3253 = vsel %vm569, %v3242, %v3244
      %v3254 = vsel %vm569, %v3244, %v3246
      %v3255 = vsel %vm569, %v3248, %v3250
      %v3256 = vsel %vm569, %v3250, %v3252
      %3261 = vst [vmem:[#allocation3] sm:$0xff] %v3253
      %3262 = vst [vmem:[#allocation3 + $0x8] sm:$0xff] %v3254
      %3263 = vst [vmem:[#allocation3 + $0x10] sm:$0xff] %v3255
      %3264 = vst [vmem:[#allocation3 + $0x18] sm:$0xff] %v3256
      %v3265 = vld [vmem:[#allocation2] sm:$0xff]
      %v3266 = vld [vmem:[#allocation2 + $0x8] sm:$0xff]
      %v3267 = vld [vmem:[#allocation2 + $0x10] sm:$0xff]
      %v3268 = vld [vmem:[#allocation2 + $0x18] sm:$0xff]
      %v3269 = vld [vmem:[#allocation2 + $0x20] sm:$0xff]
      %v3270 = vld [vmem:[#allocation2 + $0x28] sm:$0xff]
      %3277 = vrot.lane.b32.xlu0 %v3265, 93
      %v3278 = vpop.permute.xlu0 %3277
      %3279 = vrot.lane.b32.xlu0 %v3266, 93
      %v3280 = vpop.permute.xlu0 %3279
      %3281 = vrot.lane.b32.xlu0 %v3267, 93
      %v3282 = vpop.permute.xlu0 %3281
      %3283 = vrot.lane.b32.xlu0 %v3268, 93
      %v3284 = vpop.permute.xlu0 %3283
      %3285 = vrot.lane.b32.xlu0 %v3269, 93
      %v3286 = vpop.permute.xlu0 %3285
      %3287 = vrot.lane.b32.xlu0 %v3270, 93
      %v3288 = vpop.permute.xlu0 %3287
      %v3289 = vsel %vm606, %v3278, %v3280
      %v3290 = vsel %vm606, %v3280, %v3282
      %v3291 = vsel %vm606, %v3284, %v3286
      %v3292 = vsel %vm606, %v3286, %v3288
      %3297 = vst [vmem:[#allocation3 + $0x20] sm:$0xff] %v3289
      %3298 = vst [vmem:[#allocation3 + $0x28] sm:$0xff] %v3290
      %3299 = vst [vmem:[#allocation3 + $0x30] sm:$0xff] %v3291
      %3300 = vst [vmem:[#allocation3 + $0x38] sm:$0xff] %v3292
      %v3301 = vld [vmem:[#allocation2] sm:$0xff]
      %v3302 = vld [vmem:[#allocation2 + $0x8] sm:$0xff]
      %v3303 = vld [vmem:[#allocation2 + $0x10] sm:$0xff]
      %v3304 = vld [vmem:[#allocation2 + $0x18] sm:$0xff]
      %v3305 = vld [vmem:[#allocation2 + $0x20] sm:$0xff]
      %v3306 = vld [vmem:[#allocation2 + $0x28] sm:$0xff]
      %v3308 = vlaneseq
      %v3309 = vshrl.u32 %v3308, 7
      %v3310 = vsub.s32 0, %v3309
      %v3311 = vrot.slane %v3179, %v3310
      %v3312 = vlaneseq
      %v3313 = vshrl.u32 %v3312, 7
      %v3314 = vsub.s32 1, %v3313
      %v3315 = vrot.slane %v3179, %v3314
      %3316 = vrot.lane.b32.xlu0 %v3311, 36
      %v3317 = vpop.permute.xlu0 %3316
      %3318 = vrot.lane.b32.xlu0 %v3315, 36
      %v3319 = vpop.permute.xlu0 %3318
      %v3320 = vsel %vm638, %v3317, %v3319
      %v3324 = vmul.f32 %v3301, %v3317
      %v3325 = vmul.f32 %v3302, %v3320
      %v3326 = vmul.f32 %v3303, %v3319
      %v3327 = vmul.f32 %v3304, %v3317
      %v3328 = vmul.f32 %v3305, %v3320
      %v3329 = vmul.f32 %v3306, %v3319
      %3336 = vrot.lane.b32.xlu0 %v3324, 92
      %v3337 = vpop.permute.xlu0 %3336
      %3338 = vrot.lane.b32.xlu0 %v3325, 92
      %v3339 = vpop.permute.xlu0 %3338
      %3340 = vrot.lane.b32.xlu0 %v3326, 92
      %v3341 = vpop.permute.xlu0 %3340
      %3342 = vrot.lane.b32.xlu0 %v3327, 92
      %v3343 = vpop.permute.xlu0 %3342
      %3344 = vrot.lane.b32.xlu0 %v3328, 92
      %v3345 = vpop.permute.xlu0 %3344
      %3346 = vrot.lane.b32.xlu0 %v3329, 92
      %v3347 = vpop.permute.xlu0 %3346
      %v3348 = vsel %vm667, %v3337, %v3339
      %v3349 = vsel %vm667, %v3339, %v3341
      %v3350 = vsel %vm667, %v3343, %v3345
      %v3351 = vsel %vm667, %v3345, %v3347
      %3356 = vst [vmem:[#allocation3 + $0x40] sm:$0xff] %v3348
      %3357 = vst [vmem:[#allocation3 + $0x48] sm:$0xff] %v3349
      %3358 = vst [vmem:[#allocation3 + $0x50] sm:$0xff] %v3350
      %3359 = vst [vmem:[#allocation3 + $0x58] sm:$0xff] %v3351
      %v3360 = vld [vmem:[#allocation2] sm:$0xff]
      %v3361 = vld [vmem:[#allocation2 + $0x8] sm:$0xff]
      %v3362 = vld [vmem:[#allocation2 + $0x10] sm:$0xff]
      %v3363 = vld [vmem:[#allocation2 + $0x18] sm:$0xff]
      %v3364 = vld [vmem:[#allocation2 + $0x20] sm:$0xff]
      %v3365 = vld [vmem:[#allocation2 + $0x28] sm:$0xff]
      %3366 = vrot.lane.b32.xlu0 %v3216, 50
      %v3367 = vpop.permute.xlu0 %3366
      %3368 = vrot.lane.b32.xlu0 %v3220, 50
      %v3369 = vpop.permute.xlu0 %3368
      %v3370 = vsel %vm690, %v3367, %v3369
      %v3374 = vmul.f32 %v3360, %v3367
      %v3375 = vmul.f32 %v3361, %v3370
      %v3376 = vmul.f32 %v3362, %v3369
      %v3377 = vmul.f32 %v3363, %v3367
      %v3378 = vmul.f32 %v3364, %v3370
      %v3379 = vmul.f32 %v3365, %v3369
      %3386 = vrot.lane.b32.xlu0 %v3374, 78
      %v3387 = vpop.permute.xlu0 %3386
      %3388 = vrot.lane.b32.xlu0 %v3375, 78
      %v3389 = vpop.permute.xlu0 %3388
      %3390 = vrot.lane.b32.xlu0 %v3376, 78
      %v3391 = vpop.permute.xlu0 %3390
      %3392 = vrot.lane.b32.xlu0 %v3377, 78
      %v3393 = vpop.permute.xlu0 %3392
      %3394 = vrot.lane.b32.xlu0 %v3378, 78
      %v3395 = vpop.permute.xlu0 %3394
      %3396 = vrot.lane.b32.xlu0 %v3379, 78
      %v3397 = vpop.permute.xlu0 %3396
      %v3398 = vsel %vm719, %v3387, %v3389
      %v3399 = vsel %vm719, %v3389, %v3391
      %v3400 = vsel %vm719, %v3393, %v3395
      %v3401 = vsel %vm719, %v3395, %v3397
      %3406 = vst [vmem:[#allocation3 + $0x60] sm:$0xff] %v3398
      %3407 = vst [vmem:[#allocation3 + $0x68] sm:$0xff] %v3399
      %3408 = vst [vmem:[#allocation3 + $0x70] sm:$0xff] %v3400
      %3409 = vst [vmem:[#allocation3 + $0x78] sm:$0xff] %v3401
      %v3410 = vld [vmem:[#allocation2] sm:$0xff]
      %v3411 = vld [vmem:[#allocation2 + $0x8] sm:$0xff]
      %v3412 = vld [vmem:[#allocation2 + $0x10] sm:$0xff]
      %v3413 = vld [vmem:[#allocation2 + $0x18] sm:$0xff]
      %v3414 = vld [vmem:[#allocation2 + $0x20] sm:$0xff]
      %v3415 = vld [vmem:[#allocation2 + $0x28] sm:$0xff]
      %3422 = vrot.lane.b32.xlu0 %v3410, 77
      %v3423 = vpop.permute.xlu0 %3422
      %3424 = vrot.lane.b32.xlu0 %v3411, 77
      %v3425 = vpop.permute.xlu0 %3424
      %3426 = vrot.lane.b32.xlu0 %v3412, 77
      %v3427 = vpop.permute.xlu0 %3426
      %3428 = vrot.lane.b32.xlu0 %v3413, 77
      %v3429 = vpop.permute.xlu0 %3428
      %3430 = vrot.lane.b32.xlu0 %v3414, 77
      %v3431 = vpop.permute.xlu0 %3430
      %3432 = vrot.lane.b32.xlu0 %v3415, 77
      %v3433 = vpop.permute.xlu0 %3432
      %v3434 = vsel %vm756, %v3423, %v3425
      %v3435 = vsel %vm756, %v3425, %v3427
      %v3436 = vsel %vm756, %v3429, %v3431
      %v3437 = vsel %vm756, %v3431, %v3433
      %3442 = vst [vmem:[#allocation3 + $0x80] sm:$0xff] %v3434
      %3443 = vst [vmem:[#allocation3 + $0x88] sm:$0xff] %v3435
      %3444 = vst [vmem:[#allocation3 + $0x90] sm:$0xff] %v3436
      %3445 = vst [vmem:[#allocation3 + $0x98] sm:$0xff] %v3437
      %v3446 = vld [vmem:[#allocation2] sm:$0xff]
      %v3447 = vld [vmem:[#allocation2 + $0x8] sm:$0xff]
      %v3448 = vld [vmem:[#allocation2 + $0x10] sm:$0xff]
      %v3449 = vld [vmem:[#allocation2 + $0x18] sm:$0xff]
      %v3450 = vld [vmem:[#allocation2 + $0x20] sm:$0xff]
      %v3451 = vld [vmem:[#allocation2 + $0x28] sm:$0xff]
      %3452 = vrot.lane.b32.xlu0 %v3311, 52
      %v3453 = vpop.permute.xlu0 %3452
      %3454 = vrot.lane.b32.xlu0 %v3315, 52
      %v3455 = vpop.permute.xlu0 %3454
      %v3456 = vsel %vm779, %v3453, %v3455
      %v3460 = vmul.f32 %v3446, %v3453
      %v3461 = vmul.f32 %v3447, %v3456
      %v3462 = vmul.f32 %v3448, %v3455
      %v3463 = vmul.f32 %v3449, %v3453
      %v3464 = vmul.f32 %v3450, %v3456
      %v3465 = vmul.f32 %v3451, %v3455
      %3472 = vrot.lane.b32.xlu0 %v3460, 76
      %v3473 = vpop.permute.xlu0 %3472
      %3474 = vrot.lane.b32.xlu0 %v3461, 76
      %v3475 = vpop.permute.xlu0 %3474
      %3476 = vrot.lane.b32.xlu0 %v3462, 76
      %v3477 = vpop.permute.xlu0 %3476
      %3478 = vrot.lane.b32.xlu0 %v3463, 76
      %v3479 = vpop.permute.xlu0 %3478
      %3480 = vrot.lane.b32.xlu0 %v3464, 76
      %v3481 = vpop.permute.xlu0 %3480
      %3482 = vrot.lane.b32.xlu0 %v3465, 76
      %v3483 = vpop.permute.xlu0 %3482
      %v3484 = vsel %vm808, %v3473, %v3475
      %v3485 = vsel %vm808, %v3475, %v3477
      %v3486 = vsel %vm808, %v3479, %v3481
      %v3487 = vsel %vm808, %v3481, %v3483
      %3492 = vst [vmem:[#allocation3 + $0xa0] sm:$0xff] %v3484
      %3493 = vst [vmem:[#allocation3 + $0xa8] sm:$0xff] %v3485
      %3494 = vst [vmem:[#allocation3 + $0xb0] sm:$0xff] %v3486
      %3495 = vst [vmem:[#allocation3 + $0xb8] sm:$0xff] %v3487
      %v3496 = vld [vmem:[#allocation2] sm:$0xff]
      %v3497 = vld [vmem:[#allocation2 + $0x8] sm:$0xff]
      %v3498 = vld [vmem:[#allocation2 + $0x10] sm:$0xff]
      %v3499 = vld [vmem:[#allocation2 + $0x18] sm:$0xff]
      %v3500 = vld [vmem:[#allocation2 + $0x20] sm:$0xff]
      %v3501 = vld [vmem:[#allocation2 + $0x28] sm:$0xff]
      %3502 = vrot.lane.b32.xlu0 %v3216, 66
      %v3503 = vpop.permute.xlu0 %3502
      %3504 = vrot.lane.b32.xlu0 %v3220, 66
      %v3505 = vpop.permute.xlu0 %3504
      %v3506 = vsel %vm831, %v3503, %v3505
      %v3510 = vmul.f32 %v3496, %v3503
      %v3511 = vmul.f32 %v3497, %v3506
      %v3512 = vmul.f32 %v3498, %v3505
      %v3513 = vmul.f32 %v3499, %v3503
      %v3514 = vmul.f32 %v3500, %v3506
      %v3515 = vmul.f32 %v3501, %v3505
      %3522 = vrot.lane.b32.xlu0 %v3510, 62
      %v3523 = vpop.permute.xlu0 %3522
      %3524 = vrot.lane.b32.xlu0 %v3511, 62
      %v3525 = vpop.permute.xlu0 %3524
      %3526 = vrot.lane.b32.xlu0 %v3512, 62
      %v3527 = vpop.permute.xlu0 %3526
      %3528 = vrot.lane.b32.xlu0 %v3513, 62
      %v3529 = vpop.permute.xlu0 %3528
      %3530 = vrot.lane.b32.xlu0 %v3514, 62
      %v3531 = vpop.permute.xlu0 %3530
      %3532 = vrot.lane.b32.xlu0 %v3515, 62
      %v3533 = vpop.permute.xlu0 %3532
      %v3534 = vsel %vm860, %v3523, %v3525
      %v3535 = vsel %vm860, %v3525, %v3527
      %v3536 = vsel %vm860, %v3529, %v3531
      %v3537 = vsel %vm860, %v3531, %v3533
      %3542 = vst [vmem:[#allocation3 + $0xc0] sm:$0xff] %v3534
      %3543 = vst [vmem:[#allocation3 + $0xc8] sm:$0xff] %v3535
      %3544 = vst [vmem:[#allocation3 + $0xd0] sm:$0xff] %v3536
      %3545 = vst [vmem:[#allocation3 + $0xd8] sm:$0xff] %v3537
      %v3546 = vld [vmem:[#allocation2] sm:$0xff]
      %v3547 = vld [vmem:[#allocation2 + $0x8] sm:$0xff]
      %v3548 = vld [vmem:[#allocation2 + $0x10] sm:$0xff]
      %v3549 = vld [vmem:[#allocation2 + $0x18] sm:$0xff]
      %v3550 = vld [vmem:[#allocation2 + $0x20] sm:$0xff]
      %v3551 = vld [vmem:[#allocation2 + $0x28] sm:$0xff]
      %3558 = vrot.lane.b32.xlu0 %v3546, 61
      %v3559 = vpop.permute.xlu0 %3558
      %3560 = vrot.lane.b32.xlu0 %v3547, 61
      %v3561 = vpop.permute.xlu0 %3560
      %3562 = vrot.lane.b32.xlu0 %v3548, 61
      %v3563 = vpop.permute.xlu0 %3562
      %3564 = vrot.lane.b32.xlu0 %v3549, 61
      %v3565 = vpop.permute.xlu0 %3564
      %3566 = vrot.lane.b32.xlu0 %v3550, 61
      %v3567 = vpop.permute.xlu0 %3566
      %3568 = vrot.lane.b32.xlu0 %v3551, 61
      %v3569 = vpop.permute.xlu0 %3568
      %v3570 = vsel %vm897, %v3559, %v3561
      %v3571 = vsel %vm897, %v3561, %v3563
      %v3572 = vsel %vm897, %v3565, %v3567
      %v3573 = vsel %vm897, %v3567, %v3569
      %3578 = vst [vmem:[#allocation3 + $0xe0] sm:$0xff] %v3570
      %3579 = vst [vmem:[#allocation3 + $0xe8] sm:$0xff] %v3571
      %3580 = vst [vmem:[#allocation3 + $0xf0] sm:$0xff] %v3572
      %3581 = vst [vmem:[#allocation3 + $0xf8] sm:$0xff] %v3573
      %v3582 = vld [vmem:[#allocation2] sm:$0xff]
      %v3583 = vld [vmem:[#allocation2 + $0x8] sm:$0xff]
      %v3584 = vld [vmem:[#allocation2 + $0x10] sm:$0xff]
      %v3585 = vld [vmem:[#allocation2 + $0x18] sm:$0xff]
      %v3586 = vld [vmem:[#allocation2 + $0x20] sm:$0xff]
      %v3587 = vld [vmem:[#allocation2 + $0x28] sm:$0xff]
      %3588 = vrot.lane.b32.xlu0 %v3311, 68
      %v3589 = vpop.permute.xlu0 %3588
      %3590 = vrot.lane.b32.xlu0 %v3315, 68
      %v3591 = vpop.permute.xlu0 %3590
      %v3592 = vsel %vm920, %v3589, %v3591
      %v3596 = vmul.f32 %v3582, %v3589
      %v3597 = vmul.f32 %v3583, %v3592
      %v3598 = vmul.f32 %v3584, %v3591
      %v3599 = vmul.f32 %v3585, %v3589
      %v3600 = vmul.f32 %v3586, %v3592
      %v3601 = vmul.f32 %v3587, %v3591
      %3608 = vrot.lane.b32.xlu0 %v3596, 60
      %v3609 = vpop.permute.xlu0 %3608
      %3610 = vrot.lane.b32.xlu0 %v3597, 60
      %v3611 = vpop.permute.xlu0 %3610
      %3612 = vrot.lane.b32.xlu0 %v3598, 60
      %v3613 = vpop.permute.xlu0 %3612
      %3614 = vrot.lane.b32.xlu0 %v3599, 60
      %v3615 = vpop.permute.xlu0 %3614
      %3616 = vrot.lane.b32.xlu0 %v3600, 60
      %v3617 = vpop.permute.xlu0 %3616
      %3618 = vrot.lane.b32.xlu0 %v3601, 60
      %v3619 = vpop.permute.xlu0 %3618
      %v3620 = vsel %vm949, %v3609, %v3611
      %v3621 = vsel %vm949, %v3611, %v3613
      %v3622 = vsel %vm949, %v3615, %v3617
      %v3623 = vsel %vm949, %v3617, %v3619
      %3628 = vst [vmem:[#allocation3 + $0x100] sm:$0xff] %v3620
      %3629 = vst [vmem:[#allocation3 + $0x108] sm:$0xff] %v3621
      %3630 = vst [vmem:[#allocation3 + $0x110] sm:$0xff] %v3622
      %3631 = vst [vmem:[#allocation3 + $0x118] sm:$0xff] %v3623
      %v3632 = vld [vmem:[#allocation3] sm:$0xff]
      %v3633 = vld [vmem:[#allocation3 + $0x8] sm:$0xff]
      %v3634 = vld [vmem:[#allocation3 + $0x10] sm:$0xff]
      %v3635 = vld [vmem:[#allocation3 + $0x18] sm:$0xff]
      %v3636 = vld [vmem:[#allocation3 + $0x20] sm:$0xff]
      %v3637 = vld [vmem:[#allocation3 + $0x28] sm:$0xff]
      %v3638 = vld [vmem:[#allocation3 + $0x30] sm:$0xff]
      %v3639 = vld [vmem:[#allocation3 + $0x38] sm:$0xff]
      %v3640 = vld [vmem:[#allocation3 + $0x40] sm:$0xff]
      %v3641 = vld [vmem:[#allocation3 + $0x48] sm:$0xff]
      %v3642 = vld [vmem:[#allocation3 + $0x50] sm:$0xff]
      %v3643 = vld [vmem:[#allocation3 + $0x58] sm:$0xff]
      %v3644 = vld [vmem:[#allocation3 + $0x60] sm:$0xff]
      %v3645 = vld [vmem:[#allocation3 + $0x68] sm:$0xff]
      %v3646 = vld [vmem:[#allocation3 + $0x70] sm:$0xff]
      %v3647 = vld [vmem:[#allocation3 + $0x78] sm:$0xff]
      %v3648 = vld [vmem:[#allocation3 + $0x80] sm:$0xff]
      %v3649 = vld [vmem:[#allocation3 + $0x88] sm:$0xff]
      %v3650 = vld [vmem:[#allocation3 + $0x90] sm:$0xff]
      %v3651 = vld [vmem:[#allocation3 + $0x98] sm:$0xff]
      %v3652 = vld [vmem:[#allocation3 + $0xa0] sm:$0xff]
      %v3653 = vld [vmem:[#allocation3 + $0xa8] sm:$0xff]
      %v3654 = vld [vmem:[#allocation3 + $0xb0] sm:$0xff]
      %v3655 = vld [vmem:[#allocation3 + $0xb8] sm:$0xff]
      %v3656 = vld [vmem:[#allocation3 + $0xc0] sm:$0xff]
      %v3657 = vld [vmem:[#allocation3 + $0xc8] sm:$0xff]
      %v3658 = vld [vmem:[#allocation3 + $0xd0] sm:$0xff]
      %v3659 = vld [vmem:[#allocation3 + $0xd8] sm:$0xff]
      %v3660 = vld [vmem:[#allocation3 + $0xe0] sm:$0xff]
      %v3661 = vld [vmem:[#allocation3 + $0xe8] sm:$0xff]
      %v3662 = vld [vmem:[#allocation3 + $0xf0] sm:$0xff]
      %v3663 = vld [vmem:[#allocation3 + $0xf8] sm:$0xff]
      %v3664 = vld [vmem:[#allocation3 + $0x100] sm:$0xff]
      %v3665 = vld [vmem:[#allocation3 + $0x108] sm:$0xff]
      %v3666 = vld [vmem:[#allocation3 + $0x110] sm:$0xff]
      %v3667 = vld [vmem:[#allocation3 + $0x118] sm:$0xff]
      %3669 = vset.pattern.permute.xlu0 0
      %3670 = vperm.xlu0 %3669, %v3176
      %v3671 = vpop.permute.xlu0 %3670
      %3674 = vset.pattern.permute.xlu0 0
      %3675 = vperm.xlu0 %3674, %v3177
      %v3676 = vpop.permute.xlu0 %3675
      %v3679 = vsel %vm1013, %v3172, 0
      %v3682 = vsel %vm1013, %v3174, 0
      %3684 = vmatprep.subr.mxu0 %v3633
      %3685 = vmatpush1.msra.mxu0 %v3632
      %3686 = vmatprep.subr.mxu0 %v3635
      %3687 = vmatpush1.msra.mxu0 %v3634
      %3688 = vmatprep.subr.mxu0 %v3637
      %3689 = vmatpush1.msra.mxu0 %v3636
      %3690 = vmatprep.subr.mxu0 %v3639
      %3691 = vmatpush1.msra.mxu0 %v3638
      %3692 = vmatprep.subr.mxu0 %v3641
      %3693 = vmatpush1.msra.mxu0 %v3640
      %3694 = vmatprep.subr.mxu0 %v3643
      %3695 = vmatpush1.msra.mxu0 %v3642
      %3696 = vmatprep.subr.mxu0 %v3645
      %3697 = vmatpush1.msra.mxu0 %v3644
      %3698 = vmatprep.subr.mxu0 %v3647
      %3699 = vmatpush1.msra.mxu0 %v3646
      %3700 = vmatprep.subr.mxu0 %v3649
      %3701 = vmatpush1.msra.mxu0 %v3648
      %3702 = vmatprep.subr.mxu0 %v3651
      %3703 = vmatpush1.msra.mxu0 %v3650
      %3704 = vmatprep.subr.mxu0 %v3653
      %3705 = vmatpush1.msra.mxu0 %v3652
      %3706 = vmatprep.subr.mxu0 %v3655
      %3707 = vmatpush1.msra.mxu0 %v3654
      %3708 = vmatprep.subr.mxu0 %v3657
      %3709 = vmatpush1.msra.mxu0 %v3656
      %3710 = vmatprep.subr.mxu0 %v3659
      %3711 = vmatpush1.msra.mxu0 %v3658
      %3712 = vmatprep.subr.mxu0 %v3661
      %3713 = vmatpush1.msra.mxu0 %v3660
      %3714 = vmatprep.subr.mxu0 %v3663
      %3715 = vmatpush1.msra.mxu0 %v3662
      %3716 = vmatprep.subr.mxu0 %v3665
      %3717 = vmatpush1.msra.mxu0 %v3664
      %3718 = vmatprep.subr.mxu0 %v3667
      %3719 = vmatpush1.msra.mxu0 %v3666
      %3720 = vmatprep.subr.mxu0 0.0
      %3721 = vmatpush1.msra.mxu0 0.0
      %3722 = vmatprep.subr.mxu0 0.0
      %3723 = vmatpush1.msra.mxu0 0.0
      %3724 = vmatprep.subr.mxu0 0.0
      %3725 = vmatpush1.msra.mxu0 0.0
      %3726 = vmatprep.subr.mxu0 0.0
      %3727 = vmatpush1.msra.mxu0 0.0
      %3728 = vmatprep.subr.mxu0 0.0
      %3729 = vmatpush1.msra.mxu0 0.0
      %3730 = vmatprep.subr.mxu0 0.0
      %3731 = vmatpush1.msra.mxu0 0.0
      %3732 = vmatprep.subr.mxu0 0.0
      %3733 = vmatpush1.msra.mxu0 0.0
      %3734 = vmatprep.subr.mxu0 0.0
      %3735 = vmatpush1.msra.mxu0 0.0
      %3736 = vmatprep.subr.mxu0 0.0
      %3737 = vmatpush1.msra.mxu0 0.0
      %3738 = vmatprep.subr.mxu0 0.0
      %3739 = vmatpush1.msra.mxu0 0.0
      %3740 = vmatprep.subr.mxu0 0.0
      %3741 = vmatpush1.msra.mxu0 0.0
      %3742 = vmatprep.subr.mxu0 0.0
      %3743 = vmatpush1.msra.mxu0 0.0
      %3744 = vmatprep.subr.mxu0 0.0
      %3745 = vmatpush1.msra.mxu0 0.0
      %3746 = vmatprep.subr.mxu0 0.0
      %3747 = vmatpush1.msra.mxu0 0.0
      %3748 = vmatprep.mubr.f32.mxu0 %v3679
      %3749 = vmatmul.mubr.f32.gmra.mrb[0].mxu0 %v3171
      %v3750 = vpop.f32.mrb[0].mxu0
      %v3751 = vadd.f32 %v3671, %v3750
      %v3752 = vpop.f32.mrb[0].mxu0
      %v3753 = vadd.f32 %v3671, %v3752
      %3754 = vmatprep.mubr.f32.mxu0 %v3682
      %3755 = vmatmul.mubr.f32.gmra.mrb[0].mxu0 %v3173
      %v3756 = vpop.f32.mrb[0].mxu0
      %v3757 = vadd.f32 %v3676, %v3756
      %v3758 = vpop.f32.mrb[0].mxu0
      %v3759 = vadd.f32 %v3676, %v3758
      %3760 = vdwg.mxu0
      %v3761 = vadd.f32 %v3751, %v3757
      %v3762 = vrot.slane %v3761, 4
      %v3763 = vadd.f32 %v3761, %v3762
      %v3764 = vrot.slane %v3763, 2
      %v3765 = vadd.f32 %v3763, %v3764
      %v3766 = vrot.slane %v3765, 1
      %v3767 = vadd.f32 %v3765, %v3766
      %v3768 = vadd.f32 %v3753, %v3759
      %v3769 = vrot.slane %v3768, 4
      %v3770 = vadd.f32 %v3768, %v3769
      %v3771 = vrot.slane %v3770, 2
      %v3772 = vadd.f32 %v3770, %v3771
      %v3773 = vrot.slane %v3772, 1
      %v3774 = vadd.f32 %v3772, %v3773
      %v3775 = vmul.f32 %v3767, %v2108
      %v3776 = vmul.f32 %v3774, %v2108
      %v3779 = vcombine.low %v3775, %v3776
      %v3781 = vunpack.c.l.s4 1966171168
      %v3782 = vunpack.c.0.s8 %v3781
      %v3783 = vlaneseq
      %v3784 = vshrl.u32 %v3783, 7
      %v3785 = vsub.s32 %v3782, %v3784
      %v3786 = vrot.slane %v3779, %v3785
      %v3788 = vunpack.c.l.s4 1966171168
      %v3789 = vunpack.c.0.s8 %v3788
      %v3790 = vlaneseq
      %v3791 = vshrl.u32 %v3790, 7
      %v3792 = vsub.s32 %v3789, %v3791
      %v3793 = vrot.slane %v3786, %v3792
      %3794 = vrot.lane.b32.xlu0 %v3793, 51
      %v3795 = vpop.permute.xlu0 %3794
      %v3796 = vrot.slane %v3795, 7
      %v3797 = vsel %vm505, %v3796, %v3795
      %3799 = vst.msk [vmem:[#allocation2] ss:$8 sm:$0x7] %vm2136, %v3797
      %3800 = vst.msk [vmem:[#allocation2] ss:$8 sm:$0x0] %vm2136, %v3797
      %v3801 = vmax.f32 %v3751, %v3757
      %v3802 = vrot.slane %v3801, 4
      %v3803 = vmax.f32 %v3801, %v3802
      %v3804 = vrot.slane %v3803, 2
      %v3805 = vmax.f32 %v3803, %v3804
      %v3806 = vrot.slane %v3805, 1
      %v3807 = vmax.f32 %v3805, %v3806
      %v3808 = vmax.f32 %v3753, %v3759
      %v3809 = vrot.slane %v3808, 4
      %v3810 = vmax.f32 %v3808, %v3809
      %v3811 = vrot.slane %v3810, 2
      %v3812 = vmax.f32 %v3810, %v3811
      %v3813 = vrot.slane %v3812, 1
      %v3814 = vmax.f32 %v3812, %v3813
      %v3817 = vcombine.low %v3807, %v3814
      %v3819 = vunpack.c.l.s4 1966171168
      %v3820 = vunpack.c.0.s8 %v3819
      %v3821 = vlaneseq
      %v3822 = vshrl.u32 %v3821, 7
      %v3823 = vsub.s32 %v3820, %v3822
      %v3824 = vrot.slane %v3817, %v3823
      %v3826 = vunpack.c.l.s4 1966171168
      %v3827 = vunpack.c.0.s8 %v3826
      %v3828 = vlaneseq
      %v3829 = vshrl.u32 %v3828, 7
      %v3830 = vsub.s32 %v3827, %v3829
      %v3831 = vrot.slane %v3824, %v3830
      %3832 = vrot.lane.b32.xlu0 %v3831, 51
      %v3833 = vpop.permute.xlu0 %3832
      %v3834 = vrot.slane %v3833, 7
      %v3835 = vsel %vm505, %v3834, %v3833
      %3837 = vst.msk [vmem:[%s2175] ss:$8 sm:$0x7] %vm2136, %v3835
      %3838 = vst.msk [vmem:[%s2175] ss:$8 sm:$0x0] %vm2136, %v3835
      %s3839 = scalar_lea.vmem %s7, %s2764
      %v3840 = vld [vmem:[%s3839] sm:$0x1]
      %v3841 = vld [vmem:[%s12] ss:$8 sm:$0x3]
      %v3842 = vld [vmem:[%s491] ss:$8 sm:$0x3]
      %v3843 = vld [vmem:[#allocation2] sm:$0x3]
      %v3844 = vld [vmem:[#allocation2 + $0x8] sm:$0x3]
      %v3845 = vld [vmem:[#allocation2 + $0x10] sm:$0x3]
      %v3847 = vlaneseq
      %v3848 = vshrl.u32 %v3847, 7
      %v3849 = vsub.s32 0, %v3848
      %v3850 = vrot.slane %v3841, %v3849
      %v3851 = vlaneseq
      %v3852 = vshrl.u32 %v3851, 7
      %v3853 = vsub.s32 1, %v3852
      %v3854 = vrot.slane %v3841, %v3853
      %3855 = vrot.lane.b32.xlu0 %v3850, 34
      %v3856 = vpop.permute.xlu0 %3855
      %3857 = vrot.lane.b32.xlu0 %v3854, 34
      %v3858 = vpop.permute.xlu0 %3857
      %v3859 = vsel %vm540, %v3856, %v3858
      %v3863 = vmul.f32 %v3843, %v3856
      %v3864 = vmul.f32 %v3844, %v3859
      %v3865 = vmul.f32 %v3845, %v3858
      %3869 = vrot.lane.b32.xlu0 %v3863, 94
      %v3870 = vpop.permute.xlu0 %3869
      %3871 = vrot.lane.b32.xlu0 %v3864, 94
      %v3872 = vpop.permute.xlu0 %3871
      %3873 = vrot.lane.b32.xlu0 %v3865, 94
      %v3874 = vpop.permute.xlu0 %3873
      %v3875 = vsel %vm569, %v3870, %v3872
      %v3876 = vsel %vm569, %v3872, %v3874
      %3879 = vst [vmem:[#allocation3] sm:$0x3] %v3875
      %3880 = vst [vmem:[#allocation3 + $0x8] sm:$0x3] %v3876
      %v3881 = vld [vmem:[#allocation2] sm:$0x3]
      %v3882 = vld [vmem:[#allocation2 + $0x8] sm:$0x3]
      %v3883 = vld [vmem:[#allocation2 + $0x10] sm:$0x3]
      %v3887 = vrot.slane %v3881, 6
      %v3888 = vrot.slane %v3882, 6
      %v3889 = vrot.slane %v3883, 6
      %3890 = vrot.lane.b32.xlu0 %v3887, 93
      %v3891 = vpop.permute.xlu0 %3890
      %3892 = vrot.lane.b32.xlu0 %v3888, 93
      %v3893 = vpop.permute.xlu0 %3892
      %3894 = vrot.lane.b32.xlu0 %v3889, 93
      %v3895 = vpop.permute.xlu0 %3894
      %v3896 = vsel %vm606, %v3891, %v3893
      %v3897 = vsel %vm606, %v3893, %v3895
      %3900 = vst [vmem:[#allocation3] sm:$0xc] %v3896
      %3901 = vst [vmem:[#allocation3 + $0x8] sm:$0xc] %v3897
      %v3902 = vld [vmem:[#allocation2] sm:$0x3]
      %v3903 = vld [vmem:[#allocation2 + $0x8] sm:$0x3]
      %v3904 = vld [vmem:[#allocation2 + $0x10] sm:$0x3]
      %v3906 = vlaneseq
      %v3907 = vshrl.u32 %v3906, 7
      %v3908 = vsub.s32 0, %v3907
      %v3909 = vrot.slane %v3842, %v3908
      %v3910 = vlaneseq
      %v3911 = vshrl.u32 %v3910, 7
      %v3912 = vsub.s32 1, %v3911
      %v3913 = vrot.slane %v3842, %v3912
      %3914 = vrot.lane.b32.xlu0 %v3909, 36
      %v3915 = vpop.permute.xlu0 %3914
      %3916 = vrot.lane.b32.xlu0 %v3913, 36
      %v3917 = vpop.permute.xlu0 %3916
      %v3918 = vsel %vm638, %v3915, %v3917
      %v3922 = vmul.f32 %v3902, %v3915
      %v3923 = vmul.f32 %v3903, %v3918
      %v3924 = vmul.f32 %v3904, %v3917
      %v3928 = vrot.slane %v3922, 4
      %v3929 = vrot.slane %v3923, 4
      %v3930 = vrot.slane %v3924, 4
      %3931 = vrot.lane.b32.xlu0 %v3928, 92
      %v3932 = vpop.permute.xlu0 %3931
      %3933 = vrot.lane.b32.xlu0 %v3929, 92
      %v3934 = vpop.permute.xlu0 %3933
      %3935 = vrot.lane.b32.xlu0 %v3930, 92
      %v3936 = vpop.permute.xlu0 %3935
      %v3937 = vsel %vm667, %v3932, %v3934
      %v3938 = vsel %vm667, %v3934, %v3936
      %3941 = vst [vmem:[#allocation3] sm:$0x30] %v3937
      %3942 = vst [vmem:[#allocation3 + $0x8] sm:$0x30] %v3938
      %v3943 = vld [vmem:[#allocation2] sm:$0x3]
      %v3944 = vld [vmem:[#allocation2 + $0x8] sm:$0x3]
      %v3945 = vld [vmem:[#allocation2 + $0x10] sm:$0x3]
      %3946 = vrot.lane.b32.xlu0 %v3850, 50
      %v3947 = vpop.permute.xlu0 %3946
      %3948 = vrot.lane.b32.xlu0 %v3854, 50
      %v3949 = vpop.permute.xlu0 %3948
      %v3950 = vsel %vm690, %v3947, %v3949
      %v3954 = vmul.f32 %v3943, %v3947
      %v3955 = vmul.f32 %v3944, %v3950
      %v3956 = vmul.f32 %v3945, %v3949
      %v3960 = vrot.slane %v3954, 2
      %v3961 = vrot.slane %v3955, 2
      %v3962 = vrot.slane %v3956, 2
      %3963 = vrot.lane.b32.xlu0 %v3960, 78
      %v3964 = vpop.permute.xlu0 %3963
      %3965 = vrot.lane.b32.xlu0 %v3961, 78
      %v3966 = vpop.permute.xlu0 %3965
      %3967 = vrot.lane.b32.xlu0 %v3962, 78
      %v3968 = vpop.permute.xlu0 %3967
      %v3969 = vsel %vm719, %v3964, %v3966
      %v3970 = vsel %vm719, %v3966, %v3968
      %3973 = vst [vmem:[#allocation3] sm:$0xc0] %v3969
      %3974 = vst [vmem:[#allocation3 + $0x8] sm:$0xc0] %v3970
      %v3975 = vld [vmem:[#allocation2] sm:$0x3]
      %v3976 = vld [vmem:[#allocation2 + $0x8] sm:$0x3]
      %v3977 = vld [vmem:[#allocation2 + $0x10] sm:$0x3]
      %3981 = vrot.lane.b32.xlu0 %v3975, 77
      %v3982 = vpop.permute.xlu0 %3981
      %3983 = vrot.lane.b32.xlu0 %v3976, 77
      %v3984 = vpop.permute.xlu0 %3983
      %3985 = vrot.lane.b32.xlu0 %v3977, 77
      %v3986 = vpop.permute.xlu0 %3985
      %v3987 = vsel %vm756, %v3982, %v3984
      %v3988 = vsel %vm756, %v3984, %v3986
      %3991 = vst [vmem:[#allocation3 + $0x10] sm:$0x3] %v3987
      %3992 = vst [vmem:[#allocation3 + $0x18] sm:$0x3] %v3988
      %v3993 = vld [vmem:[#allocation2] sm:$0x3]
      %v3994 = vld [vmem:[#allocation2 + $0x8] sm:$0x3]
      %v3995 = vld [vmem:[#allocation2 + $0x10] sm:$0x3]
      %3996 = vrot.lane.b32.xlu0 %v3909, 52
      %v3997 = vpop.permute.xlu0 %3996
      %3998 = vrot.lane.b32.xlu0 %v3913, 52
      %v3999 = vpop.permute.xlu0 %3998
      %v4000 = vsel %vm779, %v3997, %v3999
      %v4004 = vmul.f32 %v3993, %v3997
      %v4005 = vmul.f32 %v3994, %v4000
      %v4006 = vmul.f32 %v3995, %v3999
      %v4010 = vrot.slane %v4004, 6
      %v4011 = vrot.slane %v4005, 6
      %v4012 = vrot.slane %v4006, 6
      %4013 = vrot.lane.b32.xlu0 %v4010, 76
      %v4014 = vpop.permute.xlu0 %4013
      %4015 = vrot.lane.b32.xlu0 %v4011, 76
      %v4016 = vpop.permute.xlu0 %4015
      %4017 = vrot.lane.b32.xlu0 %v4012, 76
      %v4018 = vpop.permute.xlu0 %4017
      %v4019 = vsel %vm808, %v4014, %v4016
      %v4020 = vsel %vm808, %v4016, %v4018
      %4023 = vst [vmem:[#allocation3 + $0x10] sm:$0xc] %v4019
      %4024 = vst [vmem:[#allocation3 + $0x18] sm:$0xc] %v4020
      %v4025 = vld [vmem:[#allocation2] sm:$0x3]
      %v4026 = vld [vmem:[#allocation2 + $0x8] sm:$0x3]
      %v4027 = vld [vmem:[#allocation2 + $0x10] sm:$0x3]
      %4028 = vrot.lane.b32.xlu0 %v3850, 66
      %v4029 = vpop.permute.xlu0 %4028
      %4030 = vrot.lane.b32.xlu0 %v3854, 66
      %v4031 = vpop.permute.xlu0 %4030
      %v4032 = vsel %vm831, %v4029, %v4031
      %v4036 = vmul.f32 %v4025, %v4029
      %v4037 = vmul.f32 %v4026, %v4032
      %v4038 = vmul.f32 %v4027, %v4031
      %v4042 = vrot.slane %v4036, 4
      %v4043 = vrot.slane %v4037, 4
      %v4044 = vrot.slane %v4038, 4
      %4045 = vrot.lane.b32.xlu0 %v4042, 62
      %v4046 = vpop.permute.xlu0 %4045
      %4047 = vrot.lane.b32.xlu0 %v4043, 62
      %v4048 = vpop.permute.xlu0 %4047
      %4049 = vrot.lane.b32.xlu0 %v4044, 62
      %v4050 = vpop.permute.xlu0 %4049
      %v4051 = vsel %vm860, %v4046, %v4048
      %v4052 = vsel %vm860, %v4048, %v4050
      %4055 = vst [vmem:[#allocation3 + $0x10] sm:$0x30] %v4051
      %4056 = vst [vmem:[#allocation3 + $0x18] sm:$0x30] %v4052
      %v4057 = vld [vmem:[#allocation2] sm:$0x3]
      %v4058 = vld [vmem:[#allocation2 + $0x8] sm:$0x3]
      %v4059 = vld [vmem:[#allocation2 + $0x10] sm:$0x3]
      %v4063 = vrot.slane %v4057, 2
      %v4064 = vrot.slane %v4058, 2
      %v4065 = vrot.slane %v4059, 2
      %4066 = vrot.lane.b32.xlu0 %v4063, 61
      %v4067 = vpop.permute.xlu0 %4066
      %4068 = vrot.lane.b32.xlu0 %v4064, 61
      %v4069 = vpop.permute.xlu0 %4068
      %4070 = vrot.lane.b32.xlu0 %v4065, 61
      %v4071 = vpop.permute.xlu0 %4070
      %v4072 = vsel %vm897, %v4067, %v4069
      %v4073 = vsel %vm897, %v4069, %v4071
      %4076 = vst [vmem:[#allocation3 + $0x10] sm:$0xc0] %v4072
      %4077 = vst [vmem:[#allocation3 + $0x18] sm:$0xc0] %v4073
      %v4078 = vld [vmem:[#allocation2] sm:$0x3]
      %v4079 = vld [vmem:[#allocation2 + $0x8] sm:$0x3]
      %v4080 = vld [vmem:[#allocation2 + $0x10] sm:$0x3]
      %4081 = vrot.lane.b32.xlu0 %v3909, 68
      %v4082 = vpop.permute.xlu0 %4081
      %4083 = vrot.lane.b32.xlu0 %v3913, 68
      %v4084 = vpop.permute.xlu0 %4083
      %v4085 = vsel %vm920, %v4082, %v4084
      %v4089 = vmul.f32 %v4078, %v4082
      %v4090 = vmul.f32 %v4079, %v4085
      %v4091 = vmul.f32 %v4080, %v4084
      %4095 = vrot.lane.b32.xlu0 %v4089, 60
      %v4096 = vpop.permute.xlu0 %4095
      %4097 = vrot.lane.b32.xlu0 %v4090, 60
      %v4098 = vpop.permute.xlu0 %4097
      %4099 = vrot.lane.b32.xlu0 %v4091, 60
      %v4100 = vpop.permute.xlu0 %4099
      %v4101 = vsel %vm949, %v4096, %v4098
      %v4102 = vsel %vm949, %v4098, %v4100
      %4105 = vst [vmem:[#allocation3 + $0x20] sm:$0x3] %v4101
      %4106 = vst [vmem:[#allocation3 + $0x28] sm:$0x3] %v4102
      %v4107 = vld [vmem:[#allocation3] sm:$0xff]
      %v4108 = vld [vmem:[#allocation3 + $0x8] sm:$0xff]
      %v4109 = vld [vmem:[#allocation3 + $0x10] sm:$0xff]
      %v4110 = vld [vmem:[#allocation3 + $0x18] sm:$0xff]
      %v4111 = vld [vmem:[#allocation3 + $0x20] sm:$0x3]
      %v4112 = vld [vmem:[#allocation3 + $0x28] sm:$0x3]
      %v4114 = vsel %vm2452, %v3840, 0
      %v4117 = vsel %vm2456, %v4111, 0
      %v4120 = vsel %vm2456, %v4112, 0
      %4122 = vmatprep.subr.mxu0 %v4108
      %4123 = vmatpush1.msra.mxu0 %v4107
      %4124 = vmatprep.subr.mxu0 %v4110
      %4125 = vmatpush1.msra.mxu0 %v4109
      %4126 = vmatprep.subr.mxu0 %v4120
      %4127 = vmatpush1.msra.mxu0 %v4117
      %4128 = vmatprep.subr.mxu0 0.0
      %4129 = vmatpush1.msra.mxu0 0.0
      %4130 = vmatprep.subr.mxu0 0.0
      %4131 = vmatpush1.msra.mxu0 0.0
      %4132 = vmatprep.subr.mxu0 0.0
      %4133 = vmatpush1.msra.mxu0 0.0
      %4134 = vmatprep.subr.mxu0 0.0
      %4135 = vmatpush1.msra.mxu0 0.0
      %4136 = vmatprep.subr.mxu0 0.0
      %4137 = vmatpush1.msra.mxu0 0.0
      %4138 = vmatprep.subr.mxu0 0.0
      %4139 = vmatpush1.msra.mxu0 0.0
      %4140 = vmatprep.subr.mxu0 0.0
      %4141 = vmatpush1.msra.mxu0 0.0
      %4142 = vmatprep.subr.mxu0 0.0
      %4143 = vmatpush1.msra.mxu0 0.0
      %4144 = vmatprep.subr.mxu0 0.0
      %4145 = vmatpush1.msra.mxu0 0.0
      %4146 = vmatprep.subr.mxu0 0.0
      %4147 = vmatpush1.msra.mxu0 0.0
      %4148 = vmatprep.subr.mxu0 0.0
      %4149 = vmatpush1.msra.mxu0 0.0
      %4150 = vmatprep.subr.mxu0 0.0
      %4151 = vmatpush1.msra.mxu0 0.0
      %4152 = vmatprep.subr.mxu0 0.0
      %4153 = vmatpush1.msra.mxu0 0.0
      %4154 = vmatprep.subr.mxu0 0.0
      %4155 = vmatpush1.msra.mxu0 0.0
      %4156 = vmatprep.subr.mxu0 0.0
      %4157 = vmatpush1.msra.mxu0 0.0
      %4158 = vmatprep.subr.mxu0 0.0
      %4159 = vmatpush1.msra.mxu0 0.0
      %4160 = vmatprep.subr.mxu0 0.0
      %4161 = vmatpush1.msra.mxu0 0.0
      %4162 = vmatprep.subr.mxu0 0.0
      %4163 = vmatpush1.msra.mxu0 0.0
      %4164 = vmatprep.subr.mxu0 0.0
      %4165 = vmatpush1.msra.mxu0 0.0
      %4166 = vmatprep.subr.mxu0 0.0
      %4167 = vmatpush1.msra.mxu0 0.0
      %4168 = vmatprep.subr.mxu0 0.0
      %4169 = vmatpush1.msra.mxu0 0.0
      %4170 = vmatprep.subr.mxu0 0.0
      %4171 = vmatpush1.msra.mxu0 0.0
      %4172 = vmatprep.subr.mxu0 0.0
      %4173 = vmatpush1.msra.mxu0 0.0
      %4174 = vmatprep.subr.mxu0 0.0
      %4175 = vmatpush1.msra.mxu0 0.0
      %4176 = vmatprep.subr.mxu0 0.0
      %4177 = vmatpush1.msra.mxu0 0.0
      %4178 = vmatprep.subr.mxu0 0.0
      %4179 = vmatpush1.msra.mxu0 0.0
      %4180 = vmatprep.subr.mxu0 0.0
      %4181 = vmatpush1.msra.mxu0 0.0
      %4182 = vmatprep.subr.mxu0 0.0
      %4183 = vmatpush1.msra.mxu0 0.0
      %4184 = vmatprep.subr.mxu0 0.0
      %4185 = vmatpush1.msra.mxu0 0.0
      %4186 = vmatprep.mubr.f32.mxu0 0.0
      %4187 = vmatmul.mubr.f32.gmra.mrb[0].mxu0 %v4114
      %v4188 = vpop.f32.mrb[0].mxu0
      %v4189 = vadd.f32 0.0, %v4188
      %v4190 = vpop.f32.mrb[0].mxu0
      %v4191 = vadd.f32 0.0, %v4190
      %4192 = vdwg.mxu0
      %v4193 = vxor.u32 %v4189, 2147483648
      %v4194 = vxor.u32 %v4191, 2147483648
      %v4195 = vmul.f32 %v4193, 1.442695
      %v4196 = vpow.pop %v4195
      %v4197 = vmul.f32 %v4194, 1.442695
      %v4198 = vpow.pop %v4197
      %v4199 = vadd.f32 %v4196, 1.0
      %v4200 = vadd.f32 %v4198, 1.0
      %v4201 = vrcp.pop %v4199
      %v4202 = vmul.f32 1.0, %v4201
      %v4203 = vrcp.pop %v4200
      %v4204 = vmul.f32 1.0, %v4203
      %v4205 = vlaneseq
      %v4206 = vshrl.u32 %v4205, 7
      %v4207 = vsub.s32 0, %v4206
      %v4208 = vrot.slane %v4202, %v4207
      %v4209 = vlaneseq
      %v4210 = vshrl.u32 %v4209, 7
      %v4211 = vsub.s32 0, %v4210
      %v4212 = vrot.slane %v4204, %v4211
      %v4213 = vmul.f32 %v3751, %v4208
      %v4214 = vmul.f32 %v3753, %v4212
      %v4215 = vmul.f32 %v3757, %v4208
      %v4216 = vmul.f32 %v3759, %v4212
      %v4217 = vadd.f32 %v4213, %v4214
      %4218 = vadd.xlane.f32.xlu0 %v4217
      %v4219 = vpop.xlane.xlu0 %4218
      %v4220 = vadd.f32 %v4215, %v4216
      %4221 = vadd.xlane.f32.xlu0 %v4220
      %v4222 = vpop.xlane.xlu0 %4221
      %v4223 = vmul.f32 %v4219, %v2564
      %v4224 = vmul.f32 %v4222, %v2564
      %s4225 = smul.u32 %s2764, 8
      %s4226 = scalar_lea.vmem %s8, %s4225
      %v4227 = vld [vmem:[%s4226] sm:$0xff]
      %s4228 = scalar_lea.vmem %s9, %s4225
      %v4229 = vld [vmem:[%s4228] sm:$0xff]
      %v4231 = vsel %vm1013, %v4227, 0
      %4233 = vmatprep.subr.mxu0 0.0
      %4234 = vmatpush1.msra.mxu0 %v4223
      %4235 = vmatprep.subr.mxu0 0.0
      %4236 = vmatpush1.msra.mxu0 %v4224
      %4237 = vmatprep.subr.mxu0 0.0
      %4238 = vmatpush1.msra.mxu0 0.0
      %4239 = vmatprep.subr.mxu0 0.0
      %4240 = vmatpush1.msra.mxu0 0.0
      %4241 = vmatprep.subr.mxu0 0.0
      %4242 = vmatpush1.msra.mxu0 0.0
      %4243 = vmatprep.subr.mxu0 0.0
      %4244 = vmatpush1.msra.mxu0 0.0
      %4245 = vmatprep.subr.mxu0 0.0
      %4246 = vmatpush1.msra.mxu0 0.0
      %4247 = vmatprep.subr.mxu0 0.0
      %4248 = vmatpush1.msra.mxu0 0.0
      %4249 = vmatprep.subr.mxu0 0.0
      %4250 = vmatpush1.msra.mxu0 0.0
      %4251 = vmatprep.subr.mxu0 0.0
      %4252 = vmatpush1.msra.mxu0 0.0
      %4253 = vmatprep.subr.mxu0 0.0
      %4254 = vmatpush1.msra.mxu0 0.0
      %4255 = vmatprep.subr.mxu0 0.0
      %4256 = vmatpush1.msra.mxu0 0.0
      %4257 = vmatprep.subr.mxu0 0.0
      %4258 = vmatpush1.msra.mxu0 0.0
      %4259 = vmatprep.subr.mxu0 0.0
      %4260 = vmatpush1.msra.mxu0 0.0
      %4261 = vmatprep.subr.mxu0 0.0
      %4262 = vmatpush1.msra.mxu0 0.0
      %4263 = vmatprep.subr.mxu0 0.0
      %4264 = vmatpush1.msra.mxu0 0.0
      %4265 = vmatprep.subr.mxu0 0.0
      %4266 = vmatpush1.msra.mxu0 0.0
      %4267 = vmatprep.subr.mxu0 0.0
      %4268 = vmatpush1.msra.mxu0 0.0
      %4269 = vmatprep.subr.mxu0 0.0
      %4270 = vmatpush1.msra.mxu0 0.0
      %4271 = vmatprep.subr.mxu0 0.0
      %4272 = vmatpush1.msra.mxu0 0.0
      %4273 = vmatprep.subr.mxu0 0.0
      %4274 = vmatpush1.msra.mxu0 0.0
      %4275 = vmatprep.subr.mxu0 0.0
      %4276 = vmatpush1.msra.mxu0 0.0
      %4277 = vmatprep.subr.mxu0 0.0
      %4278 = vmatpush1.msra.mxu0 0.0
      %4279 = vmatprep.subr.mxu0 0.0
      %4280 = vmatpush1.msra.mxu0 0.0
      %4281 = vmatprep.subr.mxu0 0.0
      %4282 = vmatpush1.msra.mxu0 0.0
      %4283 = vmatprep.subr.mxu0 0.0
      %4284 = vmatpush1.msra.mxu0 0.0
      %4285 = vmatprep.subr.mxu0 0.0
      %4286 = vmatpush1.msra.mxu0 0.0
      %4287 = vmatprep.subr.mxu0 0.0
      %4288 = vmatpush1.msra.mxu0 0.0
      %4289 = vmatprep.subr.mxu0 0.0
      %4290 = vmatpush1.msra.mxu0 0.0
      %4291 = vmatprep.subr.mxu0 0.0
      %4292 = vmatpush1.msra.mxu0 0.0
      %4293 = vmatprep.subr.mxu0 0.0
      %4294 = vmatpush1.msra.mxu0 0.0
      %4295 = vmatprep.subr.mxu0 0.0
      %4296 = vmatpush1.msra.mxu0 0.0
      %4297 = vmatprep.mubr.f32.mxu0 0.0
      %4298 = vmatmul.mubr.f32.gmra.mrb[0].mxu0 %v4231
      %v4299 = vpop.f32.mrb[0].mxu0
      %v4300 = vadd.f32 %v4229, %v4299
      %v4301 = vpop.f32.mrb[0].mxu0
      %4302 = vdwg.mxu0
      %v4303 = vmax.f32 %v4300, 0.0
      %s4304 = scalar_lea.vmem %s10, %s2765
      %v4305 = vld [vmem:[%s4304] sm:$0xff]
      %v4306 = vld [vmem:[%s4304 + $0x8] sm:$0xff]
      %s4307 = scalar_lea.vmem %s11, %s2765
      %v4308 = vld [vmem:[%s4307] sm:$0xff]
      %v4309 = vld [vmem:[%s4307 + $0x8] sm:$0xff]
      %v4311 = vsel %vm2652, %v4305, 0
      %v4314 = vsel %vm2652, %v4306, 0
      %4316 = vmatprep.subr.mxu0 0.0
      %4317 = vmatpush1.msra.mxu0 %v4303
      %4318 = vmatprep.subr.mxu0 0.0
      %4319 = vmatpush1.msra.mxu0 0.0
      %4320 = vmatprep.subr.mxu0 0.0
      %4321 = vmatpush1.msra.mxu0 0.0
      %4322 = vmatprep.subr.mxu0 0.0
      %4323 = vmatpush1.msra.mxu0 0.0
      %4324 = vmatprep.subr.mxu0 0.0
      %4325 = vmatpush1.msra.mxu0 0.0
      %4326 = vmatprep.subr.mxu0 0.0
      %4327 = vmatpush1.msra.mxu0 0.0
      %4328 = vmatprep.subr.mxu0 0.0
      %4329 = vmatpush1.msra.mxu0 0.0
      %4330 = vmatprep.subr.mxu0 0.0
      %4331 = vmatpush1.msra.mxu0 0.0
      %4332 = vmatprep.subr.mxu0 0.0
      %4333 = vmatpush1.msra.mxu0 0.0
      %4334 = vmatprep.subr.mxu0 0.0
      %4335 = vmatpush1.msra.mxu0 0.0
      %4336 = vmatprep.subr.mxu0 0.0
      %4337 = vmatpush1.msra.mxu0 0.0
      %4338 = vmatprep.subr.mxu0 0.0
      %4339 = vmatpush1.msra.mxu0 0.0
      %4340 = vmatprep.subr.mxu0 0.0
      %4341 = vmatpush1.msra.mxu0 0.0
      %4342 = vmatprep.subr.mxu0 0.0
      %4343 = vmatpush1.msra.mxu0 0.0
      %4344 = vmatprep.subr.mxu0 0.0
      %4345 = vmatpush1.msra.mxu0 0.0
      %4346 = vmatprep.subr.mxu0 0.0
      %4347 = vmatpush1.msra.mxu0 0.0
      %4348 = vmatprep.subr.mxu0 0.0
      %4349 = vmatpush1.msra.mxu0 0.0
      %4350 = vmatprep.subr.mxu0 0.0
      %4351 = vmatpush1.msra.mxu0 0.0
      %4352 = vmatprep.subr.mxu0 0.0
      %4353 = vmatpush1.msra.mxu0 0.0
      %4354 = vmatprep.subr.mxu0 0.0
      %4355 = vmatpush1.msra.mxu0 0.0
      %4356 = vmatprep.subr.mxu0 0.0
      %4357 = vmatpush1.msra.mxu0 0.0
      %4358 = vmatprep.subr.mxu0 0.0
      %4359 = vmatpush1.msra.mxu0 0.0
      %4360 = vmatprep.subr.mxu0 0.0
      %4361 = vmatpush1.msra.mxu0 0.0
      %4362 = vmatprep.subr.mxu0 0.0
      %4363 = vmatpush1.msra.mxu0 0.0
      %4364 = vmatprep.subr.mxu0 0.0
      %4365 = vmatpush1.msra.mxu0 0.0
      %4366 = vmatprep.subr.mxu0 0.0
      %4367 = vmatpush1.msra.mxu0 0.0
      %4368 = vmatprep.subr.mxu0 0.0
      %4369 = vmatpush1.msra.mxu0 0.0
      %4370 = vmatprep.subr.mxu0 0.0
      %4371 = vmatpush1.msra.mxu0 0.0
      %4372 = vmatprep.subr.mxu0 0.0
      %4373 = vmatpush1.msra.mxu0 0.0
      %4374 = vmatprep.subr.mxu0 0.0
      %4375 = vmatpush1.msra.mxu0 0.0
      %4376 = vmatprep.subr.mxu0 0.0
      %4377 = vmatpush1.msra.mxu0 0.0
      %4378 = vmatprep.subr.mxu0 0.0
      %4379 = vmatpush1.msra.mxu0 0.0
      %4380 = vmatprep.mubr.f32.mxu0 0.0
      %4381 = vmatmul.mubr.f32.gmra.mrb[0].mxu0 %v4311
      %v4382 = vpop.f32.mrb[0].mxu0
      %v4383 = vadd.f32 %v4308, %v4382
      %v4384 = vpop.f32.mrb[0].mxu0
      %4385 = vmatprep.mubr.f32.mxu0 0.0
      %4386 = vmatmul.mubr.f32.gmra.mrb[0].mxu0 %v4314
      %v4387 = vpop.f32.mrb[0].mxu0
      %v4388 = vadd.f32 %v4309, %v4387
      %v4389 = vpop.f32.mrb[0].mxu0
      %4390 = vdwg.mxu0
      %v4391 = vxor.u32 %v4383, 2147483648
      %v4392 = vxor.u32 %v4388, 2147483648
      %v4393 = vmul.f32 %v4391, 1.442695
      %v4394 = vpow.pop %v4393
      %v4395 = vmul.f32 %v4392, 1.442695
      %v4396 = vpow.pop %v4395
      %v4397 = vadd.f32 %v4394, 1.0
      %v4398 = vadd.f32 %v4396, 1.0
      %v4399 = vrcp.pop %v4397
      %v4400 = vmul.f32 1.0, %v4399
      %v4401 = vrcp.pop %v4398
      %v4402 = vmul.f32 1.0, %v4401
      %4404 = vset.pattern.permute.xlu0 0
      %4405 = vperm.xlu0 %4404, %v4400
      %v4406 = vpop.permute.xlu0 %4405
      %4409 = vset.pattern.permute.xlu0 0
      %4410 = vperm.xlu0 %4409, %v4402
      %v4411 = vpop.permute.xlu0 %4410
      %v4413 = vmul.f32 %v4213, %v4406
      %v4414 = vmul.f32 %v4214, %v4406
      %v4415 = vmul.f32 %v4215, %v4411
      %v4416 = vmul.f32 %v4216, %v4411
      %v4417 = vadd.f32 %v2760, %v4413
      %v4418 = vadd.f32 %v2761, %v4414
      %v4419 = vadd.f32 %v2762, %v4415
      %v4420 = vadd.f32 %v2763, %v4416
      %s4421 = sadd.s32 %s1112, 2
      %s4422 = smul.u32 %s4421, 16
      %s4423 = scalar_lea.vmem %s3, %s4422
      %v4424 = vld [vmem:[%s4423] sm:$0xff]
      %v4425 = vld [vmem:[%s4423 + $0x8] sm:$0xff]
      %s4426 = scalar_lea.vmem %s4, %s4422
      %v4427 = vld [vmem:[%s4426] sm:$0xff]
      %v4428 = vld [vmem:[%s4426 + $0x8] sm:$0xff]
      %s4429 = scalar_lea.vmem %s12, 4
      %v4430 = vld [vmem:[%s4429] ss:$8 sm:$0x3]
      %s4431 = scalar_lea.vmem %s12, 5
      %v4432 = vld [vmem:[%s4431] ss:$8 sm:$0x3]
      %4435 = vrot.lane.b32.xlu0 %v1110, 51
      %v4436 = vpop.permute.xlu0 %4435
      %4437 = vrot.lane.b32.xlu0 %v1111, 51
      %v4438 = vpop.permute.xlu0 %4437
      %v4439 = vsel %vm505, %v4436, %v4438
      %4443 = vst.msk [vmem:[#allocation2] sm:$0xff] %vm514, %v4436
      %4444 = vst [vmem:[#allocation2 + $0x8] sm:$0xff] %v4439
      %4445 = vst.msk [vmem:[#allocation2 + $0x10] sm:$0xff] %vm505, %v4438
      %v4446 = vld [vmem:[#allocation2] sm:$0xff]
      %v4447 = vld [vmem:[#allocation2 + $0x8] sm:$0xff]
      %v4449 = vlaneseq
      %v4450 = vshrl.u32 %v4449, 7
      %v4451 = vsub.s32 0, %v4450
      %v4452 = vrot.slane %v4430, %v4451
      %v4453 = vlaneseq
      %v4454 = vshrl.u32 %v4453, 7
      %v4455 = vsub.s32 1, %v4454
      %v4456 = vrot.slane %v4430, %v4455
      %v4459 = vmul.f32 %v4446, %v4452
      %v4460 = vmul.f32 %v4447, %v4456
      %4461 = vst [vmem:[#allocation3] sm:$0xff] %v4459
      %4462 = vst [vmem:[#allocation3 + $0x8] sm:$0xff] %v4460
      %v4463 = vld [vmem:[#allocation2] sm:$0xff]
      %v4464 = vld [vmem:[#allocation2 + $0x8] sm:$0xff]
      %v4465 = vld [vmem:[#allocation2 + $0x10] sm:$0xff]
      %4469 = vrot.lane.b32.xlu0 %v4463, 125
      %v4470 = vpop.permute.xlu0 %4469
      %4471 = vrot.lane.b32.xlu0 %v4464, 125
      %v4472 = vpop.permute.xlu0 %4471
      %4473 = vrot.lane.b32.xlu0 %v4465, 125
      %v4474 = vpop.permute.xlu0 %4473
      %vm4475 = vcmask 1022976
      %v4476 = vsel %vm4475, %v4470, %v4472
      %v4477 = vsel %vm4475, %v4472, %v4474
      %4480 = vst [vmem:[#allocation3 + $0x10] sm:$0xff] %v4476
      %4481 = vst [vmem:[#allocation3 + $0x18] sm:$0xff] %v4477
      %v4482 = vld [vmem:[#allocation2] sm:$0xff]
      %v4483 = vld [vmem:[#allocation2 + $0x8] sm:$0xff]
      %v4484 = vld [vmem:[#allocation2 + $0x10] sm:$0xff]
      %v4486 = vlaneseq
      %v4487 = vshrl.u32 %v4486, 7
      %v4488 = vsub.s32 0, %v4487
      %v4489 = vrot.slane %v4432, %v4488
      %v4490 = vlaneseq
      %v4491 = vshrl.u32 %v4490, 7
      %v4492 = vsub.s32 1, %v4491
      %v4493 = vrot.slane %v4432, %v4492
      %4494 = vrot.lane.b32.xlu0 %v4489, 6
      %v4495 = vpop.permute.xlu0 %4494
      %4496 = vrot.lane.b32.xlu0 %v4493, 6
      %v4497 = vpop.permute.xlu0 %4496
      %vm4498 = vcmask 48128
      %v4499 = vsel %vm4498, %v4495, %v4497
      %v4503 = vmul.f32 %v4482, %v4495
      %v4504 = vmul.f32 %v4483, %v4499
      %v4505 = vmul.f32 %v4484, %v4497
      %4509 = vrot.lane.b32.xlu0 %v4503, 122
      %v4510 = vpop.permute.xlu0 %4509
      %4511 = vrot.lane.b32.xlu0 %v4504, 122
      %v4512 = vpop.permute.xlu0 %4511
      %4513 = vrot.lane.b32.xlu0 %v4505, 122
      %v4514 = vpop.permute.xlu0 %4513
      %vm4515 = vcmask 998400
      %v4516 = vsel %vm4515, %v4510, %v4512
      %v4517 = vsel %vm4515, %v4512, %v4514
      %4520 = vst [vmem:[#allocation3 + $0x20] sm:$0xff] %v4516
      %4521 = vst [vmem:[#allocation3 + $0x28] sm:$0xff] %v4517
      %v4522 = vld [vmem:[#allocation2] sm:$0xff]
      %v4523 = vld [vmem:[#allocation2 + $0x8] sm:$0xff]
      %v4524 = vld [vmem:[#allocation2 + $0x10] sm:$0xff]
      %4525 = vrot.lane.b32.xlu0 %v4452, 48
      %v4526 = vpop.permute.xlu0 %4525
      %4527 = vrot.lane.b32.xlu0 %v4456, 48
      %v4528 = vpop.permute.xlu0 %4527
      %vm4529 = vcmask 392192
      %v4530 = vsel %vm4529, %v4526, %v4528
      %v4534 = vmul.f32 %v4522, %v4526
      %v4535 = vmul.f32 %v4523, %v4530
      %v4536 = vmul.f32 %v4524, %v4528
      %4540 = vrot.lane.b32.xlu0 %v4534, 80
      %v4541 = vpop.permute.xlu0 %4540
      %4542 = vrot.lane.b32.xlu0 %v4535, 80
      %v4543 = vpop.permute.xlu0 %4542
      %4544 = vrot.lane.b32.xlu0 %v4536, 80
      %v4545 = vpop.permute.xlu0 %4544
      %vm4546 = vcmask 654336
      %v4547 = vsel %vm4546, %v4541, %v4543
      %v4548 = vsel %vm4546, %v4543, %v4545
      %4551 = vst [vmem:[#allocation3 + $0x30] sm:$0xff] %v4547
      %4552 = vst [vmem:[#allocation3 + $0x38] sm:$0xff] %v4548
      %v4553 = vld [vmem:[#allocation2] sm:$0xff]
      %v4554 = vld [vmem:[#allocation2 + $0x8] sm:$0xff]
      %v4555 = vld [vmem:[#allocation2 + $0x10] sm:$0xff]
      %4559 = vrot.lane.b32.xlu0 %v4553, 77
      %v4560 = vpop.permute.xlu0 %4559
      %4561 = vrot.lane.b32.xlu0 %v4554, 77
      %v4562 = vpop.permute.xlu0 %4561
      %4563 = vrot.lane.b32.xlu0 %v4555, 77
      %v4564 = vpop.permute.xlu0 %4563
      %v4565 = vsel %vm756, %v4560, %v4562
      %v4566 = vsel %vm756, %v4562, %v4564
      %4569 = vst [vmem:[#allocation3 + $0x40] sm:$0xff] %v4565
      %4570 = vst [vmem:[#allocation3 + $0x48] sm:$0xff] %v4566
      %v4571 = vld [vmem:[#allocation2] sm:$0xff]
      %v4572 = vld [vmem:[#allocation2 + $0x8] sm:$0xff]
      %v4573 = vld [vmem:[#allocation2 + $0x10] sm:$0xff]
      %4574 = vrot.lane.b32.xlu0 %v4489, 54
      %v4575 = vpop.permute.xlu0 %4574
      %4576 = vrot.lane.b32.xlu0 %v4493, 54
      %v4577 = vpop.permute.xlu0 %4576
      %vm4578 = vcmask 441344
      %v4579 = vsel %vm4578, %v4575, %v4577
      %v4583 = vmul.f32 %v4571, %v4575
      %v4584 = vmul.f32 %v4572, %v4579
      %v4585 = vmul.f32 %v4573, %v4577
      %4589 = vrot.lane.b32.xlu0 %v4583, 74
      %v4590 = vpop.permute.xlu0 %4589
      %4591 = vrot.lane.b32.xlu0 %v4584, 74
      %v4592 = vpop.permute.xlu0 %4591
      %4593 = vrot.lane.b32.xlu0 %v4585, 74
      %v4594 = vpop.permute.xlu0 %4593
      %vm4595 = vcmask 605184
      %v4596 = vsel %vm4595, %v4590, %v4592
      %v4597 = vsel %vm4595, %v4592, %v4594
      %4600 = vst [vmem:[#allocation3 + $0x50] sm:$0xff] %v4596
      %4601 = vst [vmem:[#allocation3 + $0x58] sm:$0xff] %v4597
      %v4602 = vld [vmem:[#allocation2] sm:$0xff]
      %v4603 = vld [vmem:[#allocation2 + $0x8] sm:$0xff]
      %v4604 = vld [vmem:[#allocation2 + $0x10] sm:$0xff]
      %4605 = vrot.lane.b32.xlu0 %v4452, 96
      %v4606 = vpop.permute.xlu0 %4605
      %4607 = vrot.lane.b32.xlu0 %v4456, 96
      %v4608 = vpop.permute.xlu0 %4607
      %vm4609 = vcmask 785408
      %v4610 = vsel %vm4609, %v4606, %v4608
      %v4614 = vmul.f32 %v4602, %v4606
      %v4615 = vmul.f32 %v4603, %v4610
      %v4616 = vmul.f32 %v4604, %v4608
      %4620 = vrot.lane.b32.xlu0 %v4614, 32
      %v4621 = vpop.permute.xlu0 %4620
      %4622 = vrot.lane.b32.xlu0 %v4615, 32
      %v4623 = vpop.permute.xlu0 %4622
      %4624 = vrot.lane.b32.xlu0 %v4616, 32
      %v4625 = vpop.permute.xlu0 %4624
      %vm4626 = vcmask 261120
      %v4627 = vsel %vm4626, %v4621, %v4623
      %v4628 = vsel %vm4626, %v4623, %v4625
      %4631 = vst [vmem:[#allocation3 + $0x60] sm:$0xff] %v4627
      %4632 = vst [vmem:[#allocation3 + $0x68] sm:$0xff] %v4628
      %v4633 = vld [vmem:[#allocation2] sm:$0xff]
      %v4634 = vld [vmem:[#allocation2 + $0x8] sm:$0xff]
      %v4635 = vld [vmem:[#allocation2 + $0x10] sm:$0xff]
      %4639 = vrot.lane.b32.xlu0 %v4633, 29
      %v4640 = vpop.permute.xlu0 %4639
      %4641 = vrot.lane.b32.xlu0 %v4634, 29
      %v4642 = vpop.permute.xlu0 %4641
      %4643 = vrot.lane.b32.xlu0 %v4635, 29
      %v4644 = vpop.permute.xlu0 %4643
      %vm4645 = vcmask 236544
      %v4646 = vsel %vm4645, %v4640, %v4642
      %v4647 = vsel %vm4645, %v4642, %v4644
      %4650 = vst [vmem:[#allocation3 + $0x70] sm:$0xff] %v4646
      %4651 = vst [vmem:[#allocation3 + $0x78] sm:$0xff] %v4647
      %v4652 = vld [vmem:[#allocation2] sm:$0xff]
      %v4653 = vld [vmem:[#allocation2 + $0x8] sm:$0xff]
      %v4654 = vld [vmem:[#allocation2 + $0x10] sm:$0xff]
      %4655 = vrot.lane.b32.xlu0 %v4489, 102
      %v4656 = vpop.permute.xlu0 %4655
      %4657 = vrot.lane.b32.xlu0 %v4493, 102
      %v4658 = vpop.permute.xlu0 %4657
      %vm4659 = vcmask 834560
      %v4660 = vsel %vm4659, %v4656, %v4658
      %v4664 = vmul.f32 %v4652, %v4656
      %v4665 = vmul.f32 %v4653, %v4660
      %v4666 = vmul.f32 %v4654, %v4658
      %4670 = vrot.lane.b32.xlu0 %v4664, 26
      %v4671 = vpop.permute.xlu0 %4670
      %4672 = vrot.lane.b32.xlu0 %v4665, 26
      %v4673 = vpop.permute.xlu0 %4672
      %4674 = vrot.lane.b32.xlu0 %v4666, 26
      %v4675 = vpop.permute.xlu0 %4674
      %vm4676 = vcmask 211968
      %v4677 = vsel %vm4676, %v4671, %v4673
      %v4678 = vsel %vm4676, %v4673, %v4675
      %4681 = vst [vmem:[#allocation3 + $0x80] sm:$0xff] %v4677
      %4682 = vst [vmem:[#allocation3 + $0x88] sm:$0xff] %v4678
      %v4683 = vld [vmem:[#allocation3] sm:$0xff]
      %v4684 = vld [vmem:[#allocation3 + $0x8] sm:$0xff]
      %v4685 = vld [vmem:[#allocation3 + $0x10] sm:$0xff]
      %v4686 = vld [vmem:[#allocation3 + $0x18] sm:$0xff]
      %v4687 = vld [vmem:[#allocation3 + $0x20] sm:$0xff]
      %v4688 = vld [vmem:[#allocation3 + $0x28] sm:$0xff]
      %v4689 = vld [vmem:[#allocation3 + $0x30] sm:$0xff]
      %v4690 = vld [vmem:[#allocation3 + $0x38] sm:$0xff]
      %v4691 = vld [vmem:[#allocation3 + $0x40] sm:$0xff]
      %v4692 = vld [vmem:[#allocation3 + $0x48] sm:$0xff]
      %v4693 = vld [vmem:[#allocation3 + $0x50] sm:$0xff]
      %v4694 = vld [vmem:[#allocation3 + $0x58] sm:$0xff]
      %v4695 = vld [vmem:[#allocation3 + $0x60] sm:$0xff]
      %v4696 = vld [vmem:[#allocation3 + $0x68] sm:$0xff]
      %v4697 = vld [vmem:[#allocation3 + $0x70] sm:$0xff]
      %v4698 = vld [vmem:[#allocation3 + $0x78] sm:$0xff]
      %v4699 = vld [vmem:[#allocation3 + $0x80] sm:$0xff]
      %v4700 = vld [vmem:[#allocation3 + $0x88] sm:$0xff]
      %4702 = vset.pattern.permute.xlu0 0
      %4703 = vperm.xlu0 %4702, %v4427
      %v4704 = vpop.permute.xlu0 %4703
      %4707 = vset.pattern.permute.xlu0 0
      %4708 = vperm.xlu0 %4707, %v4428
      %v4709 = vpop.permute.xlu0 %4708
      %v4712 = vsel %vm1409, %v4424, 0
      %v4715 = vsel %vm1409, %v4425, 0
      %4717 = vmatprep.subr.mxu0 %v4684
      %4718 = vmatpush1.msra.mxu0 %v4683
      %4719 = vmatprep.subr.mxu0 %v4686
      %4720 = vmatpush1.msra.mxu0 %v4685
      %4721 = vmatprep.subr.mxu0 %v4688
      %4722 = vmatpush1.msra.mxu0 %v4687
      %4723 = vmatprep.subr.mxu0 %v4690
      %4724 = vmatpush1.msra.mxu0 %v4689
      %4725 = vmatprep.subr.mxu0 %v4692
      %4726 = vmatpush1.msra.mxu0 %v4691
      %4727 = vmatprep.subr.mxu0 %v4694
      %4728 = vmatpush1.msra.mxu0 %v4693
      %4729 = vmatprep.subr.mxu0 %v4696
      %4730 = vmatpush1.msra.mxu0 %v4695
      %4731 = vmatprep.subr.mxu0 %v4698
      %4732 = vmatpush1.msra.mxu0 %v4697
      %4733 = vmatprep.subr.mxu0 %v4700
      %4734 = vmatpush1.msra.mxu0 %v4699
      %4735 = vmatprep.subr.mxu0 0.0
      %4736 = vmatpush1.msra.mxu0 0.0
      %4737 = vmatprep.subr.mxu0 0.0
      %4738 = vmatpush1.msra.mxu0 0.0
      %4739 = vmatprep.subr.mxu0 0.0
      %4740 = vmatpush1.msra.mxu0 0.0
      %4741 = vmatprep.subr.mxu0 0.0
      %4742 = vmatpush1.msra.mxu0 0.0
      %4743 = vmatprep.subr.mxu0 0.0
      %4744 = vmatpush1.msra.mxu0 0.0
      %4745 = vmatprep.subr.mxu0 0.0
      %4746 = vmatpush1.msra.mxu0 0.0
      %4747 = vmatprep.subr.mxu0 0.0
      %4748 = vmatpush1.msra.mxu0 0.0
      %4749 = vmatprep.subr.mxu0 0.0
      %4750 = vmatpush1.msra.mxu0 0.0
      %4751 = vmatprep.subr.mxu0 0.0
      %4752 = vmatpush1.msra.mxu0 0.0
      %4753 = vmatprep.subr.mxu0 0.0
      %4754 = vmatpush1.msra.mxu0 0.0
      %4755 = vmatprep.subr.mxu0 0.0
      %4756 = vmatpush1.msra.mxu0 0.0
      %4757 = vmatprep.subr.mxu0 0.0
      %4758 = vmatpush1.msra.mxu0 0.0
      %4759 = vmatprep.subr.mxu0 0.0
      %4760 = vmatpush1.msra.mxu0 0.0
      %4761 = vmatprep.subr.mxu0 0.0
      %4762 = vmatpush1.msra.mxu0 0.0
      %4763 = vmatprep.subr.mxu0 0.0
      %4764 = vmatpush1.msra.mxu0 0.0
      %4765 = vmatprep.subr.mxu0 0.0
      %4766 = vmatpush1.msra.mxu0 0.0
      %4767 = vmatprep.subr.mxu0 0.0
      %4768 = vmatpush1.msra.mxu0 0.0
      %4769 = vmatprep.subr.mxu0 0.0
      %4770 = vmatpush1.msra.mxu0 0.0
      %4771 = vmatprep.subr.mxu0 0.0
      %4772 = vmatpush1.msra.mxu0 0.0
      %4773 = vmatprep.subr.mxu0 0.0
      %4774 = vmatpush1.msra.mxu0 0.0
      %4775 = vmatprep.subr.mxu0 0.0
      %4776 = vmatpush1.msra.mxu0 0.0
      %4777 = vmatprep.subr.mxu0 0.0
      %4778 = vmatpush1.msra.mxu0 0.0
      %4779 = vmatprep.subr.mxu0 0.0
      %4780 = vmatpush1.msra.mxu0 0.0
      %4781 = vmatprep.mubr.f32.mxu0 0.0
      %4782 = vmatmul.mubr.f32.gmra.mrb[0].mxu0 %v4712
      %v4783 = vpop.f32.mrb[0].mxu0
      %v4784 = vadd.f32 %v4704, %v4783
      %v4785 = vpop.f32.mrb[0].mxu0
      %v4786 = vadd.f32 %v4704, %v4785
      %4787 = vmatprep.mubr.f32.mxu0 0.0
      %4788 = vmatmul.mubr.f32.gmra.mrb[0].mxu0 %v4715
      %v4789 = vpop.f32.mrb[0].mxu0
      %v4790 = vadd.f32 %v4709, %v4789
      %v4791 = vpop.f32.mrb[0].mxu0
      %v4792 = vadd.f32 %v4709, %v4791
      %4793 = vdwg.mxu0
      %v4794 = vadd.f32 %v4784, %v472
      %v4795 = vadd.f32 %v4786, %v473
      %v4796 = vadd.f32 %v4790, %v474
      %v4797 = vadd.f32 %v4792, %v475
      %v4798 = vmax.f32 %v4794, 0.0
      %v4799 = vmax.f32 %v4795, 0.0
      %v4800 = vmax.f32 %v4796, 0.0
      %v4801 = vmax.f32 %v4797, 0.0
      %s4802 = smul.u32 %s4421, 4
      %s4803 = smul.addr %s4802, 8
      %s4804 = scalar_lea.vmem %s5, %s4803
      %v4805 = vld [vmem:[%s4804] sm:$0xff]
      %v4806 = vld [vmem:[%s4804 + $0x8] sm:$0xff]
      %v4807 = vld [vmem:[%s4804 + $0x10] sm:$0xff]
      %v4808 = vld [vmem:[%s4804 + $0x18] sm:$0xff]
      %s4809 = scalar_lea.vmem %s6, %s4422
      %v4810 = vld [vmem:[%s4809] sm:$0xff]
      %v4811 = vld [vmem:[%s4809 + $0x8] sm:$0xff]
      %v4812 = vld [vmem:[%s12] ss:$8 sm:$0x3]
      %v4813 = vld [vmem:[%s491] ss:$8 sm:$0x3]
      %4818 = vrot.lane.b32.xlu0 %v4798, 51
      %v4819 = vpop.permute.xlu0 %4818
      %4820 = vrot.lane.b32.xlu0 %v4799, 51
      %v4821 = vpop.permute.xlu0 %4820
      %4822 = vrot.lane.b32.xlu0 %v4800, 51
      %v4823 = vpop.permute.xlu0 %4822
      %4824 = vrot.lane.b32.xlu0 %v4801, 51
      %v4825 = vpop.permute.xlu0 %4824
      %v4826 = vsel %vm505, %v4819, %v4821
      %v4827 = vsel %vm505, %v4823, %v4825
      %4834 = vst.msk [vmem:[#allocation2] sm:$0xff] %vm514, %v4819
      %4835 = vst [vmem:[#allocation2 + $0x8] sm:$0xff] %v4826
      %4836 = vst.msk [vmem:[#allocation2 + $0x10] sm:$0xff] %vm505, %v4821
      %4837 = vst.msk [vmem:[#allocation2 + $0x18] sm:$0xff] %vm514, %v4823
      %4838 = vst [vmem:[#allocation2 + $0x20] sm:$0xff] %v4827
      %4839 = vst.msk [vmem:[#allocation2 + $0x28] sm:$0xff] %vm505, %v4825
      %v4840 = vld [vmem:[#allocation2] sm:$0xff]
      %v4841 = vld [vmem:[#allocation2 + $0x8] sm:$0xff]
      %v4842 = vld [vmem:[#allocation2 + $0x10] sm:$0xff]
      %v4843 = vld [vmem:[#allocation2 + $0x18] sm:$0xff]
      %v4844 = vld [vmem:[#allocation2 + $0x20] sm:$0xff]
      %v4845 = vld [vmem:[#allocation2 + $0x28] sm:$0xff]
      %v4847 = vlaneseq
      %v4848 = vshrl.u32 %v4847, 7
      %v4849 = vsub.s32 0, %v4848
      %v4850 = vrot.slane %v4812, %v4849
      %v4851 = vlaneseq
      %v4852 = vshrl.u32 %v4851, 7
      %v4853 = vsub.s32 1, %v4852
      %v4854 = vrot.slane %v4812, %v4853
      %4855 = vrot.lane.b32.xlu0 %v4850, 34
      %v4856 = vpop.permute.xlu0 %4855
      %4857 = vrot.lane.b32.xlu0 %v4854, 34
      %v4858 = vpop.permute.xlu0 %4857
      %v4859 = vsel %vm540, %v4856, %v4858
      %v4863 = vmul.f32 %v4840, %v4856
      %v4864 = vmul.f32 %v4841, %v4859
      %v4865 = vmul.f32 %v4842, %v4858
      %v4866 = vmul.f32 %v4843, %v4856
      %v4867 = vmul.f32 %v4844, %v4859
      %v4868 = vmul.f32 %v4845, %v4858
      %4875 = vrot.lane.b32.xlu0 %v4863, 94
      %v4876 = vpop.permute.xlu0 %4875
      %4877 = vrot.lane.b32.xlu0 %v4864, 94
      %v4878 = vpop.permute.xlu0 %4877
      %4879 = vrot.lane.b32.xlu0 %v4865, 94
      %v4880 = vpop.permute.xlu0 %4879
      %4881 = vrot.lane.b32.xlu0 %v4866, 94
      %v4882 = vpop.permute.xlu0 %4881
      %4883 = vrot.lane.b32.xlu0 %v4867, 94
      %v4884 = vpop.permute.xlu0 %4883
      %4885 = vrot.lane.b32.xlu0 %v4868, 94
      %v4886 = vpop.permute.xlu0 %4885
      %v4887 = vsel %vm569, %v4876, %v4878
      %v4888 = vsel %vm569, %v4878, %v4880
      %v4889 = vsel %vm569, %v4882, %v4884
      %v4890 = vsel %vm569, %v4884, %v4886
      %4895 = vst [vmem:[#allocation3] sm:$0xff] %v4887
      %4896 = vst [vmem:[#allocation3 + $0x8] sm:$0xff] %v4888
      %4897 = vst [vmem:[#allocation3 + $0x10] sm:$0xff] %v4889
      %4898 = vst [vmem:[#allocation3 + $0x18] sm:$0xff] %v4890
      %v4899 = vld [vmem:[#allocation2] sm:$0xff]
      %v4900 = vld [vmem:[#allocation2 + $0x8] sm:$0xff]
      %v4901 = vld [vmem:[#allocation2 + $0x10] sm:$0xff]
      %v4902 = vld [vmem:[#allocation2 + $0x18] sm:$0xff]
      %v4903 = vld [vmem:[#allocation2 + $0x20] sm:$0xff]
      %v4904 = vld [vmem:[#allocation2 + $0x28] sm:$0xff]
      %4911 = vrot.lane.b32.xlu0 %v4899, 93
      %v4912 = vpop.permute.xlu0 %4911
      %4913 = vrot.lane.b32.xlu0 %v4900, 93
      %v4914 = vpop.permute.xlu0 %4913
      %4915 = vrot.lane.b32.xlu0 %v4901, 93
      %v4916 = vpop.permute.xlu0 %4915
      %4917 = vrot.lane.b32.xlu0 %v4902, 93
      %v4918 = vpop.permute.xlu0 %4917
      %4919 = vrot.lane.b32.xlu0 %v4903, 93
      %v4920 = vpop.permute.xlu0 %4919
      %4921 = vrot.lane.b32.xlu0 %v4904, 93
      %v4922 = vpop.permute.xlu0 %4921
      %v4923 = vsel %vm606, %v4912, %v4914
      %v4924 = vsel %vm606, %v4914, %v4916
      %v4925 = vsel %vm606, %v4918, %v4920
      %v4926 = vsel %vm606, %v4920, %v4922
      %4931 = vst [vmem:[#allocation3 + $0x20] sm:$0xff] %v4923
      %4932 = vst [vmem:[#allocation3 + $0x28] sm:$0xff] %v4924
      %4933 = vst [vmem:[#allocation3 + $0x30] sm:$0xff] %v4925
      %4934 = vst [vmem:[#allocation3 + $0x38] sm:$0xff] %v4926
      %v4935 = vld [vmem:[#allocation2] sm:$0xff]
      %v4936 = vld [vmem:[#allocation2 + $0x8] sm:$0xff]
      %v4937 = vld [vmem:[#allocation2 + $0x10] sm:$0xff]
      %v4938 = vld [vmem:[#allocation2 + $0x18] sm:$0xff]
      %v4939 = vld [vmem:[#allocation2 + $0x20] sm:$0xff]
      %v4940 = vld [vmem:[#allocation2 + $0x28] sm:$0xff]
      %v4942 = vlaneseq
      %v4943 = vshrl.u32 %v4942, 7
      %v4944 = vsub.s32 0, %v4943
      %v4945 = vrot.slane %v4813, %v4944
      %v4946 = vlaneseq
      %v4947 = vshrl.u32 %v4946, 7
      %v4948 = vsub.s32 1, %v4947
      %v4949 = vrot.slane %v4813, %v4948
      %4950 = vrot.lane.b32.xlu0 %v4945, 36
      %v4951 = vpop.permute.xlu0 %4950
      %4952 = vrot.lane.b32.xlu0 %v4949, 36
      %v4953 = vpop.permute.xlu0 %4952
      %v4954 = vsel %vm638, %v4951, %v4953
      %v4958 = vmul.f32 %v4935, %v4951
      %v4959 = vmul.f32 %v4936, %v4954
      %v4960 = vmul.f32 %v4937, %v4953
      %v4961 = vmul.f32 %v4938, %v4951
      %v4962 = vmul.f32 %v4939, %v4954
      %v4963 = vmul.f32 %v4940, %v4953
      %4970 = vrot.lane.b32.xlu0 %v4958, 92
      %v4971 = vpop.permute.xlu0 %4970
      %4972 = vrot.lane.b32.xlu0 %v4959, 92
      %v4973 = vpop.permute.xlu0 %4972
      %4974 = vrot.lane.b32.xlu0 %v4960, 92
      %v4975 = vpop.permute.xlu0 %4974
      %4976 = vrot.lane.b32.xlu0 %v4961, 92
      %v4977 = vpop.permute.xlu0 %4976
      %4978 = vrot.lane.b32.xlu0 %v4962, 92
      %v4979 = vpop.permute.xlu0 %4978
      %4980 = vrot.lane.b32.xlu0 %v4963, 92
      %v4981 = vpop.permute.xlu0 %4980
      %v4982 = vsel %vm667, %v4971, %v4973
      %v4983 = vsel %vm667, %v4973, %v4975
      %v4984 = vsel %vm667, %v4977, %v4979
      %v4985 = vsel %vm667, %v4979, %v4981
      %4990 = vst [vmem:[#allocation3 + $0x40] sm:$0xff] %v4982
      %4991 = vst [vmem:[#allocation3 + $0x48] sm:$0xff] %v4983
      %4992 = vst [vmem:[#allocation3 + $0x50] sm:$0xff] %v4984
      %4993 = vst [vmem:[#allocation3 + $0x58] sm:$0xff] %v4985
      %v4994 = vld [vmem:[#allocation2] sm:$0xff]
      %v4995 = vld [vmem:[#allocation2 + $0x8] sm:$0xff]
      %v4996 = vld [vmem:[#allocation2 + $0x10] sm:$0xff]
      %v4997 = vld [vmem:[#allocation2 + $0x18] sm:$0xff]
      %v4998 = vld [vmem:[#allocation2 + $0x20] sm:$0xff]
      %v4999 = vld [vmem:[#allocation2 + $0x28] sm:$0xff]
      %5000 = vrot.lane.b32.xlu0 %v4850, 50
      %v5001 = vpop.permute.xlu0 %5000
      %5002 = vrot.lane.b32.xlu0 %v4854, 50
      %v5003 = vpop.permute.xlu0 %5002
      %v5004 = vsel %vm690, %v5001, %v5003
      %v5008 = vmul.f32 %v4994, %v5001
      %v5009 = vmul.f32 %v4995, %v5004
      %v5010 = vmul.f32 %v4996, %v5003
      %v5011 = vmul.f32 %v4997, %v5001
      %v5012 = vmul.f32 %v4998, %v5004
      %v5013 = vmul.f32 %v4999, %v5003
      %5020 = vrot.lane.b32.xlu0 %v5008, 78
      %v5021 = vpop.permute.xlu0 %5020
      %5022 = vrot.lane.b32.xlu0 %v5009, 78
      %v5023 = vpop.permute.xlu0 %5022
      %5024 = vrot.lane.b32.xlu0 %v5010, 78
      %v5025 = vpop.permute.xlu0 %5024
      %5026 = vrot.lane.b32.xlu0 %v5011, 78
      %v5027 = vpop.permute.xlu0 %5026
      %5028 = vrot.lane.b32.xlu0 %v5012, 78
      %v5029 = vpop.permute.xlu0 %5028
      %5030 = vrot.lane.b32.xlu0 %v5013, 78
      %v5031 = vpop.permute.xlu0 %5030
      %v5032 = vsel %vm719, %v5021, %v5023
      %v5033 = vsel %vm719, %v5023, %v5025
      %v5034 = vsel %vm719, %v5027, %v5029
      %v5035 = vsel %vm719, %v5029, %v5031
      %5040 = vst [vmem:[#allocation3 + $0x60] sm:$0xff] %v5032
      %5041 = vst [vmem:[#allocation3 + $0x68] sm:$0xff] %v5033
      %5042 = vst [vmem:[#allocation3 + $0x70] sm:$0xff] %v5034
      %5043 = vst [vmem:[#allocation3 + $0x78] sm:$0xff] %v5035
      %v5044 = vld [vmem:[#allocation2] sm:$0xff]
      %v5045 = vld [vmem:[#allocation2 + $0x8] sm:$0xff]
      %v5046 = vld [vmem:[#allocation2 + $0x10] sm:$0xff]
      %v5047 = vld [vmem:[#allocation2 + $0x18] sm:$0xff]
      %v5048 = vld [vmem:[#allocation2 + $0x20] sm:$0xff]
      %v5049 = vld [vmem:[#allocation2 + $0x28] sm:$0xff]
      %5056 = vrot.lane.b32.xlu0 %v5044, 77
      %v5057 = vpop.permute.xlu0 %5056
      %5058 = vrot.lane.b32.xlu0 %v5045, 77
      %v5059 = vpop.permute.xlu0 %5058
      %5060 = vrot.lane.b32.xlu0 %v5046, 77
      %v5061 = vpop.permute.xlu0 %5060
      %5062 = vrot.lane.b32.xlu0 %v5047, 77
      %v5063 = vpop.permute.xlu0 %5062
      %5064 = vrot.lane.b32.xlu0 %v5048, 77
      %v5065 = vpop.permute.xlu0 %5064
      %5066 = vrot.lane.b32.xlu0 %v5049, 77
      %v5067 = vpop.permute.xlu0 %5066
      %v5068 = vsel %vm756, %v5057, %v5059
      %v5069 = vsel %vm756, %v5059, %v5061
      %v5070 = vsel %vm756, %v5063, %v5065
      %v5071 = vsel %vm756, %v5065, %v5067
      %5076 = vst [vmem:[#allocation3 + $0x80] sm:$0xff] %v5068
      %5077 = vst [vmem:[#allocation3 + $0x88] sm:$0xff] %v5069
      %5078 = vst [vmem:[#allocation3 + $0x90] sm:$0xff] %v5070
      %5079 = vst [vmem:[#allocation3 + $0x98] sm:$0xff] %v5071
      %v5080 = vld [vmem:[#allocation2] sm:$0xff]
      %v5081 = vld [vmem:[#allocation2 + $0x8] sm:$0xff]
      %v5082 = vld [vmem:[#allocation2 + $0x10] sm:$0xff]
      %v5083 = vld [vmem:[#allocation2 + $0x18] sm:$0xff]
      %v5084 = vld [vmem:[#allocation2 + $0x20] sm:$0xff]
      %v5085 = vld [vmem:[#allocation2 + $0x28] sm:$0xff]
      %5086 = vrot.lane.b32.xlu0 %v4945, 52
      %v5087 = vpop.permute.xlu0 %5086
      %5088 = vrot.lane.b32.xlu0 %v4949, 52
      %v5089 = vpop.permute.xlu0 %5088
      %v5090 = vsel %vm779, %v5087, %v5089
      %v5094 = vmul.f32 %v5080, %v5087
      %v5095 = vmul.f32 %v5081, %v5090
      %v5096 = vmul.f32 %v5082, %v5089
      %v5097 = vmul.f32 %v5083, %v5087
      %v5098 = vmul.f32 %v5084, %v5090
      %v5099 = vmul.f32 %v5085, %v5089
      %5106 = vrot.lane.b32.xlu0 %v5094, 76
      %v5107 = vpop.permute.xlu0 %5106
      %5108 = vrot.lane.b32.xlu0 %v5095, 76
      %v5109 = vpop.permute.xlu0 %5108
      %5110 = vrot.lane.b32.xlu0 %v5096, 76
      %v5111 = vpop.permute.xlu0 %5110
      %5112 = vrot.lane.b32.xlu0 %v5097, 76
      %v5113 = vpop.permute.xlu0 %5112
      %5114 = vrot.lane.b32.xlu0 %v5098, 76
      %v5115 = vpop.permute.xlu0 %5114
      %5116 = vrot.lane.b32.xlu0 %v5099, 76
      %v5117 = vpop.permute.xlu0 %5116
      %v5118 = vsel %vm808, %v5107, %v5109
      %v5119 = vsel %vm808, %v5109, %v5111
      %v5120 = vsel %vm808, %v5113, %v5115
      %v5121 = vsel %vm808, %v5115, %v5117
      %5126 = vst [vmem:[#allocation3 + $0xa0] sm:$0xff] %v5118
      %5127 = vst [vmem:[#allocation3 + $0xa8] sm:$0xff] %v5119
      %5128 = vst [vmem:[#allocation3 + $0xb0] sm:$0xff] %v5120
      %5129 = vst [vmem:[#allocation3 + $0xb8] sm:$0xff] %v5121
      %v5130 = vld [vmem:[#allocation2] sm:$0xff]
      %v5131 = vld [vmem:[#allocation2 + $0x8] sm:$0xff]
      %v5132 = vld [vmem:[#allocation2 + $0x10] sm:$0xff]
      %v5133 = vld [vmem:[#allocation2 + $0x18] sm:$0xff]
      %v5134 = vld [vmem:[#allocation2 + $0x20] sm:$0xff]
      %v5135 = vld [vmem:[#allocation2 + $0x28] sm:$0xff]
      %5136 = vrot.lane.b32.xlu0 %v4850, 66
      %v5137 = vpop.permute.xlu0 %5136
      %5138 = vrot.lane.b32.xlu0 %v4854, 66
      %v5139 = vpop.permute.xlu0 %5138
      %v5140 = vsel %vm831, %v5137, %v5139
      %v5144 = vmul.f32 %v5130, %v5137
      %v5145 = vmul.f32 %v5131, %v5140
      %v5146 = vmul.f32 %v5132, %v5139
      %v5147 = vmul.f32 %v5133, %v5137
      %v5148 = vmul.f32 %v5134, %v5140
      %v5149 = vmul.f32 %v5135, %v5139
      %5156 = vrot.lane.b32.xlu0 %v5144, 62
      %v5157 = vpop.permute.xlu0 %5156
      %5158 = vrot.lane.b32.xlu0 %v5145, 62
      %v5159 = vpop.permute.xlu0 %5158
      %5160 = vrot.lane.b32.xlu0 %v5146, 62
      %v5161 = vpop.permute.xlu0 %5160
      %5162 = vrot.lane.b32.xlu0 %v5147, 62
      %v5163 = vpop.permute.xlu0 %5162
      %5164 = vrot.lane.b32.xlu0 %v5148, 62
      %v5165 = vpop.permute.xlu0 %5164
      %5166 = vrot.lane.b32.xlu0 %v5149, 62
      %v5167 = vpop.permute.xlu0 %5166
      %v5168 = vsel %vm860, %v5157, %v5159
      %v5169 = vsel %vm860, %v5159, %v5161
      %v5170 = vsel %vm860, %v5163, %v5165
      %v5171 = vsel %vm860, %v5165, %v5167
      %5176 = vst [vmem:[#allocation3 + $0xc0] sm:$0xff] %v5168
      %5177 = vst [vmem:[#allocation3 + $0xc8] sm:$0xff] %v5169
      %5178 = vst [vmem:[#allocation3 + $0xd0] sm:$0xff] %v5170
      %5179 = vst [vmem:[#allocation3 + $0xd8] sm:$0xff] %v5171
      %v5180 = vld [vmem:[#allocation2] sm:$0xff]
      %v5181 = vld [vmem:[#allocation2 + $0x8] sm:$0xff]
      %v5182 = vld [vmem:[#allocation2 + $0x10] sm:$0xff]
      %v5183 = vld [vmem:[#allocation2 + $0x18] sm:$0xff]
      %v5184 = vld [vmem:[#allocation2 + $0x20] sm:$0xff]
      %v5185 = vld [vmem:[#allocation2 + $0x28] sm:$0xff]
      %5192 = vrot.lane.b32.xlu0 %v5180, 61
      %v5193 = vpop.permute.xlu0 %5192
      %5194 = vrot.lane.b32.xlu0 %v5181, 61
      %v5195 = vpop.permute.xlu0 %5194
      %5196 = vrot.lane.b32.xlu0 %v5182, 61
      %v5197 = vpop.permute.xlu0 %5196
      %5198 = vrot.lane.b32.xlu0 %v5183, 61
      %v5199 = vpop.permute.xlu0 %5198
      %5200 = vrot.lane.b32.xlu0 %v5184, 61
      %v5201 = vpop.permute.xlu0 %5200
      %5202 = vrot.lane.b32.xlu0 %v5185, 61
      %v5203 = vpop.permute.xlu0 %5202
      %v5204 = vsel %vm897, %v5193, %v5195
      %v5205 = vsel %vm897, %v5195, %v5197
      %v5206 = vsel %vm897, %v5199, %v5201
      %v5207 = vsel %vm897, %v5201, %v5203
      %5212 = vst [vmem:[#allocation3 + $0xe0] sm:$0xff] %v5204
      %5213 = vst [vmem:[#allocation3 + $0xe8] sm:$0xff] %v5205
      %5214 = vst [vmem:[#allocation3 + $0xf0] sm:$0xff] %v5206
      %5215 = vst [vmem:[#allocation3 + $0xf8] sm:$0xff] %v5207
      %v5216 = vld [vmem:[#allocation2] sm:$0xff]
      %v5217 = vld [vmem:[#allocation2 + $0x8] sm:$0xff]
      %v5218 = vld [vmem:[#allocation2 + $0x10] sm:$0xff]
      %v5219 = vld [vmem:[#allocation2 + $0x18] sm:$0xff]
      %v5220 = vld [vmem:[#allocation2 + $0x20] sm:$0xff]
      %v5221 = vld [vmem:[#allocation2 + $0x28] sm:$0xff]
      %5222 = vrot.lane.b32.xlu0 %v4945, 68
      %v5223 = vpop.permute.xlu0 %5222
      %5224 = vrot.lane.b32.xlu0 %v4949, 68
      %v5225 = vpop.permute.xlu0 %5224
      %v5226 = vsel %vm920, %v5223, %v5225
      %v5230 = vmul.f32 %v5216, %v5223
      %v5231 = vmul.f32 %v5217, %v5226
      %v5232 = vmul.f32 %v5218, %v5225
      %v5233 = vmul.f32 %v5219, %v5223
      %v5234 = vmul.f32 %v5220, %v5226
      %v5235 = vmul.f32 %v5221, %v5225
      %5242 = vrot.lane.b32.xlu0 %v5230, 60
      %v5243 = vpop.permute.xlu0 %5242
      %5244 = vrot.lane.b32.xlu0 %v5231, 60
      %v5245 = vpop.permute.xlu0 %5244
      %5246 = vrot.lane.b32.xlu0 %v5232, 60
      %v5247 = vpop.permute.xlu0 %5246
      %5248 = vrot.lane.b32.xlu0 %v5233, 60
      %v5249 = vpop.permute.xlu0 %5248
      %5250 = vrot.lane.b32.xlu0 %v5234, 60
      %v5251 = vpop.permute.xlu0 %5250
      %5252 = vrot.lane.b32.xlu0 %v5235, 60
      %v5253 = vpop.permute.xlu0 %5252
      %v5254 = vsel %vm949, %v5243, %v5245
      %v5255 = vsel %vm949, %v5245, %v5247
      %v5256 = vsel %vm949, %v5249, %v5251
      %v5257 = vsel %vm949, %v5251, %v5253
      %5262 = vst [vmem:[#allocation3 + $0x100] sm:$0xff] %v5254
      %5263 = vst [vmem:[#allocation3 + $0x108] sm:$0xff] %v5255
      %5264 = vst [vmem:[#allocation3 + $0x110] sm:$0xff] %v5256
      %5265 = vst [vmem:[#allocation3 + $0x118] sm:$0xff] %v5257
      %v5266 = vld [vmem:[#allocation3] sm:$0xff]
      %v5267 = vld [vmem:[#allocation3 + $0x8] sm:$0xff]
      %v5268 = vld [vmem:[#allocation3 + $0x10] sm:$0xff]
      %v5269 = vld [vmem:[#allocation3 + $0x18] sm:$0xff]
      %v5270 = vld [vmem:[#allocation3 + $0x20] sm:$0xff]
      %v5271 = vld [vmem:[#allocation3 + $0x28] sm:$0xff]
      %v5272 = vld [vmem:[#allocation3 + $0x30] sm:$0xff]
      %v5273 = vld [vmem:[#allocation3 + $0x38] sm:$0xff]
      %v5274 = vld [vmem:[#allocation3 + $0x40] sm:$0xff]
      %v5275 = vld [vmem:[#allocation3 + $0x48] sm:$0xff]
      %v5276 = vld [vmem:[#allocation3 + $0x50] sm:$0xff]
      %v5277 = vld [vmem:[#allocation3 + $0x58] sm:$0xff]
      %v5278 = vld [vmem:[#allocation3 + $0x60] sm:$0xff]
      %v5279 = vld [vmem:[#allocation3 + $0x68] sm:$0xff]
      %v5280 = vld [vmem:[#allocation3 + $0x70] sm:$0xff]
      %v5281 = vld [vmem:[#allocation3 + $0x78] sm:$0xff]
      %v5282 = vld [vmem:[#allocation3 + $0x80] sm:$0xff]
      %v5283 = vld [vmem:[#allocation3 + $0x88] sm:$0xff]
      %v5284 = vld [vmem:[#allocation3 + $0x90] sm:$0xff]
      %v5285 = vld [vmem:[#allocation3 + $0x98] sm:$0xff]
      %v5286 = vld [vmem:[#allocation3 + $0xa0] sm:$0xff]
      %v5287 = vld [vmem:[#allocation3 + $0xa8] sm:$0xff]
      %v5288 = vld [vmem:[#allocation3 + $0xb0] sm:$0xff]
      %v5289 = vld [vmem:[#allocation3 + $0xb8] sm:$0xff]
      %v5290 = vld [vmem:[#allocation3 + $0xc0] sm:$0xff]
      %v5291 = vld [vmem:[#allocation3 + $0xc8] sm:$0xff]
      %v5292 = vld [vmem:[#allocation3 + $0xd0] sm:$0xff]
      %v5293 = vld [vmem:[#allocation3 + $0xd8] sm:$0xff]
      %v5294 = vld [vmem:[#allocation3 + $0xe0] sm:$0xff]
      %v5295 = vld [vmem:[#allocation3 + $0xe8] sm:$0xff]
      %v5296 = vld [vmem:[#allocation3 + $0xf0] sm:$0xff]
      %v5297 = vld [vmem:[#allocation3 + $0xf8] sm:$0xff]
      %v5298 = vld [vmem:[#allocation3 + $0x100] sm:$0xff]
      %v5299 = vld [vmem:[#allocation3 + $0x108] sm:$0xff]
      %v5300 = vld [vmem:[#allocation3 + $0x110] sm:$0xff]
      %v5301 = vld [vmem:[#allocation3 + $0x118] sm:$0xff]
      %5303 = vset.pattern.permute.xlu0 0
      %5304 = vperm.xlu0 %5303, %v4810
      %v5305 = vpop.permute.xlu0 %5304
      %5308 = vset.pattern.permute.xlu0 0
      %5309 = vperm.xlu0 %5308, %v4811
      %v5310 = vpop.permute.xlu0 %5309
      %v5313 = vsel %vm1013, %v4806, 0
      %v5316 = vsel %vm1013, %v4808, 0
      %5318 = vmatprep.subr.mxu0 %v5267
      %5319 = vmatpush1.msra.mxu0 %v5266
      %5320 = vmatprep.subr.mxu0 %v5269
      %5321 = vmatpush1.msra.mxu0 %v5268
      %5322 = vmatprep.subr.mxu0 %v5271
      %5323 = vmatpush1.msra.mxu0 %v5270
      %5324 = vmatprep.subr.mxu0 %v5273
      %5325 = vmatpush1.msra.mxu0 %v5272
      %5326 = vmatprep.subr.mxu0 %v5275
      %5327 = vmatpush1.msra.mxu0 %v5274
      %5328 = vmatprep.subr.mxu0 %v5277
      %5329 = vmatpush1.msra.mxu0 %v5276
      %5330 = vmatprep.subr.mxu0 %v5279
      %5331 = vmatpush1.msra.mxu0 %v5278
      %5332 = vmatprep.subr.mxu0 %v5281
      %5333 = vmatpush1.msra.mxu0 %v5280
      %5334 = vmatprep.subr.mxu0 %v5283
      %5335 = vmatpush1.msra.mxu0 %v5282
      %5336 = vmatprep.subr.mxu0 %v5285
      %5337 = vmatpush1.msra.mxu0 %v5284
      %5338 = vmatprep.subr.mxu0 %v5287
      %5339 = vmatpush1.msra.mxu0 %v5286
      %5340 = vmatprep.subr.mxu0 %v5289
      %5341 = vmatpush1.msra.mxu0 %v5288
      %5342 = vmatprep.subr.mxu0 %v5291
      %5343 = vmatpush1.msra.mxu0 %v5290
      %5344 = vmatprep.subr.mxu0 %v5293
      %5345 = vmatpush1.msra.mxu0 %v5292
      %5346 = vmatprep.subr.mxu0 %v5295
      %5347 = vmatpush1.msra.mxu0 %v5294
      %5348 = vmatprep.subr.mxu0 %v5297
      %5349 = vmatpush1.msra.mxu0 %v5296
      %5350 = vmatprep.subr.mxu0 %v5299
      %5351 = vmatpush1.msra.mxu0 %v5298
      %5352 = vmatprep.subr.mxu0 %v5301
      %5353 = vmatpush1.msra.mxu0 %v5300
      %5354 = vmatprep.subr.mxu0 0.0
      %5355 = vmatpush1.msra.mxu0 0.0
      %5356 = vmatprep.subr.mxu0 0.0
      %5357 = vmatpush1.msra.mxu0 0.0
      %5358 = vmatprep.subr.mxu0 0.0
      %5359 = vmatpush1.msra.mxu0 0.0
      %5360 = vmatprep.subr.mxu0 0.0
      %5361 = vmatpush1.msra.mxu0 0.0
      %5362 = vmatprep.subr.mxu0 0.0
      %5363 = vmatpush1.msra.mxu0 0.0
      %5364 = vmatprep.subr.mxu0 0.0
      %5365 = vmatpush1.msra.mxu0 0.0
      %5366 = vmatprep.subr.mxu0 0.0
      %5367 = vmatpush1.msra.mxu0 0.0
      %5368 = vmatprep.subr.mxu0 0.0
      %5369 = vmatpush1.msra.mxu0 0.0
      %5370 = vmatprep.subr.mxu0 0.0
      %5371 = vmatpush1.msra.mxu0 0.0
      %5372 = vmatprep.subr.mxu0 0.0
      %5373 = vmatpush1.msra.mxu0 0.0
      %5374 = vmatprep.subr.mxu0 0.0
      %5375 = vmatpush1.msra.mxu0 0.0
      %5376 = vmatprep.subr.mxu0 0.0
      %5377 = vmatpush1.msra.mxu0 0.0
      %5378 = vmatprep.subr.mxu0 0.0
      %5379 = vmatpush1.msra.mxu0 0.0
      %5380 = vmatprep.subr.mxu0 0.0
      %5381 = vmatpush1.msra.mxu0 0.0
      %5382 = vmatprep.mubr.f32.mxu0 %v5313
      %5383 = vmatmul.mubr.f32.gmra.mrb[0].mxu0 %v4805
      %v5384 = vpop.f32.mrb[0].mxu0
      %v5385 = vadd.f32 %v5305, %v5384
      %v5386 = vpop.f32.mrb[0].mxu0
      %v5387 = vadd.f32 %v5305, %v5386
      %5388 = vmatprep.mubr.f32.mxu0 %v5316
      %5389 = vmatmul.mubr.f32.gmra.mrb[0].mxu0 %v4807
      %v5390 = vpop.f32.mrb[0].mxu0
      %v5391 = vadd.f32 %v5310, %v5390
      %v5392 = vpop.f32.mrb[0].mxu0
      %v5393 = vadd.f32 %v5310, %v5392
      %5394 = vdwg.mxu0
      %v5395 = vadd.f32 %v5385, %v5391
      %v5396 = vrot.slane %v5395, 4
      %v5397 = vadd.f32 %v5395, %v5396
      %v5398 = vrot.slane %v5397, 2
      %v5399 = vadd.f32 %v5397, %v5398
      %v5400 = vrot.slane %v5399, 1
      %v5401 = vadd.f32 %v5399, %v5400
      %v5402 = vadd.f32 %v5387, %v5393
      %v5403 = vrot.slane %v5402, 4
      %v5404 = vadd.f32 %v5402, %v5403
      %v5405 = vrot.slane %v5404, 2
      %v5406 = vadd.f32 %v5404, %v5405
      %v5407 = vrot.slane %v5406, 1
      %v5408 = vadd.f32 %v5406, %v5407
      %v5409 = vmul.f32 %v5401, %v2108
      %v5410 = vmul.f32 %v5408, %v2108
      %v5413 = vcombine.low %v5409, %v5410
      %v5415 = vunpack.c.l.s4 1966171168
      %v5416 = vunpack.c.0.s8 %v5415
      %v5417 = vlaneseq
      %v5418 = vshrl.u32 %v5417, 7
      %v5419 = vsub.s32 %v5416, %v5418
      %v5420 = vrot.slane %v5413, %v5419
      %v5422 = vunpack.c.l.s4 1966171168
      %v5423 = vunpack.c.0.s8 %v5422
      %v5424 = vlaneseq
      %v5425 = vshrl.u32 %v5424, 7
      %v5426 = vsub.s32 %v5423, %v5425
      %v5427 = vrot.slane %v5420, %v5426
      %5428 = vrot.lane.b32.xlu0 %v5427, 51
      %v5429 = vpop.permute.xlu0 %5428
      %v5430 = vrot.slane %v5429, 7
      %v5431 = vsel %vm505, %v5430, %v5429
      %5433 = vst.msk [vmem:[#allocation2] ss:$8 sm:$0x7] %vm2136, %v5431
      %5434 = vst.msk [vmem:[#allocation2] ss:$8 sm:$0x0] %vm2136, %v5431
      %v5435 = vmax.f32 %v5385, %v5391
      %v5436 = vrot.slane %v5435, 4
      %v5437 = vmax.f32 %v5435, %v5436
      %v5438 = vrot.slane %v5437, 2
      %v5439 = vmax.f32 %v5437, %v5438
      %v5440 = vrot.slane %v5439, 1
      %v5441 = vmax.f32 %v5439, %v5440
      %v5442 = vmax.f32 %v5387, %v5393
      %v5443 = vrot.slane %v5442, 4
      %v5444 = vmax.f32 %v5442, %v5443
      %v5445 = vrot.slane %v5444, 2
      %v5446 = vmax.f32 %v5444, %v5445
      %v5447 = vrot.slane %v5446, 1
      %v5448 = vmax.f32 %v5446, %v5447
      %v5451 = vcombine.low %v5441, %v5448
      %v5453 = vunpack.c.l.s4 1966171168
      %v5454 = vunpack.c.0.s8 %v5453
      %v5455 = vlaneseq
      %v5456 = vshrl.u32 %v5455, 7
      %v5457 = vsub.s32 %v5454, %v5456
      %v5458 = vrot.slane %v5451, %v5457
      %v5460 = vunpack.c.l.s4 1966171168
      %v5461 = vunpack.c.0.s8 %v5460
      %v5462 = vlaneseq
      %v5463 = vshrl.u32 %v5462, 7
      %v5464 = vsub.s32 %v5461, %v5463
      %v5465 = vrot.slane %v5458, %v5464
      %5466 = vrot.lane.b32.xlu0 %v5465, 51
      %v5467 = vpop.permute.xlu0 %5466
      %v5468 = vrot.slane %v5467, 7
      %v5469 = vsel %vm505, %v5468, %v5467
      %5471 = vst.msk [vmem:[%s2175] ss:$8 sm:$0x7] %vm2136, %v5469
      %5472 = vst.msk [vmem:[%s2175] ss:$8 sm:$0x0] %vm2136, %v5469
      %s5473 = scalar_lea.vmem %s7, %s4421
      %v5474 = vld [vmem:[%s5473] sm:$0x1]
      %v5475 = vld [vmem:[%s12] ss:$8 sm:$0x3]
      %v5476 = vld [vmem:[%s491] ss:$8 sm:$0x3]
      %v5477 = vld [vmem:[#allocation2] sm:$0x3]
      %v5478 = vld [vmem:[#allocation2 + $0x8] sm:$0x3]
      %v5479 = vld [vmem:[#allocation2 + $0x10] sm:$0x3]
      %v5481 = vlaneseq
      %v5482 = vshrl.u32 %v5481, 7
      %v5483 = vsub.s32 0, %v5482
      %v5484 = vrot.slane %v5475, %v5483
      %v5485 = vlaneseq
      %v5486 = vshrl.u32 %v5485, 7
      %v5487 = vsub.s32 1, %v5486
      %v5488 = vrot.slane %v5475, %v5487
      %5489 = vrot.lane.b32.xlu0 %v5484, 34
      %v5490 = vpop.permute.xlu0 %5489
      %5491 = vrot.lane.b32.xlu0 %v5488, 34
      %v5492 = vpop.permute.xlu0 %5491
      %v5493 = vsel %vm540, %v5490, %v5492
      %v5497 = vmul.f32 %v5477, %v5490
      %v5498 = vmul.f32 %v5478, %v5493
      %v5499 = vmul.f32 %v5479, %v5492
      %5503 = vrot.lane.b32.xlu0 %v5497, 94
      %v5504 = vpop.permute.xlu0 %5503
      %5505 = vrot.lane.b32.xlu0 %v5498, 94
      %v5506 = vpop.permute.xlu0 %5505
      %5507 = vrot.lane.b32.xlu0 %v5499, 94
      %v5508 = vpop.permute.xlu0 %5507
      %v5509 = vsel %vm569, %v5504, %v5506
      %v5510 = vsel %vm569, %v5506, %v5508
      %5513 = vst [vmem:[#allocation3] sm:$0x3] %v5509
      %5514 = vst [vmem:[#allocation3 + $0x8] sm:$0x3] %v5510
      %v5515 = vld [vmem:[#allocation2] sm:$0x3]
      %v5516 = vld [vmem:[#allocation2 + $0x8] sm:$0x3]
      %v5517 = vld [vmem:[#allocation2 + $0x10] sm:$0x3]
      %v5521 = vrot.slane %v5515, 6
      %v5522 = vrot.slane %v5516, 6
      %v5523 = vrot.slane %v5517, 6
      %5524 = vrot.lane.b32.xlu0 %v5521, 93
      %v5525 = vpop.permute.xlu0 %5524
      %5526 = vrot.lane.b32.xlu0 %v5522, 93
      %v5527 = vpop.permute.xlu0 %5526
      %5528 = vrot.lane.b32.xlu0 %v5523, 93
      %v5529 = vpop.permute.xlu0 %5528
      %v5530 = vsel %vm606, %v5525, %v5527
      %v5531 = vsel %vm606, %v5527, %v5529
      %5534 = vst [vmem:[#allocation3] sm:$0xc] %v5530
      %5535 = vst [vmem:[#allocation3 + $0x8] sm:$0xc] %v5531
      %v5536 = vld [vmem:[#allocation2] sm:$0x3]
      %v5537 = vld [vmem:[#allocation2 + $0x8] sm:$0x3]
      %v5538 = vld [vmem:[#allocation2 + $0x10] sm:$0x3]
      %v5540 = vlaneseq
      %v5541 = vshrl.u32 %v5540, 7
      %v5542 = vsub.s32 0, %v5541
      %v5543 = vrot.slane %v5476, %v5542
      %v5544 = vlaneseq
      %v5545 = vshrl.u32 %v5544, 7
      %v5546 = vsub.s32 1, %v5545
      %v5547 = vrot.slane %v5476, %v5546
      %5548 = vrot.lane.b32.xlu0 %v5543, 36
      %v5549 = vpop.permute.xlu0 %5548
      %5550 = vrot.lane.b32.xlu0 %v5547, 36
      %v5551 = vpop.permute.xlu0 %5550
      %v5552 = vsel %vm638, %v5549, %v5551
      %v5556 = vmul.f32 %v5536, %v5549
      %v5557 = vmul.f32 %v5537, %v5552
      %v5558 = vmul.f32 %v5538, %v5551
      %v5562 = vrot.slane %v5556, 4
      %v5563 = vrot.slane %v5557, 4
      %v5564 = vrot.slane %v5558, 4
      %5565 = vrot.lane.b32.xlu0 %v5562, 92
      %v5566 = vpop.permute.xlu0 %5565
      %5567 = vrot.lane.b32.xlu0 %v5563, 92
      %v5568 = vpop.permute.xlu0 %5567
      %5569 = vrot.lane.b32.xlu0 %v5564, 92
      %v5570 = vpop.permute.xlu0 %5569
      %v5571 = vsel %vm667, %v5566, %v5568
      %v5572 = vsel %vm667, %v5568, %v5570
      %5575 = vst [vmem:[#allocation3] sm:$0x30] %v5571
      %5576 = vst [vmem:[#allocation3 + $0x8] sm:$0x30] %v5572
      %v5577 = vld [vmem:[#allocation2] sm:$0x3]
      %v5578 = vld [vmem:[#allocation2 + $0x8] sm:$0x3]
      %v5579 = vld [vmem:[#allocation2 + $0x10] sm:$0x3]
      %5580 = vrot.lane.b32.xlu0 %v5484, 50
      %v5581 = vpop.permute.xlu0 %5580
      %5582 = vrot.lane.b32.xlu0 %v5488, 50
      %v5583 = vpop.permute.xlu0 %5582
      %v5584 = vsel %vm690, %v5581, %v5583
      %v5588 = vmul.f32 %v5577, %v5581
      %v5589 = vmul.f32 %v5578, %v5584
      %v5590 = vmul.f32 %v5579, %v5583
      %v5594 = vrot.slane %v5588, 2
      %v5595 = vrot.slane %v5589, 2
      %v5596 = vrot.slane %v5590, 2
      %5597 = vrot.lane.b32.xlu0 %v5594, 78
      %v5598 = vpop.permute.xlu0 %5597
      %5599 = vrot.lane.b32.xlu0 %v5595, 78
      %v5600 = vpop.permute.xlu0 %5599
      %5601 = vrot.lane.b32.xlu0 %v5596, 78
      %v5602 = vpop.permute.xlu0 %5601
      %v5603 = vsel %vm719, %v5598, %v5600
      %v5604 = vsel %vm719, %v5600, %v5602
      %5607 = vst [vmem:[#allocation3] sm:$0xc0] %v5603
      %5608 = vst [vmem:[#allocation3 + $0x8] sm:$0xc0] %v5604
      %v5609 = vld [vmem:[#allocation2] sm:$0x3]
      %v5610 = vld [vmem:[#allocation2 + $0x8] sm:$0x3]
      %v5611 = vld [vmem:[#allocation2 + $0x10] sm:$0x3]
      %5615 = vrot.lane.b32.xlu0 %v5609, 77
      %v5616 = vpop.permute.xlu0 %5615
      %5617 = vrot.lane.b32.xlu0 %v5610, 77
      %v5618 = vpop.permute.xlu0 %5617
      %5619 = vrot.lane.b32.xlu0 %v5611, 77
      %v5620 = vpop.permute.xlu0 %5619
      %v5621 = vsel %vm756, %v5616, %v5618
      %v5622 = vsel %vm756, %v5618, %v5620
      %5625 = vst [vmem:[#allocation3 + $0x10] sm:$0x3] %v5621
      %5626 = vst [vmem:[#allocation3 + $0x18] sm:$0x3] %v5622
      %v5627 = vld [vmem:[#allocation2] sm:$0x3]
      %v5628 = vld [vmem:[#allocation2 + $0x8] sm:$0x3]
      %v5629 = vld [vmem:[#allocation2 + $0x10] sm:$0x3]
      %5630 = vrot.lane.b32.xlu0 %v5543, 52
      %v5631 = vpop.permute.xlu0 %5630
      %5632 = vrot.lane.b32.xlu0 %v5547, 52
      %v5633 = vpop.permute.xlu0 %5632
      %v5634 = vsel %vm779, %v5631, %v5633
      %v5638 = vmul.f32 %v5627, %v5631
      %v5639 = vmul.f32 %v5628, %v5634
      %v5640 = vmul.f32 %v5629, %v5633
      %v5644 = vrot.slane %v5638, 6
      %v5645 = vrot.slane %v5639, 6
      %v5646 = vrot.slane %v5640, 6
      %5647 = vrot.lane.b32.xlu0 %v5644, 76
      %v5648 = vpop.permute.xlu0 %5647
      %5649 = vrot.lane.b32.xlu0 %v5645, 76
      %v5650 = vpop.permute.xlu0 %5649
      %5651 = vrot.lane.b32.xlu0 %v5646, 76
      %v5652 = vpop.permute.xlu0 %5651
      %v5653 = vsel %vm808, %v5648, %v5650
      %v5654 = vsel %vm808, %v5650, %v5652
      %5657 = vst [vmem:[#allocation3 + $0x10] sm:$0xc] %v5653
      %5658 = vst [vmem:[#allocation3 + $0x18] sm:$0xc] %v5654
      %v5659 = vld [vmem:[#allocation2] sm:$0x3]
      %v5660 = vld [vmem:[#allocation2 + $0x8] sm:$0x3]
      %v5661 = vld [vmem:[#allocation2 + $0x10] sm:$0x3]
      %5662 = vrot.lane.b32.xlu0 %v5484, 66
      %v5663 = vpop.permute.xlu0 %5662
      %5664 = vrot.lane.b32.xlu0 %v5488, 66
      %v5665 = vpop.permute.xlu0 %5664
      %v5666 = vsel %vm831, %v5663, %v5665
      %v5670 = vmul.f32 %v5659, %v5663
      %v5671 = vmul.f32 %v5660, %v5666
      %v5672 = vmul.f32 %v5661, %v5665
      %v5676 = vrot.slane %v5670, 4
      %v5677 = vrot.slane %v5671, 4
      %v5678 = vrot.slane %v5672, 4
      %5679 = vrot.lane.b32.xlu0 %v5676, 62
      %v5680 = vpop.permute.xlu0 %5679
      %5681 = vrot.lane.b32.xlu0 %v5677, 62
      %v5682 = vpop.permute.xlu0 %5681
      %5683 = vrot.lane.b32.xlu0 %v5678, 62
      %v5684 = vpop.permute.xlu0 %5683
      %v5685 = vsel %vm860, %v5680, %v5682
      %v5686 = vsel %vm860, %v5682, %v5684
      %5689 = vst [vmem:[#allocation3 + $0x10] sm:$0x30] %v5685
      %5690 = vst [vmem:[#allocation3 + $0x18] sm:$0x30] %v5686
      %v5691 = vld [vmem:[#allocation2] sm:$0x3]
      %v5692 = vld [vmem:[#allocation2 + $0x8] sm:$0x3]
      %v5693 = vld [vmem:[#allocation2 + $0x10] sm:$0x3]
      %v5697 = vrot.slane %v5691, 2
      %v5698 = vrot.slane %v5692, 2
      %v5699 = vrot.slane %v5693, 2
      %5700 = vrot.lane.b32.xlu0 %v5697, 61
      %v5701 = vpop.permute.xlu0 %5700
      %5702 = vrot.lane.b32.xlu0 %v5698, 61
      %v5703 = vpop.permute.xlu0 %5702
      %5704 = vrot.lane.b32.xlu0 %v5699, 61
      %v5705 = vpop.permute.xlu0 %5704
      %v5706 = vsel %vm897, %v5701, %v5703
      %v5707 = vsel %vm897, %v5703, %v5705
      %5710 = vst [vmem:[#allocation3 + $0x10] sm:$0xc0] %v5706
      %5711 = vst [vmem:[#allocation3 + $0x18] sm:$0xc0] %v5707
      %v5712 = vld [vmem:[#allocation2] sm:$0x3]
      %v5713 = vld [vmem:[#allocation2 + $0x8] sm:$0x3]
      %v5714 = vld [vmem:[#allocation2 + $0x10] sm:$0x3]
      %5715 = vrot.lane.b32.xlu0 %v5543, 68
      %v5716 = vpop.permute.xlu0 %5715
      %5717 = vrot.lane.b32.xlu0 %v5547, 68
      %v5718 = vpop.permute.xlu0 %5717
      %v5719 = vsel %vm920, %v5716, %v5718
      %v5723 = vmul.f32 %v5712, %v5716
      %v5724 = vmul.f32 %v5713, %v5719
      %v5725 = vmul.f32 %v5714, %v5718
      %5729 = vrot.lane.b32.xlu0 %v5723, 60
      %v5730 = vpop.permute.xlu0 %5729
      %5731 = vrot.lane.b32.xlu0 %v5724, 60
      %v5732 = vpop.permute.xlu0 %5731
      %5733 = vrot.lane.b32.xlu0 %v5725, 60
      %v5734 = vpop.permute.xlu0 %5733
      %v5735 = vsel %vm949, %v5730, %v5732
      %v5736 = vsel %vm949, %v5732, %v5734
      %5739 = vst [vmem:[#allocation3 + $0x20] sm:$0x3] %v5735
      %5740 = vst [vmem:[#allocation3 + $0x28] sm:$0x3] %v5736
      %v5741 = vld [vmem:[#allocation3] sm:$0xff]
      %v5742 = vld [vmem:[#allocation3 + $0x8] sm:$0xff]
      %v5743 = vld [vmem:[#allocation3 + $0x10] sm:$0xff]
      %v5744 = vld [vmem:[#allocation3 + $0x18] sm:$0xff]
      %v5745 = vld [vmem:[#allocation3 + $0x20] sm:$0x3]
      %v5746 = vld [vmem:[#allocation3 + $0x28] sm:$0x3]
      %v5748 = vsel %vm2452, %v5474, 0
      %v5751 = vsel %vm2456, %v5745, 0
      %v5754 = vsel %vm2456, %v5746, 0
      %5756 = vmatprep.subr.mxu0 %v5742
      %5757 = vmatpush1.msra.mxu0 %v5741
      %5758 = vmatprep.subr.mxu0 %v5744
      %5759 = vmatpush1.msra.mxu0 %v5743
      %5760 = vmatprep.subr.mxu0 %v5754
      %5761 = vmatpush1.msra.mxu0 %v5751
      %5762 = vmatprep.subr.mxu0 0.0
      %5763 = vmatpush1.msra.mxu0 0.0
      %5764 = vmatprep.subr.mxu0 0.0
      %5765 = vmatpush1.msra.mxu0 0.0
      %5766 = vmatprep.subr.mxu0 0.0
      %5767 = vmatpush1.msra.mxu0 0.0
      %5768 = vmatprep.subr.mxu0 0.0
      %5769 = vmatpush1.msra.mxu0 0.0
      %5770 = vmatprep.subr.mxu0 0.0
      %5771 = vmatpush1.msra.mxu0 0.0
      %5772 = vmatprep.subr.mxu0 0.0
      %5773 = vmatpush1.msra.mxu0 0.0
      %5774 = vmatprep.subr.mxu0 0.0
      %5775 = vmatpush1.msra.mxu0 0.0
      %5776 = vmatprep.subr.mxu0 0.0
      %5777 = vmatpush1.msra.mxu0 0.0
      %5778 = vmatprep.subr.mxu0 0.0
      %5779 = vmatpush1.msra.mxu0 0.0
      %5780 = vmatprep.subr.mxu0 0.0
      %5781 = vmatpush1.msra.mxu0 0.0
      %5782 = vmatprep.subr.mxu0 0.0
      %5783 = vmatpush1.msra.mxu0 0.0
      %5784 = vmatprep.subr.mxu0 0.0
      %5785 = vmatpush1.msra.mxu0 0.0
      %5786 = vmatprep.subr.mxu0 0.0
      %5787 = vmatpush1.msra.mxu0 0.0
      %5788 = vmatprep.subr.mxu0 0.0
      %5789 = vmatpush1.msra.mxu0 0.0
      %5790 = vmatprep.subr.mxu0 0.0
      %5791 = vmatpush1.msra.mxu0 0.0
      %5792 = vmatprep.subr.mxu0 0.0
      %5793 = vmatpush1.msra.mxu0 0.0
      %5794 = vmatprep.subr.mxu0 0.0
      %5795 = vmatpush1.msra.mxu0 0.0
      %5796 = vmatprep.subr.mxu0 0.0
      %5797 = vmatpush1.msra.mxu0 0.0
      %5798 = vmatprep.subr.mxu0 0.0
      %5799 = vmatpush1.msra.mxu0 0.0
      %5800 = vmatprep.subr.mxu0 0.0
      %5801 = vmatpush1.msra.mxu0 0.0
      %5802 = vmatprep.subr.mxu0 0.0
      %5803 = vmatpush1.msra.mxu0 0.0
      %5804 = vmatprep.subr.mxu0 0.0
      %5805 = vmatpush1.msra.mxu0 0.0
      %5806 = vmatprep.subr.mxu0 0.0
      %5807 = vmatpush1.msra.mxu0 0.0
      %5808 = vmatprep.subr.mxu0 0.0
      %5809 = vmatpush1.msra.mxu0 0.0
      %5810 = vmatprep.subr.mxu0 0.0
      %5811 = vmatpush1.msra.mxu0 0.0
      %5812 = vmatprep.subr.mxu0 0.0
      %5813 = vmatpush1.msra.mxu0 0.0
      %5814 = vmatprep.subr.mxu0 0.0
      %5815 = vmatpush1.msra.mxu0 0.0
      %5816 = vmatprep.subr.mxu0 0.0
      %5817 = vmatpush1.msra.mxu0 0.0
      %5818 = vmatprep.subr.mxu0 0.0
      %5819 = vmatpush1.msra.mxu0 0.0
      %5820 = vmatprep.mubr.f32.mxu0 0.0
      %5821 = vmatmul.mubr.f32.gmra.mrb[0].mxu0 %v5748
      %v5822 = vpop.f32.mrb[0].mxu0
      %v5823 = vadd.f32 0.0, %v5822
      %v5824 = vpop.f32.mrb[0].mxu0
      %v5825 = vadd.f32 0.0, %v5824
      %5826 = vdwg.mxu0
      %v5827 = vxor.u32 %v5823, 2147483648
      %v5828 = vxor.u32 %v5825, 2147483648
      %v5829 = vmul.f32 %v5827, 1.442695
      %v5830 = vpow.pop %v5829
      %v5831 = vmul.f32 %v5828, 1.442695
      %v5832 = vpow.pop %v5831
      %v5833 = vadd.f32 %v5830, 1.0
      %v5834 = vadd.f32 %v5832, 1.0
      %v5835 = vrcp.pop %v5833
      %v5836 = vmul.f32 1.0, %v5835
      %v5837 = vrcp.pop %v5834
      %v5838 = vmul.f32 1.0, %v5837
      %v5839 = vlaneseq
      %v5840 = vshrl.u32 %v5839, 7
      %v5841 = vsub.s32 0, %v5840
      %v5842 = vrot.slane %v5836, %v5841
      %v5843 = vlaneseq
      %v5844 = vshrl.u32 %v5843, 7
      %v5845 = vsub.s32 0, %v5844
      %v5846 = vrot.slane %v5838, %v5845
      %v5847 = vmul.f32 %v5385, %v5842
      %v5848 = vmul.f32 %v5387, %v5846
      %v5849 = vmul.f32 %v5391, %v5842
      %v5850 = vmul.f32 %v5393, %v5846
      %v5851 = vadd.f32 %v5847, %v5848
      %5852 = vadd.xlane.f32.xlu0 %v5851
      %v5853 = vpop.xlane.xlu0 %5852
      %v5854 = vadd.f32 %v5849, %v5850
      %5855 = vadd.xlane.f32.xlu0 %v5854
      %v5856 = vpop.xlane.xlu0 %5855
      %v5857 = vmul.f32 %v5853, %v2564
      %v5858 = vmul.f32 %v5856, %v2564
      %s5859 = smul.u32 %s4421, 8
      %s5860 = scalar_lea.vmem %s8, %s5859
      %v5861 = vld [vmem:[%s5860] sm:$0xff]
      %s5862 = scalar_lea.vmem %s9, %s5859
      %v5863 = vld [vmem:[%s5862] sm:$0xff]
      %v5865 = vsel %vm1013, %v5861, 0
      %5867 = vmatprep.subr.mxu0 0.0
      %5868 = vmatpush1.msra.mxu0 %v5857
      %5869 = vmatprep.subr.mxu0 0.0
      %5870 = vmatpush1.msra.mxu0 %v5858
      %5871 = vmatprep.subr.mxu0 0.0
      %5872 = vmatpush1.msra.mxu0 0.0
      %5873 = vmatprep.subr.mxu0 0.0
      %5874 = vmatpush1.msra.mxu0 0.0
      %5875 = vmatprep.subr.mxu0 0.0
      %5876 = vmatpush1.msra.mxu0 0.0
      %5877 = vmatprep.subr.mxu0 0.0
      %5878 = vmatpush1.msra.mxu0 0.0
      %5879 = vmatprep.subr.mxu0 0.0
      %5880 = vmatpush1.msra.mxu0 0.0
      %5881 = vmatprep.subr.mxu0 0.0
      %5882 = vmatpush1.msra.mxu0 0.0
      %5883 = vmatprep.subr.mxu0 0.0
      %5884 = vmatpush1.msra.mxu0 0.0
      %5885 = vmatprep.subr.mxu0 0.0
      %5886 = vmatpush1.msra.mxu0 0.0
      %5887 = vmatprep.subr.mxu0 0.0
      %5888 = vmatpush1.msra.mxu0 0.0
      %5889 = vmatprep.subr.mxu0 0.0
      %5890 = vmatpush1.msra.mxu0 0.0
      %5891 = vmatprep.subr.mxu0 0.0
      %5892 = vmatpush1.msra.mxu0 0.0
      %5893 = vmatprep.subr.mxu0 0.0
      %5894 = vmatpush1.msra.mxu0 0.0
      %5895 = vmatprep.subr.mxu0 0.0
      %5896 = vmatpush1.msra.mxu0 0.0
      %5897 = vmatprep.subr.mxu0 0.0
      %5898 = vmatpush1.msra.mxu0 0.0
      %5899 = vmatprep.subr.mxu0 0.0
      %5900 = vmatpush1.msra.mxu0 0.0
      %5901 = vmatprep.subr.mxu0 0.0
      %5902 = vmatpush1.msra.mxu0 0.0
      %5903 = vmatprep.subr.mxu0 0.0
      %5904 = vmatpush1.msra.mxu0 0.0
      %5905 = vmatprep.subr.mxu0 0.0
      %5906 = vmatpush1.msra.mxu0 0.0
      %5907 = vmatprep.subr.mxu0 0.0
      %5908 = vmatpush1.msra.mxu0 0.0
      %5909 = vmatprep.subr.mxu0 0.0
      %5910 = vmatpush1.msra.mxu0 0.0
      %5911 = vmatprep.subr.mxu0 0.0
      %5912 = vmatpush1.msra.mxu0 0.0
      %5913 = vmatprep.subr.mxu0 0.0
      %5914 = vmatpush1.msra.mxu0 0.0
      %5915 = vmatprep.subr.mxu0 0.0
      %5916 = vmatpush1.msra.mxu0 0.0
      %5917 = vmatprep.subr.mxu0 0.0
      %5918 = vmatpush1.msra.mxu0 0.0
      %5919 = vmatprep.subr.mxu0 0.0
      %5920 = vmatpush1.msra.mxu0 0.0
      %5921 = vmatprep.subr.mxu0 0.0
      %5922 = vmatpush1.msra.mxu0 0.0
      %5923 = vmatprep.subr.mxu0 0.0
      %5924 = vmatpush1.msra.mxu0 0.0
      %5925 = vmatprep.subr.mxu0 0.0
      %5926 = vmatpush1.msra.mxu0 0.0
      %5927 = vmatprep.subr.mxu0 0.0
      %5928 = vmatpush1.msra.mxu0 0.0
      %5929 = vmatprep.subr.mxu0 0.0
      %5930 = vmatpush1.msra.mxu0 0.0
      %5931 = vmatprep.mubr.f32.mxu0 0.0
      %5932 = vmatmul.mubr.f32.gmra.mrb[0].mxu0 %v5865
      %v5933 = vpop.f32.mrb[0].mxu0
      %v5934 = vadd.f32 %v5863, %v5933
      %v5935 = vpop.f32.mrb[0].mxu0
      %5936 = vdwg.mxu0
      %v5937 = vmax.f32 %v5934, 0.0
      %s5938 = scalar_lea.vmem %s10, %s4422
      %v5939 = vld [vmem:[%s5938] sm:$0xff]
      %v5940 = vld [vmem:[%s5938 + $0x8] sm:$0xff]
      %s5941 = scalar_lea.vmem %s11, %s4422
      %v5942 = vld [vmem:[%s5941] sm:$0xff]
      %v5943 = vld [vmem:[%s5941 + $0x8] sm:$0xff]
      %v5945 = vsel %vm2652, %v5939, 0
      %v5948 = vsel %vm2652, %v5940, 0
      %5950 = vmatprep.subr.mxu0 0.0
      %5951 = vmatpush1.msra.mxu0 %v5937
      %5952 = vmatprep.subr.mxu0 0.0
      %5953 = vmatpush1.msra.mxu0 0.0
      %5954 = vmatprep.subr.mxu0 0.0
      %5955 = vmatpush1.msra.mxu0 0.0
      %5956 = vmatprep.subr.mxu0 0.0
      %5957 = vmatpush1.msra.mxu0 0.0
      %5958 = vmatprep.subr.mxu0 0.0
      %5959 = vmatpush1.msra.mxu0 0.0
      %5960 = vmatprep.subr.mxu0 0.0
      %5961 = vmatpush1.msra.mxu0 0.0
      %5962 = vmatprep.subr.mxu0 0.0
      %5963 = vmatpush1.msra.mxu0 0.0
      %5964 = vmatprep.subr.mxu0 0.0
      %5965 = vmatpush1.msra.mxu0 0.0
      %5966 = vmatprep.subr.mxu0 0.0
      %5967 = vmatpush1.msra.mxu0 0.0
      %5968 = vmatprep.subr.mxu0 0.0
      %5969 = vmatpush1.msra.mxu0 0.0
      %5970 = vmatprep.subr.mxu0 0.0
      %5971 = vmatpush1.msra.mxu0 0.0
      %5972 = vmatprep.subr.mxu0 0.0
      %5973 = vmatpush1.msra.mxu0 0.0
      %5974 = vmatprep.subr.mxu0 0.0
      %5975 = vmatpush1.msra.mxu0 0.0
      %5976 = vmatprep.subr.mxu0 0.0
      %5977 = vmatpush1.msra.mxu0 0.0
      %5978 = vmatprep.subr.mxu0 0.0
      %5979 = vmatpush1.msra.mxu0 0.0
      %5980 = vmatprep.subr.mxu0 0.0
      %5981 = vmatpush1.msra.mxu0 0.0
      %5982 = vmatprep.subr.mxu0 0.0
      %5983 = vmatpush1.msra.mxu0 0.0
      %5984 = vmatprep.subr.mxu0 0.0
      %5985 = vmatpush1.msra.mxu0 0.0
      %5986 = vmatprep.subr.mxu0 0.0
      %5987 = vmatpush1.msra.mxu0 0.0
      %5988 = vmatprep.subr.mxu0 0.0
      %5989 = vmatpush1.msra.mxu0 0.0
      %5990 = vmatprep.subr.mxu0 0.0
      %5991 = vmatpush1.msra.mxu0 0.0
      %5992 = vmatprep.subr.mxu0 0.0
      %5993 = vmatpush1.msra.mxu0 0.0
      %5994 = vmatprep.subr.mxu0 0.0
      %5995 = vmatpush1.msra.mxu0 0.0
      %5996 = vmatprep.subr.mxu0 0.0
      %5997 = vmatpush1.msra.mxu0 0.0
      %5998 = vmatprep.subr.mxu0 0.0
      %5999 = vmatpush1.msra.mxu0 0.0
      %6000 = vmatprep.subr.mxu0 0.0
      %6001 = vmatpush1.msra.mxu0 0.0
      %6002 = vmatprep.subr.mxu0 0.0
      %6003 = vmatpush1.msra.mxu0 0.0
      %6004 = vmatprep.subr.mxu0 0.0
      %6005 = vmatpush1.msra.mxu0 0.0
      %6006 = vmatprep.subr.mxu0 0.0
      %6007 = vmatpush1.msra.mxu0 0.0
      %6008 = vmatprep.subr.mxu0 0.0
      %6009 = vmatpush1.msra.mxu0 0.0
      %6010 = vmatprep.subr.mxu0 0.0
      %6011 = vmatpush1.msra.mxu0 0.0
      %6012 = vmatprep.subr.mxu0 0.0
      %6013 = vmatpush1.msra.mxu0 0.0
      %6014 = vmatprep.mubr.f32.mxu0 0.0
      %6015 = vmatmul.mubr.f32.gmra.mrb[0].mxu0 %v5945
      %v6016 = vpop.f32.mrb[0].mxu0
      %v6017 = vadd.f32 %v5942, %v6016
      %v6018 = vpop.f32.mrb[0].mxu0
      %6019 = vmatprep.mubr.f32.mxu0 0.0
      %6020 = vmatmul.mubr.f32.gmra.mrb[0].mxu0 %v5948
      %v6021 = vpop.f32.mrb[0].mxu0
      %v6022 = vadd.f32 %v5943, %v6021
      %v6023 = vpop.f32.mrb[0].mxu0
      %6024 = vdwg.mxu0
      %v6025 = vxor.u32 %v6017, 2147483648
      %v6026 = vxor.u32 %v6022, 2147483648
      %v6027 = vmul.f32 %v6025, 1.442695
      %v6028 = vpow.pop %v6027
      %v6029 = vmul.f32 %v6026, 1.442695
      %v6030 = vpow.pop %v6029
      %v6031 = vadd.f32 %v6028, 1.0
      %v6032 = vadd.f32 %v6030, 1.0
      %v6033 = vrcp.pop %v6031
      %v6034 = vmul.f32 1.0, %v6033
      %v6035 = vrcp.pop %v6032
      %v6036 = vmul.f32 1.0, %v6035
      %6038 = vset.pattern.permute.xlu0 0
      %6039 = vperm.xlu0 %6038, %v6034
      %v6040 = vpop.permute.xlu0 %6039
      %6043 = vset.pattern.permute.xlu0 0
      %6044 = vperm.xlu0 %6043, %v6036
      %v6045 = vpop.permute.xlu0 %6044
      %v6047 = vmul.f32 %v5847, %v6040
      %v6048 = vmul.f32 %v5848, %v6040
      %v6049 = vmul.f32 %v5849, %v6045
      %v6050 = vmul.f32 %v5850, %v6045
      %v6051 = vadd.f32 %v4417, %v6047
      %v6052 = vadd.f32 %v4418, %v6048
      %v6053 = vadd.f32 %v4419, %v6049
      %v6054 = vadd.f32 %v4420, %v6050
      %v6055 = vadd.f32 %v6051, %v472
      %v6056 = vadd.f32 %v6052, %v473
      %v6057 = vadd.f32 %v6053, %v474
      %v6058 = vadd.f32 %v6054, %v475
      %6059 = vst [vmem:[%s452] sm:$0xff] %v6055
      %6060 = vst [vmem:[%s452 + $0x8] sm:$0xff] %v6056
      %6061 = vst [vmem:[%s452 + $0x10] sm:$0xff] %v6057
      %6062 = vst [vmem:[%s452 + $0x18] sm:$0xff] %v6058
      %p6063 = scmp.lt.s32.totalorder %s28, 1
      %s6064 = scalar_select %p6063, %s28, 1
      %s6065 = smul.addr %s6064, 4
      %s6066 = smul.addr %s6065, 8
      %s6067 = scalar_lea.vmem %s13, %s6066
      // Predicated region
      $region77: #{msc_group_forward.1} parent=71 // pred_check
        %p6068 = pneg %p332
      $region78: #{msc_group_forward.1} parent=71 // pred_check_branch
        %6070 = sbr.rel (%p6068) target = $region80
      $region79: #{msc_group_forward.1} parent=71 // pred_region
        _
      $region80: #{msc_group_forward.1} parent=71 // pred_fallthru
        _
    $region72: #{msc_group_forward.1} parent=5 // pred_fallthru
      _
    %p6071 = scmp.le.s32.totalorder 2, %s19
    // Predicated region
    $region81: #{msc_group_forward.1} parent=5 // pred_check
      %p6072 = pneg %p6071
    $region82: #{msc_group_forward.1} parent=5 // pred_check_branch
      %6074 = sbr.rel (%p6072) target = $region84
    $region83: #{msc_group_forward.1} parent=5 // pred_region
      %s6075 = ssub.s32 %s19, 2
      // Predicated region
      $region85: #{msc_group_forward.1} parent=83 // pred_check
        %p6076 = pneg %p338
      $region86: #{msc_group_forward.1} parent=83 // pred_check_branch
        %6078 = sbr.rel (%p6076) target = $region88
      $region87: #{msc_group_forward.1} parent=83 // pred_region
        %p6079 = scmp.lt.s32.totalorder %s30, 1
        %s6080 = scalar_select %p6079, %s30, 1
        %s6081 = smul.addr %s6080, 4
        %s6082 = smul.addr %s6081, 8
        %s6083 = scalar_lea.vmem %s13, %s6082
      $region88: #{msc_group_forward.1} parent=83 // pred_fallthru
        _
    $region84: #{msc_group_forward.1} parent=5 // pred_fallthru
      _
  $region6: #{msc_group_forward.1} parent=0 // loop_footer
    %s23 = sadd.s32 1, %s19
  $region7: #{msc_group_forward.1} parent=0 // loop_footer_branch
    %18 = sbr.rel target = $region3
  $region8: #{msc_group_forward.1} parent=0 // loop_exit
    _

</llo_original>
